<compile_context>
chip_gen: v6e
topology: v6e:2x2x1
jax: 0.10.0
libtpu: 0.0.40
codegen_flags: <defaults>
</compile_context>

<pallas_src>
import functools

import jax
import jax.numpy as jnp
from jax.experimental import pallas as pl
from jax.experimental.pallas import tpu as pltpu

DIM = 32
HEADS = 8
HEAD_DIM = DIM // HEADS
MLP_DIM = 64
DEPTH = 2
EPS = 1e-5  # nn.LayerNorm default


def _layernorm(x, gamma, beta):
    mean = jnp.mean(x, axis=-1, keepdims=True)
    var = jnp.mean(jnp.square(x - mean), axis=-1, keepdims=True)
    return (x - mean) * jax.lax.rsqrt(var + EPS) * gamma + beta


# ---------------------------------------------------------------------------
# Fused Pallas kernel: full DEPTH-layer transformer forward for one batch elem
# ---------------------------------------------------------------------------
def transformer_kernel(x_ref,
                       ln1_g, ln1_b, wq, wk, wv, wo, bo,
                       ln2_g, ln2_b, w1, b1, w2, b2,
                       o_ref, *, depth, heads, scale):
    n, d = x_ref.shape[1], x_ref.shape[2]
    x = x_ref[0]                                   # (N, D), stays resident

    for l in range(depth):                         # unrolled (DEPTH=2)
        # ---- attention block: LayerNorm -> per-head attention -> proj -> residual
        xn = _layernorm(x, ln1_g[l], ln1_b[l])                     # (N, D)
        # heads on the leading (sublane-batch) axis -> no lane slicing / concat
        xn_b = jnp.broadcast_to(xn[None], (heads, n, d))           # (H, N, D)
        q = jnp.einsum("hnd,hde->hne", xn_b, wq[l],
                       preferred_element_type=jnp.float32)         # (H, N, hd)
        k = jnp.einsum("hnd,hde->hne", xn_b, wk[l],
                       preferred_element_type=jnp.float32)
        v = jnp.einsum("hnd,hde->hne", xn_b, wv[l],
                       preferred_element_type=jnp.float32)

        dots = jnp.einsum("hne,hme->hnm", q, k,
                          preferred_element_type=jnp.float32) * scale   # (H, N, N)
        dots = dots - jnp.max(dots, axis=-1, keepdims=True)
        p = jnp.exp(dots)
        attn = p * pl.reciprocal(jnp.sum(p, axis=-1, keepdims=True), approx=True)
        av = jnp.einsum("hnm,hme->hne", attn, v,
                        preferred_element_type=jnp.float32)        # (H, N, hd)

        # merge heads via per-head output projection + leading-axis sum
        proj = jnp.sum(jnp.einsum("hne,hed->hnd", av, wo[l],
                                  preferred_element_type=jnp.float32), axis=0)  # (N, D)
        x = proj + bo[l] + x

        # ---- feed-forward block: LayerNorm -> Linear -> ReLU -> Linear -> residual
        xn2 = _layernorm(x, ln2_g[l], ln2_b[l])
        h1 = jnp.maximum(
            jnp.dot(xn2, w1[l], preferred_element_type=jnp.float32) + b1[l], 0.0)
        x = jnp.dot(h1, w2[l], preferred_element_type=jnp.float32) + b2[l] + x

    o_ref[0] = x.astype(o_ref.dtype)


# ---------------------------------------------------------------------------
# pallas_call wrapper
# ---------------------------------------------------------------------------
def _const_spec(shape):
    nd = len(shape)
    return pl.BlockSpec(shape, lambda b, _nd=nd: (0,) * _nd)


WEIGHT_ORDER = ("ln1_g", "ln1_b", "wq", "wk", "wv", "wo", "bo",
                "ln2_g", "ln2_b", "w1", "b1", "w2", "b2")


def transformer_forward(x, packed):
    """x: (B, N, D) f32; packed: dict of DEPTH-stacked, kernel-layout weights."""
    B, N, D = x.shape
    kernel = functools.partial(transformer_kernel, depth=DEPTH, heads=HEADS,
                               scale=float(D) ** -0.5)
    weights = [packed[k] for k in WEIGHT_ORDER]
    in_specs = [pl.BlockSpec((1, N, D), lambda b: (b, 0, 0))]
    in_specs += [_const_spec(w.shape) for w in weights]   # weights DMA'd once, VMEM-resident
    return pl.pallas_call(
        kernel,
        out_shape=jax.ShapeDtypeStruct((B, N, D), x.dtype),
        grid=(B,),                                         # TC sharding only (v7x: 2 cores)
        in_specs=in_specs,
        out_specs=pl.BlockSpec((1, N, D), lambda b: (b, 0, 0)),
        compiler_params=pltpu.CompilerParams(dimension_semantics=("parallel",)),
    )(x, *weights)


# ---------------------------------------------------------------------------
# Parameter construction (PyTorch-equivalent base layout) and kernel packing
# ---------------------------------------------------------------------------
def make_params(key):
    layers = []
    for _ in range(DEPTH):
        key, *ks = jax.random.split(key, 11)
        layers.append({
            "ln1_g": (1.0 + 0.1 * jax.random.normal(ks[0], (DIM,))).astype(jnp.float32),
            "ln1_b": (0.1 * jax.random.normal(ks[1], (DIM,))).astype(jnp.float32),
            # pre-transposed linear weights: (in_dim, out_dim)
            # to_qkv output columns ordered (qkv, h, d) — matches the einops rearrange
            "wqkv_t": (0.05 * jax.random.normal(ks[2], (DIM, 3 * DIM))).astype(jnp.float32),
            "wout_t": (0.05 * jax.random.normal(ks[3], (DIM, DIM))).astype(jnp.float32),
            "bout":   (0.05 * jax.random.normal(ks[4], (DIM,))).astype(jnp.float32),
            "ln2_g": (1.0 + 0.1 * jax.random.normal(ks[5], (DIM,))).astype(jnp.float32),
            "ln2_b": (0.1 * jax.random.normal(ks[6], (DIM,))).astype(jnp.float32),
            "w1_t": (0.05 * jax.random.normal(ks[7], (DIM, MLP_DIM))).astype(jnp.float32),
            "b1":   (0.05 * jax.random.normal(ks[8], (MLP_DIM,))).astype(jnp.float32),
            "w2_t": (0.05 * jax.random.normal(ks[9], (MLP_DIM, DIM))).astype(jnp.float32),
            "b2":   jnp.zeros((DIM,), jnp.float32),
        })
    return layers


def pack_params(layers):
    """Restructure per-layer weights into DEPTH-stacked, head-major kernel layout."""
    def st(fn):
        return jnp.stack([fn(p) for p in layers], axis=0)

    def split_qkv(p, idx):
        w = p["wqkv_t"].reshape(DIM, 3, HEADS, HEAD_DIM)[:, idx]   # (D, H, hd)
        return jnp.transpose(w, (1, 0, 2))                         # (H, D, hd)

    return {
        "ln1_g": st(lambda p: p["ln1_g"].reshape(1, DIM)),
        "ln1_b": st(lambda p: p["ln1_b"].reshape(1, DIM)),
        "wq": st(lambda p: split_qkv(p, 0)),                       # (DEPTH, H, D, hd)
        "wk": st(lambda p: split_qkv(p, 1)),
        "wv": st(lambda p: split_qkv(p, 2)),
        "wo": st(lambda p: p["wout_t"].reshape(HEADS, HEAD_DIM, DIM)),  # (DEPTH, H, hd, D)
        "bo": st(lambda p: p["bout"].reshape(1, DIM)),
        "ln2_g": st(lambda p: p["ln2_g"].reshape(1, DIM)),
        "ln2_b": st(lambda p: p["ln2_b"].reshape(1, DIM)),
        "w1": st(lambda p: p["w1_t"]),                             # (DEPTH, D, MLP)
        "b1": st(lambda p: p["b1"].reshape(1, MLP_DIM)),
        "w2": st(lambda p: p["w2_t"]),                             # (DEPTH, MLP, D)
        "b2": st(lambda p: p["b2"].reshape(1, DIM)),
    }


# ---------------------------------------------------------------------------
# Pure-JAX reference (matches PyTorch module semantics) for verification
# ---------------------------------------------------------------------------
def _ref_forward(x, layers):
    B, N, D = x.shape
    scale = float(D) ** -0.5
    for p in layers:
        xn = _layernorm(x, p["ln1_g"], p["ln1_b"])
        qkv = xn @ p["wqkv_t"]                              # (B, N, 3D)
        qkv = qkv.reshape(B, N, 3, HEADS, HEAD_DIM)
        q = jnp.transpose(qkv[:, :, 0], (0, 2, 1, 3))       # (B, H, N, hd)
        k = jnp.transpose(qkv[:, :, 1], (0, 2, 1, 3))
        v = jnp.transpose(qkv[:, :, 2], (0, 2, 1, 3))
        dots = jnp.einsum("bhid,bhjd->bhij", q, k) * scale
        attn = jax.nn.softmax(dots, axis=-1)
        out = jnp.einsum("bhij,bhjd->bhid", attn, v)
        out = jnp.transpose(out, (0, 2, 1, 3)).reshape(B, N, D)
        x = out @ p["wout_t"] + p["bout"] + x

        xn = _layernorm(x, p["ln2_g"], p["ln2_b"])
        h1 = jnp.maximum(xn @ p["w1_t"] + p["b1"], 0.0)
        x = h1 @ p["w2_t"] + p["b2"] + x
    return x


# ---------------------------------------------------------------------------
if __name__ == "__main__":
    key = jax.random.PRNGKey(0)
    kx, kp = jax.random.split(key)

    B, N = 2, 8
    x = jax.random.normal(kx, (B, N, DIM), jnp.float32)
    layers = make_params(kp)
    packed = pack_params(layers)

    out = transformer_forward(x, packed)
    out = jax.block_until_ready(out)

    ref = _ref_forward(x, layers)
    assert out.shape == (B, N, DIM)
    # Tolerance is looser than strict f32 because the softmax denominator uses the
    # EUP approximate reciprocal; real bugs produce O(0.1+) errors, so 1e-2 is safe.
    assert jnp.max(jnp.abs(out - ref)) < 1e-2, "Pallas output mismatch vs reference"

    print("KERNEL_OK")
</pallas_src>

<mosaic_0001>
module attributes {stable_mosaic.version = 11 : i64} {
  func.func @transformer_kernel(%arg0: i32, %arg1: memref<1x8x32xf32, #tpu.memory_space<vmem>>, %arg2: memref<2x1x32xf32, #tpu.memory_space<vmem>>, %arg3: memref<2x1x32xf32, #tpu.memory_space<vmem>>, %arg4: memref<2x8x32x4xf32, #tpu.memory_space<vmem>>, %arg5: memref<2x8x32x4xf32, #tpu.memory_space<vmem>>, %arg6: memref<2x8x32x4xf32, #tpu.memory_space<vmem>>, %arg7: memref<2x8x4x32xf32, #tpu.memory_space<vmem>>, %arg8: memref<2x1x32xf32, #tpu.memory_space<vmem>>, %arg9: memref<2x1x32xf32, #tpu.memory_space<vmem>>, %arg10: memref<2x1x32xf32, #tpu.memory_space<vmem>>, %arg11: memref<2x32x64xf32, #tpu.memory_space<vmem>>, %arg12: memref<2x1x64xf32, #tpu.memory_space<vmem>>, %arg13: memref<2x64x32xf32, #tpu.memory_space<vmem>>, %arg14: memref<2x1x32xf32, #tpu.memory_space<vmem>>, %arg15: memref<1x8x32xf32, #tpu.memory_space<vmem>>) attributes {dimension_semantics = [#tpu.dimension_semantics<parallel>], iteration_bounds = array<i64: 2>, scalar_prefetch = 0 : i64, scratch_operands = 0 : i64, tpu.core_type = #tpu.core_type<tc>, window_params = [{transform_indices = @transform_0, window_bounds = array<i64: 1, 8, 32>}, {pipeline_mode = #tpu.pipeline_mode<synchronous>, transform_indices = @transform_1, window_bounds = array<i64: 2, 1, 32>}, {pipeline_mode = #tpu.pipeline_mode<synchronous>, transform_indices = @transform_2, window_bounds = array<i64: 2, 1, 32>}, {pipeline_mode = #tpu.pipeline_mode<synchronous>, transform_indices = @transform_3, window_bounds = array<i64: 2, 8, 32, 4>}, {pipeline_mode = #tpu.pipeline_mode<synchronous>, transform_indices = @transform_4, window_bounds = array<i64: 2, 8, 32, 4>}, {pipeline_mode = #tpu.pipeline_mode<synchronous>, transform_indices = @transform_5, window_bounds = array<i64: 2, 8, 32, 4>}, {pipeline_mode = #tpu.pipeline_mode<synchronous>, transform_indices = @transform_6, window_bounds = array<i64: 2, 8, 4, 32>}, {pipeline_mode = #tpu.pipeline_mode<synchronous>, transform_indices = @transform_7, window_bounds = array<i64: 2, 1, 32>}, {pipeline_mode = #tpu.pipeline_mode<synchronous>, transform_indices = @transform_8, window_bounds = array<i64: 2, 1, 32>}, {pipeline_mode = #tpu.pipeline_mode<synchronous>, transform_indices = @transform_9, window_bounds = array<i64: 2, 1, 32>}, {pipeline_mode = #tpu.pipeline_mode<synchronous>, transform_indices = @transform_10, window_bounds = array<i64: 2, 32, 64>}, {pipeline_mode = #tpu.pipeline_mode<synchronous>, transform_indices = @transform_11, window_bounds = array<i64: 2, 1, 64>}, {pipeline_mode = #tpu.pipeline_mode<synchronous>, transform_indices = @transform_12, window_bounds = array<i64: 2, 64, 32>}, {pipeline_mode = #tpu.pipeline_mode<synchronous>, transform_indices = @transform_13, window_bounds = array<i64: 2, 1, 32>}, {transform_indices = @transform_14, window_bounds = array<i64: 1, 8, 32>}]} {
    %c0 = arith.constant 0 : index
    %c0_0 = arith.constant 0 : index
    %c0_1 = arith.constant 0 : index
    %0 = vector.load %arg1[%c0, %c0_0, %c0_1] : memref<1x8x32xf32, #tpu.memory_space<vmem>>, vector<1x8x32xf32>
    %1 = vector.shape_cast %0 : vector<1x8x32xf32> to vector<8x32xf32>
    %c0_2 = arith.constant 0 : index
    %c0_3 = arith.constant 0 : index
    %c0_4 = arith.constant 0 : index
    %2 = vector.load %arg2[%c0_2, %c0_3, %c0_4] : memref<2x1x32xf32, #tpu.memory_space<vmem>>, vector<1x1x32xf32>
    %3 = vector.shape_cast %2 : vector<1x1x32xf32> to vector<1x32xf32>
    %c0_5 = arith.constant 0 : index
    %c0_6 = arith.constant 0 : index
    %c0_7 = arith.constant 0 : index
    %4 = vector.load %arg3[%c0_5, %c0_6, %c0_7] : memref<2x1x32xf32, #tpu.memory_space<vmem>>, vector<1x1x32xf32>
    %5 = vector.shape_cast %4 : vector<1x1x32xf32> to vector<1x32xf32>
    %cst = arith.constant dense<0.000000e+00> : vector<8xf32>
    %6 = vector.multi_reduction <add>, %1, %cst [1] : vector<8x32xf32> to vector<8xf32>
    %7 = vector.shape_cast %6 : vector<8xf32> to vector<8x1xf32>
    %cst_8 = arith.constant 3.200000e+01 : f32
    %8 = vector.broadcast %cst_8 : f32 to vector<8x1xf32>
    %9 = arith.divf %7, %8 : vector<8x1xf32>
    %10 = vector.broadcast %9 : vector<8x1xf32> to vector<8x32xf32>
    %11 = arith.subf %1, %10 : vector<8x32xf32>
    %12 = arith.mulf %11, %11 : vector<8x32xf32>
    %cst_9 = arith.constant dense<0.000000e+00> : vector<8xf32>
    %13 = vector.multi_reduction <add>, %12, %cst_9 [1] : vector<8x32xf32> to vector<8xf32>
    %14 = vector.shape_cast %13 : vector<8xf32> to vector<8x1xf32>
    %cst_10 = arith.constant 3.200000e+01 : f32
    %15 = vector.broadcast %cst_10 : f32 to vector<8x1xf32>
    %16 = arith.divf %14, %15 : vector<8x1xf32>
    %17 = vector.broadcast %9 : vector<8x1xf32> to vector<8x32xf32>
    %18 = arith.subf %1, %17 : vector<8x32xf32>
    %cst_11 = arith.constant 9.99999974E-6 : f32
    %19 = vector.broadcast %cst_11 : f32 to vector<8x1xf32>
    %20 = arith.addf %16, %19 : vector<8x1xf32>
    %21 = math.rsqrt %20 : vector<8x1xf32>
    %22 = vector.broadcast %21 : vector<8x1xf32> to vector<8x32xf32>
    %23 = arith.mulf %18, %22 : vector<8x32xf32>
    %24 = vector.broadcast %3 : vector<1x32xf32> to vector<8x32xf32>
    %25 = arith.mulf %23, %24 : vector<8x32xf32>
    %26 = vector.broadcast %5 : vector<1x32xf32> to vector<8x32xf32>
    %27 = arith.addf %25, %26 : vector<8x32xf32>
    %28 = vector.shape_cast %27 : vector<8x32xf32> to vector<1x8x32xf32>
    %29 = vector.shape_cast %28 : vector<1x8x32xf32> to vector<1x8x32xf32>
    %30 = vector.broadcast %29 : vector<1x8x32xf32> to vector<8x8x32xf32>
    %c0_12 = arith.constant 0 : index
    %c0_13 = arith.constant 0 : index
    %c0_14 = arith.constant 0 : index
    %c0_15 = arith.constant 0 : index
    %31 = vector.load %arg4[%c0_12, %c0_13, %c0_14, %c0_15] : memref<2x8x32x4xf32, #tpu.memory_space<vmem>>, vector<1x8x32x4xf32>
    %32 = vector.shape_cast %31 : vector<1x8x32x4xf32> to vector<8x32x4xf32>
    "tpu.trace_start"() <{level = 10 : i32, message = "hnd,hde->hne"}> : () -> ()
    %cst_16 = arith.constant dense<0.000000e+00> : vector<8x8x4xf32>
    %33 = tpu.matmul %30, %32, %cst_16 {dimension_numbers = #tpu.dot_dimension_numbers<[2], [1], [1], [2], [0, 0, 0, 1, 1, 2], [0], [0]>} : vector<8x8x32xf32>, vector<8x32x4xf32>, vector<8x8x4xf32> -> vector<8x8x4xf32>
    "tpu.trace_stop"() : () -> ()
    %c0_17 = arith.constant 0 : index
    %c0_18 = arith.constant 0 : index
    %c0_19 = arith.constant 0 : index
    %c0_20 = arith.constant 0 : index
    %34 = vector.load %arg5[%c0_17, %c0_18, %c0_19, %c0_20] : memref<2x8x32x4xf32, #tpu.memory_space<vmem>>, vector<1x8x32x4xf32>
    %35 = vector.shape_cast %34 : vector<1x8x32x4xf32> to vector<8x32x4xf32>
    "tpu.trace_start"() <{level = 10 : i32, message = "hnd,hde->hne"}> : () -> ()
    %cst_21 = arith.constant dense<0.000000e+00> : vector<8x8x4xf32>
    %36 = tpu.matmul %30, %35, %cst_21 {dimension_numbers = #tpu.dot_dimension_numbers<[2], [1], [1], [2], [0, 0, 0, 1, 1, 2], [0], [0]>} : vector<8x8x32xf32>, vector<8x32x4xf32>, vector<8x8x4xf32> -> vector<8x8x4xf32>
    "tpu.trace_stop"() : () -> ()
    %c0_22 = arith.constant 0 : index
    %c0_23 = arith.constant 0 : index
    %c0_24 = arith.constant 0 : index
    %c0_25 = arith.constant 0 : index
    %37 = vector.load %arg6[%c0_22, %c0_23, %c0_24, %c0_25] : memref<2x8x32x4xf32, #tpu.memory_space<vmem>>, vector<1x8x32x4xf32>
    %38 = vector.shape_cast %37 : vector<1x8x32x4xf32> to vector<8x32x4xf32>
    "tpu.trace_start"() <{level = 10 : i32, message = "hnd,hde->hne"}> : () -> ()
    %cst_26 = arith.constant dense<0.000000e+00> : vector<8x8x4xf32>
    %39 = tpu.matmul %30, %38, %cst_26 {dimension_numbers = #tpu.dot_dimension_numbers<[2], [1], [1], [2], [0, 0, 0, 1, 1, 2], [0], [0]>} : vector<8x8x32xf32>, vector<8x32x4xf32>, vector<8x8x4xf32> -> vector<8x8x4xf32>
    "tpu.trace_stop"() : () -> ()
    "tpu.trace_start"() <{level = 10 : i32, message = "hne,hme->hnm"}> : () -> ()
    %cst_27 = arith.constant dense<0.000000e+00> : vector<8x8x8xf32>
    %40 = tpu.matmul %33, %36, %cst_27 {dimension_numbers = #tpu.dot_dimension_numbers<[2], [2], [1], [1], [0, 0, 0, 1, 1, 1], [0], [0]>} : vector<8x8x4xf32>, vector<8x8x4xf32>, vector<8x8x8xf32> -> vector<8x8x8xf32>
    "tpu.trace_stop"() : () -> ()
    %cst_28 = arith.constant 0.176776692 : f32
    %41 = vector.broadcast %cst_28 : f32 to vector<8x8x8xf32>
    %42 = arith.mulf %40, %41 : vector<8x8x8xf32>
    %cst_29 = arith.constant dense<0xFF800000> : vector<8x8xf32>
    %43 = vector.multi_reduction <maximumf>, %42, %cst_29 [2] : vector<8x8x8xf32> to vector<8x8xf32>
    %44 = vector.shape_cast %43 : vector<8x8xf32> to vector<8x8x1xf32>
    %45 = vector.broadcast %44 : vector<8x8x1xf32> to vector<8x8x8xf32>
    %46 = arith.subf %42, %45 : vector<8x8x8xf32>
    %47 = math.exp %46 : vector<8x8x8xf32>
    %cst_30 = arith.constant dense<0.000000e+00> : vector<8x8xf32>
    %48 = vector.multi_reduction <add>, %47, %cst_30 [2] : vector<8x8x8xf32> to vector<8x8xf32>
    %49 = vector.shape_cast %48 : vector<8x8xf32> to vector<8x8x1xf32>
    %50 = tpu.reciprocal %49 {approx = true} : vector<8x8x1xf32> -> vector<8x8x1xf32>
    %51 = vector.broadcast %50 : vector<8x8x1xf32> to vector<8x8x8xf32>
    %52 = arith.mulf %47, %51 : vector<8x8x8xf32>
    "tpu.trace_start"() <{level = 10 : i32, message = "hnm,hme->hne"}> : () -> ()
    %cst_31 = arith.constant dense<0.000000e+00> : vector<8x8x4xf32>
    %53 = tpu.matmul %52, %39, %cst_31 {dimension_numbers = #tpu.dot_dimension_numbers<[2], [1], [1], [2], [0, 0, 0, 1, 1, 2], [0], [0]>} : vector<8x8x8xf32>, vector<8x8x4xf32>, vector<8x8x4xf32> -> vector<8x8x4xf32>
    "tpu.trace_stop"() : () -> ()
    %c0_32 = arith.constant 0 : index
    %c0_33 = arith.constant 0 : index
    %c0_34 = arith.constant 0 : index
    %c0_35 = arith.constant 0 : index
    %54 = vector.load %arg7[%c0_32, %c0_33, %c0_34, %c0_35] : memref<2x8x4x32xf32, #tpu.memory_space<vmem>>, vector<1x8x4x32xf32>
    %55 = vector.shape_cast %54 : vector<1x8x4x32xf32> to vector<8x4x32xf32>
    "tpu.trace_start"() <{level = 10 : i32, message = "hne,hed->hnd"}> : () -> ()
    %cst_36 = arith.constant dense<0.000000e+00> : vector<8x8x32xf32>
    %56 = tpu.matmul %53, %55, %cst_36 {dimension_numbers = #tpu.dot_dimension_numbers<[2], [1], [1], [2], [0, 0, 0, 1, 1, 2], [0], [0]>} : vector<8x8x4xf32>, vector<8x4x32xf32>, vector<8x8x32xf32> -> vector<8x8x32xf32>
    "tpu.trace_stop"() : () -> ()
    %cst_37 = arith.constant dense<0.000000e+00> : vector<8x32xf32>
    %57 = vector.multi_reduction <add>, %56, %cst_37 [0] : vector<8x8x32xf32> to vector<8x32xf32>
    %c0_38 = arith.constant 0 : index
    %c0_39 = arith.constant 0 : index
    %c0_40 = arith.constant 0 : index
    %58 = vector.load %arg8[%c0_38, %c0_39, %c0_40] : memref<2x1x32xf32, #tpu.memory_space<vmem>>, vector<1x1x32xf32>
    %59 = vector.shape_cast %58 : vector<1x1x32xf32> to vector<1x32xf32>
    %60 = vector.broadcast %59 : vector<1x32xf32> to vector<8x32xf32>
    %61 = arith.addf %57, %60 : vector<8x32xf32>
    %62 = arith.addf %61, %1 : vector<8x32xf32>
    %c0_41 = arith.constant 0 : index
    %c0_42 = arith.constant 0 : index
    %c0_43 = arith.constant 0 : index
    %63 = vector.load %arg9[%c0_41, %c0_42, %c0_43] : memref<2x1x32xf32, #tpu.memory_space<vmem>>, vector<1x1x32xf32>
    %64 = vector.shape_cast %63 : vector<1x1x32xf32> to vector<1x32xf32>
    %c0_44 = arith.constant 0 : index
    %c0_45 = arith.constant 0 : index
    %c0_46 = arith.constant 0 : index
    %65 = vector.load %arg10[%c0_44, %c0_45, %c0_46] : memref<2x1x32xf32, #tpu.memory_space<vmem>>, vector<1x1x32xf32>
    %66 = vector.shape_cast %65 : vector<1x1x32xf32> to vector<1x32xf32>
    %cst_47 = arith.constant dense<0.000000e+00> : vector<8xf32>
    %67 = vector.multi_reduction <add>, %62, %cst_47 [1] : vector<8x32xf32> to vector<8xf32>
    %68 = vector.shape_cast %67 : vector<8xf32> to vector<8x1xf32>
    %cst_48 = arith.constant 3.200000e+01 : f32
    %69 = vector.broadcast %cst_48 : f32 to vector<8x1xf32>
    %70 = arith.divf %68, %69 : vector<8x1xf32>
    %71 = vector.broadcast %70 : vector<8x1xf32> to vector<8x32xf32>
    %72 = arith.subf %62, %71 : vector<8x32xf32>
    %73 = arith.mulf %72, %72 : vector<8x32xf32>
    %cst_49 = arith.constant dense<0.000000e+00> : vector<8xf32>
    %74 = vector.multi_reduction <add>, %73, %cst_49 [1] : vector<8x32xf32> to vector<8xf32>
    %75 = vector.shape_cast %74 : vector<8xf32> to vector<8x1xf32>
    %cst_50 = arith.constant 3.200000e+01 : f32
    %76 = vector.broadcast %cst_50 : f32 to vector<8x1xf32>
    %77 = arith.divf %75, %76 : vector<8x1xf32>
    %78 = vector.broadcast %70 : vector<8x1xf32> to vector<8x32xf32>
    %79 = arith.subf %62, %78 : vector<8x32xf32>
    %cst_51 = arith.constant 9.99999974E-6 : f32
    %80 = vector.broadcast %cst_51 : f32 to vector<8x1xf32>
    %81 = arith.addf %77, %80 : vector<8x1xf32>
    %82 = math.rsqrt %81 : vector<8x1xf32>
    %83 = vector.broadcast %82 : vector<8x1xf32> to vector<8x32xf32>
    %84 = arith.mulf %79, %83 : vector<8x32xf32>
    %85 = vector.broadcast %64 : vector<1x32xf32> to vector<8x32xf32>
    %86 = arith.mulf %84, %85 : vector<8x32xf32>
    %87 = vector.broadcast %66 : vector<1x32xf32> to vector<8x32xf32>
    %88 = arith.addf %86, %87 : vector<8x32xf32>
    %c0_52 = arith.constant 0 : index
    %c0_53 = arith.constant 0 : index
    %c0_54 = arith.constant 0 : index
    %89 = vector.load %arg11[%c0_52, %c0_53, %c0_54] : memref<2x32x64xf32, #tpu.memory_space<vmem>>, vector<1x32x64xf32>
    %90 = vector.shape_cast %89 : vector<1x32x64xf32> to vector<32x64xf32>
    %cst_55 = arith.constant dense<0.000000e+00> : vector<8x64xf32>
    %91 = tpu.matmul %88, %90, %cst_55 {dimension_numbers = #tpu.dot_dimension_numbers<[1], [0], [0], [1], [0, 0, 1, 1], [], []>} : vector<8x32xf32>, vector<32x64xf32>, vector<8x64xf32> -> vector<8x64xf32>
    %c0_56 = arith.constant 0 : index
    %c0_57 = arith.constant 0 : index
    %c0_58 = arith.constant 0 : index
    %92 = vector.load %arg12[%c0_56, %c0_57, %c0_58] : memref<2x1x64xf32, #tpu.memory_space<vmem>>, vector<1x1x64xf32>
    %93 = vector.shape_cast %92 : vector<1x1x64xf32> to vector<1x64xf32>
    %94 = vector.broadcast %93 : vector<1x64xf32> to vector<8x64xf32>
    %95 = arith.addf %91, %94 : vector<8x64xf32>
    %cst_59 = arith.constant 0.000000e+00 : f32
    %96 = vector.broadcast %cst_59 : f32 to vector<8x64xf32>
    %97 = arith.maximumf %95, %96 : vector<8x64xf32>
    %c0_60 = arith.constant 0 : index
    %c0_61 = arith.constant 0 : index
    %c0_62 = arith.constant 0 : index
    %98 = vector.load %arg13[%c0_60, %c0_61, %c0_62] : memref<2x64x32xf32, #tpu.memory_space<vmem>>, vector<1x64x32xf32>
    %99 = vector.shape_cast %98 : vector<1x64x32xf32> to vector<64x32xf32>
    %cst_63 = arith.constant dense<0.000000e+00> : vector<8x32xf32>
    %100 = tpu.matmul %97, %99, %cst_63 {dimension_numbers = #tpu.dot_dimension_numbers<[1], [0], [0], [1], [0, 0, 1, 1], [], []>} : vector<8x64xf32>, vector<64x32xf32>, vector<8x32xf32> -> vector<8x32xf32>
    %c0_64 = arith.constant 0 : index
    %c0_65 = arith.constant 0 : index
    %c0_66 = arith.constant 0 : index
    %101 = vector.load %arg14[%c0_64, %c0_65, %c0_66] : memref<2x1x32xf32, #tpu.memory_space<vmem>>, vector<1x1x32xf32>
    %102 = vector.shape_cast %101 : vector<1x1x32xf32> to vector<1x32xf32>
    %103 = vector.broadcast %102 : vector<1x32xf32> to vector<8x32xf32>
    %104 = arith.addf %100, %103 : vector<8x32xf32>
    %105 = arith.addf %104, %62 : vector<8x32xf32>
    %c1 = arith.constant 1 : index
    %c0_67 = arith.constant 0 : index
    %c0_68 = arith.constant 0 : index
    %106 = vector.load %arg2[%c1, %c0_67, %c0_68] : memref<2x1x32xf32, #tpu.memory_space<vmem>>, vector<1x1x32xf32>
    %107 = vector.shape_cast %106 : vector<1x1x32xf32> to vector<1x32xf32>
    %c1_69 = arith.constant 1 : index
    %c0_70 = arith.constant 0 : index
    %c0_71 = arith.constant 0 : index
    %108 = vector.load %arg3[%c1_69, %c0_70, %c0_71] : memref<2x1x32xf32, #tpu.memory_space<vmem>>, vector<1x1x32xf32>
    %109 = vector.shape_cast %108 : vector<1x1x32xf32> to vector<1x32xf32>
    %cst_72 = arith.constant dense<0.000000e+00> : vector<8xf32>
    %110 = vector.multi_reduction <add>, %105, %cst_72 [1] : vector<8x32xf32> to vector<8xf32>
    %111 = vector.shape_cast %110 : vector<8xf32> to vector<8x1xf32>
    %cst_73 = arith.constant 3.200000e+01 : f32
    %112 = vector.broadcast %cst_73 : f32 to vector<8x1xf32>
    %113 = arith.divf %111, %112 : vector<8x1xf32>
    %114 = vector.broadcast %113 : vector<8x1xf32> to vector<8x32xf32>
    %115 = arith.subf %105, %114 : vector<8x32xf32>
    %116 = arith.mulf %115, %115 : vector<8x32xf32>
    %cst_74 = arith.constant dense<0.000000e+00> : vector<8xf32>
    %117 = vector.multi_reduction <add>, %116, %cst_74 [1] : vector<8x32xf32> to vector<8xf32>
    %118 = vector.shape_cast %117 : vector<8xf32> to vector<8x1xf32>
    %cst_75 = arith.constant 3.200000e+01 : f32
    %119 = vector.broadcast %cst_75 : f32 to vector<8x1xf32>
    %120 = arith.divf %118, %119 : vector<8x1xf32>
    %121 = vector.broadcast %113 : vector<8x1xf32> to vector<8x32xf32>
    %122 = arith.subf %105, %121 : vector<8x32xf32>
    %cst_76 = arith.constant 9.99999974E-6 : f32
    %123 = vector.broadcast %cst_76 : f32 to vector<8x1xf32>
    %124 = arith.addf %120, %123 : vector<8x1xf32>
    %125 = math.rsqrt %124 : vector<8x1xf32>
    %126 = vector.broadcast %125 : vector<8x1xf32> to vector<8x32xf32>
    %127 = arith.mulf %122, %126 : vector<8x32xf32>
    %128 = vector.broadcast %107 : vector<1x32xf32> to vector<8x32xf32>
    %129 = arith.mulf %127, %128 : vector<8x32xf32>
    %130 = vector.broadcast %109 : vector<1x32xf32> to vector<8x32xf32>
    %131 = arith.addf %129, %130 : vector<8x32xf32>
    %132 = vector.shape_cast %131 : vector<8x32xf32> to vector<1x8x32xf32>
    %133 = vector.shape_cast %132 : vector<1x8x32xf32> to vector<1x8x32xf32>
    %134 = vector.broadcast %133 : vector<1x8x32xf32> to vector<8x8x32xf32>
    %c1_77 = arith.constant 1 : index
    %c0_78 = arith.constant 0 : index
    %c0_79 = arith.constant 0 : index
    %c0_80 = arith.constant 0 : index
    %135 = vector.load %arg4[%c1_77, %c0_78, %c0_79, %c0_80] : memref<2x8x32x4xf32, #tpu.memory_space<vmem>>, vector<1x8x32x4xf32>
    %136 = vector.shape_cast %135 : vector<1x8x32x4xf32> to vector<8x32x4xf32>
    "tpu.trace_start"() <{level = 10 : i32, message = "hnd,hde->hne"}> : () -> ()
    %cst_81 = arith.constant dense<0.000000e+00> : vector<8x8x4xf32>
    %137 = tpu.matmul %134, %136, %cst_81 {dimension_numbers = #tpu.dot_dimension_numbers<[2], [1], [1], [2], [0, 0, 0, 1, 1, 2], [0], [0]>} : vector<8x8x32xf32>, vector<8x32x4xf32>, vector<8x8x4xf32> -> vector<8x8x4xf32>
    "tpu.trace_stop"() : () -> ()
    %c1_82 = arith.constant 1 : index
    %c0_83 = arith.constant 0 : index
    %c0_84 = arith.constant 0 : index
    %c0_85 = arith.constant 0 : index
    %138 = vector.load %arg5[%c1_82, %c0_83, %c0_84, %c0_85] : memref<2x8x32x4xf32, #tpu.memory_space<vmem>>, vector<1x8x32x4xf32>
    %139 = vector.shape_cast %138 : vector<1x8x32x4xf32> to vector<8x32x4xf32>
    "tpu.trace_start"() <{level = 10 : i32, message = "hnd,hde->hne"}> : () -> ()
    %cst_86 = arith.constant dense<0.000000e+00> : vector<8x8x4xf32>
    %140 = tpu.matmul %134, %139, %cst_86 {dimension_numbers = #tpu.dot_dimension_numbers<[2], [1], [1], [2], [0, 0, 0, 1, 1, 2], [0], [0]>} : vector<8x8x32xf32>, vector<8x32x4xf32>, vector<8x8x4xf32> -> vector<8x8x4xf32>
    "tpu.trace_stop"() : () -> ()
    %c1_87 = arith.constant 1 : index
    %c0_88 = arith.constant 0 : index
    %c0_89 = arith.constant 0 : index
    %c0_90 = arith.constant 0 : index
    %141 = vector.load %arg6[%c1_87, %c0_88, %c0_89, %c0_90] : memref<2x8x32x4xf32, #tpu.memory_space<vmem>>, vector<1x8x32x4xf32>
    %142 = vector.shape_cast %141 : vector<1x8x32x4xf32> to vector<8x32x4xf32>
    "tpu.trace_start"() <{level = 10 : i32, message = "hnd,hde->hne"}> : () -> ()
    %cst_91 = arith.constant dense<0.000000e+00> : vector<8x8x4xf32>
    %143 = tpu.matmul %134, %142, %cst_91 {dimension_numbers = #tpu.dot_dimension_numbers<[2], [1], [1], [2], [0, 0, 0, 1, 1, 2], [0], [0]>} : vector<8x8x32xf32>, vector<8x32x4xf32>, vector<8x8x4xf32> -> vector<8x8x4xf32>
    "tpu.trace_stop"() : () -> ()
    "tpu.trace_start"() <{level = 10 : i32, message = "hne,hme->hnm"}> : () -> ()
    %cst_92 = arith.constant dense<0.000000e+00> : vector<8x8x8xf32>
    %144 = tpu.matmul %137, %140, %cst_92 {dimension_numbers = #tpu.dot_dimension_numbers<[2], [2], [1], [1], [0, 0, 0, 1, 1, 1], [0], [0]>} : vector<8x8x4xf32>, vector<8x8x4xf32>, vector<8x8x8xf32> -> vector<8x8x8xf32>
    "tpu.trace_stop"() : () -> ()
    %cst_93 = arith.constant 0.176776692 : f32
    %145 = vector.broadcast %cst_93 : f32 to vector<8x8x8xf32>
    %146 = arith.mulf %144, %145 : vector<8x8x8xf32>
    %cst_94 = arith.constant dense<0xFF800000> : vector<8x8xf32>
    %147 = vector.multi_reduction <maximumf>, %146, %cst_94 [2] : vector<8x8x8xf32> to vector<8x8xf32>
    %148 = vector.shape_cast %147 : vector<8x8xf32> to vector<8x8x1xf32>
    %149 = vector.broadcast %148 : vector<8x8x1xf32> to vector<8x8x8xf32>
    %150 = arith.subf %146, %149 : vector<8x8x8xf32>
    %151 = math.exp %150 : vector<8x8x8xf32>
    %cst_95 = arith.constant dense<0.000000e+00> : vector<8x8xf32>
    %152 = vector.multi_reduction <add>, %151, %cst_95 [2] : vector<8x8x8xf32> to vector<8x8xf32>
    %153 = vector.shape_cast %152 : vector<8x8xf32> to vector<8x8x1xf32>
    %154 = tpu.reciprocal %153 {approx = true} : vector<8x8x1xf32> -> vector<8x8x1xf32>
    %155 = vector.broadcast %154 : vector<8x8x1xf32> to vector<8x8x8xf32>
    %156 = arith.mulf %151, %155 : vector<8x8x8xf32>
    "tpu.trace_start"() <{level = 10 : i32, message = "hnm,hme->hne"}> : () -> ()
    %cst_96 = arith.constant dense<0.000000e+00> : vector<8x8x4xf32>
    %157 = tpu.matmul %156, %143, %cst_96 {dimension_numbers = #tpu.dot_dimension_numbers<[2], [1], [1], [2], [0, 0, 0, 1, 1, 2], [0], [0]>} : vector<8x8x8xf32>, vector<8x8x4xf32>, vector<8x8x4xf32> -> vector<8x8x4xf32>
    "tpu.trace_stop"() : () -> ()
    %c1_97 = arith.constant 1 : index
    %c0_98 = arith.constant 0 : index
    %c0_99 = arith.constant 0 : index
    %c0_100 = arith.constant 0 : index
    %158 = vector.load %arg7[%c1_97, %c0_98, %c0_99, %c0_100] : memref<2x8x4x32xf32, #tpu.memory_space<vmem>>, vector<1x8x4x32xf32>
    %159 = vector.shape_cast %158 : vector<1x8x4x32xf32> to vector<8x4x32xf32>
    "tpu.trace_start"() <{level = 10 : i32, message = "hne,hed->hnd"}> : () -> ()
    %cst_101 = arith.constant dense<0.000000e+00> : vector<8x8x32xf32>
    %160 = tpu.matmul %157, %159, %cst_101 {dimension_numbers = #tpu.dot_dimension_numbers<[2], [1], [1], [2], [0, 0, 0, 1, 1, 2], [0], [0]>} : vector<8x8x4xf32>, vector<8x4x32xf32>, vector<8x8x32xf32> -> vector<8x8x32xf32>
    "tpu.trace_stop"() : () -> ()
    %cst_102 = arith.constant dense<0.000000e+00> : vector<8x32xf32>
    %161 = vector.multi_reduction <add>, %160, %cst_102 [0] : vector<8x8x32xf32> to vector<8x32xf32>
    %c1_103 = arith.constant 1 : index
    %c0_104 = arith.constant 0 : index
    %c0_105 = arith.constant 0 : index
    %162 = vector.load %arg8[%c1_103, %c0_104, %c0_105] : memref<2x1x32xf32, #tpu.memory_space<vmem>>, vector<1x1x32xf32>
    %163 = vector.shape_cast %162 : vector<1x1x32xf32> to vector<1x32xf32>
    %164 = vector.broadcast %163 : vector<1x32xf32> to vector<8x32xf32>
    %165 = arith.addf %161, %164 : vector<8x32xf32>
    %166 = arith.addf %165, %105 : vector<8x32xf32>
    %c1_106 = arith.constant 1 : index
    %c0_107 = arith.constant 0 : index
    %c0_108 = arith.constant 0 : index
    %167 = vector.load %arg9[%c1_106, %c0_107, %c0_108] : memref<2x1x32xf32, #tpu.memory_space<vmem>>, vector<1x1x32xf32>
    %168 = vector.shape_cast %167 : vector<1x1x32xf32> to vector<1x32xf32>
    %c1_109 = arith.constant 1 : index
    %c0_110 = arith.constant 0 : index
    %c0_111 = arith.constant 0 : index
    %169 = vector.load %arg10[%c1_109, %c0_110, %c0_111] : memref<2x1x32xf32, #tpu.memory_space<vmem>>, vector<1x1x32xf32>
    %170 = vector.shape_cast %169 : vector<1x1x32xf32> to vector<1x32xf32>
    %cst_112 = arith.constant dense<0.000000e+00> : vector<8xf32>
    %171 = vector.multi_reduction <add>, %166, %cst_112 [1] : vector<8x32xf32> to vector<8xf32>
    %172 = vector.shape_cast %171 : vector<8xf32> to vector<8x1xf32>
    %cst_113 = arith.constant 3.200000e+01 : f32
    %173 = vector.broadcast %cst_113 : f32 to vector<8x1xf32>
    %174 = arith.divf %172, %173 : vector<8x1xf32>
    %175 = vector.broadcast %174 : vector<8x1xf32> to vector<8x32xf32>
    %176 = arith.subf %166, %175 : vector<8x32xf32>
    %177 = arith.mulf %176, %176 : vector<8x32xf32>
    %cst_114 = arith.constant dense<0.000000e+00> : vector<8xf32>
    %178 = vector.multi_reduction <add>, %177, %cst_114 [1] : vector<8x32xf32> to vector<8xf32>
    %179 = vector.shape_cast %178 : vector<8xf32> to vector<8x1xf32>
    %cst_115 = arith.constant 3.200000e+01 : f32
    %180 = vector.broadcast %cst_115 : f32 to vector<8x1xf32>
    %181 = arith.divf %179, %180 : vector<8x1xf32>
    %182 = vector.broadcast %174 : vector<8x1xf32> to vector<8x32xf32>
    %183 = arith.subf %166, %182 : vector<8x32xf32>
    %cst_116 = arith.constant 9.99999974E-6 : f32
    %184 = vector.broadcast %cst_116 : f32 to vector<8x1xf32>
    %185 = arith.addf %181, %184 : vector<8x1xf32>
    %186 = math.rsqrt %185 : vector<8x1xf32>
    %187 = vector.broadcast %186 : vector<8x1xf32> to vector<8x32xf32>
    %188 = arith.mulf %183, %187 : vector<8x32xf32>
    %189 = vector.broadcast %168 : vector<1x32xf32> to vector<8x32xf32>
    %190 = arith.mulf %188, %189 : vector<8x32xf32>
    %191 = vector.broadcast %170 : vector<1x32xf32> to vector<8x32xf32>
    %192 = arith.addf %190, %191 : vector<8x32xf32>
    %c1_117 = arith.constant 1 : index
    %c0_118 = arith.constant 0 : index
    %c0_119 = arith.constant 0 : index
    %193 = vector.load %arg11[%c1_117, %c0_118, %c0_119] : memref<2x32x64xf32, #tpu.memory_space<vmem>>, vector<1x32x64xf32>
    %194 = vector.shape_cast %193 : vector<1x32x64xf32> to vector<32x64xf32>
    %cst_120 = arith.constant dense<0.000000e+00> : vector<8x64xf32>
    %195 = tpu.matmul %192, %194, %cst_120 {dimension_numbers = #tpu.dot_dimension_numbers<[1], [0], [0], [1], [0, 0, 1, 1], [], []>} : vector<8x32xf32>, vector<32x64xf32>, vector<8x64xf32> -> vector<8x64xf32>
    %c1_121 = arith.constant 1 : index
    %c0_122 = arith.constant 0 : index
    %c0_123 = arith.constant 0 : index
    %196 = vector.load %arg12[%c1_121, %c0_122, %c0_123] : memref<2x1x64xf32, #tpu.memory_space<vmem>>, vector<1x1x64xf32>
    %197 = vector.shape_cast %196 : vector<1x1x64xf32> to vector<1x64xf32>
    %198 = vector.broadcast %197 : vector<1x64xf32> to vector<8x64xf32>
    %199 = arith.addf %195, %198 : vector<8x64xf32>
    %cst_124 = arith.constant 0.000000e+00 : f32
    %200 = vector.broadcast %cst_124 : f32 to vector<8x64xf32>
    %201 = arith.maximumf %199, %200 : vector<8x64xf32>
    %c1_125 = arith.constant 1 : index
    %c0_126 = arith.constant 0 : index
    %c0_127 = arith.constant 0 : index
    %202 = vector.load %arg13[%c1_125, %c0_126, %c0_127] : memref<2x64x32xf32, #tpu.memory_space<vmem>>, vector<1x64x32xf32>
    %203 = vector.shape_cast %202 : vector<1x64x32xf32> to vector<64x32xf32>
    %cst_128 = arith.constant dense<0.000000e+00> : vector<8x32xf32>
    %204 = tpu.matmul %201, %203, %cst_128 {dimension_numbers = #tpu.dot_dimension_numbers<[1], [0], [0], [1], [0, 0, 1, 1], [], []>} : vector<8x64xf32>, vector<64x32xf32>, vector<8x32xf32> -> vector<8x32xf32>
    %c1_129 = arith.constant 1 : index
    %c0_130 = arith.constant 0 : index
    %c0_131 = arith.constant 0 : index
    %205 = vector.load %arg14[%c1_129, %c0_130, %c0_131] : memref<2x1x32xf32, #tpu.memory_space<vmem>>, vector<1x1x32xf32>
    %206 = vector.shape_cast %205 : vector<1x1x32xf32> to vector<1x32xf32>
    %207 = vector.broadcast %206 : vector<1x32xf32> to vector<8x32xf32>
    %208 = arith.addf %204, %207 : vector<8x32xf32>
    %209 = arith.addf %208, %166 : vector<8x32xf32>
    %c0_132 = arith.constant 0 : index
    %c0_133 = arith.constant 0 : index
    %c0_134 = arith.constant 0 : index
    %210 = vector.load %arg15[%c0_132, %c0_133, %c0_134] : memref<1x8x32xf32, #tpu.memory_space<vmem>>, vector<1x8x32xf32>
    %211 = vector.shape_cast %210 : vector<1x8x32xf32> to vector<8x32xf32>
    %212 = vector.shape_cast %209 : vector<8x32xf32> to vector<1x8x32xf32>
    tpu.vector_store %arg15[%c0_132, %c0_133, %c0_134], %212 {strides = array<i32>} : memref<1x8x32xf32, #tpu.memory_space<vmem>>, vector<1x8x32xf32>,
    return
  }
  func.func @transform_0(%arg0: i32) -> (i32, i32, i32) {
    %c0_i32 = arith.constant 0 : i32
    %c0_i32_0 = arith.constant 0 : i32
    %c0_i32_1 = arith.constant 0 : i32
    return %arg0, %c0_i32, %c0_i32_0 : i32, i32, i32
  }
  func.func @transform_1(%arg0: i32) -> (i32, i32, i32) {
    %c0_i32 = arith.constant 0 : i32
    %c0_i32_0 = arith.constant 0 : i32
    %c0_i32_1 = arith.constant 0 : i32
    %c0_i32_2 = arith.constant 0 : i32
    return %c0_i32, %c0_i32_0, %c0_i32_1 : i32, i32, i32
  }
  func.func @transform_2(%arg0: i32) -> (i32, i32, i32) {
    %c0_i32 = arith.constant 0 : i32
    %c0_i32_0 = arith.constant 0 : i32
    %c0_i32_1 = arith.constant 0 : i32
    %c0_i32_2 = arith.constant 0 : i32
    return %c0_i32, %c0_i32_0, %c0_i32_1 : i32, i32, i32
  }
  func.func @transform_3(%arg0: i32) -> (i32, i32, i32, i32) {
    %c0_i32 = arith.constant 0 : i32
    %c0_i32_0 = arith.constant 0 : i32
    %c0_i32_1 = arith.constant 0 : i32
    %c0_i32_2 = arith.constant 0 : i32
    %c0_i32_3 = arith.constant 0 : i32
    return %c0_i32, %c0_i32_0, %c0_i32_1, %c0_i32_2 : i32, i32, i32, i32
  }
  func.func @transform_4(%arg0: i32) -> (i32, i32, i32, i32) {
    %c0_i32 = arith.constant 0 : i32
    %c0_i32_0 = arith.constant 0 : i32
    %c0_i32_1 = arith.constant 0 : i32
    %c0_i32_2 = arith.constant 0 : i32
    %c0_i32_3 = arith.constant 0 : i32
    return %c0_i32, %c0_i32_0, %c0_i32_1, %c0_i32_2 : i32, i32, i32, i32
  }
  func.func @transform_5(%arg0: i32) -> (i32, i32, i32, i32) {
    %c0_i32 = arith.constant 0 : i32
    %c0_i32_0 = arith.constant 0 : i32
    %c0_i32_1 = arith.constant 0 : i32
    %c0_i32_2 = arith.constant 0 : i32
    %c0_i32_3 = arith.constant 0 : i32
    return %c0_i32, %c0_i32_0, %c0_i32_1, %c0_i32_2 : i32, i32, i32, i32
  }
  func.func @transform_6(%arg0: i32) -> (i32, i32, i32, i32) {
    %c0_i32 = arith.constant 0 : i32
    %c0_i32_0 = arith.constant 0 : i32
    %c0_i32_1 = arith.constant 0 : i32
    %c0_i32_2 = arith.constant 0 : i32
    %c0_i32_3 = arith.constant 0 : i32
    return %c0_i32, %c0_i32_0, %c0_i32_1, %c0_i32_2 : i32, i32, i32, i32
  }
  func.func @transform_7(%arg0: i32) -> (i32, i32, i32) {
    %c0_i32 = arith.constant 0 : i32
    %c0_i32_0 = arith.constant 0 : i32
    %c0_i32_1 = arith.constant 0 : i32
    %c0_i32_2 = arith.constant 0 : i32
    return %c0_i32, %c0_i32_0, %c0_i32_1 : i32, i32, i32
  }
  func.func @transform_8(%arg0: i32) -> (i32, i32, i32) {
    %c0_i32 = arith.constant 0 : i32
    %c0_i32_0 = arith.constant 0 : i32
    %c0_i32_1 = arith.constant 0 : i32
    %c0_i32_2 = arith.constant 0 : i32
    return %c0_i32, %c0_i32_0, %c0_i32_1 : i32, i32, i32
  }
  func.func @transform_9(%arg0: i32) -> (i32, i32, i32) {
    %c0_i32 = arith.constant 0 : i32
    %c0_i32_0 = arith.constant 0 : i32
    %c0_i32_1 = arith.constant 0 : i32
    %c0_i32_2 = arith.constant 0 : i32
    return %c0_i32, %c0_i32_0, %c0_i32_1 : i32, i32, i32
  }
  func.func @transform_10(%arg0: i32) -> (i32, i32, i32) {
    %c0_i32 = arith.constant 0 : i32
    %c0_i32_0 = arith.constant 0 : i32
    %c0_i32_1 = arith.constant 0 : i32
    %c0_i32_2 = arith.constant 0 : i32
    return %c0_i32, %c0_i32_0, %c0_i32_1 : i32, i32, i32
  }
  func.func @transform_11(%arg0: i32) -> (i32, i32, i32) {
    %c0_i32 = arith.constant 0 : i32
    %c0_i32_0 = arith.constant 0 : i32
    %c0_i32_1 = arith.constant 0 : i32
    %c0_i32_2 = arith.constant 0 : i32
    return %c0_i32, %c0_i32_0, %c0_i32_1 : i32, i32, i32
  }
  func.func @transform_12(%arg0: i32) -> (i32, i32, i32) {
    %c0_i32 = arith.constant 0 : i32
    %c0_i32_0 = arith.constant 0 : i32
    %c0_i32_1 = arith.constant 0 : i32
    %c0_i32_2 = arith.constant 0 : i32
    return %c0_i32, %c0_i32_0, %c0_i32_1 : i32, i32, i32
  }
  func.func @transform_13(%arg0: i32) -> (i32, i32, i32) {
    %c0_i32 = arith.constant 0 : i32
    %c0_i32_0 = arith.constant 0 : i32
    %c0_i32_1 = arith.constant 0 : i32
    %c0_i32_2 = arith.constant 0 : i32
    return %c0_i32, %c0_i32_0, %c0_i32_1 : i32, i32, i32
  }
  func.func @transform_14(%arg0: i32) -> (i32, i32, i32) {
    %c0_i32 = arith.constant 0 : i32
    %c0_i32_0 = arith.constant 0 : i32
    %c0_i32_1 = arith.constant 0 : i32
    return %arg0, %c0_i32, %c0_i32_0 : i32, i32, i32
  }
}

</mosaic_0001>

<llo_original>
// kernel: tpu_custom_call.1
$region0: #{tpu_custom_call.1}
  #allocation0 [shape = 'u32[]', space=smem, size = 0x4, offset = 0x4, fixed_abs, tag = 'smem constant byte address 0x4 - core index']
  #allocation1 [shape = 'u32[144,128]{1,0:T(1,128)}', space=vmem, size = 0x12000, scoped, tag = 'internal scratch']
  %s0 = inlined_call_operand.vmem [shape: f32[2,8,32], index: 0, kind: input, shape index: {}]
  %s1 = inlined_call_operand.vmem [shape: f32[2,1,32], index: 1, kind: input, shape index: {}]
  %s2 = inlined_call_operand.vmem [shape: f32[2,1,32], index: 2, kind: input, shape index: {}]
  %s3 = inlined_call_operand.vmem [shape: f32[2,8,32,4], index: 3, kind: input, shape index: {}]
  %s4 = inlined_call_operand.vmem [shape: f32[2,8,32,4], index: 4, kind: input, shape index: {}]
  %s5 = inlined_call_operand.vmem [shape: f32[2,8,32,4], index: 5, kind: input, shape index: {}]
  %s6 = inlined_call_operand.vmem [shape: f32[2,8,4,32], index: 6, kind: input, shape index: {}]
  %s7 = inlined_call_operand.vmem [shape: f32[2,1,32], index: 7, kind: input, shape index: {}]
  %s8 = inlined_call_operand.vmem [shape: f32[2,1,32], index: 8, kind: input, shape index: {}]
  %s9 = inlined_call_operand.vmem [shape: f32[2,1,32], index: 9, kind: input, shape index: {}]
  %s10 = inlined_call_operand.vmem [shape: f32[2,32,64], index: 10, kind: input, shape index: {}]
  %s11 = inlined_call_operand.vmem [shape: f32[2,1,64], index: 11, kind: input, shape index: {}]
  %s12 = inlined_call_operand.vmem [shape: f32[2,64,32], index: 12, kind: input, shape index: {}]
  %s13 = inlined_call_operand.vmem [shape: f32[2,1,32], index: 13, kind: input, shape index: {}]
  %s14 = inlined_call_operand.hbm [shape: f32[2,8,32], index: 14, kind: output, shape index: {}]
  %s15 = sld [smem:[#allocation0]]
  $region89: #{tpu_custom_call.1} parent=0
    _
  %s17 = ssub.s32 1, %s15
  %s18 = scalar_select 0, %s17, %s15
  $region1: #{tpu_custom_call.1} parent=0
    #allocation2 [shape = 'u8[8192]{0}', space=vmem, size = 0x2000, scoped, tag = 'output window, operand 0']
    #allocation3 [shape = 's32[2]{0}', space=sflag, size = 0x8, scoped, tag = 'scoped memory for tpu_custom_call.1']
    %19 = vsyncpa [#allocation3], 0
    %s20 = scalar_lea.sflag [#allocation3], 1
    %21 = vsyncpa %s20, 0
    loop: start=0, step=1, limit=4
    $region2: #{tpu_custom_call.1} parent=1 // loop_pre_header
      _
    $region3: #{tpu_custom_call.1} parent=1 // loop_header
      %s23 = sphi 0, %s27
      %p24 = scmp.ge.s32.totalorder %s23, 4
      %s33 = sphi 0, %s35
      %s36 = sphi 0, %s33
      %s37 = sphi 0, %s36
      %s53 = sphi 0, %s37
      %s57 = sphi 0, %s57
      %s59 = sphi 0, %s57
      %s60 = sphi 0, %s59
      %s74 = sphi 0, %s60
      %s78 = sphi 0, %s78
      %s80 = sphi 0, %s78
      %s81 = sphi 0, %s80
      %s95 = sphi 0, %s81
      %s99 = sphi 0, %s99
      %s101 = sphi 0, %s99
      %s102 = sphi 0, %s101
      %s116 = sphi 0, %s102
      %s120 = sphi 0, %s120
      %s122 = sphi 0, %s120
      %s123 = sphi 0, %s122
      %s137 = sphi 0, %s123
      %s141 = sphi 0, %s141
      %s143 = sphi 0, %s141
      %s144 = sphi 0, %s143
      %s158 = sphi 0, %s144
      %s162 = sphi 0, %s162
      %s164 = sphi 0, %s162
      %s165 = sphi 0, %s164
      %s179 = sphi 0, %s165
      %s183 = sphi 0, %s183
      %s185 = sphi 0, %s183
      %s186 = sphi 0, %s185
      %s200 = sphi 0, %s186
      %s204 = sphi 0, %s204
      %s206 = sphi 0, %s204
      %s207 = sphi 0, %s206
      %s221 = sphi 0, %s207
      %s225 = sphi 0, %s225
      %s227 = sphi 0, %s225
      %s228 = sphi 0, %s227
      %s242 = sphi 0, %s228
      %s246 = sphi 0, %s246
      %s248 = sphi 0, %s246
      %s249 = sphi 0, %s248
      %s263 = sphi 0, %s249
      %s267 = sphi 0, %s267
      %s269 = sphi 0, %s267
      %s270 = sphi 0, %s269
      %s284 = sphi 0, %s270
      %s288 = sphi 0, %s288
      %s290 = sphi 0, %s288
      %s291 = sphi 0, %s290
      %s305 = sphi 0, %s291
      %s309 = sphi 0, %s309
      %s311 = sphi 0, %s309
      %s312 = sphi 0, %s311
      %s326 = sphi 0, %s312
      %s332 = sphi 0, %s334
      %s335 = sphi 0, %s332
      %s336 = sphi 0, %s335
      %s352 = sphi 0, %s336
    $region4: #{tpu_custom_call.1} parent=1 // loop_header_branch
      %26 = sbr.rel (%p24) target = $region8
    $region5: #{tpu_custom_call.1} parent=1 // loop_body
      %s28 = ssub.s32 %s23, 1
      %s29 = ssub.s32 %s23, 2
      %s30 = sadd.s32 %s23, 1
      %s31 = ssub.s32 %s23, %s30
      %p32 = scmp.eq.s32.totalorder %s31, 0
      %s34 = sadd.s32 %s33, 1
      %s35 = scalar_select %p32, %s33, %s34
      %p38 = pneg %p32
      %p39 = scmp.eq.s32.totalorder %s23, 1
      %p40 = por %p38, %p39
      %p41 = scmp.ne.s32.totalorder %s33, %s36
      %p42 = scmp.eq.s32.totalorder %s23, 0
      %p43 = por %p41, %p42
      %p44 = scmp.ne.s32.totalorder %s33, %s36
      %p45 = scmp.eq.s32.totalorder %s28, 1
      %p46 = por %p44, %p45
      %p47 = scmp.ne.s32.totalorder %s36, %s37
      %p48 = scmp.eq.s32.totalorder %s28, 0
      %p49 = por %p47, %p48
      %p50 = scmp.ne.s32.totalorder %s36, %s37
      %p51 = scmp.eq.s32.totalorder %s29, 1
      %p52 = por %p50, %p51
      %p54 = scmp.ne.s32.totalorder %s37, %s53
      %p55 = scmp.eq.s32.totalorder %s29, 0
      %p56 = por %p54, %p55
      %s58 = sadd.s32 %s57, 1
      %p61 = scmp.eq.s32.totalorder %s23, 1
      %p62 = scmp.ne.s32.totalorder %s57, %s59
      %p63 = scmp.eq.s32.totalorder %s23, 0
      %p64 = por %p62, %p63
      %p65 = scmp.ne.s32.totalorder %s57, %s59
      %p66 = scmp.eq.s32.totalorder %s28, 1
      %p67 = por %p65, %p66
      %p68 = scmp.ne.s32.totalorder %s59, %s60
      %p69 = scmp.eq.s32.totalorder %s28, 0
      %p70 = por %p68, %p69
      %p71 = scmp.ne.s32.totalorder %s59, %s60
      %p72 = scmp.eq.s32.totalorder %s29, 1
      %p73 = por %p71, %p72
      %p75 = scmp.ne.s32.totalorder %s60, %s74
      %p76 = scmp.eq.s32.totalorder %s29, 0
      %p77 = por %p75, %p76
      %s79 = sadd.s32 %s78, 1
      %p82 = scmp.eq.s32.totalorder %s23, 1
      %p83 = scmp.ne.s32.totalorder %s78, %s80
      %p84 = scmp.eq.s32.totalorder %s23, 0
      %p85 = por %p83, %p84
      %p86 = scmp.ne.s32.totalorder %s78, %s80
      %p87 = scmp.eq.s32.totalorder %s28, 1
      %p88 = por %p86, %p87
      %p89 = scmp.ne.s32.totalorder %s80, %s81
      %p90 = scmp.eq.s32.totalorder %s28, 0
      %p91 = por %p89, %p90
      %p92 = scmp.ne.s32.totalorder %s80, %s81
      %p93 = scmp.eq.s32.totalorder %s29, 1
      %p94 = por %p92, %p93
      %p96 = scmp.ne.s32.totalorder %s81, %s95
      %p97 = scmp.eq.s32.totalorder %s29, 0
      %p98 = por %p96, %p97
      %s100 = sadd.s32 %s99, 1
      %p103 = scmp.eq.s32.totalorder %s23, 1
      %p104 = scmp.ne.s32.totalorder %s99, %s101
      %p105 = scmp.eq.s32.totalorder %s23, 0
      %p106 = por %p104, %p105
      %p107 = scmp.ne.s32.totalorder %s99, %s101
      %p108 = scmp.eq.s32.totalorder %s28, 1
      %p109 = por %p107, %p108
      %p110 = scmp.ne.s32.totalorder %s101, %s102
      %p111 = scmp.eq.s32.totalorder %s28, 0
      %p112 = por %p110, %p111
      %p113 = scmp.ne.s32.totalorder %s101, %s102
      %p114 = scmp.eq.s32.totalorder %s29, 1
      %p115 = por %p113, %p114
      %p117 = scmp.ne.s32.totalorder %s102, %s116
      %p118 = scmp.eq.s32.totalorder %s29, 0
      %p119 = por %p117, %p118
      %s121 = sadd.s32 %s120, 1
      %p124 = scmp.eq.s32.totalorder %s23, 1
      %p125 = scmp.ne.s32.totalorder %s120, %s122
      %p126 = scmp.eq.s32.totalorder %s23, 0
      %p127 = por %p125, %p126
      %p128 = scmp.ne.s32.totalorder %s120, %s122
      %p129 = scmp.eq.s32.totalorder %s28, 1
      %p130 = por %p128, %p129
      %p131 = scmp.ne.s32.totalorder %s122, %s123
      %p132 = scmp.eq.s32.totalorder %s28, 0
      %p133 = por %p131, %p132
      %p134 = scmp.ne.s32.totalorder %s122, %s123
      %p135 = scmp.eq.s32.totalorder %s29, 1
      %p136 = por %p134, %p135
      %p138 = scmp.ne.s32.totalorder %s123, %s137
      %p139 = scmp.eq.s32.totalorder %s29, 0
      %p140 = por %p138, %p139
      %s142 = sadd.s32 %s141, 1
      %p145 = scmp.eq.s32.totalorder %s23, 1
      %p146 = scmp.ne.s32.totalorder %s141, %s143
      %p147 = scmp.eq.s32.totalorder %s23, 0
      %p148 = por %p146, %p147
      %p149 = scmp.ne.s32.totalorder %s141, %s143
      %p150 = scmp.eq.s32.totalorder %s28, 1
      %p151 = por %p149, %p150
      %p152 = scmp.ne.s32.totalorder %s143, %s144
      %p153 = scmp.eq.s32.totalorder %s28, 0
      %p154 = por %p152, %p153
      %p155 = scmp.ne.s32.totalorder %s143, %s144
      %p156 = scmp.eq.s32.totalorder %s29, 1
      %p157 = por %p155, %p156
      %p159 = scmp.ne.s32.totalorder %s144, %s158
      %p160 = scmp.eq.s32.totalorder %s29, 0
      %p161 = por %p159, %p160
      %s163 = sadd.s32 %s162, 1
      %p166 = scmp.eq.s32.totalorder %s23, 1
      %p167 = scmp.ne.s32.totalorder %s162, %s164
      %p168 = scmp.eq.s32.totalorder %s23, 0
      %p169 = por %p167, %p168
      %p170 = scmp.ne.s32.totalorder %s162, %s164
      %p171 = scmp.eq.s32.totalorder %s28, 1
      %p172 = por %p170, %p171
      %p173 = scmp.ne.s32.totalorder %s164, %s165
      %p174 = scmp.eq.s32.totalorder %s28, 0
      %p175 = por %p173, %p174
      %p176 = scmp.ne.s32.totalorder %s164, %s165
      %p177 = scmp.eq.s32.totalorder %s29, 1
      %p178 = por %p176, %p177
      %p180 = scmp.ne.s32.totalorder %s165, %s179
      %p181 = scmp.eq.s32.totalorder %s29, 0
      %p182 = por %p180, %p181
      %s184 = sadd.s32 %s183, 1
      %p187 = scmp.eq.s32.totalorder %s23, 1
      %p188 = scmp.ne.s32.totalorder %s183, %s185
      %p189 = scmp.eq.s32.totalorder %s23, 0
      %p190 = por %p188, %p189
      %p191 = scmp.ne.s32.totalorder %s183, %s185
      %p192 = scmp.eq.s32.totalorder %s28, 1
      %p193 = por %p191, %p192
      %p194 = scmp.ne.s32.totalorder %s185, %s186
      %p195 = scmp.eq.s32.totalorder %s28, 0
      %p196 = por %p194, %p195
      %p197 = scmp.ne.s32.totalorder %s185, %s186
      %p198 = scmp.eq.s32.totalorder %s29, 1
      %p199 = por %p197, %p198
      %p201 = scmp.ne.s32.totalorder %s186, %s200
      %p202 = scmp.eq.s32.totalorder %s29, 0
      %p203 = por %p201, %p202
      %s205 = sadd.s32 %s204, 1
      %p208 = scmp.eq.s32.totalorder %s23, 1
      %p209 = scmp.ne.s32.totalorder %s204, %s206
      %p210 = scmp.eq.s32.totalorder %s23, 0
      %p211 = por %p209, %p210
      %p212 = scmp.ne.s32.totalorder %s204, %s206
      %p213 = scmp.eq.s32.totalorder %s28, 1
      %p214 = por %p212, %p213
      %p215 = scmp.ne.s32.totalorder %s206, %s207
      %p216 = scmp.eq.s32.totalorder %s28, 0
      %p217 = por %p215, %p216
      %p218 = scmp.ne.s32.totalorder %s206, %s207
      %p219 = scmp.eq.s32.totalorder %s29, 1
      %p220 = por %p218, %p219
      %p222 = scmp.ne.s32.totalorder %s207, %s221
      %p223 = scmp.eq.s32.totalorder %s29, 0
      %p224 = por %p222, %p223
      %s226 = sadd.s32 %s225, 1
      %p229 = scmp.eq.s32.totalorder %s23, 1
      %p230 = scmp.ne.s32.totalorder %s225, %s227
      %p231 = scmp.eq.s32.totalorder %s23, 0
      %p232 = por %p230, %p231
      %p233 = scmp.ne.s32.totalorder %s225, %s227
      %p234 = scmp.eq.s32.totalorder %s28, 1
      %p235 = por %p233, %p234
      %p236 = scmp.ne.s32.totalorder %s227, %s228
      %p237 = scmp.eq.s32.totalorder %s28, 0
      %p238 = por %p236, %p237
      %p239 = scmp.ne.s32.totalorder %s227, %s228
      %p240 = scmp.eq.s32.totalorder %s29, 1
      %p241 = por %p239, %p240
      %p243 = scmp.ne.s32.totalorder %s228, %s242
      %p244 = scmp.eq.s32.totalorder %s29, 0
      %p245 = por %p243, %p244
      %s247 = sadd.s32 %s246, 1
      %p250 = scmp.eq.s32.totalorder %s23, 1
      %p251 = scmp.ne.s32.totalorder %s246, %s248
      %p252 = scmp.eq.s32.totalorder %s23, 0
      %p253 = por %p251, %p252
      %p254 = scmp.ne.s32.totalorder %s246, %s248
      %p255 = scmp.eq.s32.totalorder %s28, 1
      %p256 = por %p254, %p255
      %p257 = scmp.ne.s32.totalorder %s248, %s249
      %p258 = scmp.eq.s32.totalorder %s28, 0
      %p259 = por %p257, %p258
      %p260 = scmp.ne.s32.totalorder %s248, %s249
      %p261 = scmp.eq.s32.totalorder %s29, 1
      %p262 = por %p260, %p261
      %p264 = scmp.ne.s32.totalorder %s249, %s263
      %p265 = scmp.eq.s32.totalorder %s29, 0
      %p266 = por %p264, %p265
      %s268 = sadd.s32 %s267, 1
      %p271 = scmp.eq.s32.totalorder %s23, 1
      %p272 = scmp.ne.s32.totalorder %s267, %s269
      %p273 = scmp.eq.s32.totalorder %s23, 0
      %p274 = por %p272, %p273
      %p275 = scmp.ne.s32.totalorder %s267, %s269
      %p276 = scmp.eq.s32.totalorder %s28, 1
      %p277 = por %p275, %p276
      %p278 = scmp.ne.s32.totalorder %s269, %s270
      %p279 = scmp.eq.s32.totalorder %s28, 0
      %p280 = por %p278, %p279
      %p281 = scmp.ne.s32.totalorder %s269, %s270
      %p282 = scmp.eq.s32.totalorder %s29, 1
      %p283 = por %p281, %p282
      %p285 = scmp.ne.s32.totalorder %s270, %s284
      %p286 = scmp.eq.s32.totalorder %s29, 0
      %p287 = por %p285, %p286
      %s289 = sadd.s32 %s288, 1
      %p292 = scmp.eq.s32.totalorder %s23, 1
      %p293 = scmp.ne.s32.totalorder %s288, %s290
      %p294 = scmp.eq.s32.totalorder %s23, 0
      %p295 = por %p293, %p294
      %p296 = scmp.ne.s32.totalorder %s288, %s290
      %p297 = scmp.eq.s32.totalorder %s28, 1
      %p298 = por %p296, %p297
      %p299 = scmp.ne.s32.totalorder %s290, %s291
      %p300 = scmp.eq.s32.totalorder %s28, 0
      %p301 = por %p299, %p300
      %p302 = scmp.ne.s32.totalorder %s290, %s291
      %p303 = scmp.eq.s32.totalorder %s29, 1
      %p304 = por %p302, %p303
      %p306 = scmp.ne.s32.totalorder %s291, %s305
      %p307 = scmp.eq.s32.totalorder %s29, 0
      %p308 = por %p306, %p307
      %s310 = sadd.s32 %s309, 1
      %p313 = scmp.eq.s32.totalorder %s23, 1
      %p314 = scmp.ne.s32.totalorder %s309, %s311
      %p315 = scmp.eq.s32.totalorder %s23, 0
      %p316 = por %p314, %p315
      %p317 = scmp.ne.s32.totalorder %s309, %s311
      %p318 = scmp.eq.s32.totalorder %s28, 1
      %p319 = por %p317, %p318
      %p320 = scmp.ne.s32.totalorder %s311, %s312
      %p321 = scmp.eq.s32.totalorder %s28, 0
      %p322 = por %p320, %p321
      %p323 = scmp.ne.s32.totalorder %s311, %s312
      %p324 = scmp.eq.s32.totalorder %s29, 1
      %p325 = por %p323, %p324
      %p327 = scmp.ne.s32.totalorder %s312, %s326
      %p328 = scmp.eq.s32.totalorder %s29, 0
      %p329 = por %p327, %p328
      %s330 = ssub.s32 %s23, %s30
      %p331 = scmp.eq.s32.totalorder %s330, 0
      %s333 = sadd.s32 %s332, 1
      %s334 = scalar_select %p331, %s332, %s333
      %p337 = pneg %p331
      %p338 = scmp.eq.s32.totalorder %s23, 1
      %p339 = por %p337, %p338
      %p340 = scmp.ne.s32.totalorder %s332, %s335
      %p341 = scmp.eq.s32.totalorder %s23, 0
      %p342 = por %p340, %p341
      %p343 = scmp.ne.s32.totalorder %s332, %s335
      %p344 = scmp.eq.s32.totalorder %s28, 1
      %p345 = por %p343, %p344
      %p346 = scmp.ne.s32.totalorder %s335, %s336
      %p347 = scmp.eq.s32.totalorder %s28, 0
      %p348 = por %p346, %p347
      %p349 = scmp.ne.s32.totalorder %s335, %s336
      %p350 = scmp.eq.s32.totalorder %s29, 1
      %p351 = por %p349, %p350
      %p353 = scmp.ne.s32.totalorder %s336, %s352
      %p354 = scmp.eq.s32.totalorder %s29, 0
      %p355 = por %p353, %p354
      %p356 = scmp.le.s32.totalorder 1, %s23
      %p357 = scmp.lt.s32.totalorder %s23, 3
      %p358 = pnand %p356, %p357
      %p359 = pneg %p358
      // Predicated region
      $region9: #{tpu_custom_call.1} parent=5 // pred_check
        _
      $region10: #{tpu_custom_call.1} parent=5 // pred_check_branch
        %361 = sbr.rel (%p358) target = $region12
      $region11: #{tpu_custom_call.1} parent=5 // pred_region
        %s362 = ssub.s32 %s23, 1
        // Predicated region
        $region13: #{tpu_custom_call.1} parent=11 // pred_check
          %p363 = pneg %p70
        $region14: #{tpu_custom_call.1} parent=11 // pred_check_branch
          %365 = sbr.rel (%p363) target = $region16
        $region15: #{tpu_custom_call.1} parent=11 // pred_region
          _
        $region16: #{tpu_custom_call.1} parent=11 // pred_fallthru
          _
        // Predicated region
        $region17: #{tpu_custom_call.1} parent=11 // pred_check
          %p366 = pneg %p91
        $region18: #{tpu_custom_call.1} parent=11 // pred_check_branch
          %368 = sbr.rel (%p366) target = $region20
        $region19: #{tpu_custom_call.1} parent=11 // pred_region
          _
        $region20: #{tpu_custom_call.1} parent=11 // pred_fallthru
          _
        // Predicated region
        $region21: #{tpu_custom_call.1} parent=11 // pred_check
          %p369 = pneg %p112
        $region22: #{tpu_custom_call.1} parent=11 // pred_check_branch
          %371 = sbr.rel (%p369) target = $region24
        $region23: #{tpu_custom_call.1} parent=11 // pred_region
          _
        $region24: #{tpu_custom_call.1} parent=11 // pred_fallthru
          _
        // Predicated region
        $region25: #{tpu_custom_call.1} parent=11 // pred_check
          %p372 = pneg %p133
        $region26: #{tpu_custom_call.1} parent=11 // pred_check_branch
          %374 = sbr.rel (%p372) target = $region28
        $region27: #{tpu_custom_call.1} parent=11 // pred_region
          _
        $region28: #{tpu_custom_call.1} parent=11 // pred_fallthru
          _
        // Predicated region
        $region29: #{tpu_custom_call.1} parent=11 // pred_check
          %p375 = pneg %p154
        $region30: #{tpu_custom_call.1} parent=11 // pred_check_branch
          %377 = sbr.rel (%p375) target = $region32
        $region31: #{tpu_custom_call.1} parent=11 // pred_region
          _
        $region32: #{tpu_custom_call.1} parent=11 // pred_fallthru
          _
        // Predicated region
        $region33: #{tpu_custom_call.1} parent=11 // pred_check
          %p378 = pneg %p175
        $region34: #{tpu_custom_call.1} parent=11 // pred_check_branch
          %380 = sbr.rel (%p378) target = $region36
        $region35: #{tpu_custom_call.1} parent=11 // pred_region
          _
        $region36: #{tpu_custom_call.1} parent=11 // pred_fallthru
          _
        // Predicated region
        $region37: #{tpu_custom_call.1} parent=11 // pred_check
          %p381 = pneg %p196
        $region38: #{tpu_custom_call.1} parent=11 // pred_check_branch
          %383 = sbr.rel (%p381) target = $region40
        $region39: #{tpu_custom_call.1} parent=11 // pred_region
          _
        $region40: #{tpu_custom_call.1} parent=11 // pred_fallthru
          _
        // Predicated region
        $region41: #{tpu_custom_call.1} parent=11 // pred_check
          %p384 = pneg %p217
        $region42: #{tpu_custom_call.1} parent=11 // pred_check_branch
          %386 = sbr.rel (%p384) target = $region44
        $region43: #{tpu_custom_call.1} parent=11 // pred_region
          _
        $region44: #{tpu_custom_call.1} parent=11 // pred_fallthru
          _
        // Predicated region
        $region45: #{tpu_custom_call.1} parent=11 // pred_check
          %p387 = pneg %p238
        $region46: #{tpu_custom_call.1} parent=11 // pred_check_branch
          %389 = sbr.rel (%p387) target = $region48
        $region47: #{tpu_custom_call.1} parent=11 // pred_region
          _
        $region48: #{tpu_custom_call.1} parent=11 // pred_fallthru
          _
        // Predicated region
        $region49: #{tpu_custom_call.1} parent=11 // pred_check
          %p390 = pneg %p259
        $region50: #{tpu_custom_call.1} parent=11 // pred_check_branch
          %392 = sbr.rel (%p390) target = $region52
        $region51: #{tpu_custom_call.1} parent=11 // pred_region
          _
        $region52: #{tpu_custom_call.1} parent=11 // pred_fallthru
          _
        // Predicated region
        $region53: #{tpu_custom_call.1} parent=11 // pred_check
          %p393 = pneg %p280
        $region54: #{tpu_custom_call.1} parent=11 // pred_check_branch
          %395 = sbr.rel (%p393) target = $region56
        $region55: #{tpu_custom_call.1} parent=11 // pred_region
          _
        $region56: #{tpu_custom_call.1} parent=11 // pred_fallthru
          _
        // Predicated region
        $region57: #{tpu_custom_call.1} parent=11 // pred_check
          %p396 = pneg %p301
        $region58: #{tpu_custom_call.1} parent=11 // pred_check_branch
          %398 = sbr.rel (%p396) target = $region60
        $region59: #{tpu_custom_call.1} parent=11 // pred_region
          _
        $region60: #{tpu_custom_call.1} parent=11 // pred_fallthru
          _
        // Predicated region
        $region61: #{tpu_custom_call.1} parent=11 // pred_check
          %p399 = pneg %p322
        $region62: #{tpu_custom_call.1} parent=11 // pred_check_branch
          %401 = sbr.rel (%p399) target = $region64
        $region63: #{tpu_custom_call.1} parent=11 // pred_region
          _
        $region64: #{tpu_custom_call.1} parent=11 // pred_fallthru
          _
      $region12: #{tpu_custom_call.1} parent=5 // pred_fallthru
        _
      %p402 = scmp.lt.s32.totalorder %s23, 2
      // Predicated region
      $region65: #{tpu_custom_call.1} parent=5 // pred_check
        %p403 = pneg %p402
      $region66: #{tpu_custom_call.1} parent=5 // pred_check_branch
        %405 = sbr.rel (%p403) target = $region68
      $region67: #{tpu_custom_call.1} parent=5 // pred_region
        // Predicated region
        $region69: #{tpu_custom_call.1} parent=67 // pred_check
          %p406 = pneg %p43
        $region70: #{tpu_custom_call.1} parent=67 // pred_check_branch
          %408 = sbr.rel (%p406) target = $region72
        $region71: #{tpu_custom_call.1} parent=67 // pred_region
          %p409 = scmp.lt.s32.totalorder %s23, 1
          %s410 = scalar_select %p409, %s23, 1
          %s411 = smul.addr %s410, 8
          %s412 = scalar_lea.vmem %s0, %s411
        $region72: #{tpu_custom_call.1} parent=67 // pred_fallthru
          _
      $region68: #{tpu_custom_call.1} parent=5 // pred_fallthru
        _
      %p413 = scmp.le.s32.totalorder 1, %s23
      %p414 = scmp.lt.s32.totalorder %s23, 3
      %p415 = pnand %p413, %p414
      %p416 = pneg %p415
      // Predicated region
      $region73: #{tpu_custom_call.1} parent=5 // pred_check
        _
      $region74: #{tpu_custom_call.1} parent=5 // pred_check_branch
        %418 = sbr.rel (%p415) target = $region76
      $region75: #{tpu_custom_call.1} parent=5 // pred_region
        %s419 = ssub.s32 %s23, 1
        %p420 = scmp.lt.s32.totalorder %s28, 1
        %s421 = scalar_select %p420, %s28, 1
        %s422 = smul.addr %s421, 8
        %s423 = scalar_lea.vmem %s0, %s422
        %p424 = pneg %p49
        %p425 = pneg %p46
        %p426 = pneg %p70
        %p427 = pneg %p67
        %p428 = pneg %p91
        %p429 = pneg %p88
        %p430 = pneg %p112
        %p431 = pneg %p109
        %p432 = pneg %p133
        %p433 = pneg %p130
        %p434 = pneg %p154
        %p435 = pneg %p151
        %p436 = pneg %p175
        %p437 = pneg %p172
        %p438 = pneg %p196
        %p439 = pneg %p193
        %p440 = pneg %p217
        %p441 = pneg %p214
        %p442 = pneg %p238
        %p443 = pneg %p235
        %p444 = pneg %p259
        %p445 = pneg %p256
        %p446 = pneg %p280
        %p447 = pneg %p277
        %p448 = pneg %p301
        %p449 = pneg %p298
        %p450 = pneg %p322
        %p451 = pneg %p319
        %p452 = pneg %p348
        %p453 = pneg %p345
        %s454 = sand.u32 %s335, 1
        %s455 = scalar_lea.sflag [#allocation3], %s454
        %s456 = sand.u32 %s335, 1
        %s457 = smul.addr %s456, 8
        %s458 = scalar_lea.vmem [#allocation2], %s457
        %p459 = scmp.lt.s32.totalorder %s28, 1
        %s460 = scalar_select %p459, %s28, 1
        %s461 = smul.addr %s460, 8
        %s462 = scalar_lea.vmem %s0, %s461
        %v463 = vld [vmem:[%s462] sm:$0xff]
        %v464 = vld [vmem:[%s1] sm:$0x1]
        %v465 = vld [vmem:[%s2] sm:$0x1]
        %vm466 = vcmask 261120
        %v467 = vsel %vm466, %v463, 0.0
        %468 = vadd.xlane.f32.xlu0 %v467
        %v469 = vpop.xlane.xlu0 %468
        %v470 = vrcp.pop 32.0
        %v471 = vmul.f32 %v469, %v470
        %v472 = vsub.f32 %v463, %v471
        %v473 = vmul.f32 %v472, %v472
        %v474 = vsel %vm466, %v473, 0.0
        %475 = vadd.xlane.f32.xlu0 %v474
        %v476 = vpop.xlane.xlu0 %475
        %v477 = vmul.f32 %v476, %v470
        %v478 = vadd.f32 %v477, 1e-05
        %v479 = vrsqrt.pop %v478
        %v480 = vmul.f32 %v472, %v479
        %v482 = vlaneseq
        %v483 = vshrl.u32 %v482, 7
        %v484 = vsub.s32 0, %v483
        %v485 = vrot.slane %v464, %v484
        %v487 = vmul.f32 %v480, %v485
        %v489 = vlaneseq
        %v490 = vshrl.u32 %v489, 7
        %v491 = vsub.s32 0, %v490
        %v492 = vrot.slane %v465, %v491
        %v494 = vadd.f32 %v487, %v492
        %v495 = vld [vmem:[%s3] sm:$0xff]
        %v496 = vld [vmem:[%s3 + $0x8] sm:$0xff]
        %v497 = vld [vmem:[%s3 + $0x10] sm:$0xff]
        %v498 = vld [vmem:[%s3 + $0x18] sm:$0xff]
        %v499 = vld [vmem:[%s3 + $0x20] sm:$0xff]
        %v500 = vld [vmem:[%s3 + $0x28] sm:$0xff]
        %v501 = vld [vmem:[%s3 + $0x30] sm:$0xff]
        %v502 = vld [vmem:[%s3 + $0x38] sm:$0xff]
        %v503 = vld [vmem:[%s3 + $0x40] sm:$0xff]
        %v504 = vld [vmem:[%s3 + $0x48] sm:$0xff]
        %v505 = vld [vmem:[%s3 + $0x50] sm:$0xff]
        %v506 = vld [vmem:[%s3 + $0x58] sm:$0xff]
        %v507 = vld [vmem:[%s3 + $0x60] sm:$0xff]
        %v508 = vld [vmem:[%s3 + $0x68] sm:$0xff]
        %v509 = vld [vmem:[%s3 + $0x70] sm:$0xff]
        %v510 = vld [vmem:[%s3 + $0x78] sm:$0xff]
        %v511 = vld [vmem:[%s3 + $0x80] sm:$0xff]
        %v512 = vld [vmem:[%s3 + $0x88] sm:$0xff]
        %v513 = vld [vmem:[%s3 + $0x90] sm:$0xff]
        %v514 = vld [vmem:[%s3 + $0x98] sm:$0xff]
        %v515 = vld [vmem:[%s3 + $0xa0] sm:$0xff]
        %v516 = vld [vmem:[%s3 + $0xa8] sm:$0xff]
        %v517 = vld [vmem:[%s3 + $0xb0] sm:$0xff]
        %v518 = vld [vmem:[%s3 + $0xb8] sm:$0xff]
        %v519 = vld [vmem:[%s3 + $0xc0] sm:$0xff]
        %v520 = vld [vmem:[%s3 + $0xc8] sm:$0xff]
        %v521 = vld [vmem:[%s3 + $0xd0] sm:$0xff]
        %v522 = vld [vmem:[%s3 + $0xd8] sm:$0xff]
        %v523 = vld [vmem:[%s3 + $0xe0] sm:$0xff]
        %v524 = vld [vmem:[%s3 + $0xe8] sm:$0xff]
        %v525 = vld [vmem:[%s3 + $0xf0] sm:$0xff]
        %v526 = vld [vmem:[%s3 + $0xf8] sm:$0xff]
        %v528 = vsel %vm466, %v494, 0
        %530 = vmatprep.subr.mxu0 0.0
        %531 = vmatpush1.msra.mxu0 0.0
        %532 = vmatprep.subr.mxu0 0.0
        %533 = vmatpush1.msra.mxu0 0.0
        %534 = vmatprep.subr.mxu0 0.0
        %535 = vmatpush1.msra.mxu0 0.0
        %536 = vmatprep.subr.mxu0 0.0
        %537 = vmatpush1.msra.mxu0 0.0
        %538 = vmatprep.subr.mxu0 0.0
        %539 = vmatpush1.msra.mxu0 0.0
        %540 = vmatprep.subr.mxu0 0.0
        %541 = vmatpush1.msra.mxu0 0.0
        %542 = vmatprep.subr.mxu0 0.0
        %543 = vmatpush1.msra.mxu0 0.0
        %544 = vmatprep.subr.mxu0 0.0
        %545 = vmatpush1.msra.mxu0 0.0
        %546 = vmatprep.subr.mxu0 0.0
        %547 = vmatpush1.msra.mxu0 0.0
        %548 = vmatprep.subr.mxu0 0.0
        %549 = vmatpush1.msra.mxu0 0.0
        %550 = vmatprep.subr.mxu0 0.0
        %551 = vmatpush1.msra.mxu0 0.0
        %552 = vmatprep.subr.mxu0 0.0
        %553 = vmatpush1.msra.mxu0 0.0
        %554 = vmatprep.subr.mxu0 0.0
        %555 = vmatpush1.msra.mxu0 %v498
        %556 = vmatprep.subr.mxu0 0.0
        %557 = vmatpush1.msra.mxu0 %v497
        %558 = vmatprep.subr.mxu0 0.0
        %559 = vmatpush1.msra.mxu0 %v496
        %560 = vmatprep.subr.mxu0 0.0
        %561 = vmatpush1.msra.mxu0 %v495
        %562 = vmatprep.subr.mxu0 0.0
        %563 = vmatpush2.msra.mxu0 0.0
        %564 = vmatprep.subr.mxu0 0.0
        %565 = vmatpush2.msra.mxu0 0.0
        %566 = vmatprep.subr.mxu0 0.0
        %567 = vmatpush2.msra.mxu0 0.0
        %568 = vmatprep.subr.mxu0 0.0
        %569 = vmatpush2.msra.mxu0 0.0
        %570 = vmatprep.subr.mxu0 0.0
        %571 = vmatpush2.msra.mxu0 0.0
        %572 = vmatprep.subr.mxu0 0.0
        %573 = vmatpush2.msra.mxu0 0.0
        %574 = vmatprep.subr.mxu0 0.0
        %575 = vmatpush2.msra.mxu0 0.0
        %576 = vmatprep.subr.mxu0 0.0
        %577 = vmatpush2.msra.mxu0 0.0
        %578 = vmatprep.subr.mxu0 0.0
        %579 = vmatpush2.msra.mxu0 0.0
        %580 = vmatprep.subr.mxu0 0.0
        %581 = vmatpush2.msra.mxu0 0.0
        %582 = vmatprep.subr.mxu0 0.0
        %583 = vmatpush2.msra.mxu0 0.0
        %584 = vmatprep.subr.mxu0 0.0
        %585 = vmatpush2.msra.mxu0 0.0
        %586 = vmatprep.subr.mxu0 0.0
        %587 = vmatpush2.msra.mxu0 0.0
        %588 = vmatprep.subr.mxu0 0.0
        %589 = vmatpush2.msra.mxu0 0.0
        %590 = vmatprep.subr.mxu0 0.0
        %591 = vmatpush2.msra.mxu0 0.0
        %592 = vmatprep.subr.mxu0 0.0
        %593 = vmatpush2.msra.mxu0 0.0
        %594 = vmatprep.mubr.f32.mxu0 0.0
        %595 = vmatmul.mubr.f32.gmra.mxu0 %v528
        %v596 = vpop.f32.mrf.mxu0
        %v597 = vadd.f32 0.0, %v596
        %v598 = vpop.f32.mrf.mxu0
        %599 = vdwg.mxu0
        %600 = vmatprep.subr.mxu0 0.0
        %601 = vmatpush1.msra.mxu0 0.0
        %602 = vmatprep.subr.mxu0 0.0
        %603 = vmatpush1.msra.mxu0 0.0
        %604 = vmatprep.subr.mxu0 0.0
        %605 = vmatpush1.msra.mxu0 0.0
        %606 = vmatprep.subr.mxu0 0.0
        %607 = vmatpush1.msra.mxu0 0.0
        %608 = vmatprep.subr.mxu0 0.0
        %609 = vmatpush1.msra.mxu0 0.0
        %610 = vmatprep.subr.mxu0 0.0
        %611 = vmatpush1.msra.mxu0 0.0
        %612 = vmatprep.subr.mxu0 0.0
        %613 = vmatpush1.msra.mxu0 0.0
        %614 = vmatprep.subr.mxu0 0.0
        %615 = vmatpush1.msra.mxu0 0.0
        %616 = vmatprep.subr.mxu0 0.0
        %617 = vmatpush1.msra.mxu0 0.0
        %618 = vmatprep.subr.mxu0 0.0
        %619 = vmatpush1.msra.mxu0 0.0
        %620 = vmatprep.subr.mxu0 0.0
        %621 = vmatpush1.msra.mxu0 0.0
        %622 = vmatprep.subr.mxu0 0.0
        %623 = vmatpush1.msra.mxu0 0.0
        %624 = vmatprep.subr.mxu0 0.0
        %625 = vmatpush1.msra.mxu0 %v502
        %626 = vmatprep.subr.mxu0 0.0
        %627 = vmatpush1.msra.mxu0 %v501
        %628 = vmatprep.subr.mxu0 0.0
        %629 = vmatpush1.msra.mxu0 %v500
        %630 = vmatprep.subr.mxu0 0.0
        %631 = vmatpush1.msra.mxu0 %v499
        %632 = vmatprep.subr.mxu0 0.0
        %633 = vmatpush2.msra.mxu0 0.0
        %634 = vmatprep.subr.mxu0 0.0
        %635 = vmatpush2.msra.mxu0 0.0
        %636 = vmatprep.subr.mxu0 0.0
        %637 = vmatpush2.msra.mxu0 0.0
        %638 = vmatprep.subr.mxu0 0.0
        %639 = vmatpush2.msra.mxu0 0.0
        %640 = vmatprep.subr.mxu0 0.0
        %641 = vmatpush2.msra.mxu0 0.0
        %642 = vmatprep.subr.mxu0 0.0
        %643 = vmatpush2.msra.mxu0 0.0
        %644 = vmatprep.subr.mxu0 0.0
        %645 = vmatpush2.msra.mxu0 0.0
        %646 = vmatprep.subr.mxu0 0.0
        %647 = vmatpush2.msra.mxu0 0.0
        %648 = vmatprep.subr.mxu0 0.0
        %649 = vmatpush2.msra.mxu0 0.0
        %650 = vmatprep.subr.mxu0 0.0
        %651 = vmatpush2.msra.mxu0 0.0
        %652 = vmatprep.subr.mxu0 0.0
        %653 = vmatpush2.msra.mxu0 0.0
        %654 = vmatprep.subr.mxu0 0.0
        %655 = vmatpush2.msra.mxu0 0.0
        %656 = vmatprep.subr.mxu0 0.0
        %657 = vmatpush2.msra.mxu0 0.0
        %658 = vmatprep.subr.mxu0 0.0
        %659 = vmatpush2.msra.mxu0 0.0
        %660 = vmatprep.subr.mxu0 0.0
        %661 = vmatpush2.msra.mxu0 0.0
        %662 = vmatprep.subr.mxu0 0.0
        %663 = vmatpush2.msra.mxu0 0.0
        %664 = vmatprep.mubr.f32.mxu0 0.0
        %665 = vmatmul.mubr.f32.gmra.mxu0 %v528
        %v666 = vpop.f32.mrf.mxu0
        %v667 = vadd.f32 0.0, %v666
        %v668 = vpop.f32.mrf.mxu0
        %669 = vdwg.mxu0
        %670 = vmatprep.subr.mxu0 0.0
        %671 = vmatpush1.msra.mxu0 0.0
        %672 = vmatprep.subr.mxu0 0.0
        %673 = vmatpush1.msra.mxu0 0.0
        %674 = vmatprep.subr.mxu0 0.0
        %675 = vmatpush1.msra.mxu0 0.0
        %676 = vmatprep.subr.mxu0 0.0
        %677 = vmatpush1.msra.mxu0 0.0
        %678 = vmatprep.subr.mxu0 0.0
        %679 = vmatpush1.msra.mxu0 0.0
        %680 = vmatprep.subr.mxu0 0.0
        %681 = vmatpush1.msra.mxu0 0.0
        %682 = vmatprep.subr.mxu0 0.0
        %683 = vmatpush1.msra.mxu0 0.0
        %684 = vmatprep.subr.mxu0 0.0
        %685 = vmatpush1.msra.mxu0 0.0
        %686 = vmatprep.subr.mxu0 0.0
        %687 = vmatpush1.msra.mxu0 0.0
        %688 = vmatprep.subr.mxu0 0.0
        %689 = vmatpush1.msra.mxu0 0.0
        %690 = vmatprep.subr.mxu0 0.0
        %691 = vmatpush1.msra.mxu0 0.0
        %692 = vmatprep.subr.mxu0 0.0
        %693 = vmatpush1.msra.mxu0 0.0
        %694 = vmatprep.subr.mxu0 0.0
        %695 = vmatpush1.msra.mxu0 %v506
        %696 = vmatprep.subr.mxu0 0.0
        %697 = vmatpush1.msra.mxu0 %v505
        %698 = vmatprep.subr.mxu0 0.0
        %699 = vmatpush1.msra.mxu0 %v504
        %700 = vmatprep.subr.mxu0 0.0
        %701 = vmatpush1.msra.mxu0 %v503
        %702 = vmatprep.subr.mxu0 0.0
        %703 = vmatpush2.msra.mxu0 0.0
        %704 = vmatprep.subr.mxu0 0.0
        %705 = vmatpush2.msra.mxu0 0.0
        %706 = vmatprep.subr.mxu0 0.0
        %707 = vmatpush2.msra.mxu0 0.0
        %708 = vmatprep.subr.mxu0 0.0
        %709 = vmatpush2.msra.mxu0 0.0
        %710 = vmatprep.subr.mxu0 0.0
        %711 = vmatpush2.msra.mxu0 0.0
        %712 = vmatprep.subr.mxu0 0.0
        %713 = vmatpush2.msra.mxu0 0.0
        %714 = vmatprep.subr.mxu0 0.0
        %715 = vmatpush2.msra.mxu0 0.0
        %716 = vmatprep.subr.mxu0 0.0
        %717 = vmatpush2.msra.mxu0 0.0
        %718 = vmatprep.subr.mxu0 0.0
        %719 = vmatpush2.msra.mxu0 0.0
        %720 = vmatprep.subr.mxu0 0.0
        %721 = vmatpush2.msra.mxu0 0.0
        %722 = vmatprep.subr.mxu0 0.0
        %723 = vmatpush2.msra.mxu0 0.0
        %724 = vmatprep.subr.mxu0 0.0
        %725 = vmatpush2.msra.mxu0 0.0
        %726 = vmatprep.subr.mxu0 0.0
        %727 = vmatpush2.msra.mxu0 0.0
        %728 = vmatprep.subr.mxu0 0.0
        %729 = vmatpush2.msra.mxu0 0.0
        %730 = vmatprep.subr.mxu0 0.0
        %731 = vmatpush2.msra.mxu0 0.0
        %732 = vmatprep.subr.mxu0 0.0
        %733 = vmatpush2.msra.mxu0 0.0
        %734 = vmatprep.mubr.f32.mxu0 0.0
        %735 = vmatmul.mubr.f32.gmra.mxu0 %v528
        %v736 = vpop.f32.mrf.mxu0
        %v737 = vadd.f32 0.0, %v736
        %v738 = vpop.f32.mrf.mxu0
        %739 = vdwg.mxu0
        %740 = vmatprep.subr.mxu0 0.0
        %741 = vmatpush1.msra.mxu0 0.0
        %742 = vmatprep.subr.mxu0 0.0
        %743 = vmatpush1.msra.mxu0 0.0
        %744 = vmatprep.subr.mxu0 0.0
        %745 = vmatpush1.msra.mxu0 0.0
        %746 = vmatprep.subr.mxu0 0.0
        %747 = vmatpush1.msra.mxu0 0.0
        %748 = vmatprep.subr.mxu0 0.0
        %749 = vmatpush1.msra.mxu0 0.0
        %750 = vmatprep.subr.mxu0 0.0
        %751 = vmatpush1.msra.mxu0 0.0
        %752 = vmatprep.subr.mxu0 0.0
        %753 = vmatpush1.msra.mxu0 0.0
        %754 = vmatprep.subr.mxu0 0.0
        %755 = vmatpush1.msra.mxu0 0.0
        %756 = vmatprep.subr.mxu0 0.0
        %757 = vmatpush1.msra.mxu0 0.0
        %758 = vmatprep.subr.mxu0 0.0
        %759 = vmatpush1.msra.mxu0 0.0
        %760 = vmatprep.subr.mxu0 0.0
        %761 = vmatpush1.msra.mxu0 0.0
        %762 = vmatprep.subr.mxu0 0.0
        %763 = vmatpush1.msra.mxu0 0.0
        %764 = vmatprep.subr.mxu0 0.0
        %765 = vmatpush1.msra.mxu0 %v510
        %766 = vmatprep.subr.mxu0 0.0
        %767 = vmatpush1.msra.mxu0 %v509
        %768 = vmatprep.subr.mxu0 0.0
        %769 = vmatpush1.msra.mxu0 %v508
        %770 = vmatprep.subr.mxu0 0.0
        %771 = vmatpush1.msra.mxu0 %v507
        %772 = vmatprep.subr.mxu0 0.0
        %773 = vmatpush2.msra.mxu0 0.0
        %774 = vmatprep.subr.mxu0 0.0
        %775 = vmatpush2.msra.mxu0 0.0
        %776 = vmatprep.subr.mxu0 0.0
        %777 = vmatpush2.msra.mxu0 0.0
        %778 = vmatprep.subr.mxu0 0.0
        %779 = vmatpush2.msra.mxu0 0.0
        %780 = vmatprep.subr.mxu0 0.0
        %781 = vmatpush2.msra.mxu0 0.0
        %782 = vmatprep.subr.mxu0 0.0
        %783 = vmatpush2.msra.mxu0 0.0
        %784 = vmatprep.subr.mxu0 0.0
        %785 = vmatpush2.msra.mxu0 0.0
        %786 = vmatprep.subr.mxu0 0.0
        %787 = vmatpush2.msra.mxu0 0.0
        %788 = vmatprep.subr.mxu0 0.0
        %789 = vmatpush2.msra.mxu0 0.0
        %790 = vmatprep.subr.mxu0 0.0
        %791 = vmatpush2.msra.mxu0 0.0
        %792 = vmatprep.subr.mxu0 0.0
        %793 = vmatpush2.msra.mxu0 0.0
        %794 = vmatprep.subr.mxu0 0.0
        %795 = vmatpush2.msra.mxu0 0.0
        %796 = vmatprep.subr.mxu0 0.0
        %797 = vmatpush2.msra.mxu0 0.0
        %798 = vmatprep.subr.mxu0 0.0
        %799 = vmatpush2.msra.mxu0 0.0
        %800 = vmatprep.subr.mxu0 0.0
        %801 = vmatpush2.msra.mxu0 0.0
        %802 = vmatprep.subr.mxu0 0.0
        %803 = vmatpush2.msra.mxu0 0.0
        %804 = vmatprep.mubr.f32.mxu0 0.0
        %805 = vmatmul.mubr.f32.gmra.mxu0 %v528
        %v806 = vpop.f32.mrf.mxu0
        %v807 = vadd.f32 0.0, %v806
        %v808 = vpop.f32.mrf.mxu0
        %809 = vdwg.mxu0
        %810 = vmatprep.subr.mxu0 0.0
        %811 = vmatpush1.msra.mxu0 0.0
        %812 = vmatprep.subr.mxu0 0.0
        %813 = vmatpush1.msra.mxu0 0.0
        %814 = vmatprep.subr.mxu0 0.0
        %815 = vmatpush1.msra.mxu0 0.0
        %816 = vmatprep.subr.mxu0 0.0
        %817 = vmatpush1.msra.mxu0 0.0
        %818 = vmatprep.subr.mxu0 0.0
        %819 = vmatpush1.msra.mxu0 0.0
        %820 = vmatprep.subr.mxu0 0.0
        %821 = vmatpush1.msra.mxu0 0.0
        %822 = vmatprep.subr.mxu0 0.0
        %823 = vmatpush1.msra.mxu0 0.0
        %824 = vmatprep.subr.mxu0 0.0
        %825 = vmatpush1.msra.mxu0 0.0
        %826 = vmatprep.subr.mxu0 0.0
        %827 = vmatpush1.msra.mxu0 0.0
        %828 = vmatprep.subr.mxu0 0.0
        %829 = vmatpush1.msra.mxu0 0.0
        %830 = vmatprep.subr.mxu0 0.0
        %831 = vmatpush1.msra.mxu0 0.0
        %832 = vmatprep.subr.mxu0 0.0
        %833 = vmatpush1.msra.mxu0 0.0
        %834 = vmatprep.subr.mxu0 0.0
        %835 = vmatpush1.msra.mxu0 %v514
        %836 = vmatprep.subr.mxu0 0.0
        %837 = vmatpush1.msra.mxu0 %v513
        %838 = vmatprep.subr.mxu0 0.0
        %839 = vmatpush1.msra.mxu0 %v512
        %840 = vmatprep.subr.mxu0 0.0
        %841 = vmatpush1.msra.mxu0 %v511
        %842 = vmatprep.subr.mxu0 0.0
        %843 = vmatpush2.msra.mxu0 0.0
        %844 = vmatprep.subr.mxu0 0.0
        %845 = vmatpush2.msra.mxu0 0.0
        %846 = vmatprep.subr.mxu0 0.0
        %847 = vmatpush2.msra.mxu0 0.0
        %848 = vmatprep.subr.mxu0 0.0
        %849 = vmatpush2.msra.mxu0 0.0
        %850 = vmatprep.subr.mxu0 0.0
        %851 = vmatpush2.msra.mxu0 0.0
        %852 = vmatprep.subr.mxu0 0.0
        %853 = vmatpush2.msra.mxu0 0.0
        %854 = vmatprep.subr.mxu0 0.0
        %855 = vmatpush2.msra.mxu0 0.0
        %856 = vmatprep.subr.mxu0 0.0
        %857 = vmatpush2.msra.mxu0 0.0
        %858 = vmatprep.subr.mxu0 0.0
        %859 = vmatpush2.msra.mxu0 0.0
        %860 = vmatprep.subr.mxu0 0.0
        %861 = vmatpush2.msra.mxu0 0.0
        %862 = vmatprep.subr.mxu0 0.0
        %863 = vmatpush2.msra.mxu0 0.0
        %864 = vmatprep.subr.mxu0 0.0
        %865 = vmatpush2.msra.mxu0 0.0
        %866 = vmatprep.subr.mxu0 0.0
        %867 = vmatpush2.msra.mxu0 0.0
        %868 = vmatprep.subr.mxu0 0.0
        %869 = vmatpush2.msra.mxu0 0.0
        %870 = vmatprep.subr.mxu0 0.0
        %871 = vmatpush2.msra.mxu0 0.0
        %872 = vmatprep.subr.mxu0 0.0
        %873 = vmatpush2.msra.mxu0 0.0
        %874 = vmatprep.mubr.f32.mxu0 0.0
        %875 = vmatmul.mubr.f32.gmra.mxu0 %v528
        %v876 = vpop.f32.mrf.mxu0
        %v877 = vadd.f32 0.0, %v876
        %v878 = vpop.f32.mrf.mxu0
        %879 = vdwg.mxu0
        %880 = vmatprep.subr.mxu0 0.0
        %881 = vmatpush1.msra.mxu0 0.0
        %882 = vmatprep.subr.mxu0 0.0
        %883 = vmatpush1.msra.mxu0 0.0
        %884 = vmatprep.subr.mxu0 0.0
        %885 = vmatpush1.msra.mxu0 0.0
        %886 = vmatprep.subr.mxu0 0.0
        %887 = vmatpush1.msra.mxu0 0.0
        %888 = vmatprep.subr.mxu0 0.0
        %889 = vmatpush1.msra.mxu0 0.0
        %890 = vmatprep.subr.mxu0 0.0
        %891 = vmatpush1.msra.mxu0 0.0
        %892 = vmatprep.subr.mxu0 0.0
        %893 = vmatpush1.msra.mxu0 0.0
        %894 = vmatprep.subr.mxu0 0.0
        %895 = vmatpush1.msra.mxu0 0.0
        %896 = vmatprep.subr.mxu0 0.0
        %897 = vmatpush1.msra.mxu0 0.0
        %898 = vmatprep.subr.mxu0 0.0
        %899 = vmatpush1.msra.mxu0 0.0
        %900 = vmatprep.subr.mxu0 0.0
        %901 = vmatpush1.msra.mxu0 0.0
        %902 = vmatprep.subr.mxu0 0.0
        %903 = vmatpush1.msra.mxu0 0.0
        %904 = vmatprep.subr.mxu0 0.0
        %905 = vmatpush1.msra.mxu0 %v518
        %906 = vmatprep.subr.mxu0 0.0
        %907 = vmatpush1.msra.mxu0 %v517
        %908 = vmatprep.subr.mxu0 0.0
        %909 = vmatpush1.msra.mxu0 %v516
        %910 = vmatprep.subr.mxu0 0.0
        %911 = vmatpush1.msra.mxu0 %v515
        %912 = vmatprep.subr.mxu0 0.0
        %913 = vmatpush2.msra.mxu0 0.0
        %914 = vmatprep.subr.mxu0 0.0
        %915 = vmatpush2.msra.mxu0 0.0
        %916 = vmatprep.subr.mxu0 0.0
        %917 = vmatpush2.msra.mxu0 0.0
        %918 = vmatprep.subr.mxu0 0.0
        %919 = vmatpush2.msra.mxu0 0.0
        %920 = vmatprep.subr.mxu0 0.0
        %921 = vmatpush2.msra.mxu0 0.0
        %922 = vmatprep.subr.mxu0 0.0
        %923 = vmatpush2.msra.mxu0 0.0
        %924 = vmatprep.subr.mxu0 0.0
        %925 = vmatpush2.msra.mxu0 0.0
        %926 = vmatprep.subr.mxu0 0.0
        %927 = vmatpush2.msra.mxu0 0.0
        %928 = vmatprep.subr.mxu0 0.0
        %929 = vmatpush2.msra.mxu0 0.0
        %930 = vmatprep.subr.mxu0 0.0
        %931 = vmatpush2.msra.mxu0 0.0
        %932 = vmatprep.subr.mxu0 0.0
        %933 = vmatpush2.msra.mxu0 0.0
        %934 = vmatprep.subr.mxu0 0.0
        %935 = vmatpush2.msra.mxu0 0.0
        %936 = vmatprep.subr.mxu0 0.0
        %937 = vmatpush2.msra.mxu0 0.0
        %938 = vmatprep.subr.mxu0 0.0
        %939 = vmatpush2.msra.mxu0 0.0
        %940 = vmatprep.subr.mxu0 0.0
        %941 = vmatpush2.msra.mxu0 0.0
        %942 = vmatprep.subr.mxu0 0.0
        %943 = vmatpush2.msra.mxu0 0.0
        %944 = vmatprep.mubr.f32.mxu0 0.0
        %945 = vmatmul.mubr.f32.gmra.mxu0 %v528
        %v946 = vpop.f32.mrf.mxu0
        %v947 = vadd.f32 0.0, %v946
        %v948 = vpop.f32.mrf.mxu0
        %949 = vdwg.mxu0
        %950 = vmatprep.subr.mxu0 0.0
        %951 = vmatpush1.msra.mxu0 0.0
        %952 = vmatprep.subr.mxu0 0.0
        %953 = vmatpush1.msra.mxu0 0.0
        %954 = vmatprep.subr.mxu0 0.0
        %955 = vmatpush1.msra.mxu0 0.0
        %956 = vmatprep.subr.mxu0 0.0
        %957 = vmatpush1.msra.mxu0 0.0
        %958 = vmatprep.subr.mxu0 0.0
        %959 = vmatpush1.msra.mxu0 0.0
        %960 = vmatprep.subr.mxu0 0.0
        %961 = vmatpush1.msra.mxu0 0.0
        %962 = vmatprep.subr.mxu0 0.0
        %963 = vmatpush1.msra.mxu0 0.0
        %964 = vmatprep.subr.mxu0 0.0
        %965 = vmatpush1.msra.mxu0 0.0
        %966 = vmatprep.subr.mxu0 0.0
        %967 = vmatpush1.msra.mxu0 0.0
        %968 = vmatprep.subr.mxu0 0.0
        %969 = vmatpush1.msra.mxu0 0.0
        %970 = vmatprep.subr.mxu0 0.0
        %971 = vmatpush1.msra.mxu0 0.0
        %972 = vmatprep.subr.mxu0 0.0
        %973 = vmatpush1.msra.mxu0 0.0
        %974 = vmatprep.subr.mxu0 0.0
        %975 = vmatpush1.msra.mxu0 %v522
        %976 = vmatprep.subr.mxu0 0.0
        %977 = vmatpush1.msra.mxu0 %v521
        %978 = vmatprep.subr.mxu0 0.0
        %979 = vmatpush1.msra.mxu0 %v520
        %980 = vmatprep.subr.mxu0 0.0
        %981 = vmatpush1.msra.mxu0 %v519
        %982 = vmatprep.subr.mxu0 0.0
        %983 = vmatpush2.msra.mxu0 0.0
        %984 = vmatprep.subr.mxu0 0.0
        %985 = vmatpush2.msra.mxu0 0.0
        %986 = vmatprep.subr.mxu0 0.0
        %987 = vmatpush2.msra.mxu0 0.0
        %988 = vmatprep.subr.mxu0 0.0
        %989 = vmatpush2.msra.mxu0 0.0
        %990 = vmatprep.subr.mxu0 0.0
        %991 = vmatpush2.msra.mxu0 0.0
        %992 = vmatprep.subr.mxu0 0.0
        %993 = vmatpush2.msra.mxu0 0.0
        %994 = vmatprep.subr.mxu0 0.0
        %995 = vmatpush2.msra.mxu0 0.0
        %996 = vmatprep.subr.mxu0 0.0
        %997 = vmatpush2.msra.mxu0 0.0
        %998 = vmatprep.subr.mxu0 0.0
        %999 = vmatpush2.msra.mxu0 0.0
        %1000 = vmatprep.subr.mxu0 0.0
        %1001 = vmatpush2.msra.mxu0 0.0
        %1002 = vmatprep.subr.mxu0 0.0
        %1003 = vmatpush2.msra.mxu0 0.0
        %1004 = vmatprep.subr.mxu0 0.0
        %1005 = vmatpush2.msra.mxu0 0.0
        %1006 = vmatprep.subr.mxu0 0.0
        %1007 = vmatpush2.msra.mxu0 0.0
        %1008 = vmatprep.subr.mxu0 0.0
        %1009 = vmatpush2.msra.mxu0 0.0
        %1010 = vmatprep.subr.mxu0 0.0
        %1011 = vmatpush2.msra.mxu0 0.0
        %1012 = vmatprep.subr.mxu0 0.0
        %1013 = vmatpush2.msra.mxu0 0.0
        %1014 = vmatprep.mubr.f32.mxu0 0.0
        %1015 = vmatmul.mubr.f32.gmra.mxu0 %v528
        %v1016 = vpop.f32.mrf.mxu0
        %v1017 = vadd.f32 0.0, %v1016
        %v1018 = vpop.f32.mrf.mxu0
        %1019 = vdwg.mxu0
        %1020 = vmatprep.subr.mxu0 0.0
        %1021 = vmatpush1.msra.mxu0 0.0
        %1022 = vmatprep.subr.mxu0 0.0
        %1023 = vmatpush1.msra.mxu0 0.0
        %1024 = vmatprep.subr.mxu0 0.0
        %1025 = vmatpush1.msra.mxu0 0.0
        %1026 = vmatprep.subr.mxu0 0.0
        %1027 = vmatpush1.msra.mxu0 0.0
        %1028 = vmatprep.subr.mxu0 0.0
        %1029 = vmatpush1.msra.mxu0 0.0
        %1030 = vmatprep.subr.mxu0 0.0
        %1031 = vmatpush1.msra.mxu0 0.0
        %1032 = vmatprep.subr.mxu0 0.0
        %1033 = vmatpush1.msra.mxu0 0.0
        %1034 = vmatprep.subr.mxu0 0.0
        %1035 = vmatpush1.msra.mxu0 0.0
        %1036 = vmatprep.subr.mxu0 0.0
        %1037 = vmatpush1.msra.mxu0 0.0
        %1038 = vmatprep.subr.mxu0 0.0
        %1039 = vmatpush1.msra.mxu0 0.0
        %1040 = vmatprep.subr.mxu0 0.0
        %1041 = vmatpush1.msra.mxu0 0.0
        %1042 = vmatprep.subr.mxu0 0.0
        %1043 = vmatpush1.msra.mxu0 0.0
        %1044 = vmatprep.subr.mxu0 0.0
        %1045 = vmatpush1.msra.mxu0 %v526
        %1046 = vmatprep.subr.mxu0 0.0
        %1047 = vmatpush1.msra.mxu0 %v525
        %1048 = vmatprep.subr.mxu0 0.0
        %1049 = vmatpush1.msra.mxu0 %v524
        %1050 = vmatprep.subr.mxu0 0.0
        %1051 = vmatpush1.msra.mxu0 %v523
        %1052 = vmatprep.subr.mxu0 0.0
        %1053 = vmatpush2.msra.mxu0 0.0
        %1054 = vmatprep.subr.mxu0 0.0
        %1055 = vmatpush2.msra.mxu0 0.0
        %1056 = vmatprep.subr.mxu0 0.0
        %1057 = vmatpush2.msra.mxu0 0.0
        %1058 = vmatprep.subr.mxu0 0.0
        %1059 = vmatpush2.msra.mxu0 0.0
        %1060 = vmatprep.subr.mxu0 0.0
        %1061 = vmatpush2.msra.mxu0 0.0
        %1062 = vmatprep.subr.mxu0 0.0
        %1063 = vmatpush2.msra.mxu0 0.0
        %1064 = vmatprep.subr.mxu0 0.0
        %1065 = vmatpush2.msra.mxu0 0.0
        %1066 = vmatprep.subr.mxu0 0.0
        %1067 = vmatpush2.msra.mxu0 0.0
        %1068 = vmatprep.subr.mxu0 0.0
        %1069 = vmatpush2.msra.mxu0 0.0
        %1070 = vmatprep.subr.mxu0 0.0
        %1071 = vmatpush2.msra.mxu0 0.0
        %1072 = vmatprep.subr.mxu0 0.0
        %1073 = vmatpush2.msra.mxu0 0.0
        %1074 = vmatprep.subr.mxu0 0.0
        %1075 = vmatpush2.msra.mxu0 0.0
        %1076 = vmatprep.subr.mxu0 0.0
        %1077 = vmatpush2.msra.mxu0 0.0
        %1078 = vmatprep.subr.mxu0 0.0
        %1079 = vmatpush2.msra.mxu0 0.0
        %1080 = vmatprep.subr.mxu0 0.0
        %1081 = vmatpush2.msra.mxu0 0.0
        %1082 = vmatprep.subr.mxu0 0.0
        %1083 = vmatpush2.msra.mxu0 0.0
        %1084 = vmatprep.mubr.f32.mxu0 0.0
        %1085 = vmatmul.mubr.f32.gmra.mxu0 %v528
        %v1086 = vpop.f32.mrf.mxu0
        %v1087 = vadd.f32 0.0, %v1086
        %v1088 = vpop.f32.mrf.mxu0
        %1089 = vdwg.mxu0
        %v1090 = vld [vmem:[%s4] sm:$0xff]
        %v1091 = vld [vmem:[%s4 + $0x8] sm:$0xff]
        %v1092 = vld [vmem:[%s4 + $0x10] sm:$0xff]
        %v1093 = vld [vmem:[%s4 + $0x18] sm:$0xff]
        %v1094 = vld [vmem:[%s4 + $0x20] sm:$0xff]
        %v1095 = vld [vmem:[%s4 + $0x28] sm:$0xff]
        %v1096 = vld [vmem:[%s4 + $0x30] sm:$0xff]
        %v1097 = vld [vmem:[%s4 + $0x38] sm:$0xff]
        %v1098 = vld [vmem:[%s4 + $0x40] sm:$0xff]
        %v1099 = vld [vmem:[%s4 + $0x48] sm:$0xff]
        %v1100 = vld [vmem:[%s4 + $0x50] sm:$0xff]
        %v1101 = vld [vmem:[%s4 + $0x58] sm:$0xff]
        %v1102 = vld [vmem:[%s4 + $0x60] sm:$0xff]
        %v1103 = vld [vmem:[%s4 + $0x68] sm:$0xff]
        %v1104 = vld [vmem:[%s4 + $0x70] sm:$0xff]
        %v1105 = vld [vmem:[%s4 + $0x78] sm:$0xff]
        %v1106 = vld [vmem:[%s4 + $0x80] sm:$0xff]
        %v1107 = vld [vmem:[%s4 + $0x88] sm:$0xff]
        %v1108 = vld [vmem:[%s4 + $0x90] sm:$0xff]
        %v1109 = vld [vmem:[%s4 + $0x98] sm:$0xff]
        %v1110 = vld [vmem:[%s4 + $0xa0] sm:$0xff]
        %v1111 = vld [vmem:[%s4 + $0xa8] sm:$0xff]
        %v1112 = vld [vmem:[%s4 + $0xb0] sm:$0xff]
        %v1113 = vld [vmem:[%s4 + $0xb8] sm:$0xff]
        %v1114 = vld [vmem:[%s4 + $0xc0] sm:$0xff]
        %v1115 = vld [vmem:[%s4 + $0xc8] sm:$0xff]
        %v1116 = vld [vmem:[%s4 + $0xd0] sm:$0xff]
        %v1117 = vld [vmem:[%s4 + $0xd8] sm:$0xff]
        %v1118 = vld [vmem:[%s4 + $0xe0] sm:$0xff]
        %v1119 = vld [vmem:[%s4 + $0xe8] sm:$0xff]
        %v1120 = vld [vmem:[%s4 + $0xf0] sm:$0xff]
        %v1121 = vld [vmem:[%s4 + $0xf8] sm:$0xff]
        %1122 = vmatprep.subr.mxu0 0.0
        %1123 = vmatpush1.msra.mxu0 0.0
        %1124 = vmatprep.subr.mxu0 0.0
        %1125 = vmatpush1.msra.mxu0 0.0
        %1126 = vmatprep.subr.mxu0 0.0
        %1127 = vmatpush1.msra.mxu0 0.0
        %1128 = vmatprep.subr.mxu0 0.0
        %1129 = vmatpush1.msra.mxu0 0.0
        %1130 = vmatprep.subr.mxu0 0.0
        %1131 = vmatpush1.msra.mxu0 0.0
        %1132 = vmatprep.subr.mxu0 0.0
        %1133 = vmatpush1.msra.mxu0 0.0
        %1134 = vmatprep.subr.mxu0 0.0
        %1135 = vmatpush1.msra.mxu0 0.0
        %1136 = vmatprep.subr.mxu0 0.0
        %1137 = vmatpush1.msra.mxu0 0.0
        %1138 = vmatprep.subr.mxu0 0.0
        %1139 = vmatpush1.msra.mxu0 0.0
        %1140 = vmatprep.subr.mxu0 0.0
        %1141 = vmatpush1.msra.mxu0 0.0
        %1142 = vmatprep.subr.mxu0 0.0
        %1143 = vmatpush1.msra.mxu0 0.0
        %1144 = vmatprep.subr.mxu0 0.0
        %1145 = vmatpush1.msra.mxu0 0.0
        %1146 = vmatprep.subr.mxu0 0.0
        %1147 = vmatpush1.msra.mxu0 %v1093
        %1148 = vmatprep.subr.mxu0 0.0
        %1149 = vmatpush1.msra.mxu0 %v1092
        %1150 = vmatprep.subr.mxu0 0.0
        %1151 = vmatpush1.msra.mxu0 %v1091
        %1152 = vmatprep.subr.mxu0 0.0
        %1153 = vmatpush1.msra.mxu0 %v1090
        %1154 = vmatprep.subr.mxu0 0.0
        %1155 = vmatpush2.msra.mxu0 0.0
        %1156 = vmatprep.subr.mxu0 0.0
        %1157 = vmatpush2.msra.mxu0 0.0
        %1158 = vmatprep.subr.mxu0 0.0
        %1159 = vmatpush2.msra.mxu0 0.0
        %1160 = vmatprep.subr.mxu0 0.0
        %1161 = vmatpush2.msra.mxu0 0.0
        %1162 = vmatprep.subr.mxu0 0.0
        %1163 = vmatpush2.msra.mxu0 0.0
        %1164 = vmatprep.subr.mxu0 0.0
        %1165 = vmatpush2.msra.mxu0 0.0
        %1166 = vmatprep.subr.mxu0 0.0
        %1167 = vmatpush2.msra.mxu0 0.0
        %1168 = vmatprep.subr.mxu0 0.0
        %1169 = vmatpush2.msra.mxu0 0.0
        %1170 = vmatprep.subr.mxu0 0.0
        %1171 = vmatpush2.msra.mxu0 0.0
        %1172 = vmatprep.subr.mxu0 0.0
        %1173 = vmatpush2.msra.mxu0 0.0
        %1174 = vmatprep.subr.mxu0 0.0
        %1175 = vmatpush2.msra.mxu0 0.0
        %1176 = vmatprep.subr.mxu0 0.0
        %1177 = vmatpush2.msra.mxu0 0.0
        %1178 = vmatprep.subr.mxu0 0.0
        %1179 = vmatpush2.msra.mxu0 0.0
        %1180 = vmatprep.subr.mxu0 0.0
        %1181 = vmatpush2.msra.mxu0 0.0
        %1182 = vmatprep.subr.mxu0 0.0
        %1183 = vmatpush2.msra.mxu0 0.0
        %1184 = vmatprep.subr.mxu0 0.0
        %1185 = vmatpush2.msra.mxu0 0.0
        %1186 = vmatprep.mubr.f32.mxu0 0.0
        %1187 = vmatmul.mubr.f32.gmra.mxu0 %v528
        %v1188 = vpop.f32.mrf.mxu0
        %v1189 = vadd.f32 0.0, %v1188
        %v1190 = vpop.f32.mrf.mxu0
        %1191 = vdwg.mxu0
        %1192 = vmatprep.subr.mxu0 0.0
        %1193 = vmatpush1.msra.mxu0 0.0
        %1194 = vmatprep.subr.mxu0 0.0
        %1195 = vmatpush1.msra.mxu0 0.0
        %1196 = vmatprep.subr.mxu0 0.0
        %1197 = vmatpush1.msra.mxu0 0.0
        %1198 = vmatprep.subr.mxu0 0.0
        %1199 = vmatpush1.msra.mxu0 0.0
        %1200 = vmatprep.subr.mxu0 0.0
        %1201 = vmatpush1.msra.mxu0 0.0
        %1202 = vmatprep.subr.mxu0 0.0
        %1203 = vmatpush1.msra.mxu0 0.0
        %1204 = vmatprep.subr.mxu0 0.0
        %1205 = vmatpush1.msra.mxu0 0.0
        %1206 = vmatprep.subr.mxu0 0.0
        %1207 = vmatpush1.msra.mxu0 0.0
        %1208 = vmatprep.subr.mxu0 0.0
        %1209 = vmatpush1.msra.mxu0 0.0
        %1210 = vmatprep.subr.mxu0 0.0
        %1211 = vmatpush1.msra.mxu0 0.0
        %1212 = vmatprep.subr.mxu0 0.0
        %1213 = vmatpush1.msra.mxu0 0.0
        %1214 = vmatprep.subr.mxu0 0.0
        %1215 = vmatpush1.msra.mxu0 0.0
        %1216 = vmatprep.subr.mxu0 0.0
        %1217 = vmatpush1.msra.mxu0 %v1097
        %1218 = vmatprep.subr.mxu0 0.0
        %1219 = vmatpush1.msra.mxu0 %v1096
        %1220 = vmatprep.subr.mxu0 0.0
        %1221 = vmatpush1.msra.mxu0 %v1095
        %1222 = vmatprep.subr.mxu0 0.0
        %1223 = vmatpush1.msra.mxu0 %v1094
        %1224 = vmatprep.subr.mxu0 0.0
        %1225 = vmatpush2.msra.mxu0 0.0
        %1226 = vmatprep.subr.mxu0 0.0
        %1227 = vmatpush2.msra.mxu0 0.0
        %1228 = vmatprep.subr.mxu0 0.0
        %1229 = vmatpush2.msra.mxu0 0.0
        %1230 = vmatprep.subr.mxu0 0.0
        %1231 = vmatpush2.msra.mxu0 0.0
        %1232 = vmatprep.subr.mxu0 0.0
        %1233 = vmatpush2.msra.mxu0 0.0
        %1234 = vmatprep.subr.mxu0 0.0
        %1235 = vmatpush2.msra.mxu0 0.0
        %1236 = vmatprep.subr.mxu0 0.0
        %1237 = vmatpush2.msra.mxu0 0.0
        %1238 = vmatprep.subr.mxu0 0.0
        %1239 = vmatpush2.msra.mxu0 0.0
        %1240 = vmatprep.subr.mxu0 0.0
        %1241 = vmatpush2.msra.mxu0 0.0
        %1242 = vmatprep.subr.mxu0 0.0
        %1243 = vmatpush2.msra.mxu0 0.0
        %1244 = vmatprep.subr.mxu0 0.0
        %1245 = vmatpush2.msra.mxu0 0.0
        %1246 = vmatprep.subr.mxu0 0.0
        %1247 = vmatpush2.msra.mxu0 0.0
        %1248 = vmatprep.subr.mxu0 0.0
        %1249 = vmatpush2.msra.mxu0 0.0
        %1250 = vmatprep.subr.mxu0 0.0
        %1251 = vmatpush2.msra.mxu0 0.0
        %1252 = vmatprep.subr.mxu0 0.0
        %1253 = vmatpush2.msra.mxu0 0.0
        %1254 = vmatprep.subr.mxu0 0.0
        %1255 = vmatpush2.msra.mxu0 0.0
        %1256 = vmatprep.mubr.f32.mxu0 0.0
        %1257 = vmatmul.mubr.f32.gmra.mxu0 %v528
        %v1258 = vpop.f32.mrf.mxu0
        %v1259 = vadd.f32 0.0, %v1258
        %v1260 = vpop.f32.mrf.mxu0
        %1261 = vdwg.mxu0
        %1262 = vmatprep.subr.mxu0 0.0
        %1263 = vmatpush1.msra.mxu0 0.0
        %1264 = vmatprep.subr.mxu0 0.0
        %1265 = vmatpush1.msra.mxu0 0.0
        %1266 = vmatprep.subr.mxu0 0.0
        %1267 = vmatpush1.msra.mxu0 0.0
        %1268 = vmatprep.subr.mxu0 0.0
        %1269 = vmatpush1.msra.mxu0 0.0
        %1270 = vmatprep.subr.mxu0 0.0
        %1271 = vmatpush1.msra.mxu0 0.0
        %1272 = vmatprep.subr.mxu0 0.0
        %1273 = vmatpush1.msra.mxu0 0.0
        %1274 = vmatprep.subr.mxu0 0.0
        %1275 = vmatpush1.msra.mxu0 0.0
        %1276 = vmatprep.subr.mxu0 0.0
        %1277 = vmatpush1.msra.mxu0 0.0
        %1278 = vmatprep.subr.mxu0 0.0
        %1279 = vmatpush1.msra.mxu0 0.0
        %1280 = vmatprep.subr.mxu0 0.0
        %1281 = vmatpush1.msra.mxu0 0.0
        %1282 = vmatprep.subr.mxu0 0.0
        %1283 = vmatpush1.msra.mxu0 0.0
        %1284 = vmatprep.subr.mxu0 0.0
        %1285 = vmatpush1.msra.mxu0 0.0
        %1286 = vmatprep.subr.mxu0 0.0
        %1287 = vmatpush1.msra.mxu0 %v1101
        %1288 = vmatprep.subr.mxu0 0.0
        %1289 = vmatpush1.msra.mxu0 %v1100
        %1290 = vmatprep.subr.mxu0 0.0
        %1291 = vmatpush1.msra.mxu0 %v1099
        %1292 = vmatprep.subr.mxu0 0.0
        %1293 = vmatpush1.msra.mxu0 %v1098
        %1294 = vmatprep.subr.mxu0 0.0
        %1295 = vmatpush2.msra.mxu0 0.0
        %1296 = vmatprep.subr.mxu0 0.0
        %1297 = vmatpush2.msra.mxu0 0.0
        %1298 = vmatprep.subr.mxu0 0.0
        %1299 = vmatpush2.msra.mxu0 0.0
        %1300 = vmatprep.subr.mxu0 0.0
        %1301 = vmatpush2.msra.mxu0 0.0
        %1302 = vmatprep.subr.mxu0 0.0
        %1303 = vmatpush2.msra.mxu0 0.0
        %1304 = vmatprep.subr.mxu0 0.0
        %1305 = vmatpush2.msra.mxu0 0.0
        %1306 = vmatprep.subr.mxu0 0.0
        %1307 = vmatpush2.msra.mxu0 0.0
        %1308 = vmatprep.subr.mxu0 0.0
        %1309 = vmatpush2.msra.mxu0 0.0
        %1310 = vmatprep.subr.mxu0 0.0
        %1311 = vmatpush2.msra.mxu0 0.0
        %1312 = vmatprep.subr.mxu0 0.0
        %1313 = vmatpush2.msra.mxu0 0.0
        %1314 = vmatprep.subr.mxu0 0.0
        %1315 = vmatpush2.msra.mxu0 0.0
        %1316 = vmatprep.subr.mxu0 0.0
        %1317 = vmatpush2.msra.mxu0 0.0
        %1318 = vmatprep.subr.mxu0 0.0
        %1319 = vmatpush2.msra.mxu0 0.0
        %1320 = vmatprep.subr.mxu0 0.0
        %1321 = vmatpush2.msra.mxu0 0.0
        %1322 = vmatprep.subr.mxu0 0.0
        %1323 = vmatpush2.msra.mxu0 0.0
        %1324 = vmatprep.subr.mxu0 0.0
        %1325 = vmatpush2.msra.mxu0 0.0
        %1326 = vmatprep.mubr.f32.mxu0 0.0
        %1327 = vmatmul.mubr.f32.gmra.mxu0 %v528
        %v1328 = vpop.f32.mrf.mxu0
        %v1329 = vadd.f32 0.0, %v1328
        %v1330 = vpop.f32.mrf.mxu0
        %1331 = vdwg.mxu0
        %1332 = vmatprep.subr.mxu0 0.0
        %1333 = vmatpush1.msra.mxu0 0.0
        %1334 = vmatprep.subr.mxu0 0.0
        %1335 = vmatpush1.msra.mxu0 0.0
        %1336 = vmatprep.subr.mxu0 0.0
        %1337 = vmatpush1.msra.mxu0 0.0
        %1338 = vmatprep.subr.mxu0 0.0
        %1339 = vmatpush1.msra.mxu0 0.0
        %1340 = vmatprep.subr.mxu0 0.0
        %1341 = vmatpush1.msra.mxu0 0.0
        %1342 = vmatprep.subr.mxu0 0.0
        %1343 = vmatpush1.msra.mxu0 0.0
        %1344 = vmatprep.subr.mxu0 0.0
        %1345 = vmatpush1.msra.mxu0 0.0
        %1346 = vmatprep.subr.mxu0 0.0
        %1347 = vmatpush1.msra.mxu0 0.0
        %1348 = vmatprep.subr.mxu0 0.0
        %1349 = vmatpush1.msra.mxu0 0.0
        %1350 = vmatprep.subr.mxu0 0.0
        %1351 = vmatpush1.msra.mxu0 0.0
        %1352 = vmatprep.subr.mxu0 0.0
        %1353 = vmatpush1.msra.mxu0 0.0
        %1354 = vmatprep.subr.mxu0 0.0
        %1355 = vmatpush1.msra.mxu0 0.0
        %1356 = vmatprep.subr.mxu0 0.0
        %1357 = vmatpush1.msra.mxu0 %v1105
        %1358 = vmatprep.subr.mxu0 0.0
        %1359 = vmatpush1.msra.mxu0 %v1104
        %1360 = vmatprep.subr.mxu0 0.0
        %1361 = vmatpush1.msra.mxu0 %v1103
        %1362 = vmatprep.subr.mxu0 0.0
        %1363 = vmatpush1.msra.mxu0 %v1102
        %1364 = vmatprep.subr.mxu0 0.0
        %1365 = vmatpush2.msra.mxu0 0.0
        %1366 = vmatprep.subr.mxu0 0.0
        %1367 = vmatpush2.msra.mxu0 0.0
        %1368 = vmatprep.subr.mxu0 0.0
        %1369 = vmatpush2.msra.mxu0 0.0
        %1370 = vmatprep.subr.mxu0 0.0
        %1371 = vmatpush2.msra.mxu0 0.0
        %1372 = vmatprep.subr.mxu0 0.0
        %1373 = vmatpush2.msra.mxu0 0.0
        %1374 = vmatprep.subr.mxu0 0.0
        %1375 = vmatpush2.msra.mxu0 0.0
        %1376 = vmatprep.subr.mxu0 0.0
        %1377 = vmatpush2.msra.mxu0 0.0
        %1378 = vmatprep.subr.mxu0 0.0
        %1379 = vmatpush2.msra.mxu0 0.0
        %1380 = vmatprep.subr.mxu0 0.0
        %1381 = vmatpush2.msra.mxu0 0.0
        %1382 = vmatprep.subr.mxu0 0.0
        %1383 = vmatpush2.msra.mxu0 0.0
        %1384 = vmatprep.subr.mxu0 0.0
        %1385 = vmatpush2.msra.mxu0 0.0
        %1386 = vmatprep.subr.mxu0 0.0
        %1387 = vmatpush2.msra.mxu0 0.0
        %1388 = vmatprep.subr.mxu0 0.0
        %1389 = vmatpush2.msra.mxu0 0.0
        %1390 = vmatprep.subr.mxu0 0.0
        %1391 = vmatpush2.msra.mxu0 0.0
        %1392 = vmatprep.subr.mxu0 0.0
        %1393 = vmatpush2.msra.mxu0 0.0
        %1394 = vmatprep.subr.mxu0 0.0
        %1395 = vmatpush2.msra.mxu0 0.0
        %1396 = vmatprep.mubr.f32.mxu0 0.0
        %1397 = vmatmul.mubr.f32.gmra.mxu0 %v528
        %v1398 = vpop.f32.mrf.mxu0
        %v1399 = vadd.f32 0.0, %v1398
        %v1400 = vpop.f32.mrf.mxu0
        %1401 = vdwg.mxu0
        %1402 = vmatprep.subr.mxu0 0.0
        %1403 = vmatpush1.msra.mxu0 0.0
        %1404 = vmatprep.subr.mxu0 0.0
        %1405 = vmatpush1.msra.mxu0 0.0
        %1406 = vmatprep.subr.mxu0 0.0
        %1407 = vmatpush1.msra.mxu0 0.0
        %1408 = vmatprep.subr.mxu0 0.0
        %1409 = vmatpush1.msra.mxu0 0.0
        %1410 = vmatprep.subr.mxu0 0.0
        %1411 = vmatpush1.msra.mxu0 0.0
        %1412 = vmatprep.subr.mxu0 0.0
        %1413 = vmatpush1.msra.mxu0 0.0
        %1414 = vmatprep.subr.mxu0 0.0
        %1415 = vmatpush1.msra.mxu0 0.0
        %1416 = vmatprep.subr.mxu0 0.0
        %1417 = vmatpush1.msra.mxu0 0.0
        %1418 = vmatprep.subr.mxu0 0.0
        %1419 = vmatpush1.msra.mxu0 0.0
        %1420 = vmatprep.subr.mxu0 0.0
        %1421 = vmatpush1.msra.mxu0 0.0
        %1422 = vmatprep.subr.mxu0 0.0
        %1423 = vmatpush1.msra.mxu0 0.0
        %1424 = vmatprep.subr.mxu0 0.0
        %1425 = vmatpush1.msra.mxu0 0.0
        %1426 = vmatprep.subr.mxu0 0.0
        %1427 = vmatpush1.msra.mxu0 %v1109
        %1428 = vmatprep.subr.mxu0 0.0
        %1429 = vmatpush1.msra.mxu0 %v1108
        %1430 = vmatprep.subr.mxu0 0.0
        %1431 = vmatpush1.msra.mxu0 %v1107
        %1432 = vmatprep.subr.mxu0 0.0
        %1433 = vmatpush1.msra.mxu0 %v1106
        %1434 = vmatprep.subr.mxu0 0.0
        %1435 = vmatpush2.msra.mxu0 0.0
        %1436 = vmatprep.subr.mxu0 0.0
        %1437 = vmatpush2.msra.mxu0 0.0
        %1438 = vmatprep.subr.mxu0 0.0
        %1439 = vmatpush2.msra.mxu0 0.0
        %1440 = vmatprep.subr.mxu0 0.0
        %1441 = vmatpush2.msra.mxu0 0.0
        %1442 = vmatprep.subr.mxu0 0.0
        %1443 = vmatpush2.msra.mxu0 0.0
        %1444 = vmatprep.subr.mxu0 0.0
        %1445 = vmatpush2.msra.mxu0 0.0
        %1446 = vmatprep.subr.mxu0 0.0
        %1447 = vmatpush2.msra.mxu0 0.0
        %1448 = vmatprep.subr.mxu0 0.0
        %1449 = vmatpush2.msra.mxu0 0.0
        %1450 = vmatprep.subr.mxu0 0.0
        %1451 = vmatpush2.msra.mxu0 0.0
        %1452 = vmatprep.subr.mxu0 0.0
        %1453 = vmatpush2.msra.mxu0 0.0
        %1454 = vmatprep.subr.mxu0 0.0
        %1455 = vmatpush2.msra.mxu0 0.0
        %1456 = vmatprep.subr.mxu0 0.0
        %1457 = vmatpush2.msra.mxu0 0.0
        %1458 = vmatprep.subr.mxu0 0.0
        %1459 = vmatpush2.msra.mxu0 0.0
        %1460 = vmatprep.subr.mxu0 0.0
        %1461 = vmatpush2.msra.mxu0 0.0
        %1462 = vmatprep.subr.mxu0 0.0
        %1463 = vmatpush2.msra.mxu0 0.0
        %1464 = vmatprep.subr.mxu0 0.0
        %1465 = vmatpush2.msra.mxu0 0.0
        %1466 = vmatprep.mubr.f32.mxu0 0.0
        %1467 = vmatmul.mubr.f32.gmra.mxu0 %v528
        %v1468 = vpop.f32.mrf.mxu0
        %v1469 = vadd.f32 0.0, %v1468
        %v1470 = vpop.f32.mrf.mxu0
        %1471 = vdwg.mxu0
        %1472 = vmatprep.subr.mxu0 0.0
        %1473 = vmatpush1.msra.mxu0 0.0
        %1474 = vmatprep.subr.mxu0 0.0
        %1475 = vmatpush1.msra.mxu0 0.0
        %1476 = vmatprep.subr.mxu0 0.0
        %1477 = vmatpush1.msra.mxu0 0.0
        %1478 = vmatprep.subr.mxu0 0.0
        %1479 = vmatpush1.msra.mxu0 0.0
        %1480 = vmatprep.subr.mxu0 0.0
        %1481 = vmatpush1.msra.mxu0 0.0
        %1482 = vmatprep.subr.mxu0 0.0
        %1483 = vmatpush1.msra.mxu0 0.0
        %1484 = vmatprep.subr.mxu0 0.0
        %1485 = vmatpush1.msra.mxu0 0.0
        %1486 = vmatprep.subr.mxu0 0.0
        %1487 = vmatpush1.msra.mxu0 0.0
        %1488 = vmatprep.subr.mxu0 0.0
        %1489 = vmatpush1.msra.mxu0 0.0
        %1490 = vmatprep.subr.mxu0 0.0
        %1491 = vmatpush1.msra.mxu0 0.0
        %1492 = vmatprep.subr.mxu0 0.0
        %1493 = vmatpush1.msra.mxu0 0.0
        %1494 = vmatprep.subr.mxu0 0.0
        %1495 = vmatpush1.msra.mxu0 0.0
        %1496 = vmatprep.subr.mxu0 0.0
        %1497 = vmatpush1.msra.mxu0 %v1113
        %1498 = vmatprep.subr.mxu0 0.0
        %1499 = vmatpush1.msra.mxu0 %v1112
        %1500 = vmatprep.subr.mxu0 0.0
        %1501 = vmatpush1.msra.mxu0 %v1111
        %1502 = vmatprep.subr.mxu0 0.0
        %1503 = vmatpush1.msra.mxu0 %v1110
        %1504 = vmatprep.subr.mxu0 0.0
        %1505 = vmatpush2.msra.mxu0 0.0
        %1506 = vmatprep.subr.mxu0 0.0
        %1507 = vmatpush2.msra.mxu0 0.0
        %1508 = vmatprep.subr.mxu0 0.0
        %1509 = vmatpush2.msra.mxu0 0.0
        %1510 = vmatprep.subr.mxu0 0.0
        %1511 = vmatpush2.msra.mxu0 0.0
        %1512 = vmatprep.subr.mxu0 0.0
        %1513 = vmatpush2.msra.mxu0 0.0
        %1514 = vmatprep.subr.mxu0 0.0
        %1515 = vmatpush2.msra.mxu0 0.0
        %1516 = vmatprep.subr.mxu0 0.0
        %1517 = vmatpush2.msra.mxu0 0.0
        %1518 = vmatprep.subr.mxu0 0.0
        %1519 = vmatpush2.msra.mxu0 0.0
        %1520 = vmatprep.subr.mxu0 0.0
        %1521 = vmatpush2.msra.mxu0 0.0
        %1522 = vmatprep.subr.mxu0 0.0
        %1523 = vmatpush2.msra.mxu0 0.0
        %1524 = vmatprep.subr.mxu0 0.0
        %1525 = vmatpush2.msra.mxu0 0.0
        %1526 = vmatprep.subr.mxu0 0.0
        %1527 = vmatpush2.msra.mxu0 0.0
        %1528 = vmatprep.subr.mxu0 0.0
        %1529 = vmatpush2.msra.mxu0 0.0
        %1530 = vmatprep.subr.mxu0 0.0
        %1531 = vmatpush2.msra.mxu0 0.0
        %1532 = vmatprep.subr.mxu0 0.0
        %1533 = vmatpush2.msra.mxu0 0.0
        %1534 = vmatprep.subr.mxu0 0.0
        %1535 = vmatpush2.msra.mxu0 0.0
        %1536 = vmatprep.mubr.f32.mxu0 0.0
        %1537 = vmatmul.mubr.f32.gmra.mxu0 %v528
        %v1538 = vpop.f32.mrf.mxu0
        %v1539 = vadd.f32 0.0, %v1538
        %v1540 = vpop.f32.mrf.mxu0
        %1541 = vdwg.mxu0
        %1542 = vmatprep.subr.mxu0 0.0
        %1543 = vmatpush1.msra.mxu0 0.0
        %1544 = vmatprep.subr.mxu0 0.0
        %1545 = vmatpush1.msra.mxu0 0.0
        %1546 = vmatprep.subr.mxu0 0.0
        %1547 = vmatpush1.msra.mxu0 0.0
        %1548 = vmatprep.subr.mxu0 0.0
        %1549 = vmatpush1.msra.mxu0 0.0
        %1550 = vmatprep.subr.mxu0 0.0
        %1551 = vmatpush1.msra.mxu0 0.0
        %1552 = vmatprep.subr.mxu0 0.0
        %1553 = vmatpush1.msra.mxu0 0.0
        %1554 = vmatprep.subr.mxu0 0.0
        %1555 = vmatpush1.msra.mxu0 0.0
        %1556 = vmatprep.subr.mxu0 0.0
        %1557 = vmatpush1.msra.mxu0 0.0
        %1558 = vmatprep.subr.mxu0 0.0
        %1559 = vmatpush1.msra.mxu0 0.0
        %1560 = vmatprep.subr.mxu0 0.0
        %1561 = vmatpush1.msra.mxu0 0.0
        %1562 = vmatprep.subr.mxu0 0.0
        %1563 = vmatpush1.msra.mxu0 0.0
        %1564 = vmatprep.subr.mxu0 0.0
        %1565 = vmatpush1.msra.mxu0 0.0
        %1566 = vmatprep.subr.mxu0 0.0
        %1567 = vmatpush1.msra.mxu0 %v1117
        %1568 = vmatprep.subr.mxu0 0.0
        %1569 = vmatpush1.msra.mxu0 %v1116
        %1570 = vmatprep.subr.mxu0 0.0
        %1571 = vmatpush1.msra.mxu0 %v1115
        %1572 = vmatprep.subr.mxu0 0.0
        %1573 = vmatpush1.msra.mxu0 %v1114
        %1574 = vmatprep.subr.mxu0 0.0
        %1575 = vmatpush2.msra.mxu0 0.0
        %1576 = vmatprep.subr.mxu0 0.0
        %1577 = vmatpush2.msra.mxu0 0.0
        %1578 = vmatprep.subr.mxu0 0.0
        %1579 = vmatpush2.msra.mxu0 0.0
        %1580 = vmatprep.subr.mxu0 0.0
        %1581 = vmatpush2.msra.mxu0 0.0
        %1582 = vmatprep.subr.mxu0 0.0
        %1583 = vmatpush2.msra.mxu0 0.0
        %1584 = vmatprep.subr.mxu0 0.0
        %1585 = vmatpush2.msra.mxu0 0.0
        %1586 = vmatprep.subr.mxu0 0.0
        %1587 = vmatpush2.msra.mxu0 0.0
        %1588 = vmatprep.subr.mxu0 0.0
        %1589 = vmatpush2.msra.mxu0 0.0
        %1590 = vmatprep.subr.mxu0 0.0
        %1591 = vmatpush2.msra.mxu0 0.0
        %1592 = vmatprep.subr.mxu0 0.0
        %1593 = vmatpush2.msra.mxu0 0.0
        %1594 = vmatprep.subr.mxu0 0.0
        %1595 = vmatpush2.msra.mxu0 0.0
        %1596 = vmatprep.subr.mxu0 0.0
        %1597 = vmatpush2.msra.mxu0 0.0
        %1598 = vmatprep.subr.mxu0 0.0
        %1599 = vmatpush2.msra.mxu0 0.0
        %1600 = vmatprep.subr.mxu0 0.0
        %1601 = vmatpush2.msra.mxu0 0.0
        %1602 = vmatprep.subr.mxu0 0.0
        %1603 = vmatpush2.msra.mxu0 0.0
        %1604 = vmatprep.subr.mxu0 0.0
        %1605 = vmatpush2.msra.mxu0 0.0
        %1606 = vmatprep.mubr.f32.mxu0 0.0
        %1607 = vmatmul.mubr.f32.gmra.mxu0 %v528
        %v1608 = vpop.f32.mrf.mxu0
        %v1609 = vadd.f32 0.0, %v1608
        %v1610 = vpop.f32.mrf.mxu0
        %1611 = vdwg.mxu0
        %1612 = vmatprep.subr.mxu0 0.0
        %1613 = vmatpush1.msra.mxu0 0.0
        %1614 = vmatprep.subr.mxu0 0.0
        %1615 = vmatpush1.msra.mxu0 0.0
        %1616 = vmatprep.subr.mxu0 0.0
        %1617 = vmatpush1.msra.mxu0 0.0
        %1618 = vmatprep.subr.mxu0 0.0
        %1619 = vmatpush1.msra.mxu0 0.0
        %1620 = vmatprep.subr.mxu0 0.0
        %1621 = vmatpush1.msra.mxu0 0.0
        %1622 = vmatprep.subr.mxu0 0.0
        %1623 = vmatpush1.msra.mxu0 0.0
        %1624 = vmatprep.subr.mxu0 0.0
        %1625 = vmatpush1.msra.mxu0 0.0
        %1626 = vmatprep.subr.mxu0 0.0
        %1627 = vmatpush1.msra.mxu0 0.0
        %1628 = vmatprep.subr.mxu0 0.0
        %1629 = vmatpush1.msra.mxu0 0.0
        %1630 = vmatprep.subr.mxu0 0.0
        %1631 = vmatpush1.msra.mxu0 0.0
        %1632 = vmatprep.subr.mxu0 0.0
        %1633 = vmatpush1.msra.mxu0 0.0
        %1634 = vmatprep.subr.mxu0 0.0
        %1635 = vmatpush1.msra.mxu0 0.0
        %1636 = vmatprep.subr.mxu0 0.0
        %1637 = vmatpush1.msra.mxu0 %v1121
        %1638 = vmatprep.subr.mxu0 0.0
        %1639 = vmatpush1.msra.mxu0 %v1120
        %1640 = vmatprep.subr.mxu0 0.0
        %1641 = vmatpush1.msra.mxu0 %v1119
        %1642 = vmatprep.subr.mxu0 0.0
        %1643 = vmatpush1.msra.mxu0 %v1118
        %1644 = vmatprep.subr.mxu0 0.0
        %1645 = vmatpush2.msra.mxu0 0.0
        %1646 = vmatprep.subr.mxu0 0.0
        %1647 = vmatpush2.msra.mxu0 0.0
        %1648 = vmatprep.subr.mxu0 0.0
        %1649 = vmatpush2.msra.mxu0 0.0
        %1650 = vmatprep.subr.mxu0 0.0
        %1651 = vmatpush2.msra.mxu0 0.0
        %1652 = vmatprep.subr.mxu0 0.0
        %1653 = vmatpush2.msra.mxu0 0.0
        %1654 = vmatprep.subr.mxu0 0.0
        %1655 = vmatpush2.msra.mxu0 0.0
        %1656 = vmatprep.subr.mxu0 0.0
        %1657 = vmatpush2.msra.mxu0 0.0
        %1658 = vmatprep.subr.mxu0 0.0
        %1659 = vmatpush2.msra.mxu0 0.0
        %1660 = vmatprep.subr.mxu0 0.0
        %1661 = vmatpush2.msra.mxu0 0.0
        %1662 = vmatprep.subr.mxu0 0.0
        %1663 = vmatpush2.msra.mxu0 0.0
        %1664 = vmatprep.subr.mxu0 0.0
        %1665 = vmatpush2.msra.mxu0 0.0
        %1666 = vmatprep.subr.mxu0 0.0
        %1667 = vmatpush2.msra.mxu0 0.0
        %1668 = vmatprep.subr.mxu0 0.0
        %1669 = vmatpush2.msra.mxu0 0.0
        %1670 = vmatprep.subr.mxu0 0.0
        %1671 = vmatpush2.msra.mxu0 0.0
        %1672 = vmatprep.subr.mxu0 0.0
        %1673 = vmatpush2.msra.mxu0 0.0
        %1674 = vmatprep.subr.mxu0 0.0
        %1675 = vmatpush2.msra.mxu0 0.0
        %1676 = vmatprep.mubr.f32.mxu0 0.0
        %1677 = vmatmul.mubr.f32.gmra.mxu0 %v528
        %v1678 = vpop.f32.mrf.mxu0
        %v1679 = vadd.f32 0.0, %v1678
        %v1680 = vpop.f32.mrf.mxu0
        %1681 = vdwg.mxu0
        %v1682 = vld [vmem:[%s5] sm:$0xff]
        %v1683 = vld [vmem:[%s5 + $0x8] sm:$0xff]
        %v1684 = vld [vmem:[%s5 + $0x10] sm:$0xff]
        %v1685 = vld [vmem:[%s5 + $0x18] sm:$0xff]
        %v1686 = vld [vmem:[%s5 + $0x20] sm:$0xff]
        %v1687 = vld [vmem:[%s5 + $0x28] sm:$0xff]
        %v1688 = vld [vmem:[%s5 + $0x30] sm:$0xff]
        %v1689 = vld [vmem:[%s5 + $0x38] sm:$0xff]
        %v1690 = vld [vmem:[%s5 + $0x40] sm:$0xff]
        %v1691 = vld [vmem:[%s5 + $0x48] sm:$0xff]
        %v1692 = vld [vmem:[%s5 + $0x50] sm:$0xff]
        %v1693 = vld [vmem:[%s5 + $0x58] sm:$0xff]
        %v1694 = vld [vmem:[%s5 + $0x60] sm:$0xff]
        %v1695 = vld [vmem:[%s5 + $0x68] sm:$0xff]
        %v1696 = vld [vmem:[%s5 + $0x70] sm:$0xff]
        %v1697 = vld [vmem:[%s5 + $0x78] sm:$0xff]
        %v1698 = vld [vmem:[%s5 + $0x80] sm:$0xff]
        %v1699 = vld [vmem:[%s5 + $0x88] sm:$0xff]
        %v1700 = vld [vmem:[%s5 + $0x90] sm:$0xff]
        %v1701 = vld [vmem:[%s5 + $0x98] sm:$0xff]
        %v1702 = vld [vmem:[%s5 + $0xa0] sm:$0xff]
        %v1703 = vld [vmem:[%s5 + $0xa8] sm:$0xff]
        %v1704 = vld [vmem:[%s5 + $0xb0] sm:$0xff]
        %v1705 = vld [vmem:[%s5 + $0xb8] sm:$0xff]
        %v1706 = vld [vmem:[%s5 + $0xc0] sm:$0xff]
        %v1707 = vld [vmem:[%s5 + $0xc8] sm:$0xff]
        %v1708 = vld [vmem:[%s5 + $0xd0] sm:$0xff]
        %v1709 = vld [vmem:[%s5 + $0xd8] sm:$0xff]
        %v1710 = vld [vmem:[%s5 + $0xe0] sm:$0xff]
        %v1711 = vld [vmem:[%s5 + $0xe8] sm:$0xff]
        %v1712 = vld [vmem:[%s5 + $0xf0] sm:$0xff]
        %v1713 = vld [vmem:[%s5 + $0xf8] sm:$0xff]
        %1714 = vmatprep.subr.mxu0 0.0
        %1715 = vmatpush1.msra.mxu0 0.0
        %1716 = vmatprep.subr.mxu0 0.0
        %1717 = vmatpush1.msra.mxu0 0.0
        %1718 = vmatprep.subr.mxu0 0.0
        %1719 = vmatpush1.msra.mxu0 0.0
        %1720 = vmatprep.subr.mxu0 0.0
        %1721 = vmatpush1.msra.mxu0 0.0
        %1722 = vmatprep.subr.mxu0 0.0
        %1723 = vmatpush1.msra.mxu0 0.0
        %1724 = vmatprep.subr.mxu0 0.0
        %1725 = vmatpush1.msra.mxu0 0.0
        %1726 = vmatprep.subr.mxu0 0.0
        %1727 = vmatpush1.msra.mxu0 0.0
        %1728 = vmatprep.subr.mxu0 0.0
        %1729 = vmatpush1.msra.mxu0 0.0
        %1730 = vmatprep.subr.mxu0 0.0
        %1731 = vmatpush1.msra.mxu0 0.0
        %1732 = vmatprep.subr.mxu0 0.0
        %1733 = vmatpush1.msra.mxu0 0.0
        %1734 = vmatprep.subr.mxu0 0.0
        %1735 = vmatpush1.msra.mxu0 0.0
        %1736 = vmatprep.subr.mxu0 0.0
        %1737 = vmatpush1.msra.mxu0 0.0
        %1738 = vmatprep.subr.mxu0 0.0
        %1739 = vmatpush1.msra.mxu0 %v1685
        %1740 = vmatprep.subr.mxu0 0.0
        %1741 = vmatpush1.msra.mxu0 %v1684
        %1742 = vmatprep.subr.mxu0 0.0
        %1743 = vmatpush1.msra.mxu0 %v1683
        %1744 = vmatprep.subr.mxu0 0.0
        %1745 = vmatpush1.msra.mxu0 %v1682
        %1746 = vmatprep.subr.mxu0 0.0
        %1747 = vmatpush2.msra.mxu0 0.0
        %1748 = vmatprep.subr.mxu0 0.0
        %1749 = vmatpush2.msra.mxu0 0.0
        %1750 = vmatprep.subr.mxu0 0.0
        %1751 = vmatpush2.msra.mxu0 0.0
        %1752 = vmatprep.subr.mxu0 0.0
        %1753 = vmatpush2.msra.mxu0 0.0
        %1754 = vmatprep.subr.mxu0 0.0
        %1755 = vmatpush2.msra.mxu0 0.0
        %1756 = vmatprep.subr.mxu0 0.0
        %1757 = vmatpush2.msra.mxu0 0.0
        %1758 = vmatprep.subr.mxu0 0.0
        %1759 = vmatpush2.msra.mxu0 0.0
        %1760 = vmatprep.subr.mxu0 0.0
        %1761 = vmatpush2.msra.mxu0 0.0
        %1762 = vmatprep.subr.mxu0 0.0
        %1763 = vmatpush2.msra.mxu0 0.0
        %1764 = vmatprep.subr.mxu0 0.0
        %1765 = vmatpush2.msra.mxu0 0.0
        %1766 = vmatprep.subr.mxu0 0.0
        %1767 = vmatpush2.msra.mxu0 0.0
        %1768 = vmatprep.subr.mxu0 0.0
        %1769 = vmatpush2.msra.mxu0 0.0
        %1770 = vmatprep.subr.mxu0 0.0
        %1771 = vmatpush2.msra.mxu0 0.0
        %1772 = vmatprep.subr.mxu0 0.0
        %1773 = vmatpush2.msra.mxu0 0.0
        %1774 = vmatprep.subr.mxu0 0.0
        %1775 = vmatpush2.msra.mxu0 0.0
        %1776 = vmatprep.subr.mxu0 0.0
        %1777 = vmatpush2.msra.mxu0 0.0
        %1778 = vmatprep.mubr.f32.mxu0 0.0
        %1779 = vmatmul.mubr.f32.gmra.mxu0 %v528
        %v1780 = vpop.f32.mrf.mxu0
        %v1781 = vadd.f32 0.0, %v1780
        %v1782 = vpop.f32.mrf.mxu0
        %1783 = vdwg.mxu0
        %1784 = vmatprep.subr.mxu0 0.0
        %1785 = vmatpush1.msra.mxu0 0.0
        %1786 = vmatprep.subr.mxu0 0.0
        %1787 = vmatpush1.msra.mxu0 0.0
        %1788 = vmatprep.subr.mxu0 0.0
        %1789 = vmatpush1.msra.mxu0 0.0
        %1790 = vmatprep.subr.mxu0 0.0
        %1791 = vmatpush1.msra.mxu0 0.0
        %1792 = vmatprep.subr.mxu0 0.0
        %1793 = vmatpush1.msra.mxu0 0.0
        %1794 = vmatprep.subr.mxu0 0.0
        %1795 = vmatpush1.msra.mxu0 0.0
        %1796 = vmatprep.subr.mxu0 0.0
        %1797 = vmatpush1.msra.mxu0 0.0
        %1798 = vmatprep.subr.mxu0 0.0
        %1799 = vmatpush1.msra.mxu0 0.0
        %1800 = vmatprep.subr.mxu0 0.0
        %1801 = vmatpush1.msra.mxu0 0.0
        %1802 = vmatprep.subr.mxu0 0.0
        %1803 = vmatpush1.msra.mxu0 0.0
        %1804 = vmatprep.subr.mxu0 0.0
        %1805 = vmatpush1.msra.mxu0 0.0
        %1806 = vmatprep.subr.mxu0 0.0
        %1807 = vmatpush1.msra.mxu0 0.0
        %1808 = vmatprep.subr.mxu0 0.0
        %1809 = vmatpush1.msra.mxu0 %v1689
        %1810 = vmatprep.subr.mxu0 0.0
        %1811 = vmatpush1.msra.mxu0 %v1688
        %1812 = vmatprep.subr.mxu0 0.0
        %1813 = vmatpush1.msra.mxu0 %v1687
        %1814 = vmatprep.subr.mxu0 0.0
        %1815 = vmatpush1.msra.mxu0 %v1686
        %1816 = vmatprep.subr.mxu0 0.0
        %1817 = vmatpush2.msra.mxu0 0.0
        %1818 = vmatprep.subr.mxu0 0.0
        %1819 = vmatpush2.msra.mxu0 0.0
        %1820 = vmatprep.subr.mxu0 0.0
        %1821 = vmatpush2.msra.mxu0 0.0
        %1822 = vmatprep.subr.mxu0 0.0
        %1823 = vmatpush2.msra.mxu0 0.0
        %1824 = vmatprep.subr.mxu0 0.0
        %1825 = vmatpush2.msra.mxu0 0.0
        %1826 = vmatprep.subr.mxu0 0.0
        %1827 = vmatpush2.msra.mxu0 0.0
        %1828 = vmatprep.subr.mxu0 0.0
        %1829 = vmatpush2.msra.mxu0 0.0
        %1830 = vmatprep.subr.mxu0 0.0
        %1831 = vmatpush2.msra.mxu0 0.0
        %1832 = vmatprep.subr.mxu0 0.0
        %1833 = vmatpush2.msra.mxu0 0.0
        %1834 = vmatprep.subr.mxu0 0.0
        %1835 = vmatpush2.msra.mxu0 0.0
        %1836 = vmatprep.subr.mxu0 0.0
        %1837 = vmatpush2.msra.mxu0 0.0
        %1838 = vmatprep.subr.mxu0 0.0
        %1839 = vmatpush2.msra.mxu0 0.0
        %1840 = vmatprep.subr.mxu0 0.0
        %1841 = vmatpush2.msra.mxu0 0.0
        %1842 = vmatprep.subr.mxu0 0.0
        %1843 = vmatpush2.msra.mxu0 0.0
        %1844 = vmatprep.subr.mxu0 0.0
        %1845 = vmatpush2.msra.mxu0 0.0
        %1846 = vmatprep.subr.mxu0 0.0
        %1847 = vmatpush2.msra.mxu0 0.0
        %1848 = vmatprep.mubr.f32.mxu0 0.0
        %1849 = vmatmul.mubr.f32.gmra.mxu0 %v528
        %v1850 = vpop.f32.mrf.mxu0
        %v1851 = vadd.f32 0.0, %v1850
        %v1852 = vpop.f32.mrf.mxu0
        %1853 = vdwg.mxu0
        %1854 = vmatprep.subr.mxu0 0.0
        %1855 = vmatpush1.msra.mxu0 0.0
        %1856 = vmatprep.subr.mxu0 0.0
        %1857 = vmatpush1.msra.mxu0 0.0
        %1858 = vmatprep.subr.mxu0 0.0
        %1859 = vmatpush1.msra.mxu0 0.0
        %1860 = vmatprep.subr.mxu0 0.0
        %1861 = vmatpush1.msra.mxu0 0.0
        %1862 = vmatprep.subr.mxu0 0.0
        %1863 = vmatpush1.msra.mxu0 0.0
        %1864 = vmatprep.subr.mxu0 0.0
        %1865 = vmatpush1.msra.mxu0 0.0
        %1866 = vmatprep.subr.mxu0 0.0
        %1867 = vmatpush1.msra.mxu0 0.0
        %1868 = vmatprep.subr.mxu0 0.0
        %1869 = vmatpush1.msra.mxu0 0.0
        %1870 = vmatprep.subr.mxu0 0.0
        %1871 = vmatpush1.msra.mxu0 0.0
        %1872 = vmatprep.subr.mxu0 0.0
        %1873 = vmatpush1.msra.mxu0 0.0
        %1874 = vmatprep.subr.mxu0 0.0
        %1875 = vmatpush1.msra.mxu0 0.0
        %1876 = vmatprep.subr.mxu0 0.0
        %1877 = vmatpush1.msra.mxu0 0.0
        %1878 = vmatprep.subr.mxu0 0.0
        %1879 = vmatpush1.msra.mxu0 %v1693
        %1880 = vmatprep.subr.mxu0 0.0
        %1881 = vmatpush1.msra.mxu0 %v1692
        %1882 = vmatprep.subr.mxu0 0.0
        %1883 = vmatpush1.msra.mxu0 %v1691
        %1884 = vmatprep.subr.mxu0 0.0
        %1885 = vmatpush1.msra.mxu0 %v1690
        %1886 = vmatprep.subr.mxu0 0.0
        %1887 = vmatpush2.msra.mxu0 0.0
        %1888 = vmatprep.subr.mxu0 0.0
        %1889 = vmatpush2.msra.mxu0 0.0
        %1890 = vmatprep.subr.mxu0 0.0
        %1891 = vmatpush2.msra.mxu0 0.0
        %1892 = vmatprep.subr.mxu0 0.0
        %1893 = vmatpush2.msra.mxu0 0.0
        %1894 = vmatprep.subr.mxu0 0.0
        %1895 = vmatpush2.msra.mxu0 0.0
        %1896 = vmatprep.subr.mxu0 0.0
        %1897 = vmatpush2.msra.mxu0 0.0
        %1898 = vmatprep.subr.mxu0 0.0
        %1899 = vmatpush2.msra.mxu0 0.0
        %1900 = vmatprep.subr.mxu0 0.0
        %1901 = vmatpush2.msra.mxu0 0.0
        %1902 = vmatprep.subr.mxu0 0.0
        %1903 = vmatpush2.msra.mxu0 0.0
        %1904 = vmatprep.subr.mxu0 0.0
        %1905 = vmatpush2.msra.mxu0 0.0
        %1906 = vmatprep.subr.mxu0 0.0
        %1907 = vmatpush2.msra.mxu0 0.0
        %1908 = vmatprep.subr.mxu0 0.0
        %1909 = vmatpush2.msra.mxu0 0.0
        %1910 = vmatprep.subr.mxu0 0.0
        %1911 = vmatpush2.msra.mxu0 0.0
        %1912 = vmatprep.subr.mxu0 0.0
        %1913 = vmatpush2.msra.mxu0 0.0
        %1914 = vmatprep.subr.mxu0 0.0
        %1915 = vmatpush2.msra.mxu0 0.0
        %1916 = vmatprep.subr.mxu0 0.0
        %1917 = vmatpush2.msra.mxu0 0.0
        %1918 = vmatprep.mubr.f32.mxu0 0.0
        %1919 = vmatmul.mubr.f32.gmra.mxu0 %v528
        %v1920 = vpop.f32.mrf.mxu0
        %v1921 = vadd.f32 0.0, %v1920
        %v1922 = vpop.f32.mrf.mxu0
        %1923 = vdwg.mxu0
        %1924 = vmatprep.subr.mxu0 0.0
        %1925 = vmatpush1.msra.mxu0 0.0
        %1926 = vmatprep.subr.mxu0 0.0
        %1927 = vmatpush1.msra.mxu0 0.0
        %1928 = vmatprep.subr.mxu0 0.0
        %1929 = vmatpush1.msra.mxu0 0.0
        %1930 = vmatprep.subr.mxu0 0.0
        %1931 = vmatpush1.msra.mxu0 0.0
        %1932 = vmatprep.subr.mxu0 0.0
        %1933 = vmatpush1.msra.mxu0 0.0
        %1934 = vmatprep.subr.mxu0 0.0
        %1935 = vmatpush1.msra.mxu0 0.0
        %1936 = vmatprep.subr.mxu0 0.0
        %1937 = vmatpush1.msra.mxu0 0.0
        %1938 = vmatprep.subr.mxu0 0.0
        %1939 = vmatpush1.msra.mxu0 0.0
        %1940 = vmatprep.subr.mxu0 0.0
        %1941 = vmatpush1.msra.mxu0 0.0
        %1942 = vmatprep.subr.mxu0 0.0
        %1943 = vmatpush1.msra.mxu0 0.0
        %1944 = vmatprep.subr.mxu0 0.0
        %1945 = vmatpush1.msra.mxu0 0.0
        %1946 = vmatprep.subr.mxu0 0.0
        %1947 = vmatpush1.msra.mxu0 0.0
        %1948 = vmatprep.subr.mxu0 0.0
        %1949 = vmatpush1.msra.mxu0 %v1697
        %1950 = vmatprep.subr.mxu0 0.0
        %1951 = vmatpush1.msra.mxu0 %v1696
        %1952 = vmatprep.subr.mxu0 0.0
        %1953 = vmatpush1.msra.mxu0 %v1695
        %1954 = vmatprep.subr.mxu0 0.0
        %1955 = vmatpush1.msra.mxu0 %v1694
        %1956 = vmatprep.subr.mxu0 0.0
        %1957 = vmatpush2.msra.mxu0 0.0
        %1958 = vmatprep.subr.mxu0 0.0
        %1959 = vmatpush2.msra.mxu0 0.0
        %1960 = vmatprep.subr.mxu0 0.0
        %1961 = vmatpush2.msra.mxu0 0.0
        %1962 = vmatprep.subr.mxu0 0.0
        %1963 = vmatpush2.msra.mxu0 0.0
        %1964 = vmatprep.subr.mxu0 0.0
        %1965 = vmatpush2.msra.mxu0 0.0
        %1966 = vmatprep.subr.mxu0 0.0
        %1967 = vmatpush2.msra.mxu0 0.0
        %1968 = vmatprep.subr.mxu0 0.0
        %1969 = vmatpush2.msra.mxu0 0.0
        %1970 = vmatprep.subr.mxu0 0.0
        %1971 = vmatpush2.msra.mxu0 0.0
        %1972 = vmatprep.subr.mxu0 0.0
        %1973 = vmatpush2.msra.mxu0 0.0
        %1974 = vmatprep.subr.mxu0 0.0
        %1975 = vmatpush2.msra.mxu0 0.0
        %1976 = vmatprep.subr.mxu0 0.0
        %1977 = vmatpush2.msra.mxu0 0.0
        %1978 = vmatprep.subr.mxu0 0.0
        %1979 = vmatpush2.msra.mxu0 0.0
        %1980 = vmatprep.subr.mxu0 0.0
        %1981 = vmatpush2.msra.mxu0 0.0
        %1982 = vmatprep.subr.mxu0 0.0
        %1983 = vmatpush2.msra.mxu0 0.0
        %1984 = vmatprep.subr.mxu0 0.0
        %1985 = vmatpush2.msra.mxu0 0.0
        %1986 = vmatprep.subr.mxu0 0.0
        %1987 = vmatpush2.msra.mxu0 0.0
        %1988 = vmatprep.mubr.f32.mxu0 0.0
        %1989 = vmatmul.mubr.f32.gmra.mxu0 %v528
        %v1990 = vpop.f32.mrf.mxu0
        %v1991 = vadd.f32 0.0, %v1990
        %v1992 = vpop.f32.mrf.mxu0
        %1993 = vdwg.mxu0
        %1994 = vmatprep.subr.mxu0 0.0
        %1995 = vmatpush1.msra.mxu0 0.0
        %1996 = vmatprep.subr.mxu0 0.0
        %1997 = vmatpush1.msra.mxu0 0.0
        %1998 = vmatprep.subr.mxu0 0.0
        %1999 = vmatpush1.msra.mxu0 0.0
        %2000 = vmatprep.subr.mxu0 0.0
        %2001 = vmatpush1.msra.mxu0 0.0
        %2002 = vmatprep.subr.mxu0 0.0
        %2003 = vmatpush1.msra.mxu0 0.0
        %2004 = vmatprep.subr.mxu0 0.0
        %2005 = vmatpush1.msra.mxu0 0.0
        %2006 = vmatprep.subr.mxu0 0.0
        %2007 = vmatpush1.msra.mxu0 0.0
        %2008 = vmatprep.subr.mxu0 0.0
        %2009 = vmatpush1.msra.mxu0 0.0
        %2010 = vmatprep.subr.mxu0 0.0
        %2011 = vmatpush1.msra.mxu0 0.0
        %2012 = vmatprep.subr.mxu0 0.0
        %2013 = vmatpush1.msra.mxu0 0.0
        %2014 = vmatprep.subr.mxu0 0.0
        %2015 = vmatpush1.msra.mxu0 0.0
        %2016 = vmatprep.subr.mxu0 0.0
        %2017 = vmatpush1.msra.mxu0 0.0
        %2018 = vmatprep.subr.mxu0 0.0
        %2019 = vmatpush1.msra.mxu0 %v1701
        %2020 = vmatprep.subr.mxu0 0.0
        %2021 = vmatpush1.msra.mxu0 %v1700
        %2022 = vmatprep.subr.mxu0 0.0
        %2023 = vmatpush1.msra.mxu0 %v1699
        %2024 = vmatprep.subr.mxu0 0.0
        %2025 = vmatpush1.msra.mxu0 %v1698
        %2026 = vmatprep.subr.mxu0 0.0
        %2027 = vmatpush2.msra.mxu0 0.0
        %2028 = vmatprep.subr.mxu0 0.0
        %2029 = vmatpush2.msra.mxu0 0.0
        %2030 = vmatprep.subr.mxu0 0.0
        %2031 = vmatpush2.msra.mxu0 0.0
        %2032 = vmatprep.subr.mxu0 0.0
        %2033 = vmatpush2.msra.mxu0 0.0
        %2034 = vmatprep.subr.mxu0 0.0
        %2035 = vmatpush2.msra.mxu0 0.0
        %2036 = vmatprep.subr.mxu0 0.0
        %2037 = vmatpush2.msra.mxu0 0.0
        %2038 = vmatprep.subr.mxu0 0.0
        %2039 = vmatpush2.msra.mxu0 0.0
        %2040 = vmatprep.subr.mxu0 0.0
        %2041 = vmatpush2.msra.mxu0 0.0
        %2042 = vmatprep.subr.mxu0 0.0
        %2043 = vmatpush2.msra.mxu0 0.0
        %2044 = vmatprep.subr.mxu0 0.0
        %2045 = vmatpush2.msra.mxu0 0.0
        %2046 = vmatprep.subr.mxu0 0.0
        %2047 = vmatpush2.msra.mxu0 0.0
        %2048 = vmatprep.subr.mxu0 0.0
        %2049 = vmatpush2.msra.mxu0 0.0
        %2050 = vmatprep.subr.mxu0 0.0
        %2051 = vmatpush2.msra.mxu0 0.0
        %2052 = vmatprep.subr.mxu0 0.0
        %2053 = vmatpush2.msra.mxu0 0.0
        %2054 = vmatprep.subr.mxu0 0.0
        %2055 = vmatpush2.msra.mxu0 0.0
        %2056 = vmatprep.subr.mxu0 0.0
        %2057 = vmatpush2.msra.mxu0 0.0
        %2058 = vmatprep.mubr.f32.mxu0 0.0
        %2059 = vmatmul.mubr.f32.gmra.mxu0 %v528
        %v2060 = vpop.f32.mrf.mxu0
        %v2061 = vadd.f32 0.0, %v2060
        %v2062 = vpop.f32.mrf.mxu0
        %2063 = vdwg.mxu0
        %2064 = vmatprep.subr.mxu0 0.0
        %2065 = vmatpush1.msra.mxu0 0.0
        %2066 = vmatprep.subr.mxu0 0.0
        %2067 = vmatpush1.msra.mxu0 0.0
        %2068 = vmatprep.subr.mxu0 0.0
        %2069 = vmatpush1.msra.mxu0 0.0
        %2070 = vmatprep.subr.mxu0 0.0
        %2071 = vmatpush1.msra.mxu0 0.0
        %2072 = vmatprep.subr.mxu0 0.0
        %2073 = vmatpush1.msra.mxu0 0.0
        %2074 = vmatprep.subr.mxu0 0.0
        %2075 = vmatpush1.msra.mxu0 0.0
        %2076 = vmatprep.subr.mxu0 0.0
        %2077 = vmatpush1.msra.mxu0 0.0
        %2078 = vmatprep.subr.mxu0 0.0
        %2079 = vmatpush1.msra.mxu0 0.0
        %2080 = vmatprep.subr.mxu0 0.0
        %2081 = vmatpush1.msra.mxu0 0.0
        %2082 = vmatprep.subr.mxu0 0.0
        %2083 = vmatpush1.msra.mxu0 0.0
        %2084 = vmatprep.subr.mxu0 0.0
        %2085 = vmatpush1.msra.mxu0 0.0
        %2086 = vmatprep.subr.mxu0 0.0
        %2087 = vmatpush1.msra.mxu0 0.0
        %2088 = vmatprep.subr.mxu0 0.0
        %2089 = vmatpush1.msra.mxu0 %v1705
        %2090 = vmatprep.subr.mxu0 0.0
        %2091 = vmatpush1.msra.mxu0 %v1704
        %2092 = vmatprep.subr.mxu0 0.0
        %2093 = vmatpush1.msra.mxu0 %v1703
        %2094 = vmatprep.subr.mxu0 0.0
        %2095 = vmatpush1.msra.mxu0 %v1702
        %2096 = vmatprep.subr.mxu0 0.0
        %2097 = vmatpush2.msra.mxu0 0.0
        %2098 = vmatprep.subr.mxu0 0.0
        %2099 = vmatpush2.msra.mxu0 0.0
        %2100 = vmatprep.subr.mxu0 0.0
        %2101 = vmatpush2.msra.mxu0 0.0
        %2102 = vmatprep.subr.mxu0 0.0
        %2103 = vmatpush2.msra.mxu0 0.0
        %2104 = vmatprep.subr.mxu0 0.0
        %2105 = vmatpush2.msra.mxu0 0.0
        %2106 = vmatprep.subr.mxu0 0.0
        %2107 = vmatpush2.msra.mxu0 0.0
        %2108 = vmatprep.subr.mxu0 0.0
        %2109 = vmatpush2.msra.mxu0 0.0
        %2110 = vmatprep.subr.mxu0 0.0
        %2111 = vmatpush2.msra.mxu0 0.0
        %2112 = vmatprep.subr.mxu0 0.0
        %2113 = vmatpush2.msra.mxu0 0.0
        %2114 = vmatprep.subr.mxu0 0.0
        %2115 = vmatpush2.msra.mxu0 0.0
        %2116 = vmatprep.subr.mxu0 0.0
        %2117 = vmatpush2.msra.mxu0 0.0
        %2118 = vmatprep.subr.mxu0 0.0
        %2119 = vmatpush2.msra.mxu0 0.0
        %2120 = vmatprep.subr.mxu0 0.0
        %2121 = vmatpush2.msra.mxu0 0.0
        %2122 = vmatprep.subr.mxu0 0.0
        %2123 = vmatpush2.msra.mxu0 0.0
        %2124 = vmatprep.subr.mxu0 0.0
        %2125 = vmatpush2.msra.mxu0 0.0
        %2126 = vmatprep.subr.mxu0 0.0
        %2127 = vmatpush2.msra.mxu0 0.0
        %2128 = vmatprep.mubr.f32.mxu0 0.0
        %2129 = vmatmul.mubr.f32.gmra.mxu0 %v528
        %v2130 = vpop.f32.mrf.mxu0
        %v2131 = vadd.f32 0.0, %v2130
        %v2132 = vpop.f32.mrf.mxu0
        %2133 = vdwg.mxu0
        %2134 = vmatprep.subr.mxu0 0.0
        %2135 = vmatpush1.msra.mxu0 0.0
        %2136 = vmatprep.subr.mxu0 0.0
        %2137 = vmatpush1.msra.mxu0 0.0
        %2138 = vmatprep.subr.mxu0 0.0
        %2139 = vmatpush1.msra.mxu0 0.0
        %2140 = vmatprep.subr.mxu0 0.0
        %2141 = vmatpush1.msra.mxu0 0.0
        %2142 = vmatprep.subr.mxu0 0.0
        %2143 = vmatpush1.msra.mxu0 0.0
        %2144 = vmatprep.subr.mxu0 0.0
        %2145 = vmatpush1.msra.mxu0 0.0
        %2146 = vmatprep.subr.mxu0 0.0
        %2147 = vmatpush1.msra.mxu0 0.0
        %2148 = vmatprep.subr.mxu0 0.0
        %2149 = vmatpush1.msra.mxu0 0.0
        %2150 = vmatprep.subr.mxu0 0.0
        %2151 = vmatpush1.msra.mxu0 0.0
        %2152 = vmatprep.subr.mxu0 0.0
        %2153 = vmatpush1.msra.mxu0 0.0
        %2154 = vmatprep.subr.mxu0 0.0
        %2155 = vmatpush1.msra.mxu0 0.0
        %2156 = vmatprep.subr.mxu0 0.0
        %2157 = vmatpush1.msra.mxu0 0.0
        %2158 = vmatprep.subr.mxu0 0.0
        %2159 = vmatpush1.msra.mxu0 %v1709
        %2160 = vmatprep.subr.mxu0 0.0
        %2161 = vmatpush1.msra.mxu0 %v1708
        %2162 = vmatprep.subr.mxu0 0.0
        %2163 = vmatpush1.msra.mxu0 %v1707
        %2164 = vmatprep.subr.mxu0 0.0
        %2165 = vmatpush1.msra.mxu0 %v1706
        %2166 = vmatprep.subr.mxu0 0.0
        %2167 = vmatpush2.msra.mxu0 0.0
        %2168 = vmatprep.subr.mxu0 0.0
        %2169 = vmatpush2.msra.mxu0 0.0
        %2170 = vmatprep.subr.mxu0 0.0
        %2171 = vmatpush2.msra.mxu0 0.0
        %2172 = vmatprep.subr.mxu0 0.0
        %2173 = vmatpush2.msra.mxu0 0.0
        %2174 = vmatprep.subr.mxu0 0.0
        %2175 = vmatpush2.msra.mxu0 0.0
        %2176 = vmatprep.subr.mxu0 0.0
        %2177 = vmatpush2.msra.mxu0 0.0
        %2178 = vmatprep.subr.mxu0 0.0
        %2179 = vmatpush2.msra.mxu0 0.0
        %2180 = vmatprep.subr.mxu0 0.0
        %2181 = vmatpush2.msra.mxu0 0.0
        %2182 = vmatprep.subr.mxu0 0.0
        %2183 = vmatpush2.msra.mxu0 0.0
        %2184 = vmatprep.subr.mxu0 0.0
        %2185 = vmatpush2.msra.mxu0 0.0
        %2186 = vmatprep.subr.mxu0 0.0
        %2187 = vmatpush2.msra.mxu0 0.0
        %2188 = vmatprep.subr.mxu0 0.0
        %2189 = vmatpush2.msra.mxu0 0.0
        %2190 = vmatprep.subr.mxu0 0.0
        %2191 = vmatpush2.msra.mxu0 0.0
        %2192 = vmatprep.subr.mxu0 0.0
        %2193 = vmatpush2.msra.mxu0 0.0
        %2194 = vmatprep.subr.mxu0 0.0
        %2195 = vmatpush2.msra.mxu0 0.0
        %2196 = vmatprep.subr.mxu0 0.0
        %2197 = vmatpush2.msra.mxu0 0.0
        %2198 = vmatprep.mubr.f32.mxu0 0.0
        %2199 = vmatmul.mubr.f32.gmra.mxu0 %v528
        %v2200 = vpop.f32.mrf.mxu0
        %v2201 = vadd.f32 0.0, %v2200
        %v2202 = vpop.f32.mrf.mxu0
        %2203 = vdwg.mxu0
        %2204 = vmatprep.subr.mxu0 0.0
        %2205 = vmatpush1.msra.mxu0 0.0
        %2206 = vmatprep.subr.mxu0 0.0
        %2207 = vmatpush1.msra.mxu0 0.0
        %2208 = vmatprep.subr.mxu0 0.0
        %2209 = vmatpush1.msra.mxu0 0.0
        %2210 = vmatprep.subr.mxu0 0.0
        %2211 = vmatpush1.msra.mxu0 0.0
        %2212 = vmatprep.subr.mxu0 0.0
        %2213 = vmatpush1.msra.mxu0 0.0
        %2214 = vmatprep.subr.mxu0 0.0
        %2215 = vmatpush1.msra.mxu0 0.0
        %2216 = vmatprep.subr.mxu0 0.0
        %2217 = vmatpush1.msra.mxu0 0.0
        %2218 = vmatprep.subr.mxu0 0.0
        %2219 = vmatpush1.msra.mxu0 0.0
        %2220 = vmatprep.subr.mxu0 0.0
        %2221 = vmatpush1.msra.mxu0 0.0
        %2222 = vmatprep.subr.mxu0 0.0
        %2223 = vmatpush1.msra.mxu0 0.0
        %2224 = vmatprep.subr.mxu0 0.0
        %2225 = vmatpush1.msra.mxu0 0.0
        %2226 = vmatprep.subr.mxu0 0.0
        %2227 = vmatpush1.msra.mxu0 0.0
        %2228 = vmatprep.subr.mxu0 0.0
        %2229 = vmatpush1.msra.mxu0 %v1713
        %2230 = vmatprep.subr.mxu0 0.0
        %2231 = vmatpush1.msra.mxu0 %v1712
        %2232 = vmatprep.subr.mxu0 0.0
        %2233 = vmatpush1.msra.mxu0 %v1711
        %2234 = vmatprep.subr.mxu0 0.0
        %2235 = vmatpush1.msra.mxu0 %v1710
        %2236 = vmatprep.subr.mxu0 0.0
        %2237 = vmatpush2.msra.mxu0 0.0
        %2238 = vmatprep.subr.mxu0 0.0
        %2239 = vmatpush2.msra.mxu0 0.0
        %2240 = vmatprep.subr.mxu0 0.0
        %2241 = vmatpush2.msra.mxu0 0.0
        %2242 = vmatprep.subr.mxu0 0.0
        %2243 = vmatpush2.msra.mxu0 0.0
        %2244 = vmatprep.subr.mxu0 0.0
        %2245 = vmatpush2.msra.mxu0 0.0
        %2246 = vmatprep.subr.mxu0 0.0
        %2247 = vmatpush2.msra.mxu0 0.0
        %2248 = vmatprep.subr.mxu0 0.0
        %2249 = vmatpush2.msra.mxu0 0.0
        %2250 = vmatprep.subr.mxu0 0.0
        %2251 = vmatpush2.msra.mxu0 0.0
        %2252 = vmatprep.subr.mxu0 0.0
        %2253 = vmatpush2.msra.mxu0 0.0
        %2254 = vmatprep.subr.mxu0 0.0
        %2255 = vmatpush2.msra.mxu0 0.0
        %2256 = vmatprep.subr.mxu0 0.0
        %2257 = vmatpush2.msra.mxu0 0.0
        %2258 = vmatprep.subr.mxu0 0.0
        %2259 = vmatpush2.msra.mxu0 0.0
        %2260 = vmatprep.subr.mxu0 0.0
        %2261 = vmatpush2.msra.mxu0 0.0
        %2262 = vmatprep.subr.mxu0 0.0
        %2263 = vmatpush2.msra.mxu0 0.0
        %2264 = vmatprep.subr.mxu0 0.0
        %2265 = vmatpush2.msra.mxu0 0.0
        %2266 = vmatprep.subr.mxu0 0.0
        %2267 = vmatpush2.msra.mxu0 0.0
        %2268 = vmatprep.mubr.f32.mxu0 0.0
        %2269 = vmatmul.mubr.f32.gmra.mxu0 %v528
        %v2270 = vpop.f32.mrf.mxu0
        %v2271 = vadd.f32 0.0, %v2270
        %v2272 = vpop.f32.mrf.mxu0
        %2273 = vdwg.mxu0
        %vm2274 = vcmask 31744
        %v2276 = vsel %vm2274, %v597, 0
        %v2279 = vsel %vm2274, %v1189, 0
        %2281 = vmatprep.subr.mxu0 0.0
        %2282 = vmatpush1.xpose.msra.mxu0 0.0
        %2283 = vmatprep.subr.mxu0 0.0
        %2284 = vmatpush1.xpose.msra.mxu0 0.0
        %2285 = vmatprep.subr.mxu0 0.0
        %2286 = vmatpush1.xpose.msra.mxu0 0.0
        %2287 = vmatprep.subr.mxu0 0.0
        %2288 = vmatpush1.xpose.msra.mxu0 0.0
        %2289 = vmatprep.subr.mxu0 0.0
        %2290 = vmatpush1.xpose.msra.mxu0 0.0
        %2291 = vmatprep.subr.mxu0 0.0
        %2292 = vmatpush1.xpose.msra.mxu0 0.0
        %2293 = vmatprep.subr.mxu0 0.0
        %2294 = vmatpush1.xpose.msra.mxu0 0.0
        %2295 = vmatprep.subr.mxu0 0.0
        %2296 = vmatpush1.xpose.msra.mxu0 0.0
        %2297 = vmatprep.subr.mxu0 0.0
        %2298 = vmatpush1.xpose.msra.mxu0 0.0
        %2299 = vmatprep.subr.mxu0 0.0
        %2300 = vmatpush1.xpose.msra.mxu0 0.0
        %2301 = vmatprep.subr.mxu0 0.0
        %2302 = vmatpush1.xpose.msra.mxu0 0.0
        %2303 = vmatprep.subr.mxu0 0.0
        %2304 = vmatpush1.xpose.msra.mxu0 0.0
        %2305 = vmatprep.subr.mxu0 0.0
        %2306 = vmatpush1.xpose.msra.mxu0 0.0
        %2307 = vmatprep.subr.mxu0 0.0
        %2308 = vmatpush1.xpose.msra.mxu0 0.0
        %2309 = vmatprep.subr.mxu0 0.0
        %2310 = vmatpush1.xpose.msra.mxu0 0.0
        %2311 = vmatprep.subr.mxu0 0.0
        %2312 = vmatpush1.xpose.msra.mxu0 %v2279
        %2313 = vmatprep.subr.mxu0 0.0
        %2314 = vmatpush2.xpose.msra.mxu0 0.0
        %2315 = vmatprep.subr.mxu0 0.0
        %2316 = vmatpush2.xpose.msra.mxu0 0.0
        %2317 = vmatprep.subr.mxu0 0.0
        %2318 = vmatpush2.xpose.msra.mxu0 0.0
        %2319 = vmatprep.subr.mxu0 0.0
        %2320 = vmatpush2.xpose.msra.mxu0 0.0
        %2321 = vmatprep.subr.mxu0 0.0
        %2322 = vmatpush2.xpose.msra.mxu0 0.0
        %2323 = vmatprep.subr.mxu0 0.0
        %2324 = vmatpush2.xpose.msra.mxu0 0.0
        %2325 = vmatprep.subr.mxu0 0.0
        %2326 = vmatpush2.xpose.msra.mxu0 0.0
        %2327 = vmatprep.subr.mxu0 0.0
        %2328 = vmatpush2.xpose.msra.mxu0 0.0
        %2329 = vmatprep.subr.mxu0 0.0
        %2330 = vmatpush2.xpose.msra.mxu0 0.0
        %2331 = vmatprep.subr.mxu0 0.0
        %2332 = vmatpush2.xpose.msra.mxu0 0.0
        %2333 = vmatprep.subr.mxu0 0.0
        %2334 = vmatpush2.xpose.msra.mxu0 0.0
        %2335 = vmatprep.subr.mxu0 0.0
        %2336 = vmatpush2.xpose.msra.mxu0 0.0
        %2337 = vmatprep.subr.mxu0 0.0
        %2338 = vmatpush2.xpose.msra.mxu0 0.0
        %2339 = vmatprep.subr.mxu0 0.0
        %2340 = vmatpush2.xpose.msra.mxu0 0.0
        %2341 = vmatprep.subr.mxu0 0.0
        %2342 = vmatpush2.xpose.msra.mxu0 0.0
        %2343 = vmatprep.subr.mxu0 0.0
        %2344 = vmatpush2.xpose.msra.mxu0 0.0
        %2345 = vmatprep.mubr.f32.mxu0 0.0
        %2346 = vmatmul.mubr.f32.gmra.mxu0 %v2276
        %v2347 = vpop.f32.mrf.mxu0
        %v2348 = vadd.f32 0.0, %v2347
        %v2349 = vpop.f32.mrf.mxu0
        %2350 = vdwg.mxu0
        %v2352 = vsel %vm2274, %v667, 0
        %v2355 = vsel %vm2274, %v1259, 0
        %2357 = vmatprep.subr.mxu0 0.0
        %2358 = vmatpush1.xpose.msra.mxu0 0.0
        %2359 = vmatprep.subr.mxu0 0.0
        %2360 = vmatpush1.xpose.msra.mxu0 0.0
        %2361 = vmatprep.subr.mxu0 0.0
        %2362 = vmatpush1.xpose.msra.mxu0 0.0
        %2363 = vmatprep.subr.mxu0 0.0
        %2364 = vmatpush1.xpose.msra.mxu0 0.0
        %2365 = vmatprep.subr.mxu0 0.0
        %2366 = vmatpush1.xpose.msra.mxu0 0.0
        %2367 = vmatprep.subr.mxu0 0.0
        %2368 = vmatpush1.xpose.msra.mxu0 0.0
        %2369 = vmatprep.subr.mxu0 0.0
        %2370 = vmatpush1.xpose.msra.mxu0 0.0
        %2371 = vmatprep.subr.mxu0 0.0
        %2372 = vmatpush1.xpose.msra.mxu0 0.0
        %2373 = vmatprep.subr.mxu0 0.0
        %2374 = vmatpush1.xpose.msra.mxu0 0.0
        %2375 = vmatprep.subr.mxu0 0.0
        %2376 = vmatpush1.xpose.msra.mxu0 0.0
        %2377 = vmatprep.subr.mxu0 0.0
        %2378 = vmatpush1.xpose.msra.mxu0 0.0
        %2379 = vmatprep.subr.mxu0 0.0
        %2380 = vmatpush1.xpose.msra.mxu0 0.0
        %2381 = vmatprep.subr.mxu0 0.0
        %2382 = vmatpush1.xpose.msra.mxu0 0.0
        %2383 = vmatprep.subr.mxu0 0.0
        %2384 = vmatpush1.xpose.msra.mxu0 0.0
        %2385 = vmatprep.subr.mxu0 0.0
        %2386 = vmatpush1.xpose.msra.mxu0 0.0
        %2387 = vmatprep.subr.mxu0 0.0
        %2388 = vmatpush1.xpose.msra.mxu0 %v2355
        %2389 = vmatprep.subr.mxu0 0.0
        %2390 = vmatpush2.xpose.msra.mxu0 0.0
        %2391 = vmatprep.subr.mxu0 0.0
        %2392 = vmatpush2.xpose.msra.mxu0 0.0
        %2393 = vmatprep.subr.mxu0 0.0
        %2394 = vmatpush2.xpose.msra.mxu0 0.0
        %2395 = vmatprep.subr.mxu0 0.0
        %2396 = vmatpush2.xpose.msra.mxu0 0.0
        %2397 = vmatprep.subr.mxu0 0.0
        %2398 = vmatpush2.xpose.msra.mxu0 0.0
        %2399 = vmatprep.subr.mxu0 0.0
        %2400 = vmatpush2.xpose.msra.mxu0 0.0
        %2401 = vmatprep.subr.mxu0 0.0
        %2402 = vmatpush2.xpose.msra.mxu0 0.0
        %2403 = vmatprep.subr.mxu0 0.0
        %2404 = vmatpush2.xpose.msra.mxu0 0.0
        %2405 = vmatprep.subr.mxu0 0.0
        %2406 = vmatpush2.xpose.msra.mxu0 0.0
        %2407 = vmatprep.subr.mxu0 0.0
        %2408 = vmatpush2.xpose.msra.mxu0 0.0
        %2409 = vmatprep.subr.mxu0 0.0
        %2410 = vmatpush2.xpose.msra.mxu0 0.0
        %2411 = vmatprep.subr.mxu0 0.0
        %2412 = vmatpush2.xpose.msra.mxu0 0.0
        %2413 = vmatprep.subr.mxu0 0.0
        %2414 = vmatpush2.xpose.msra.mxu0 0.0
        %2415 = vmatprep.subr.mxu0 0.0
        %2416 = vmatpush2.xpose.msra.mxu0 0.0
        %2417 = vmatprep.subr.mxu0 0.0
        %2418 = vmatpush2.xpose.msra.mxu0 0.0
        %2419 = vmatprep.subr.mxu0 0.0
        %2420 = vmatpush2.xpose.msra.mxu0 0.0
        %2421 = vmatprep.mubr.f32.mxu0 0.0
        %2422 = vmatmul.mubr.f32.gmra.mxu0 %v2352
        %v2423 = vpop.f32.mrf.mxu0
        %v2424 = vadd.f32 0.0, %v2423
        %v2425 = vpop.f32.mrf.mxu0
        %2426 = vdwg.mxu0
        %v2428 = vsel %vm2274, %v737, 0
        %v2431 = vsel %vm2274, %v1329, 0
        %2433 = vmatprep.subr.mxu0 0.0
        %2434 = vmatpush1.xpose.msra.mxu0 0.0
        %2435 = vmatprep.subr.mxu0 0.0
        %2436 = vmatpush1.xpose.msra.mxu0 0.0
        %2437 = vmatprep.subr.mxu0 0.0
        %2438 = vmatpush1.xpose.msra.mxu0 0.0
        %2439 = vmatprep.subr.mxu0 0.0
        %2440 = vmatpush1.xpose.msra.mxu0 0.0
        %2441 = vmatprep.subr.mxu0 0.0
        %2442 = vmatpush1.xpose.msra.mxu0 0.0
        %2443 = vmatprep.subr.mxu0 0.0
        %2444 = vmatpush1.xpose.msra.mxu0 0.0
        %2445 = vmatprep.subr.mxu0 0.0
        %2446 = vmatpush1.xpose.msra.mxu0 0.0
        %2447 = vmatprep.subr.mxu0 0.0
        %2448 = vmatpush1.xpose.msra.mxu0 0.0
        %2449 = vmatprep.subr.mxu0 0.0
        %2450 = vmatpush1.xpose.msra.mxu0 0.0
        %2451 = vmatprep.subr.mxu0 0.0
        %2452 = vmatpush1.xpose.msra.mxu0 0.0
        %2453 = vmatprep.subr.mxu0 0.0
        %2454 = vmatpush1.xpose.msra.mxu0 0.0
        %2455 = vmatprep.subr.mxu0 0.0
        %2456 = vmatpush1.xpose.msra.mxu0 0.0
        %2457 = vmatprep.subr.mxu0 0.0
        %2458 = vmatpush1.xpose.msra.mxu0 0.0
        %2459 = vmatprep.subr.mxu0 0.0
        %2460 = vmatpush1.xpose.msra.mxu0 0.0
        %2461 = vmatprep.subr.mxu0 0.0
        %2462 = vmatpush1.xpose.msra.mxu0 0.0
        %2463 = vmatprep.subr.mxu0 0.0
        %2464 = vmatpush1.xpose.msra.mxu0 %v2431
        %2465 = vmatprep.subr.mxu0 0.0
        %2466 = vmatpush2.xpose.msra.mxu0 0.0
        %2467 = vmatprep.subr.mxu0 0.0
        %2468 = vmatpush2.xpose.msra.mxu0 0.0
        %2469 = vmatprep.subr.mxu0 0.0
        %2470 = vmatpush2.xpose.msra.mxu0 0.0
        %2471 = vmatprep.subr.mxu0 0.0
        %2472 = vmatpush2.xpose.msra.mxu0 0.0
        %2473 = vmatprep.subr.mxu0 0.0
        %2474 = vmatpush2.xpose.msra.mxu0 0.0
        %2475 = vmatprep.subr.mxu0 0.0
        %2476 = vmatpush2.xpose.msra.mxu0 0.0
        %2477 = vmatprep.subr.mxu0 0.0
        %2478 = vmatpush2.xpose.msra.mxu0 0.0
        %2479 = vmatprep.subr.mxu0 0.0
        %2480 = vmatpush2.xpose.msra.mxu0 0.0
        %2481 = vmatprep.subr.mxu0 0.0
        %2482 = vmatpush2.xpose.msra.mxu0 0.0
        %2483 = vmatprep.subr.mxu0 0.0
        %2484 = vmatpush2.xpose.msra.mxu0 0.0
        %2485 = vmatprep.subr.mxu0 0.0
        %2486 = vmatpush2.xpose.msra.mxu0 0.0
        %2487 = vmatprep.subr.mxu0 0.0
        %2488 = vmatpush2.xpose.msra.mxu0 0.0
        %2489 = vmatprep.subr.mxu0 0.0
        %2490 = vmatpush2.xpose.msra.mxu0 0.0
        %2491 = vmatprep.subr.mxu0 0.0
        %2492 = vmatpush2.xpose.msra.mxu0 0.0
        %2493 = vmatprep.subr.mxu0 0.0
        %2494 = vmatpush2.xpose.msra.mxu0 0.0
        %2495 = vmatprep.subr.mxu0 0.0
        %2496 = vmatpush2.xpose.msra.mxu0 0.0
        %2497 = vmatprep.mubr.f32.mxu0 0.0
        %2498 = vmatmul.mubr.f32.gmra.mxu0 %v2428
        %v2499 = vpop.f32.mrf.mxu0
        %v2500 = vadd.f32 0.0, %v2499
        %v2501 = vpop.f32.mrf.mxu0
        %2502 = vdwg.mxu0
        %v2504 = vsel %vm2274, %v807, 0
        %v2507 = vsel %vm2274, %v1399, 0
        %2509 = vmatprep.subr.mxu0 0.0
        %2510 = vmatpush1.xpose.msra.mxu0 0.0
        %2511 = vmatprep.subr.mxu0 0.0
        %2512 = vmatpush1.xpose.msra.mxu0 0.0
        %2513 = vmatprep.subr.mxu0 0.0
        %2514 = vmatpush1.xpose.msra.mxu0 0.0
        %2515 = vmatprep.subr.mxu0 0.0
        %2516 = vmatpush1.xpose.msra.mxu0 0.0
        %2517 = vmatprep.subr.mxu0 0.0
        %2518 = vmatpush1.xpose.msra.mxu0 0.0
        %2519 = vmatprep.subr.mxu0 0.0
        %2520 = vmatpush1.xpose.msra.mxu0 0.0
        %2521 = vmatprep.subr.mxu0 0.0
        %2522 = vmatpush1.xpose.msra.mxu0 0.0
        %2523 = vmatprep.subr.mxu0 0.0
        %2524 = vmatpush1.xpose.msra.mxu0 0.0
        %2525 = vmatprep.subr.mxu0 0.0
        %2526 = vmatpush1.xpose.msra.mxu0 0.0
        %2527 = vmatprep.subr.mxu0 0.0
        %2528 = vmatpush1.xpose.msra.mxu0 0.0
        %2529 = vmatprep.subr.mxu0 0.0
        %2530 = vmatpush1.xpose.msra.mxu0 0.0
        %2531 = vmatprep.subr.mxu0 0.0
        %2532 = vmatpush1.xpose.msra.mxu0 0.0
        %2533 = vmatprep.subr.mxu0 0.0
        %2534 = vmatpush1.xpose.msra.mxu0 0.0
        %2535 = vmatprep.subr.mxu0 0.0
        %2536 = vmatpush1.xpose.msra.mxu0 0.0
        %2537 = vmatprep.subr.mxu0 0.0
        %2538 = vmatpush1.xpose.msra.mxu0 0.0
        %2539 = vmatprep.subr.mxu0 0.0
        %2540 = vmatpush1.xpose.msra.mxu0 %v2507
        %2541 = vmatprep.subr.mxu0 0.0
        %2542 = vmatpush2.xpose.msra.mxu0 0.0
        %2543 = vmatprep.subr.mxu0 0.0
        %2544 = vmatpush2.xpose.msra.mxu0 0.0
        %2545 = vmatprep.subr.mxu0 0.0
        %2546 = vmatpush2.xpose.msra.mxu0 0.0
        %2547 = vmatprep.subr.mxu0 0.0
        %2548 = vmatpush2.xpose.msra.mxu0 0.0
        %2549 = vmatprep.subr.mxu0 0.0
        %2550 = vmatpush2.xpose.msra.mxu0 0.0
        %2551 = vmatprep.subr.mxu0 0.0
        %2552 = vmatpush2.xpose.msra.mxu0 0.0
        %2553 = vmatprep.subr.mxu0 0.0
        %2554 = vmatpush2.xpose.msra.mxu0 0.0
        %2555 = vmatprep.subr.mxu0 0.0
        %2556 = vmatpush2.xpose.msra.mxu0 0.0
        %2557 = vmatprep.subr.mxu0 0.0
        %2558 = vmatpush2.xpose.msra.mxu0 0.0
        %2559 = vmatprep.subr.mxu0 0.0
        %2560 = vmatpush2.xpose.msra.mxu0 0.0
        %2561 = vmatprep.subr.mxu0 0.0
        %2562 = vmatpush2.xpose.msra.mxu0 0.0
        %2563 = vmatprep.subr.mxu0 0.0
        %2564 = vmatpush2.xpose.msra.mxu0 0.0
        %2565 = vmatprep.subr.mxu0 0.0
        %2566 = vmatpush2.xpose.msra.mxu0 0.0
        %2567 = vmatprep.subr.mxu0 0.0
        %2568 = vmatpush2.xpose.msra.mxu0 0.0
        %2569 = vmatprep.subr.mxu0 0.0
        %2570 = vmatpush2.xpose.msra.mxu0 0.0
        %2571 = vmatprep.subr.mxu0 0.0
        %2572 = vmatpush2.xpose.msra.mxu0 0.0
        %2573 = vmatprep.mubr.f32.mxu0 0.0
        %2574 = vmatmul.mubr.f32.gmra.mxu0 %v2504
        %v2575 = vpop.f32.mrf.mxu0
        %v2576 = vadd.f32 0.0, %v2575
        %v2577 = vpop.f32.mrf.mxu0
        %2578 = vdwg.mxu0
        %v2580 = vsel %vm2274, %v877, 0
        %v2583 = vsel %vm2274, %v1469, 0
        %2585 = vmatprep.subr.mxu0 0.0
        %2586 = vmatpush1.xpose.msra.mxu0 0.0
        %2587 = vmatprep.subr.mxu0 0.0
        %2588 = vmatpush1.xpose.msra.mxu0 0.0
        %2589 = vmatprep.subr.mxu0 0.0
        %2590 = vmatpush1.xpose.msra.mxu0 0.0
        %2591 = vmatprep.subr.mxu0 0.0
        %2592 = vmatpush1.xpose.msra.mxu0 0.0
        %2593 = vmatprep.subr.mxu0 0.0
        %2594 = vmatpush1.xpose.msra.mxu0 0.0
        %2595 = vmatprep.subr.mxu0 0.0
        %2596 = vmatpush1.xpose.msra.mxu0 0.0
        %2597 = vmatprep.subr.mxu0 0.0
        %2598 = vmatpush1.xpose.msra.mxu0 0.0
        %2599 = vmatprep.subr.mxu0 0.0
        %2600 = vmatpush1.xpose.msra.mxu0 0.0
        %2601 = vmatprep.subr.mxu0 0.0
        %2602 = vmatpush1.xpose.msra.mxu0 0.0
        %2603 = vmatprep.subr.mxu0 0.0
        %2604 = vmatpush1.xpose.msra.mxu0 0.0
        %2605 = vmatprep.subr.mxu0 0.0
        %2606 = vmatpush1.xpose.msra.mxu0 0.0
        %2607 = vmatprep.subr.mxu0 0.0
        %2608 = vmatpush1.xpose.msra.mxu0 0.0
        %2609 = vmatprep.subr.mxu0 0.0
        %2610 = vmatpush1.xpose.msra.mxu0 0.0
        %2611 = vmatprep.subr.mxu0 0.0
        %2612 = vmatpush1.xpose.msra.mxu0 0.0
        %2613 = vmatprep.subr.mxu0 0.0
        %2614 = vmatpush1.xpose.msra.mxu0 0.0
        %2615 = vmatprep.subr.mxu0 0.0
        %2616 = vmatpush1.xpose.msra.mxu0 %v2583
        %2617 = vmatprep.subr.mxu0 0.0
        %2618 = vmatpush2.xpose.msra.mxu0 0.0
        %2619 = vmatprep.subr.mxu0 0.0
        %2620 = vmatpush2.xpose.msra.mxu0 0.0
        %2621 = vmatprep.subr.mxu0 0.0
        %2622 = vmatpush2.xpose.msra.mxu0 0.0
        %2623 = vmatprep.subr.mxu0 0.0
        %2624 = vmatpush2.xpose.msra.mxu0 0.0
        %2625 = vmatprep.subr.mxu0 0.0
        %2626 = vmatpush2.xpose.msra.mxu0 0.0
        %2627 = vmatprep.subr.mxu0 0.0
        %2628 = vmatpush2.xpose.msra.mxu0 0.0
        %2629 = vmatprep.subr.mxu0 0.0
        %2630 = vmatpush2.xpose.msra.mxu0 0.0
        %2631 = vmatprep.subr.mxu0 0.0
        %2632 = vmatpush2.xpose.msra.mxu0 0.0
        %2633 = vmatprep.subr.mxu0 0.0
        %2634 = vmatpush2.xpose.msra.mxu0 0.0
        %2635 = vmatprep.subr.mxu0 0.0
        %2636 = vmatpush2.xpose.msra.mxu0 0.0
        %2637 = vmatprep.subr.mxu0 0.0
        %2638 = vmatpush2.xpose.msra.mxu0 0.0
        %2639 = vmatprep.subr.mxu0 0.0
        %2640 = vmatpush2.xpose.msra.mxu0 0.0
        %2641 = vmatprep.subr.mxu0 0.0
        %2642 = vmatpush2.xpose.msra.mxu0 0.0
        %2643 = vmatprep.subr.mxu0 0.0
        %2644 = vmatpush2.xpose.msra.mxu0 0.0
        %2645 = vmatprep.subr.mxu0 0.0
        %2646 = vmatpush2.xpose.msra.mxu0 0.0
        %2647 = vmatprep.subr.mxu0 0.0
        %2648 = vmatpush2.xpose.msra.mxu0 0.0
        %2649 = vmatprep.mubr.f32.mxu0 0.0
        %2650 = vmatmul.mubr.f32.gmra.mxu0 %v2580
        %v2651 = vpop.f32.mrf.mxu0
        %v2652 = vadd.f32 0.0, %v2651
        %v2653 = vpop.f32.mrf.mxu0
        %2654 = vdwg.mxu0
        %v2656 = vsel %vm2274, %v947, 0
        %v2659 = vsel %vm2274, %v1539, 0
        %2661 = vmatprep.subr.mxu0 0.0
        %2662 = vmatpush1.xpose.msra.mxu0 0.0
        %2663 = vmatprep.subr.mxu0 0.0
        %2664 = vmatpush1.xpose.msra.mxu0 0.0
        %2665 = vmatprep.subr.mxu0 0.0
        %2666 = vmatpush1.xpose.msra.mxu0 0.0
        %2667 = vmatprep.subr.mxu0 0.0
        %2668 = vmatpush1.xpose.msra.mxu0 0.0
        %2669 = vmatprep.subr.mxu0 0.0
        %2670 = vmatpush1.xpose.msra.mxu0 0.0
        %2671 = vmatprep.subr.mxu0 0.0
        %2672 = vmatpush1.xpose.msra.mxu0 0.0
        %2673 = vmatprep.subr.mxu0 0.0
        %2674 = vmatpush1.xpose.msra.mxu0 0.0
        %2675 = vmatprep.subr.mxu0 0.0
        %2676 = vmatpush1.xpose.msra.mxu0 0.0
        %2677 = vmatprep.subr.mxu0 0.0
        %2678 = vmatpush1.xpose.msra.mxu0 0.0
        %2679 = vmatprep.subr.mxu0 0.0
        %2680 = vmatpush1.xpose.msra.mxu0 0.0
        %2681 = vmatprep.subr.mxu0 0.0
        %2682 = vmatpush1.xpose.msra.mxu0 0.0
        %2683 = vmatprep.subr.mxu0 0.0
        %2684 = vmatpush1.xpose.msra.mxu0 0.0
        %2685 = vmatprep.subr.mxu0 0.0
        %2686 = vmatpush1.xpose.msra.mxu0 0.0
        %2687 = vmatprep.subr.mxu0 0.0
        %2688 = vmatpush1.xpose.msra.mxu0 0.0
        %2689 = vmatprep.subr.mxu0 0.0
        %2690 = vmatpush1.xpose.msra.mxu0 0.0
        %2691 = vmatprep.subr.mxu0 0.0
        %2692 = vmatpush1.xpose.msra.mxu0 %v2659
        %2693 = vmatprep.subr.mxu0 0.0
        %2694 = vmatpush2.xpose.msra.mxu0 0.0
        %2695 = vmatprep.subr.mxu0 0.0
        %2696 = vmatpush2.xpose.msra.mxu0 0.0
        %2697 = vmatprep.subr.mxu0 0.0
        %2698 = vmatpush2.xpose.msra.mxu0 0.0
        %2699 = vmatprep.subr.mxu0 0.0
        %2700 = vmatpush2.xpose.msra.mxu0 0.0
        %2701 = vmatprep.subr.mxu0 0.0
        %2702 = vmatpush2.xpose.msra.mxu0 0.0
        %2703 = vmatprep.subr.mxu0 0.0
        %2704 = vmatpush2.xpose.msra.mxu0 0.0
        %2705 = vmatprep.subr.mxu0 0.0
        %2706 = vmatpush2.xpose.msra.mxu0 0.0
        %2707 = vmatprep.subr.mxu0 0.0
        %2708 = vmatpush2.xpose.msra.mxu0 0.0
        %2709 = vmatprep.subr.mxu0 0.0
        %2710 = vmatpush2.xpose.msra.mxu0 0.0
        %2711 = vmatprep.subr.mxu0 0.0
        %2712 = vmatpush2.xpose.msra.mxu0 0.0
        %2713 = vmatprep.subr.mxu0 0.0
        %2714 = vmatpush2.xpose.msra.mxu0 0.0
        %2715 = vmatprep.subr.mxu0 0.0
        %2716 = vmatpush2.xpose.msra.mxu0 0.0
        %2717 = vmatprep.subr.mxu0 0.0
        %2718 = vmatpush2.xpose.msra.mxu0 0.0
        %2719 = vmatprep.subr.mxu0 0.0
        %2720 = vmatpush2.xpose.msra.mxu0 0.0
        %2721 = vmatprep.subr.mxu0 0.0
        %2722 = vmatpush2.xpose.msra.mxu0 0.0
        %2723 = vmatprep.subr.mxu0 0.0
        %2724 = vmatpush2.xpose.msra.mxu0 0.0
        %2725 = vmatprep.mubr.f32.mxu0 0.0
        %2726 = vmatmul.mubr.f32.gmra.mxu0 %v2656
        %v2727 = vpop.f32.mrf.mxu0
        %v2728 = vadd.f32 0.0, %v2727
        %v2729 = vpop.f32.mrf.mxu0
        %2730 = vdwg.mxu0
        %v2732 = vsel %vm2274, %v1017, 0
        %v2735 = vsel %vm2274, %v1609, 0
        %2737 = vmatprep.subr.mxu0 0.0
        %2738 = vmatpush1.xpose.msra.mxu0 0.0
        %2739 = vmatprep.subr.mxu0 0.0
        %2740 = vmatpush1.xpose.msra.mxu0 0.0
        %2741 = vmatprep.subr.mxu0 0.0
        %2742 = vmatpush1.xpose.msra.mxu0 0.0
        %2743 = vmatprep.subr.mxu0 0.0
        %2744 = vmatpush1.xpose.msra.mxu0 0.0
        %2745 = vmatprep.subr.mxu0 0.0
        %2746 = vmatpush1.xpose.msra.mxu0 0.0
        %2747 = vmatprep.subr.mxu0 0.0
        %2748 = vmatpush1.xpose.msra.mxu0 0.0
        %2749 = vmatprep.subr.mxu0 0.0
        %2750 = vmatpush1.xpose.msra.mxu0 0.0
        %2751 = vmatprep.subr.mxu0 0.0
        %2752 = vmatpush1.xpose.msra.mxu0 0.0
        %2753 = vmatprep.subr.mxu0 0.0
        %2754 = vmatpush1.xpose.msra.mxu0 0.0
        %2755 = vmatprep.subr.mxu0 0.0
        %2756 = vmatpush1.xpose.msra.mxu0 0.0
        %2757 = vmatprep.subr.mxu0 0.0
        %2758 = vmatpush1.xpose.msra.mxu0 0.0
        %2759 = vmatprep.subr.mxu0 0.0
        %2760 = vmatpush1.xpose.msra.mxu0 0.0
        %2761 = vmatprep.subr.mxu0 0.0
        %2762 = vmatpush1.xpose.msra.mxu0 0.0
        %2763 = vmatprep.subr.mxu0 0.0
        %2764 = vmatpush1.xpose.msra.mxu0 0.0
        %2765 = vmatprep.subr.mxu0 0.0
        %2766 = vmatpush1.xpose.msra.mxu0 0.0
        %2767 = vmatprep.subr.mxu0 0.0
        %2768 = vmatpush1.xpose.msra.mxu0 %v2735
        %2769 = vmatprep.subr.mxu0 0.0
        %2770 = vmatpush2.xpose.msra.mxu0 0.0
        %2771 = vmatprep.subr.mxu0 0.0
        %2772 = vmatpush2.xpose.msra.mxu0 0.0
        %2773 = vmatprep.subr.mxu0 0.0
        %2774 = vmatpush2.xpose.msra.mxu0 0.0
        %2775 = vmatprep.subr.mxu0 0.0
        %2776 = vmatpush2.xpose.msra.mxu0 0.0
        %2777 = vmatprep.subr.mxu0 0.0
        %2778 = vmatpush2.xpose.msra.mxu0 0.0
        %2779 = vmatprep.subr.mxu0 0.0
        %2780 = vmatpush2.xpose.msra.mxu0 0.0
        %2781 = vmatprep.subr.mxu0 0.0
        %2782 = vmatpush2.xpose.msra.mxu0 0.0
        %2783 = vmatprep.subr.mxu0 0.0
        %2784 = vmatpush2.xpose.msra.mxu0 0.0
        %2785 = vmatprep.subr.mxu0 0.0
        %2786 = vmatpush2.xpose.msra.mxu0 0.0
        %2787 = vmatprep.subr.mxu0 0.0
        %2788 = vmatpush2.xpose.msra.mxu0 0.0
        %2789 = vmatprep.subr.mxu0 0.0
        %2790 = vmatpush2.xpose.msra.mxu0 0.0
        %2791 = vmatprep.subr.mxu0 0.0
        %2792 = vmatpush2.xpose.msra.mxu0 0.0
        %2793 = vmatprep.subr.mxu0 0.0
        %2794 = vmatpush2.xpose.msra.mxu0 0.0
        %2795 = vmatprep.subr.mxu0 0.0
        %2796 = vmatpush2.xpose.msra.mxu0 0.0
        %2797 = vmatprep.subr.mxu0 0.0
        %2798 = vmatpush2.xpose.msra.mxu0 0.0
        %2799 = vmatprep.subr.mxu0 0.0
        %2800 = vmatpush2.xpose.msra.mxu0 0.0
        %2801 = vmatprep.mubr.f32.mxu0 0.0
        %2802 = vmatmul.mubr.f32.gmra.mxu0 %v2732
        %v2803 = vpop.f32.mrf.mxu0
        %v2804 = vadd.f32 0.0, %v2803
        %v2805 = vpop.f32.mrf.mxu0
        %2806 = vdwg.mxu0
        %v2808 = vsel %vm2274, %v1087, 0
        %v2811 = vsel %vm2274, %v1679, 0
        %2813 = vmatprep.subr.mxu0 0.0
        %2814 = vmatpush1.xpose.msra.mxu0 0.0
        %2815 = vmatprep.subr.mxu0 0.0
        %2816 = vmatpush1.xpose.msra.mxu0 0.0
        %2817 = vmatprep.subr.mxu0 0.0
        %2818 = vmatpush1.xpose.msra.mxu0 0.0
        %2819 = vmatprep.subr.mxu0 0.0
        %2820 = vmatpush1.xpose.msra.mxu0 0.0
        %2821 = vmatprep.subr.mxu0 0.0
        %2822 = vmatpush1.xpose.msra.mxu0 0.0
        %2823 = vmatprep.subr.mxu0 0.0
        %2824 = vmatpush1.xpose.msra.mxu0 0.0
        %2825 = vmatprep.subr.mxu0 0.0
        %2826 = vmatpush1.xpose.msra.mxu0 0.0
        %2827 = vmatprep.subr.mxu0 0.0
        %2828 = vmatpush1.xpose.msra.mxu0 0.0
        %2829 = vmatprep.subr.mxu0 0.0
        %2830 = vmatpush1.xpose.msra.mxu0 0.0
        %2831 = vmatprep.subr.mxu0 0.0
        %2832 = vmatpush1.xpose.msra.mxu0 0.0
        %2833 = vmatprep.subr.mxu0 0.0
        %2834 = vmatpush1.xpose.msra.mxu0 0.0
        %2835 = vmatprep.subr.mxu0 0.0
        %2836 = vmatpush1.xpose.msra.mxu0 0.0
        %2837 = vmatprep.subr.mxu0 0.0
        %2838 = vmatpush1.xpose.msra.mxu0 0.0
        %2839 = vmatprep.subr.mxu0 0.0
        %2840 = vmatpush1.xpose.msra.mxu0 0.0
        %2841 = vmatprep.subr.mxu0 0.0
        %2842 = vmatpush1.xpose.msra.mxu0 0.0
        %2843 = vmatprep.subr.mxu0 0.0
        %2844 = vmatpush1.xpose.msra.mxu0 %v2811
        %2845 = vmatprep.subr.mxu0 0.0
        %2846 = vmatpush2.xpose.msra.mxu0 0.0
        %2847 = vmatprep.subr.mxu0 0.0
        %2848 = vmatpush2.xpose.msra.mxu0 0.0
        %2849 = vmatprep.subr.mxu0 0.0
        %2850 = vmatpush2.xpose.msra.mxu0 0.0
        %2851 = vmatprep.subr.mxu0 0.0
        %2852 = vmatpush2.xpose.msra.mxu0 0.0
        %2853 = vmatprep.subr.mxu0 0.0
        %2854 = vmatpush2.xpose.msra.mxu0 0.0
        %2855 = vmatprep.subr.mxu0 0.0
        %2856 = vmatpush2.xpose.msra.mxu0 0.0
        %2857 = vmatprep.subr.mxu0 0.0
        %2858 = vmatpush2.xpose.msra.mxu0 0.0
        %2859 = vmatprep.subr.mxu0 0.0
        %2860 = vmatpush2.xpose.msra.mxu0 0.0
        %2861 = vmatprep.subr.mxu0 0.0
        %2862 = vmatpush2.xpose.msra.mxu0 0.0
        %2863 = vmatprep.subr.mxu0 0.0
        %2864 = vmatpush2.xpose.msra.mxu0 0.0
        %2865 = vmatprep.subr.mxu0 0.0
        %2866 = vmatpush2.xpose.msra.mxu0 0.0
        %2867 = vmatprep.subr.mxu0 0.0
        %2868 = vmatpush2.xpose.msra.mxu0 0.0
        %2869 = vmatprep.subr.mxu0 0.0
        %2870 = vmatpush2.xpose.msra.mxu0 0.0
        %2871 = vmatprep.subr.mxu0 0.0
        %2872 = vmatpush2.xpose.msra.mxu0 0.0
        %2873 = vmatprep.subr.mxu0 0.0
        %2874 = vmatpush2.xpose.msra.mxu0 0.0
        %2875 = vmatprep.subr.mxu0 0.0
        %2876 = vmatpush2.xpose.msra.mxu0 0.0
        %2877 = vmatprep.mubr.f32.mxu0 0.0
        %2878 = vmatmul.mubr.f32.gmra.mxu0 %v2808
        %v2879 = vpop.f32.mrf.mxu0
        %v2880 = vadd.f32 0.0, %v2879
        %v2881 = vpop.f32.mrf.mxu0
        %2882 = vdwg.mxu0
        %v2883 = vmul.f32 %v2348, 0.17677669
        %v2884 = vmul.f32 %v2424, 0.17677669
        %v2885 = vmul.f32 %v2500, 0.17677669
        %v2886 = vmul.f32 %v2576, 0.17677669
        %v2887 = vmul.f32 %v2652, 0.17677669
        %v2888 = vmul.f32 %v2728, 0.17677669
        %v2889 = vmul.f32 %v2804, 0.17677669
        %v2890 = vmul.f32 %v2880, 0.17677669
        %vm2891 = vcmask 64512
        %v2892 = vsel %vm2891, %v2883, -inf
        %2893 = vmax.xlane.f32.xlu0 %v2892
        %v2894 = vpop.xlane.xlu0 %2893
        %v2895 = vsel %vm2891, %v2884, -inf
        %2896 = vmax.xlane.f32.xlu0 %v2895
        %v2897 = vpop.xlane.xlu0 %2896
        %v2898 = vsel %vm2891, %v2885, -inf
        %2899 = vmax.xlane.f32.xlu0 %v2898
        %v2900 = vpop.xlane.xlu0 %2899
        %v2901 = vsel %vm2891, %v2886, -inf
        %2902 = vmax.xlane.f32.xlu0 %v2901
        %v2903 = vpop.xlane.xlu0 %2902
        %v2904 = vsel %vm2891, %v2887, -inf
        %2905 = vmax.xlane.f32.xlu0 %v2904
        %v2906 = vpop.xlane.xlu0 %2905
        %v2907 = vsel %vm2891, %v2888, -inf
        %2908 = vmax.xlane.f32.xlu0 %v2907
        %v2909 = vpop.xlane.xlu0 %2908
        %v2910 = vsel %vm2891, %v2889, -inf
        %2911 = vmax.xlane.f32.xlu0 %v2910
        %v2912 = vpop.xlane.xlu0 %2911
        %v2913 = vsel %vm2891, %v2890, -inf
        %2914 = vmax.xlane.f32.xlu0 %v2913
        %v2915 = vpop.xlane.xlu0 %2914
        %v2916 = vsub.f32 %v2883, %v2894
        %v2917 = vsub.f32 %v2884, %v2897
        %v2918 = vsub.f32 %v2885, %v2900
        %v2919 = vsub.f32 %v2886, %v2903
        %v2920 = vsub.f32 %v2887, %v2906
        %v2921 = vsub.f32 %v2888, %v2909
        %v2922 = vsub.f32 %v2889, %v2912
        %v2923 = vsub.f32 %v2890, %v2915
        %v2924 = vmul.f32 %v2916, 1.442695
        %v2925 = vpow.pop %v2924
        %v2926 = vmul.f32 %v2917, 1.442695
        %v2927 = vpow.pop %v2926
        %v2928 = vmul.f32 %v2918, 1.442695
        %v2929 = vpow.pop %v2928
        %v2930 = vmul.f32 %v2919, 1.442695
        %v2931 = vpow.pop %v2930
        %v2932 = vmul.f32 %v2920, 1.442695
        %v2933 = vpow.pop %v2932
        %v2934 = vmul.f32 %v2921, 1.442695
        %v2935 = vpow.pop %v2934
        %v2936 = vmul.f32 %v2922, 1.442695
        %v2937 = vpow.pop %v2936
        %v2938 = vmul.f32 %v2923, 1.442695
        %v2939 = vpow.pop %v2938
        %v2940 = vsel %vm2891, %v2925, 0.0
        %2941 = vadd.xlane.f32.xlu0 %v2940
        %v2942 = vpop.xlane.xlu0 %2941
        %v2943 = vsel %vm2891, %v2927, 0.0
        %2944 = vadd.xlane.f32.xlu0 %v2943
        %v2945 = vpop.xlane.xlu0 %2944
        %v2946 = vsel %vm2891, %v2929, 0.0
        %2947 = vadd.xlane.f32.xlu0 %v2946
        %v2948 = vpop.xlane.xlu0 %2947
        %v2949 = vsel %vm2891, %v2931, 0.0
        %2950 = vadd.xlane.f32.xlu0 %v2949
        %v2951 = vpop.xlane.xlu0 %2950
        %v2952 = vsel %vm2891, %v2933, 0.0
        %2953 = vadd.xlane.f32.xlu0 %v2952
        %v2954 = vpop.xlane.xlu0 %2953
        %v2955 = vsel %vm2891, %v2935, 0.0
        %2956 = vadd.xlane.f32.xlu0 %v2955
        %v2957 = vpop.xlane.xlu0 %2956
        %v2958 = vsel %vm2891, %v2937, 0.0
        %2959 = vadd.xlane.f32.xlu0 %v2958
        %v2960 = vpop.xlane.xlu0 %2959
        %v2961 = vsel %vm2891, %v2939, 0.0
        %2962 = vadd.xlane.f32.xlu0 %v2961
        %v2963 = vpop.xlane.xlu0 %2962
        %v2964 = vrcp.pop %v2942
        %v2965 = vrcp.pop %v2945
        %v2966 = vrcp.pop %v2948
        %v2967 = vrcp.pop %v2951
        %v2968 = vrcp.pop %v2954
        %v2969 = vrcp.pop %v2957
        %v2970 = vrcp.pop %v2960
        %v2971 = vrcp.pop %v2963
        %v2972 = vmul.f32 %v2925, %v2964
        %v2973 = vmul.f32 %v2927, %v2965
        %v2974 = vmul.f32 %v2929, %v2966
        %v2975 = vmul.f32 %v2931, %v2967
        %v2976 = vmul.f32 %v2933, %v2968
        %v2977 = vmul.f32 %v2935, %v2969
        %v2978 = vmul.f32 %v2937, %v2970
        %v2979 = vmul.f32 %v2939, %v2971
        %v2981 = vsel %vm2891, %v2972, 0
        %2983 = vmatprep.subr.mxu0 0.0
        %2984 = vmatpush1.msra.mxu0 0.0
        %2985 = vmatprep.subr.mxu0 0.0
        %2986 = vmatpush1.msra.mxu0 0.0
        %2987 = vmatprep.subr.mxu0 0.0
        %2988 = vmatpush1.msra.mxu0 0.0
        %2989 = vmatprep.subr.mxu0 0.0
        %2990 = vmatpush1.msra.mxu0 0.0
        %2991 = vmatprep.subr.mxu0 0.0
        %2992 = vmatpush1.msra.mxu0 0.0
        %2993 = vmatprep.subr.mxu0 0.0
        %2994 = vmatpush1.msra.mxu0 0.0
        %2995 = vmatprep.subr.mxu0 0.0
        %2996 = vmatpush1.msra.mxu0 0.0
        %2997 = vmatprep.subr.mxu0 0.0
        %2998 = vmatpush1.msra.mxu0 0.0
        %2999 = vmatprep.subr.mxu0 0.0
        %3000 = vmatpush1.msra.mxu0 0.0
        %3001 = vmatprep.subr.mxu0 0.0
        %3002 = vmatpush1.msra.mxu0 0.0
        %3003 = vmatprep.subr.mxu0 0.0
        %3004 = vmatpush1.msra.mxu0 0.0
        %3005 = vmatprep.subr.mxu0 0.0
        %3006 = vmatpush1.msra.mxu0 0.0
        %3007 = vmatprep.subr.mxu0 0.0
        %3008 = vmatpush1.msra.mxu0 0.0
        %3009 = vmatprep.subr.mxu0 0.0
        %3010 = vmatpush1.msra.mxu0 0.0
        %3011 = vmatprep.subr.mxu0 0.0
        %3012 = vmatpush1.msra.mxu0 0.0
        %3013 = vmatprep.subr.mxu0 0.0
        %3014 = vmatpush1.msra.mxu0 %v1781
        %3015 = vmatprep.subr.mxu0 0.0
        %3016 = vmatpush2.msra.mxu0 0.0
        %3017 = vmatprep.subr.mxu0 0.0
        %3018 = vmatpush2.msra.mxu0 0.0
        %3019 = vmatprep.subr.mxu0 0.0
        %3020 = vmatpush2.msra.mxu0 0.0
        %3021 = vmatprep.subr.mxu0 0.0
        %3022 = vmatpush2.msra.mxu0 0.0
        %3023 = vmatprep.subr.mxu0 0.0
        %3024 = vmatpush2.msra.mxu0 0.0
        %3025 = vmatprep.subr.mxu0 0.0
        %3026 = vmatpush2.msra.mxu0 0.0
        %3027 = vmatprep.subr.mxu0 0.0
        %3028 = vmatpush2.msra.mxu0 0.0
        %3029 = vmatprep.subr.mxu0 0.0
        %3030 = vmatpush2.msra.mxu0 0.0
        %3031 = vmatprep.subr.mxu0 0.0
        %3032 = vmatpush2.msra.mxu0 0.0
        %3033 = vmatprep.subr.mxu0 0.0
        %3034 = vmatpush2.msra.mxu0 0.0
        %3035 = vmatprep.subr.mxu0 0.0
        %3036 = vmatpush2.msra.mxu0 0.0
        %3037 = vmatprep.subr.mxu0 0.0
        %3038 = vmatpush2.msra.mxu0 0.0
        %3039 = vmatprep.subr.mxu0 0.0
        %3040 = vmatpush2.msra.mxu0 0.0
        %3041 = vmatprep.subr.mxu0 0.0
        %3042 = vmatpush2.msra.mxu0 0.0
        %3043 = vmatprep.subr.mxu0 0.0
        %3044 = vmatpush2.msra.mxu0 0.0
        %3045 = vmatprep.subr.mxu0 0.0
        %3046 = vmatpush2.msra.mxu0 0.0
        %3047 = vmatprep.mubr.f32.mxu0 0.0
        %3048 = vmatmul.mubr.f32.gmra.mxu0 %v2981
        %v3049 = vpop.f32.mrf.mxu0
        %v3050 = vadd.f32 0.0, %v3049
        %v3051 = vpop.f32.mrf.mxu0
        %3052 = vdwg.mxu0
        %v3054 = vsel %vm2891, %v2973, 0
        %3056 = vmatprep.subr.mxu0 0.0
        %3057 = vmatpush1.msra.mxu0 0.0
        %3058 = vmatprep.subr.mxu0 0.0
        %3059 = vmatpush1.msra.mxu0 0.0
        %3060 = vmatprep.subr.mxu0 0.0
        %3061 = vmatpush1.msra.mxu0 0.0
        %3062 = vmatprep.subr.mxu0 0.0
        %3063 = vmatpush1.msra.mxu0 0.0
        %3064 = vmatprep.subr.mxu0 0.0
        %3065 = vmatpush1.msra.mxu0 0.0
        %3066 = vmatprep.subr.mxu0 0.0
        %3067 = vmatpush1.msra.mxu0 0.0
        %3068 = vmatprep.subr.mxu0 0.0
        %3069 = vmatpush1.msra.mxu0 0.0
        %3070 = vmatprep.subr.mxu0 0.0
        %3071 = vmatpush1.msra.mxu0 0.0
        %3072 = vmatprep.subr.mxu0 0.0
        %3073 = vmatpush1.msra.mxu0 0.0
        %3074 = vmatprep.subr.mxu0 0.0
        %3075 = vmatpush1.msra.mxu0 0.0
        %3076 = vmatprep.subr.mxu0 0.0
        %3077 = vmatpush1.msra.mxu0 0.0
        %3078 = vmatprep.subr.mxu0 0.0
        %3079 = vmatpush1.msra.mxu0 0.0
        %3080 = vmatprep.subr.mxu0 0.0
        %3081 = vmatpush1.msra.mxu0 0.0
        %3082 = vmatprep.subr.mxu0 0.0
        %3083 = vmatpush1.msra.mxu0 0.0
        %3084 = vmatprep.subr.mxu0 0.0
        %3085 = vmatpush1.msra.mxu0 0.0
        %3086 = vmatprep.subr.mxu0 0.0
        %3087 = vmatpush1.msra.mxu0 %v1851
        %3088 = vmatprep.subr.mxu0 0.0
        %3089 = vmatpush2.msra.mxu0 0.0
        %3090 = vmatprep.subr.mxu0 0.0
        %3091 = vmatpush2.msra.mxu0 0.0
        %3092 = vmatprep.subr.mxu0 0.0
        %3093 = vmatpush2.msra.mxu0 0.0
        %3094 = vmatprep.subr.mxu0 0.0
        %3095 = vmatpush2.msra.mxu0 0.0
        %3096 = vmatprep.subr.mxu0 0.0
        %3097 = vmatpush2.msra.mxu0 0.0
        %3098 = vmatprep.subr.mxu0 0.0
        %3099 = vmatpush2.msra.mxu0 0.0
        %3100 = vmatprep.subr.mxu0 0.0
        %3101 = vmatpush2.msra.mxu0 0.0
        %3102 = vmatprep.subr.mxu0 0.0
        %3103 = vmatpush2.msra.mxu0 0.0
        %3104 = vmatprep.subr.mxu0 0.0
        %3105 = vmatpush2.msra.mxu0 0.0
        %3106 = vmatprep.subr.mxu0 0.0
        %3107 = vmatpush2.msra.mxu0 0.0
        %3108 = vmatprep.subr.mxu0 0.0
        %3109 = vmatpush2.msra.mxu0 0.0
        %3110 = vmatprep.subr.mxu0 0.0
        %3111 = vmatpush2.msra.mxu0 0.0
        %3112 = vmatprep.subr.mxu0 0.0
        %3113 = vmatpush2.msra.mxu0 0.0
        %3114 = vmatprep.subr.mxu0 0.0
        %3115 = vmatpush2.msra.mxu0 0.0
        %3116 = vmatprep.subr.mxu0 0.0
        %3117 = vmatpush2.msra.mxu0 0.0
        %3118 = vmatprep.subr.mxu0 0.0
        %3119 = vmatpush2.msra.mxu0 0.0
        %3120 = vmatprep.mubr.f32.mxu0 0.0
        %3121 = vmatmul.mubr.f32.gmra.mxu0 %v3054
        %v3122 = vpop.f32.mrf.mxu0
        %v3123 = vadd.f32 0.0, %v3122
        %v3124 = vpop.f32.mrf.mxu0
        %3125 = vdwg.mxu0
        %v3127 = vsel %vm2891, %v2974, 0
        %3129 = vmatprep.subr.mxu0 0.0
        %3130 = vmatpush1.msra.mxu0 0.0
        %3131 = vmatprep.subr.mxu0 0.0
        %3132 = vmatpush1.msra.mxu0 0.0
        %3133 = vmatprep.subr.mxu0 0.0
        %3134 = vmatpush1.msra.mxu0 0.0
        %3135 = vmatprep.subr.mxu0 0.0
        %3136 = vmatpush1.msra.mxu0 0.0
        %3137 = vmatprep.subr.mxu0 0.0
        %3138 = vmatpush1.msra.mxu0 0.0
        %3139 = vmatprep.subr.mxu0 0.0
        %3140 = vmatpush1.msra.mxu0 0.0
        %3141 = vmatprep.subr.mxu0 0.0
        %3142 = vmatpush1.msra.mxu0 0.0
        %3143 = vmatprep.subr.mxu0 0.0
        %3144 = vmatpush1.msra.mxu0 0.0
        %3145 = vmatprep.subr.mxu0 0.0
        %3146 = vmatpush1.msra.mxu0 0.0
        %3147 = vmatprep.subr.mxu0 0.0
        %3148 = vmatpush1.msra.mxu0 0.0
        %3149 = vmatprep.subr.mxu0 0.0
        %3150 = vmatpush1.msra.mxu0 0.0
        %3151 = vmatprep.subr.mxu0 0.0
        %3152 = vmatpush1.msra.mxu0 0.0
        %3153 = vmatprep.subr.mxu0 0.0
        %3154 = vmatpush1.msra.mxu0 0.0
        %3155 = vmatprep.subr.mxu0 0.0
        %3156 = vmatpush1.msra.mxu0 0.0
        %3157 = vmatprep.subr.mxu0 0.0
        %3158 = vmatpush1.msra.mxu0 0.0
        %3159 = vmatprep.subr.mxu0 0.0
        %3160 = vmatpush1.msra.mxu0 %v1921
        %3161 = vmatprep.subr.mxu0 0.0
        %3162 = vmatpush2.msra.mxu0 0.0
        %3163 = vmatprep.subr.mxu0 0.0
        %3164 = vmatpush2.msra.mxu0 0.0
        %3165 = vmatprep.subr.mxu0 0.0
        %3166 = vmatpush2.msra.mxu0 0.0
        %3167 = vmatprep.subr.mxu0 0.0
        %3168 = vmatpush2.msra.mxu0 0.0
        %3169 = vmatprep.subr.mxu0 0.0
        %3170 = vmatpush2.msra.mxu0 0.0
        %3171 = vmatprep.subr.mxu0 0.0
        %3172 = vmatpush2.msra.mxu0 0.0
        %3173 = vmatprep.subr.mxu0 0.0
        %3174 = vmatpush2.msra.mxu0 0.0
        %3175 = vmatprep.subr.mxu0 0.0
        %3176 = vmatpush2.msra.mxu0 0.0
        %3177 = vmatprep.subr.mxu0 0.0
        %3178 = vmatpush2.msra.mxu0 0.0
        %3179 = vmatprep.subr.mxu0 0.0
        %3180 = vmatpush2.msra.mxu0 0.0
        %3181 = vmatprep.subr.mxu0 0.0
        %3182 = vmatpush2.msra.mxu0 0.0
        %3183 = vmatprep.subr.mxu0 0.0
        %3184 = vmatpush2.msra.mxu0 0.0
        %3185 = vmatprep.subr.mxu0 0.0
        %3186 = vmatpush2.msra.mxu0 0.0
        %3187 = vmatprep.subr.mxu0 0.0
        %3188 = vmatpush2.msra.mxu0 0.0
        %3189 = vmatprep.subr.mxu0 0.0
        %3190 = vmatpush2.msra.mxu0 0.0
        %3191 = vmatprep.subr.mxu0 0.0
        %3192 = vmatpush2.msra.mxu0 0.0
        %3193 = vmatprep.mubr.f32.mxu0 0.0
        %3194 = vmatmul.mubr.f32.gmra.mxu0 %v3127
        %v3195 = vpop.f32.mrf.mxu0
        %v3196 = vadd.f32 0.0, %v3195
        %v3197 = vpop.f32.mrf.mxu0
        %3198 = vdwg.mxu0
        %v3200 = vsel %vm2891, %v2975, 0
        %3202 = vmatprep.subr.mxu0 0.0
        %3203 = vmatpush1.msra.mxu0 0.0
        %3204 = vmatprep.subr.mxu0 0.0
        %3205 = vmatpush1.msra.mxu0 0.0
        %3206 = vmatprep.subr.mxu0 0.0
        %3207 = vmatpush1.msra.mxu0 0.0
        %3208 = vmatprep.subr.mxu0 0.0
        %3209 = vmatpush1.msra.mxu0 0.0
        %3210 = vmatprep.subr.mxu0 0.0
        %3211 = vmatpush1.msra.mxu0 0.0
        %3212 = vmatprep.subr.mxu0 0.0
        %3213 = vmatpush1.msra.mxu0 0.0
        %3214 = vmatprep.subr.mxu0 0.0
        %3215 = vmatpush1.msra.mxu0 0.0
        %3216 = vmatprep.subr.mxu0 0.0
        %3217 = vmatpush1.msra.mxu0 0.0
        %3218 = vmatprep.subr.mxu0 0.0
        %3219 = vmatpush1.msra.mxu0 0.0
        %3220 = vmatprep.subr.mxu0 0.0
        %3221 = vmatpush1.msra.mxu0 0.0
        %3222 = vmatprep.subr.mxu0 0.0
        %3223 = vmatpush1.msra.mxu0 0.0
        %3224 = vmatprep.subr.mxu0 0.0
        %3225 = vmatpush1.msra.mxu0 0.0
        %3226 = vmatprep.subr.mxu0 0.0
        %3227 = vmatpush1.msra.mxu0 0.0
        %3228 = vmatprep.subr.mxu0 0.0
        %3229 = vmatpush1.msra.mxu0 0.0
        %3230 = vmatprep.subr.mxu0 0.0
        %3231 = vmatpush1.msra.mxu0 0.0
        %3232 = vmatprep.subr.mxu0 0.0
        %3233 = vmatpush1.msra.mxu0 %v1991
        %3234 = vmatprep.subr.mxu0 0.0
        %3235 = vmatpush2.msra.mxu0 0.0
        %3236 = vmatprep.subr.mxu0 0.0
        %3237 = vmatpush2.msra.mxu0 0.0
        %3238 = vmatprep.subr.mxu0 0.0
        %3239 = vmatpush2.msra.mxu0 0.0
        %3240 = vmatprep.subr.mxu0 0.0
        %3241 = vmatpush2.msra.mxu0 0.0
        %3242 = vmatprep.subr.mxu0 0.0
        %3243 = vmatpush2.msra.mxu0 0.0
        %3244 = vmatprep.subr.mxu0 0.0
        %3245 = vmatpush2.msra.mxu0 0.0
        %3246 = vmatprep.subr.mxu0 0.0
        %3247 = vmatpush2.msra.mxu0 0.0
        %3248 = vmatprep.subr.mxu0 0.0
        %3249 = vmatpush2.msra.mxu0 0.0
        %3250 = vmatprep.subr.mxu0 0.0
        %3251 = vmatpush2.msra.mxu0 0.0
        %3252 = vmatprep.subr.mxu0 0.0
        %3253 = vmatpush2.msra.mxu0 0.0
        %3254 = vmatprep.subr.mxu0 0.0
        %3255 = vmatpush2.msra.mxu0 0.0
        %3256 = vmatprep.subr.mxu0 0.0
        %3257 = vmatpush2.msra.mxu0 0.0
        %3258 = vmatprep.subr.mxu0 0.0
        %3259 = vmatpush2.msra.mxu0 0.0
        %3260 = vmatprep.subr.mxu0 0.0
        %3261 = vmatpush2.msra.mxu0 0.0
        %3262 = vmatprep.subr.mxu0 0.0
        %3263 = vmatpush2.msra.mxu0 0.0
        %3264 = vmatprep.subr.mxu0 0.0
        %3265 = vmatpush2.msra.mxu0 0.0
        %3266 = vmatprep.mubr.f32.mxu0 0.0
        %3267 = vmatmul.mubr.f32.gmra.mxu0 %v3200
        %v3268 = vpop.f32.mrf.mxu0
        %v3269 = vadd.f32 0.0, %v3268
        %v3270 = vpop.f32.mrf.mxu0
        %3271 = vdwg.mxu0
        %v3273 = vsel %vm2891, %v2976, 0
        %3275 = vmatprep.subr.mxu0 0.0
        %3276 = vmatpush1.msra.mxu0 0.0
        %3277 = vmatprep.subr.mxu0 0.0
        %3278 = vmatpush1.msra.mxu0 0.0
        %3279 = vmatprep.subr.mxu0 0.0
        %3280 = vmatpush1.msra.mxu0 0.0
        %3281 = vmatprep.subr.mxu0 0.0
        %3282 = vmatpush1.msra.mxu0 0.0
        %3283 = vmatprep.subr.mxu0 0.0
        %3284 = vmatpush1.msra.mxu0 0.0
        %3285 = vmatprep.subr.mxu0 0.0
        %3286 = vmatpush1.msra.mxu0 0.0
        %3287 = vmatprep.subr.mxu0 0.0
        %3288 = vmatpush1.msra.mxu0 0.0
        %3289 = vmatprep.subr.mxu0 0.0
        %3290 = vmatpush1.msra.mxu0 0.0
        %3291 = vmatprep.subr.mxu0 0.0
        %3292 = vmatpush1.msra.mxu0 0.0
        %3293 = vmatprep.subr.mxu0 0.0
        %3294 = vmatpush1.msra.mxu0 0.0
        %3295 = vmatprep.subr.mxu0 0.0
        %3296 = vmatpush1.msra.mxu0 0.0
        %3297 = vmatprep.subr.mxu0 0.0
        %3298 = vmatpush1.msra.mxu0 0.0
        %3299 = vmatprep.subr.mxu0 0.0
        %3300 = vmatpush1.msra.mxu0 0.0
        %3301 = vmatprep.subr.mxu0 0.0
        %3302 = vmatpush1.msra.mxu0 0.0
        %3303 = vmatprep.subr.mxu0 0.0
        %3304 = vmatpush1.msra.mxu0 0.0
        %3305 = vmatprep.subr.mxu0 0.0
        %3306 = vmatpush1.msra.mxu0 %v2061
        %3307 = vmatprep.subr.mxu0 0.0
        %3308 = vmatpush2.msra.mxu0 0.0
        %3309 = vmatprep.subr.mxu0 0.0
        %3310 = vmatpush2.msra.mxu0 0.0
        %3311 = vmatprep.subr.mxu0 0.0
        %3312 = vmatpush2.msra.mxu0 0.0
        %3313 = vmatprep.subr.mxu0 0.0
        %3314 = vmatpush2.msra.mxu0 0.0
        %3315 = vmatprep.subr.mxu0 0.0
        %3316 = vmatpush2.msra.mxu0 0.0
        %3317 = vmatprep.subr.mxu0 0.0
        %3318 = vmatpush2.msra.mxu0 0.0
        %3319 = vmatprep.subr.mxu0 0.0
        %3320 = vmatpush2.msra.mxu0 0.0
        %3321 = vmatprep.subr.mxu0 0.0
        %3322 = vmatpush2.msra.mxu0 0.0
        %3323 = vmatprep.subr.mxu0 0.0
        %3324 = vmatpush2.msra.mxu0 0.0
        %3325 = vmatprep.subr.mxu0 0.0
        %3326 = vmatpush2.msra.mxu0 0.0
        %3327 = vmatprep.subr.mxu0 0.0
        %3328 = vmatpush2.msra.mxu0 0.0
        %3329 = vmatprep.subr.mxu0 0.0
        %3330 = vmatpush2.msra.mxu0 0.0
        %3331 = vmatprep.subr.mxu0 0.0
        %3332 = vmatpush2.msra.mxu0 0.0
        %3333 = vmatprep.subr.mxu0 0.0
        %3334 = vmatpush2.msra.mxu0 0.0
        %3335 = vmatprep.subr.mxu0 0.0
        %3336 = vmatpush2.msra.mxu0 0.0
        %3337 = vmatprep.subr.mxu0 0.0
        %3338 = vmatpush2.msra.mxu0 0.0
        %3339 = vmatprep.mubr.f32.mxu0 0.0
        %3340 = vmatmul.mubr.f32.gmra.mxu0 %v3273
        %v3341 = vpop.f32.mrf.mxu0
        %v3342 = vadd.f32 0.0, %v3341
        %v3343 = vpop.f32.mrf.mxu0
        %3344 = vdwg.mxu0
        %v3346 = vsel %vm2891, %v2977, 0
        %3348 = vmatprep.subr.mxu0 0.0
        %3349 = vmatpush1.msra.mxu0 0.0
        %3350 = vmatprep.subr.mxu0 0.0
        %3351 = vmatpush1.msra.mxu0 0.0
        %3352 = vmatprep.subr.mxu0 0.0
        %3353 = vmatpush1.msra.mxu0 0.0
        %3354 = vmatprep.subr.mxu0 0.0
        %3355 = vmatpush1.msra.mxu0 0.0
        %3356 = vmatprep.subr.mxu0 0.0
        %3357 = vmatpush1.msra.mxu0 0.0
        %3358 = vmatprep.subr.mxu0 0.0
        %3359 = vmatpush1.msra.mxu0 0.0
        %3360 = vmatprep.subr.mxu0 0.0
        %3361 = vmatpush1.msra.mxu0 0.0
        %3362 = vmatprep.subr.mxu0 0.0
        %3363 = vmatpush1.msra.mxu0 0.0
        %3364 = vmatprep.subr.mxu0 0.0
        %3365 = vmatpush1.msra.mxu0 0.0
        %3366 = vmatprep.subr.mxu0 0.0
        %3367 = vmatpush1.msra.mxu0 0.0
        %3368 = vmatprep.subr.mxu0 0.0
        %3369 = vmatpush1.msra.mxu0 0.0
        %3370 = vmatprep.subr.mxu0 0.0
        %3371 = vmatpush1.msra.mxu0 0.0
        %3372 = vmatprep.subr.mxu0 0.0
        %3373 = vmatpush1.msra.mxu0 0.0
        %3374 = vmatprep.subr.mxu0 0.0
        %3375 = vmatpush1.msra.mxu0 0.0
        %3376 = vmatprep.subr.mxu0 0.0
        %3377 = vmatpush1.msra.mxu0 0.0
        %3378 = vmatprep.subr.mxu0 0.0
        %3379 = vmatpush1.msra.mxu0 %v2131
        %3380 = vmatprep.subr.mxu0 0.0
        %3381 = vmatpush2.msra.mxu0 0.0
        %3382 = vmatprep.subr.mxu0 0.0
        %3383 = vmatpush2.msra.mxu0 0.0
        %3384 = vmatprep.subr.mxu0 0.0
        %3385 = vmatpush2.msra.mxu0 0.0
        %3386 = vmatprep.subr.mxu0 0.0
        %3387 = vmatpush2.msra.mxu0 0.0
        %3388 = vmatprep.subr.mxu0 0.0
        %3389 = vmatpush2.msra.mxu0 0.0
        %3390 = vmatprep.subr.mxu0 0.0
        %3391 = vmatpush2.msra.mxu0 0.0
        %3392 = vmatprep.subr.mxu0 0.0
        %3393 = vmatpush2.msra.mxu0 0.0
        %3394 = vmatprep.subr.mxu0 0.0
        %3395 = vmatpush2.msra.mxu0 0.0
        %3396 = vmatprep.subr.mxu0 0.0
        %3397 = vmatpush2.msra.mxu0 0.0
        %3398 = vmatprep.subr.mxu0 0.0
        %3399 = vmatpush2.msra.mxu0 0.0
        %3400 = vmatprep.subr.mxu0 0.0
        %3401 = vmatpush2.msra.mxu0 0.0
        %3402 = vmatprep.subr.mxu0 0.0
        %3403 = vmatpush2.msra.mxu0 0.0
        %3404 = vmatprep.subr.mxu0 0.0
        %3405 = vmatpush2.msra.mxu0 0.0
        %3406 = vmatprep.subr.mxu0 0.0
        %3407 = vmatpush2.msra.mxu0 0.0
        %3408 = vmatprep.subr.mxu0 0.0
        %3409 = vmatpush2.msra.mxu0 0.0
        %3410 = vmatprep.subr.mxu0 0.0
        %3411 = vmatpush2.msra.mxu0 0.0
        %3412 = vmatprep.mubr.f32.mxu0 0.0
        %3413 = vmatmul.mubr.f32.gmra.mxu0 %v3346
        %v3414 = vpop.f32.mrf.mxu0
        %v3415 = vadd.f32 0.0, %v3414
        %v3416 = vpop.f32.mrf.mxu0
        %3417 = vdwg.mxu0
        %v3419 = vsel %vm2891, %v2978, 0
        %3421 = vmatprep.subr.mxu0 0.0
        %3422 = vmatpush1.msra.mxu0 0.0
        %3423 = vmatprep.subr.mxu0 0.0
        %3424 = vmatpush1.msra.mxu0 0.0
        %3425 = vmatprep.subr.mxu0 0.0
        %3426 = vmatpush1.msra.mxu0 0.0
        %3427 = vmatprep.subr.mxu0 0.0
        %3428 = vmatpush1.msra.mxu0 0.0
        %3429 = vmatprep.subr.mxu0 0.0
        %3430 = vmatpush1.msra.mxu0 0.0
        %3431 = vmatprep.subr.mxu0 0.0
        %3432 = vmatpush1.msra.mxu0 0.0
        %3433 = vmatprep.subr.mxu0 0.0
        %3434 = vmatpush1.msra.mxu0 0.0
        %3435 = vmatprep.subr.mxu0 0.0
        %3436 = vmatpush1.msra.mxu0 0.0
        %3437 = vmatprep.subr.mxu0 0.0
        %3438 = vmatpush1.msra.mxu0 0.0
        %3439 = vmatprep.subr.mxu0 0.0
        %3440 = vmatpush1.msra.mxu0 0.0
        %3441 = vmatprep.subr.mxu0 0.0
        %3442 = vmatpush1.msra.mxu0 0.0
        %3443 = vmatprep.subr.mxu0 0.0
        %3444 = vmatpush1.msra.mxu0 0.0
        %3445 = vmatprep.subr.mxu0 0.0
        %3446 = vmatpush1.msra.mxu0 0.0
        %3447 = vmatprep.subr.mxu0 0.0
        %3448 = vmatpush1.msra.mxu0 0.0
        %3449 = vmatprep.subr.mxu0 0.0
        %3450 = vmatpush1.msra.mxu0 0.0
        %3451 = vmatprep.subr.mxu0 0.0
        %3452 = vmatpush1.msra.mxu0 %v2201
        %3453 = vmatprep.subr.mxu0 0.0
        %3454 = vmatpush2.msra.mxu0 0.0
        %3455 = vmatprep.subr.mxu0 0.0
        %3456 = vmatpush2.msra.mxu0 0.0
        %3457 = vmatprep.subr.mxu0 0.0
        %3458 = vmatpush2.msra.mxu0 0.0
        %3459 = vmatprep.subr.mxu0 0.0
        %3460 = vmatpush2.msra.mxu0 0.0
        %3461 = vmatprep.subr.mxu0 0.0
        %3462 = vmatpush2.msra.mxu0 0.0
        %3463 = vmatprep.subr.mxu0 0.0
        %3464 = vmatpush2.msra.mxu0 0.0
        %3465 = vmatprep.subr.mxu0 0.0
        %3466 = vmatpush2.msra.mxu0 0.0
        %3467 = vmatprep.subr.mxu0 0.0
        %3468 = vmatpush2.msra.mxu0 0.0
        %3469 = vmatprep.subr.mxu0 0.0
        %3470 = vmatpush2.msra.mxu0 0.0
        %3471 = vmatprep.subr.mxu0 0.0
        %3472 = vmatpush2.msra.mxu0 0.0
        %3473 = vmatprep.subr.mxu0 0.0
        %3474 = vmatpush2.msra.mxu0 0.0
        %3475 = vmatprep.subr.mxu0 0.0
        %3476 = vmatpush2.msra.mxu0 0.0
        %3477 = vmatprep.subr.mxu0 0.0
        %3478 = vmatpush2.msra.mxu0 0.0
        %3479 = vmatprep.subr.mxu0 0.0
        %3480 = vmatpush2.msra.mxu0 0.0
        %3481 = vmatprep.subr.mxu0 0.0
        %3482 = vmatpush2.msra.mxu0 0.0
        %3483 = vmatprep.subr.mxu0 0.0
        %3484 = vmatpush2.msra.mxu0 0.0
        %3485 = vmatprep.mubr.f32.mxu0 0.0
        %3486 = vmatmul.mubr.f32.gmra.mxu0 %v3419
        %v3487 = vpop.f32.mrf.mxu0
        %v3488 = vadd.f32 0.0, %v3487
        %v3489 = vpop.f32.mrf.mxu0
        %3490 = vdwg.mxu0
        %v3492 = vsel %vm2891, %v2979, 0
        %3494 = vmatprep.subr.mxu0 0.0
        %3495 = vmatpush1.msra.mxu0 0.0
        %3496 = vmatprep.subr.mxu0 0.0
        %3497 = vmatpush1.msra.mxu0 0.0
        %3498 = vmatprep.subr.mxu0 0.0
        %3499 = vmatpush1.msra.mxu0 0.0
        %3500 = vmatprep.subr.mxu0 0.0
        %3501 = vmatpush1.msra.mxu0 0.0
        %3502 = vmatprep.subr.mxu0 0.0
        %3503 = vmatpush1.msra.mxu0 0.0
        %3504 = vmatprep.subr.mxu0 0.0
        %3505 = vmatpush1.msra.mxu0 0.0
        %3506 = vmatprep.subr.mxu0 0.0
        %3507 = vmatpush1.msra.mxu0 0.0
        %3508 = vmatprep.subr.mxu0 0.0
        %3509 = vmatpush1.msra.mxu0 0.0
        %3510 = vmatprep.subr.mxu0 0.0
        %3511 = vmatpush1.msra.mxu0 0.0
        %3512 = vmatprep.subr.mxu0 0.0
        %3513 = vmatpush1.msra.mxu0 0.0
        %3514 = vmatprep.subr.mxu0 0.0
        %3515 = vmatpush1.msra.mxu0 0.0
        %3516 = vmatprep.subr.mxu0 0.0
        %3517 = vmatpush1.msra.mxu0 0.0
        %3518 = vmatprep.subr.mxu0 0.0
        %3519 = vmatpush1.msra.mxu0 0.0
        %3520 = vmatprep.subr.mxu0 0.0
        %3521 = vmatpush1.msra.mxu0 0.0
        %3522 = vmatprep.subr.mxu0 0.0
        %3523 = vmatpush1.msra.mxu0 0.0
        %3524 = vmatprep.subr.mxu0 0.0
        %3525 = vmatpush1.msra.mxu0 %v2271
        %3526 = vmatprep.subr.mxu0 0.0
        %3527 = vmatpush2.msra.mxu0 0.0
        %3528 = vmatprep.subr.mxu0 0.0
        %3529 = vmatpush2.msra.mxu0 0.0
        %3530 = vmatprep.subr.mxu0 0.0
        %3531 = vmatpush2.msra.mxu0 0.0
        %3532 = vmatprep.subr.mxu0 0.0
        %3533 = vmatpush2.msra.mxu0 0.0
        %3534 = vmatprep.subr.mxu0 0.0
        %3535 = vmatpush2.msra.mxu0 0.0
        %3536 = vmatprep.subr.mxu0 0.0
        %3537 = vmatpush2.msra.mxu0 0.0
        %3538 = vmatprep.subr.mxu0 0.0
        %3539 = vmatpush2.msra.mxu0 0.0
        %3540 = vmatprep.subr.mxu0 0.0
        %3541 = vmatpush2.msra.mxu0 0.0
        %3542 = vmatprep.subr.mxu0 0.0
        %3543 = vmatpush2.msra.mxu0 0.0
        %3544 = vmatprep.subr.mxu0 0.0
        %3545 = vmatpush2.msra.mxu0 0.0
        %3546 = vmatprep.subr.mxu0 0.0
        %3547 = vmatpush2.msra.mxu0 0.0
        %3548 = vmatprep.subr.mxu0 0.0
        %3549 = vmatpush2.msra.mxu0 0.0
        %3550 = vmatprep.subr.mxu0 0.0
        %3551 = vmatpush2.msra.mxu0 0.0
        %3552 = vmatprep.subr.mxu0 0.0
        %3553 = vmatpush2.msra.mxu0 0.0
        %3554 = vmatprep.subr.mxu0 0.0
        %3555 = vmatpush2.msra.mxu0 0.0
        %3556 = vmatprep.subr.mxu0 0.0
        %3557 = vmatpush2.msra.mxu0 0.0
        %3558 = vmatprep.mubr.f32.mxu0 0.0
        %3559 = vmatmul.mubr.f32.gmra.mxu0 %v3492
        %v3560 = vpop.f32.mrf.mxu0
        %v3561 = vadd.f32 0.0, %v3560
        %v3562 = vpop.f32.mrf.mxu0
        %3563 = vdwg.mxu0
        %v3564 = vld [vmem:[%s6] sm:$0xf]
        %v3565 = vld [vmem:[%s6 + $0x4] sm:$0xf]
        %v3566 = vld [vmem:[%s6 + $0x8] sm:$0xf]
        %v3567 = vld [vmem:[%s6 + $0xc] sm:$0xf]
        %v3568 = vld [vmem:[%s6 + $0x10] sm:$0xf]
        %v3569 = vld [vmem:[%s6 + $0x14] sm:$0xf]
        %v3570 = vld [vmem:[%s6 + $0x18] sm:$0xf]
        %v3571 = vld [vmem:[%s6 + $0x1c] sm:$0xf]
        %v3573 = vsel %vm2274, %v3050, 0
        %vm3575 = vcmask 1043456
        %v3577 = vsel %vm3575, %v3564, 0
        %3579 = vmatprep.subr.mxu0 0.0
        %3580 = vmatpush1.msra.mxu0 0.0
        %3581 = vmatprep.subr.mxu0 0.0
        %3582 = vmatpush1.msra.mxu0 0.0
        %3583 = vmatprep.subr.mxu0 0.0
        %3584 = vmatpush1.msra.mxu0 0.0
        %3585 = vmatprep.subr.mxu0 0.0
        %3586 = vmatpush1.msra.mxu0 0.0
        %3587 = vmatprep.subr.mxu0 0.0
        %3588 = vmatpush1.msra.mxu0 0.0
        %3589 = vmatprep.subr.mxu0 0.0
        %3590 = vmatpush1.msra.mxu0 0.0
        %3591 = vmatprep.subr.mxu0 0.0
        %3592 = vmatpush1.msra.mxu0 0.0
        %3593 = vmatprep.subr.mxu0 0.0
        %3594 = vmatpush1.msra.mxu0 0.0
        %3595 = vmatprep.subr.mxu0 0.0
        %3596 = vmatpush1.msra.mxu0 0.0
        %3597 = vmatprep.subr.mxu0 0.0
        %3598 = vmatpush1.msra.mxu0 0.0
        %3599 = vmatprep.subr.mxu0 0.0
        %3600 = vmatpush1.msra.mxu0 0.0
        %3601 = vmatprep.subr.mxu0 0.0
        %3602 = vmatpush1.msra.mxu0 0.0
        %3603 = vmatprep.subr.mxu0 0.0
        %3604 = vmatpush1.msra.mxu0 0.0
        %3605 = vmatprep.subr.mxu0 0.0
        %3606 = vmatpush1.msra.mxu0 0.0
        %3607 = vmatprep.subr.mxu0 0.0
        %3608 = vmatpush1.msra.mxu0 0.0
        %3609 = vmatprep.subr.mxu0 0.0
        %3610 = vmatpush1.msra.mxu0 %v3577
        %3611 = vmatprep.subr.mxu0 0.0
        %3612 = vmatpush2.msra.mxu0 0.0
        %3613 = vmatprep.subr.mxu0 0.0
        %3614 = vmatpush2.msra.mxu0 0.0
        %3615 = vmatprep.subr.mxu0 0.0
        %3616 = vmatpush2.msra.mxu0 0.0
        %3617 = vmatprep.subr.mxu0 0.0
        %3618 = vmatpush2.msra.mxu0 0.0
        %3619 = vmatprep.subr.mxu0 0.0
        %3620 = vmatpush2.msra.mxu0 0.0
        %3621 = vmatprep.subr.mxu0 0.0
        %3622 = vmatpush2.msra.mxu0 0.0
        %3623 = vmatprep.subr.mxu0 0.0
        %3624 = vmatpush2.msra.mxu0 0.0
        %3625 = vmatprep.subr.mxu0 0.0
        %3626 = vmatpush2.msra.mxu0 0.0
        %3627 = vmatprep.subr.mxu0 0.0
        %3628 = vmatpush2.msra.mxu0 0.0
        %3629 = vmatprep.subr.mxu0 0.0
        %3630 = vmatpush2.msra.mxu0 0.0
        %3631 = vmatprep.subr.mxu0 0.0
        %3632 = vmatpush2.msra.mxu0 0.0
        %3633 = vmatprep.subr.mxu0 0.0
        %3634 = vmatpush2.msra.mxu0 0.0
        %3635 = vmatprep.subr.mxu0 0.0
        %3636 = vmatpush2.msra.mxu0 0.0
        %3637 = vmatprep.subr.mxu0 0.0
        %3638 = vmatpush2.msra.mxu0 0.0
        %3639 = vmatprep.subr.mxu0 0.0
        %3640 = vmatpush2.msra.mxu0 0.0
        %3641 = vmatprep.subr.mxu0 0.0
        %3642 = vmatpush2.msra.mxu0 0.0
        %3643 = vmatprep.mubr.f32.mxu0 0.0
        %3644 = vmatmul.mubr.f32.gmra.mxu0 %v3573
        %v3645 = vpop.f32.mrf.mxu0
        %v3646 = vadd.f32 0.0, %v3645
        %v3647 = vpop.f32.mrf.mxu0
        %3648 = vdwg.mxu0
        %v3650 = vsel %vm2274, %v3123, 0
        %v3653 = vsel %vm3575, %v3565, 0
        %3655 = vmatprep.subr.mxu0 0.0
        %3656 = vmatpush1.msra.mxu0 0.0
        %3657 = vmatprep.subr.mxu0 0.0
        %3658 = vmatpush1.msra.mxu0 0.0
        %3659 = vmatprep.subr.mxu0 0.0
        %3660 = vmatpush1.msra.mxu0 0.0
        %3661 = vmatprep.subr.mxu0 0.0
        %3662 = vmatpush1.msra.mxu0 0.0
        %3663 = vmatprep.subr.mxu0 0.0
        %3664 = vmatpush1.msra.mxu0 0.0
        %3665 = vmatprep.subr.mxu0 0.0
        %3666 = vmatpush1.msra.mxu0 0.0
        %3667 = vmatprep.subr.mxu0 0.0
        %3668 = vmatpush1.msra.mxu0 0.0
        %3669 = vmatprep.subr.mxu0 0.0
        %3670 = vmatpush1.msra.mxu0 0.0
        %3671 = vmatprep.subr.mxu0 0.0
        %3672 = vmatpush1.msra.mxu0 0.0
        %3673 = vmatprep.subr.mxu0 0.0
        %3674 = vmatpush1.msra.mxu0 0.0
        %3675 = vmatprep.subr.mxu0 0.0
        %3676 = vmatpush1.msra.mxu0 0.0
        %3677 = vmatprep.subr.mxu0 0.0
        %3678 = vmatpush1.msra.mxu0 0.0
        %3679 = vmatprep.subr.mxu0 0.0
        %3680 = vmatpush1.msra.mxu0 0.0
        %3681 = vmatprep.subr.mxu0 0.0
        %3682 = vmatpush1.msra.mxu0 0.0
        %3683 = vmatprep.subr.mxu0 0.0
        %3684 = vmatpush1.msra.mxu0 0.0
        %3685 = vmatprep.subr.mxu0 0.0
        %3686 = vmatpush1.msra.mxu0 %v3653
        %3687 = vmatprep.subr.mxu0 0.0
        %3688 = vmatpush2.msra.mxu0 0.0
        %3689 = vmatprep.subr.mxu0 0.0
        %3690 = vmatpush2.msra.mxu0 0.0
        %3691 = vmatprep.subr.mxu0 0.0
        %3692 = vmatpush2.msra.mxu0 0.0
        %3693 = vmatprep.subr.mxu0 0.0
        %3694 = vmatpush2.msra.mxu0 0.0
        %3695 = vmatprep.subr.mxu0 0.0
        %3696 = vmatpush2.msra.mxu0 0.0
        %3697 = vmatprep.subr.mxu0 0.0
        %3698 = vmatpush2.msra.mxu0 0.0
        %3699 = vmatprep.subr.mxu0 0.0
        %3700 = vmatpush2.msra.mxu0 0.0
        %3701 = vmatprep.subr.mxu0 0.0
        %3702 = vmatpush2.msra.mxu0 0.0
        %3703 = vmatprep.subr.mxu0 0.0
        %3704 = vmatpush2.msra.mxu0 0.0
        %3705 = vmatprep.subr.mxu0 0.0
        %3706 = vmatpush2.msra.mxu0 0.0
        %3707 = vmatprep.subr.mxu0 0.0
        %3708 = vmatpush2.msra.mxu0 0.0
        %3709 = vmatprep.subr.mxu0 0.0
        %3710 = vmatpush2.msra.mxu0 0.0
        %3711 = vmatprep.subr.mxu0 0.0
        %3712 = vmatpush2.msra.mxu0 0.0
        %3713 = vmatprep.subr.mxu0 0.0
        %3714 = vmatpush2.msra.mxu0 0.0
        %3715 = vmatprep.subr.mxu0 0.0
        %3716 = vmatpush2.msra.mxu0 0.0
        %3717 = vmatprep.subr.mxu0 0.0
        %3718 = vmatpush2.msra.mxu0 0.0
        %3719 = vmatprep.mubr.f32.mxu0 0.0
        %3720 = vmatmul.mubr.f32.gmra.mxu0 %v3650
        %v3721 = vpop.f32.mrf.mxu0
        %v3722 = vadd.f32 0.0, %v3721
        %v3723 = vpop.f32.mrf.mxu0
        %3724 = vdwg.mxu0
        %v3726 = vsel %vm2274, %v3196, 0
        %v3729 = vsel %vm3575, %v3566, 0
        %3731 = vmatprep.subr.mxu0 0.0
        %3732 = vmatpush1.msra.mxu0 0.0
        %3733 = vmatprep.subr.mxu0 0.0
        %3734 = vmatpush1.msra.mxu0 0.0
        %3735 = vmatprep.subr.mxu0 0.0
        %3736 = vmatpush1.msra.mxu0 0.0
        %3737 = vmatprep.subr.mxu0 0.0
        %3738 = vmatpush1.msra.mxu0 0.0
        %3739 = vmatprep.subr.mxu0 0.0
        %3740 = vmatpush1.msra.mxu0 0.0
        %3741 = vmatprep.subr.mxu0 0.0
        %3742 = vmatpush1.msra.mxu0 0.0
        %3743 = vmatprep.subr.mxu0 0.0
        %3744 = vmatpush1.msra.mxu0 0.0
        %3745 = vmatprep.subr.mxu0 0.0
        %3746 = vmatpush1.msra.mxu0 0.0
        %3747 = vmatprep.subr.mxu0 0.0
        %3748 = vmatpush1.msra.mxu0 0.0
        %3749 = vmatprep.subr.mxu0 0.0
        %3750 = vmatpush1.msra.mxu0 0.0
        %3751 = vmatprep.subr.mxu0 0.0
        %3752 = vmatpush1.msra.mxu0 0.0
        %3753 = vmatprep.subr.mxu0 0.0
        %3754 = vmatpush1.msra.mxu0 0.0
        %3755 = vmatprep.subr.mxu0 0.0
        %3756 = vmatpush1.msra.mxu0 0.0
        %3757 = vmatprep.subr.mxu0 0.0
        %3758 = vmatpush1.msra.mxu0 0.0
        %3759 = vmatprep.subr.mxu0 0.0
        %3760 = vmatpush1.msra.mxu0 0.0
        %3761 = vmatprep.subr.mxu0 0.0
        %3762 = vmatpush1.msra.mxu0 %v3729
        %3763 = vmatprep.subr.mxu0 0.0
        %3764 = vmatpush2.msra.mxu0 0.0
        %3765 = vmatprep.subr.mxu0 0.0
        %3766 = vmatpush2.msra.mxu0 0.0
        %3767 = vmatprep.subr.mxu0 0.0
        %3768 = vmatpush2.msra.mxu0 0.0
        %3769 = vmatprep.subr.mxu0 0.0
        %3770 = vmatpush2.msra.mxu0 0.0
        %3771 = vmatprep.subr.mxu0 0.0
        %3772 = vmatpush2.msra.mxu0 0.0
        %3773 = vmatprep.subr.mxu0 0.0
        %3774 = vmatpush2.msra.mxu0 0.0
        %3775 = vmatprep.subr.mxu0 0.0
        %3776 = vmatpush2.msra.mxu0 0.0
        %3777 = vmatprep.subr.mxu0 0.0
        %3778 = vmatpush2.msra.mxu0 0.0
        %3779 = vmatprep.subr.mxu0 0.0
        %3780 = vmatpush2.msra.mxu0 0.0
        %3781 = vmatprep.subr.mxu0 0.0
        %3782 = vmatpush2.msra.mxu0 0.0
        %3783 = vmatprep.subr.mxu0 0.0
        %3784 = vmatpush2.msra.mxu0 0.0
        %3785 = vmatprep.subr.mxu0 0.0
        %3786 = vmatpush2.msra.mxu0 0.0
        %3787 = vmatprep.subr.mxu0 0.0
        %3788 = vmatpush2.msra.mxu0 0.0
        %3789 = vmatprep.subr.mxu0 0.0
        %3790 = vmatpush2.msra.mxu0 0.0
        %3791 = vmatprep.subr.mxu0 0.0
        %3792 = vmatpush2.msra.mxu0 0.0
        %3793 = vmatprep.subr.mxu0 0.0
        %3794 = vmatpush2.msra.mxu0 0.0
        %3795 = vmatprep.mubr.f32.mxu0 0.0
        %3796 = vmatmul.mubr.f32.gmra.mxu0 %v3726
        %v3797 = vpop.f32.mrf.mxu0
        %v3798 = vadd.f32 0.0, %v3797
        %v3799 = vpop.f32.mrf.mxu0
        %3800 = vdwg.mxu0
        %v3802 = vsel %vm2274, %v3269, 0
        %v3805 = vsel %vm3575, %v3567, 0
        %3807 = vmatprep.subr.mxu0 0.0
        %3808 = vmatpush1.msra.mxu0 0.0
        %3809 = vmatprep.subr.mxu0 0.0
        %3810 = vmatpush1.msra.mxu0 0.0
        %3811 = vmatprep.subr.mxu0 0.0
        %3812 = vmatpush1.msra.mxu0 0.0
        %3813 = vmatprep.subr.mxu0 0.0
        %3814 = vmatpush1.msra.mxu0 0.0
        %3815 = vmatprep.subr.mxu0 0.0
        %3816 = vmatpush1.msra.mxu0 0.0
        %3817 = vmatprep.subr.mxu0 0.0
        %3818 = vmatpush1.msra.mxu0 0.0
        %3819 = vmatprep.subr.mxu0 0.0
        %3820 = vmatpush1.msra.mxu0 0.0
        %3821 = vmatprep.subr.mxu0 0.0
        %3822 = vmatpush1.msra.mxu0 0.0
        %3823 = vmatprep.subr.mxu0 0.0
        %3824 = vmatpush1.msra.mxu0 0.0
        %3825 = vmatprep.subr.mxu0 0.0
        %3826 = vmatpush1.msra.mxu0 0.0
        %3827 = vmatprep.subr.mxu0 0.0
        %3828 = vmatpush1.msra.mxu0 0.0
        %3829 = vmatprep.subr.mxu0 0.0
        %3830 = vmatpush1.msra.mxu0 0.0
        %3831 = vmatprep.subr.mxu0 0.0
        %3832 = vmatpush1.msra.mxu0 0.0
        %3833 = vmatprep.subr.mxu0 0.0
        %3834 = vmatpush1.msra.mxu0 0.0
        %3835 = vmatprep.subr.mxu0 0.0
        %3836 = vmatpush1.msra.mxu0 0.0
        %3837 = vmatprep.subr.mxu0 0.0
        %3838 = vmatpush1.msra.mxu0 %v3805
        %3839 = vmatprep.subr.mxu0 0.0
        %3840 = vmatpush2.msra.mxu0 0.0
        %3841 = vmatprep.subr.mxu0 0.0
        %3842 = vmatpush2.msra.mxu0 0.0
        %3843 = vmatprep.subr.mxu0 0.0
        %3844 = vmatpush2.msra.mxu0 0.0
        %3845 = vmatprep.subr.mxu0 0.0
        %3846 = vmatpush2.msra.mxu0 0.0
        %3847 = vmatprep.subr.mxu0 0.0
        %3848 = vmatpush2.msra.mxu0 0.0
        %3849 = vmatprep.subr.mxu0 0.0
        %3850 = vmatpush2.msra.mxu0 0.0
        %3851 = vmatprep.subr.mxu0 0.0
        %3852 = vmatpush2.msra.mxu0 0.0
        %3853 = vmatprep.subr.mxu0 0.0
        %3854 = vmatpush2.msra.mxu0 0.0
        %3855 = vmatprep.subr.mxu0 0.0
        %3856 = vmatpush2.msra.mxu0 0.0
        %3857 = vmatprep.subr.mxu0 0.0
        %3858 = vmatpush2.msra.mxu0 0.0
        %3859 = vmatprep.subr.mxu0 0.0
        %3860 = vmatpush2.msra.mxu0 0.0
        %3861 = vmatprep.subr.mxu0 0.0
        %3862 = vmatpush2.msra.mxu0 0.0
        %3863 = vmatprep.subr.mxu0 0.0
        %3864 = vmatpush2.msra.mxu0 0.0
        %3865 = vmatprep.subr.mxu0 0.0
        %3866 = vmatpush2.msra.mxu0 0.0
        %3867 = vmatprep.subr.mxu0 0.0
        %3868 = vmatpush2.msra.mxu0 0.0
        %3869 = vmatprep.subr.mxu0 0.0
        %3870 = vmatpush2.msra.mxu0 0.0
        %3871 = vmatprep.mubr.f32.mxu0 0.0
        %3872 = vmatmul.mubr.f32.gmra.mxu0 %v3802
        %v3873 = vpop.f32.mrf.mxu0
        %v3874 = vadd.f32 0.0, %v3873
        %v3875 = vpop.f32.mrf.mxu0
        %3876 = vdwg.mxu0
        %v3878 = vsel %vm2274, %v3342, 0
        %v3881 = vsel %vm3575, %v3568, 0
        %3883 = vmatprep.subr.mxu0 0.0
        %3884 = vmatpush1.msra.mxu0 0.0
        %3885 = vmatprep.subr.mxu0 0.0
        %3886 = vmatpush1.msra.mxu0 0.0
        %3887 = vmatprep.subr.mxu0 0.0
        %3888 = vmatpush1.msra.mxu0 0.0
        %3889 = vmatprep.subr.mxu0 0.0
        %3890 = vmatpush1.msra.mxu0 0.0
        %3891 = vmatprep.subr.mxu0 0.0
        %3892 = vmatpush1.msra.mxu0 0.0
        %3893 = vmatprep.subr.mxu0 0.0
        %3894 = vmatpush1.msra.mxu0 0.0
        %3895 = vmatprep.subr.mxu0 0.0
        %3896 = vmatpush1.msra.mxu0 0.0
        %3897 = vmatprep.subr.mxu0 0.0
        %3898 = vmatpush1.msra.mxu0 0.0
        %3899 = vmatprep.subr.mxu0 0.0
        %3900 = vmatpush1.msra.mxu0 0.0
        %3901 = vmatprep.subr.mxu0 0.0
        %3902 = vmatpush1.msra.mxu0 0.0
        %3903 = vmatprep.subr.mxu0 0.0
        %3904 = vmatpush1.msra.mxu0 0.0
        %3905 = vmatprep.subr.mxu0 0.0
        %3906 = vmatpush1.msra.mxu0 0.0
        %3907 = vmatprep.subr.mxu0 0.0
        %3908 = vmatpush1.msra.mxu0 0.0
        %3909 = vmatprep.subr.mxu0 0.0
        %3910 = vmatpush1.msra.mxu0 0.0
        %3911 = vmatprep.subr.mxu0 0.0
        %3912 = vmatpush1.msra.mxu0 0.0
        %3913 = vmatprep.subr.mxu0 0.0
        %3914 = vmatpush1.msra.mxu0 %v3881
        %3915 = vmatprep.subr.mxu0 0.0
        %3916 = vmatpush2.msra.mxu0 0.0
        %3917 = vmatprep.subr.mxu0 0.0
        %3918 = vmatpush2.msra.mxu0 0.0
        %3919 = vmatprep.subr.mxu0 0.0
        %3920 = vmatpush2.msra.mxu0 0.0
        %3921 = vmatprep.subr.mxu0 0.0
        %3922 = vmatpush2.msra.mxu0 0.0
        %3923 = vmatprep.subr.mxu0 0.0
        %3924 = vmatpush2.msra.mxu0 0.0
        %3925 = vmatprep.subr.mxu0 0.0
        %3926 = vmatpush2.msra.mxu0 0.0
        %3927 = vmatprep.subr.mxu0 0.0
        %3928 = vmatpush2.msra.mxu0 0.0
        %3929 = vmatprep.subr.mxu0 0.0
        %3930 = vmatpush2.msra.mxu0 0.0
        %3931 = vmatprep.subr.mxu0 0.0
        %3932 = vmatpush2.msra.mxu0 0.0
        %3933 = vmatprep.subr.mxu0 0.0
        %3934 = vmatpush2.msra.mxu0 0.0
        %3935 = vmatprep.subr.mxu0 0.0
        %3936 = vmatpush2.msra.mxu0 0.0
        %3937 = vmatprep.subr.mxu0 0.0
        %3938 = vmatpush2.msra.mxu0 0.0
        %3939 = vmatprep.subr.mxu0 0.0
        %3940 = vmatpush2.msra.mxu0 0.0
        %3941 = vmatprep.subr.mxu0 0.0
        %3942 = vmatpush2.msra.mxu0 0.0
        %3943 = vmatprep.subr.mxu0 0.0
        %3944 = vmatpush2.msra.mxu0 0.0
        %3945 = vmatprep.subr.mxu0 0.0
        %3946 = vmatpush2.msra.mxu0 0.0
        %3947 = vmatprep.mubr.f32.mxu0 0.0
        %3948 = vmatmul.mubr.f32.gmra.mxu0 %v3878
        %v3949 = vpop.f32.mrf.mxu0
        %v3950 = vadd.f32 0.0, %v3949
        %v3951 = vpop.f32.mrf.mxu0
        %3952 = vdwg.mxu0
        %v3954 = vsel %vm2274, %v3415, 0
        %v3957 = vsel %vm3575, %v3569, 0
        %3959 = vmatprep.subr.mxu0 0.0
        %3960 = vmatpush1.msra.mxu0 0.0
        %3961 = vmatprep.subr.mxu0 0.0
        %3962 = vmatpush1.msra.mxu0 0.0
        %3963 = vmatprep.subr.mxu0 0.0
        %3964 = vmatpush1.msra.mxu0 0.0
        %3965 = vmatprep.subr.mxu0 0.0
        %3966 = vmatpush1.msra.mxu0 0.0
        %3967 = vmatprep.subr.mxu0 0.0
        %3968 = vmatpush1.msra.mxu0 0.0
        %3969 = vmatprep.subr.mxu0 0.0
        %3970 = vmatpush1.msra.mxu0 0.0
        %3971 = vmatprep.subr.mxu0 0.0
        %3972 = vmatpush1.msra.mxu0 0.0
        %3973 = vmatprep.subr.mxu0 0.0
        %3974 = vmatpush1.msra.mxu0 0.0
        %3975 = vmatprep.subr.mxu0 0.0
        %3976 = vmatpush1.msra.mxu0 0.0
        %3977 = vmatprep.subr.mxu0 0.0
        %3978 = vmatpush1.msra.mxu0 0.0
        %3979 = vmatprep.subr.mxu0 0.0
        %3980 = vmatpush1.msra.mxu0 0.0
        %3981 = vmatprep.subr.mxu0 0.0
        %3982 = vmatpush1.msra.mxu0 0.0
        %3983 = vmatprep.subr.mxu0 0.0
        %3984 = vmatpush1.msra.mxu0 0.0
        %3985 = vmatprep.subr.mxu0 0.0
        %3986 = vmatpush1.msra.mxu0 0.0
        %3987 = vmatprep.subr.mxu0 0.0
        %3988 = vmatpush1.msra.mxu0 0.0
        %3989 = vmatprep.subr.mxu0 0.0
        %3990 = vmatpush1.msra.mxu0 %v3957
        %3991 = vmatprep.subr.mxu0 0.0
        %3992 = vmatpush2.msra.mxu0 0.0
        %3993 = vmatprep.subr.mxu0 0.0
        %3994 = vmatpush2.msra.mxu0 0.0
        %3995 = vmatprep.subr.mxu0 0.0
        %3996 = vmatpush2.msra.mxu0 0.0
        %3997 = vmatprep.subr.mxu0 0.0
        %3998 = vmatpush2.msra.mxu0 0.0
        %3999 = vmatprep.subr.mxu0 0.0
        %4000 = vmatpush2.msra.mxu0 0.0
        %4001 = vmatprep.subr.mxu0 0.0
        %4002 = vmatpush2.msra.mxu0 0.0
        %4003 = vmatprep.subr.mxu0 0.0
        %4004 = vmatpush2.msra.mxu0 0.0
        %4005 = vmatprep.subr.mxu0 0.0
        %4006 = vmatpush2.msra.mxu0 0.0
        %4007 = vmatprep.subr.mxu0 0.0
        %4008 = vmatpush2.msra.mxu0 0.0
        %4009 = vmatprep.subr.mxu0 0.0
        %4010 = vmatpush2.msra.mxu0 0.0
        %4011 = vmatprep.subr.mxu0 0.0
        %4012 = vmatpush2.msra.mxu0 0.0
        %4013 = vmatprep.subr.mxu0 0.0
        %4014 = vmatpush2.msra.mxu0 0.0
        %4015 = vmatprep.subr.mxu0 0.0
        %4016 = vmatpush2.msra.mxu0 0.0
        %4017 = vmatprep.subr.mxu0 0.0
        %4018 = vmatpush2.msra.mxu0 0.0
        %4019 = vmatprep.subr.mxu0 0.0
        %4020 = vmatpush2.msra.mxu0 0.0
        %4021 = vmatprep.subr.mxu0 0.0
        %4022 = vmatpush2.msra.mxu0 0.0
        %4023 = vmatprep.mubr.f32.mxu0 0.0
        %4024 = vmatmul.mubr.f32.gmra.mxu0 %v3954
        %v4025 = vpop.f32.mrf.mxu0
        %v4026 = vadd.f32 0.0, %v4025
        %v4027 = vpop.f32.mrf.mxu0
        %4028 = vdwg.mxu0
        %v4030 = vsel %vm2274, %v3488, 0
        %v4033 = vsel %vm3575, %v3570, 0
        %4035 = vmatprep.subr.mxu0 0.0
        %4036 = vmatpush1.msra.mxu0 0.0
        %4037 = vmatprep.subr.mxu0 0.0
        %4038 = vmatpush1.msra.mxu0 0.0
        %4039 = vmatprep.subr.mxu0 0.0
        %4040 = vmatpush1.msra.mxu0 0.0
        %4041 = vmatprep.subr.mxu0 0.0
        %4042 = vmatpush1.msra.mxu0 0.0
        %4043 = vmatprep.subr.mxu0 0.0
        %4044 = vmatpush1.msra.mxu0 0.0
        %4045 = vmatprep.subr.mxu0 0.0
        %4046 = vmatpush1.msra.mxu0 0.0
        %4047 = vmatprep.subr.mxu0 0.0
        %4048 = vmatpush1.msra.mxu0 0.0
        %4049 = vmatprep.subr.mxu0 0.0
        %4050 = vmatpush1.msra.mxu0 0.0
        %4051 = vmatprep.subr.mxu0 0.0
        %4052 = vmatpush1.msra.mxu0 0.0
        %4053 = vmatprep.subr.mxu0 0.0
        %4054 = vmatpush1.msra.mxu0 0.0
        %4055 = vmatprep.subr.mxu0 0.0
        %4056 = vmatpush1.msra.mxu0 0.0
        %4057 = vmatprep.subr.mxu0 0.0
        %4058 = vmatpush1.msra.mxu0 0.0
        %4059 = vmatprep.subr.mxu0 0.0
        %4060 = vmatpush1.msra.mxu0 0.0
        %4061 = vmatprep.subr.mxu0 0.0
        %4062 = vmatpush1.msra.mxu0 0.0
        %4063 = vmatprep.subr.mxu0 0.0
        %4064 = vmatpush1.msra.mxu0 0.0
        %4065 = vmatprep.subr.mxu0 0.0
        %4066 = vmatpush1.msra.mxu0 %v4033
        %4067 = vmatprep.subr.mxu0 0.0
        %4068 = vmatpush2.msra.mxu0 0.0
        %4069 = vmatprep.subr.mxu0 0.0
        %4070 = vmatpush2.msra.mxu0 0.0
        %4071 = vmatprep.subr.mxu0 0.0
        %4072 = vmatpush2.msra.mxu0 0.0
        %4073 = vmatprep.subr.mxu0 0.0
        %4074 = vmatpush2.msra.mxu0 0.0
        %4075 = vmatprep.subr.mxu0 0.0
        %4076 = vmatpush2.msra.mxu0 0.0
        %4077 = vmatprep.subr.mxu0 0.0
        %4078 = vmatpush2.msra.mxu0 0.0
        %4079 = vmatprep.subr.mxu0 0.0
        %4080 = vmatpush2.msra.mxu0 0.0
        %4081 = vmatprep.subr.mxu0 0.0
        %4082 = vmatpush2.msra.mxu0 0.0
        %4083 = vmatprep.subr.mxu0 0.0
        %4084 = vmatpush2.msra.mxu0 0.0
        %4085 = vmatprep.subr.mxu0 0.0
        %4086 = vmatpush2.msra.mxu0 0.0
        %4087 = vmatprep.subr.mxu0 0.0
        %4088 = vmatpush2.msra.mxu0 0.0
        %4089 = vmatprep.subr.mxu0 0.0
        %4090 = vmatpush2.msra.mxu0 0.0
        %4091 = vmatprep.subr.mxu0 0.0
        %4092 = vmatpush2.msra.mxu0 0.0
        %4093 = vmatprep.subr.mxu0 0.0
        %4094 = vmatpush2.msra.mxu0 0.0
        %4095 = vmatprep.subr.mxu0 0.0
        %4096 = vmatpush2.msra.mxu0 0.0
        %4097 = vmatprep.subr.mxu0 0.0
        %4098 = vmatpush2.msra.mxu0 0.0
        %4099 = vmatprep.mubr.f32.mxu0 0.0
        %4100 = vmatmul.mubr.f32.gmra.mxu0 %v4030
        %v4101 = vpop.f32.mrf.mxu0
        %v4102 = vadd.f32 0.0, %v4101
        %v4103 = vpop.f32.mrf.mxu0
        %4104 = vdwg.mxu0
        %v4106 = vsel %vm2274, %v3561, 0
        %v4109 = vsel %vm3575, %v3571, 0
        %4111 = vmatprep.subr.mxu0 0.0
        %4112 = vmatpush1.msra.mxu0 0.0
        %4113 = vmatprep.subr.mxu0 0.0
        %4114 = vmatpush1.msra.mxu0 0.0
        %4115 = vmatprep.subr.mxu0 0.0
        %4116 = vmatpush1.msra.mxu0 0.0
        %4117 = vmatprep.subr.mxu0 0.0
        %4118 = vmatpush1.msra.mxu0 0.0
        %4119 = vmatprep.subr.mxu0 0.0
        %4120 = vmatpush1.msra.mxu0 0.0
        %4121 = vmatprep.subr.mxu0 0.0
        %4122 = vmatpush1.msra.mxu0 0.0
        %4123 = vmatprep.subr.mxu0 0.0
        %4124 = vmatpush1.msra.mxu0 0.0
        %4125 = vmatprep.subr.mxu0 0.0
        %4126 = vmatpush1.msra.mxu0 0.0
        %4127 = vmatprep.subr.mxu0 0.0
        %4128 = vmatpush1.msra.mxu0 0.0
        %4129 = vmatprep.subr.mxu0 0.0
        %4130 = vmatpush1.msra.mxu0 0.0
        %4131 = vmatprep.subr.mxu0 0.0
        %4132 = vmatpush1.msra.mxu0 0.0
        %4133 = vmatprep.subr.mxu0 0.0
        %4134 = vmatpush1.msra.mxu0 0.0
        %4135 = vmatprep.subr.mxu0 0.0
        %4136 = vmatpush1.msra.mxu0 0.0
        %4137 = vmatprep.subr.mxu0 0.0
        %4138 = vmatpush1.msra.mxu0 0.0
        %4139 = vmatprep.subr.mxu0 0.0
        %4140 = vmatpush1.msra.mxu0 0.0
        %4141 = vmatprep.subr.mxu0 0.0
        %4142 = vmatpush1.msra.mxu0 %v4109
        %4143 = vmatprep.subr.mxu0 0.0
        %4144 = vmatpush2.msra.mxu0 0.0
        %4145 = vmatprep.subr.mxu0 0.0
        %4146 = vmatpush2.msra.mxu0 0.0
        %4147 = vmatprep.subr.mxu0 0.0
        %4148 = vmatpush2.msra.mxu0 0.0
        %4149 = vmatprep.subr.mxu0 0.0
        %4150 = vmatpush2.msra.mxu0 0.0
        %4151 = vmatprep.subr.mxu0 0.0
        %4152 = vmatpush2.msra.mxu0 0.0
        %4153 = vmatprep.subr.mxu0 0.0
        %4154 = vmatpush2.msra.mxu0 0.0
        %4155 = vmatprep.subr.mxu0 0.0
        %4156 = vmatpush2.msra.mxu0 0.0
        %4157 = vmatprep.subr.mxu0 0.0
        %4158 = vmatpush2.msra.mxu0 0.0
        %4159 = vmatprep.subr.mxu0 0.0
        %4160 = vmatpush2.msra.mxu0 0.0
        %4161 = vmatprep.subr.mxu0 0.0
        %4162 = vmatpush2.msra.mxu0 0.0
        %4163 = vmatprep.subr.mxu0 0.0
        %4164 = vmatpush2.msra.mxu0 0.0
        %4165 = vmatprep.subr.mxu0 0.0
        %4166 = vmatpush2.msra.mxu0 0.0
        %4167 = vmatprep.subr.mxu0 0.0
        %4168 = vmatpush2.msra.mxu0 0.0
        %4169 = vmatprep.subr.mxu0 0.0
        %4170 = vmatpush2.msra.mxu0 0.0
        %4171 = vmatprep.subr.mxu0 0.0
        %4172 = vmatpush2.msra.mxu0 0.0
        %4173 = vmatprep.subr.mxu0 0.0
        %4174 = vmatpush2.msra.mxu0 0.0
        %4175 = vmatprep.mubr.f32.mxu0 0.0
        %4176 = vmatmul.mubr.f32.gmra.mxu0 %v4106
        %v4177 = vpop.f32.mrf.mxu0
        %v4178 = vadd.f32 0.0, %v4177
        %v4179 = vpop.f32.mrf.mxu0
        %4180 = vdwg.mxu0
        %v4181 = vsel %vm466, %v3646, 0.0
        %v4182 = vsel %vm466, %v3722, 0.0
        %v4183 = vadd.f32 %v4181, %v4182
        %v4184 = vsel %vm466, %v3798, 0.0
        %v4185 = vadd.f32 %v4183, %v4184
        %v4186 = vsel %vm466, %v3874, 0.0
        %v4187 = vadd.f32 %v4185, %v4186
        %v4188 = vsel %vm466, %v3950, 0.0
        %v4189 = vadd.f32 %v4187, %v4188
        %v4190 = vsel %vm466, %v4026, 0.0
        %v4191 = vadd.f32 %v4189, %v4190
        %v4192 = vsel %vm466, %v4102, 0.0
        %v4193 = vadd.f32 %v4191, %v4192
        %v4194 = vsel %vm466, %v4178, 0.0
        %v4195 = vadd.f32 %v4193, %v4194
        %v4196 = vld [vmem:[%s7] sm:$0x1]
        %v4198 = vlaneseq
        %v4199 = vshrl.u32 %v4198, 7
        %v4200 = vsub.s32 0, %v4199
        %v4201 = vrot.slane %v4196, %v4200
        %v4203 = vadd.f32 %v4195, %v4201
        %v4204 = vadd.f32 %v4203, %v463
        %v4205 = vld [vmem:[%s8] sm:$0x1]
        %v4206 = vld [vmem:[%s9] sm:$0x1]
        %v4207 = vsel %vm466, %v4204, 0.0
        %4208 = vadd.xlane.f32.xlu0 %v4207
        %v4209 = vpop.xlane.xlu0 %4208
        %v4210 = vmul.f32 %v4209, %v470
        %v4211 = vsub.f32 %v4204, %v4210
        %v4212 = vmul.f32 %v4211, %v4211
        %v4213 = vsel %vm466, %v4212, 0.0
        %4214 = vadd.xlane.f32.xlu0 %v4213
        %v4215 = vpop.xlane.xlu0 %4214
        %v4216 = vmul.f32 %v4215, %v470
        %v4217 = vadd.f32 %v4216, 1e-05
        %v4218 = vrsqrt.pop %v4217
        %v4219 = vmul.f32 %v4211, %v4218
        %v4221 = vlaneseq
        %v4222 = vshrl.u32 %v4221, 7
        %v4223 = vsub.s32 0, %v4222
        %v4224 = vrot.slane %v4205, %v4223
        %v4226 = vmul.f32 %v4219, %v4224
        %v4228 = vlaneseq
        %v4229 = vshrl.u32 %v4228, 7
        %v4230 = vsub.s32 0, %v4229
        %v4231 = vrot.slane %v4206, %v4230
        %v4233 = vadd.f32 %v4226, %v4231
        %v4234 = vld [vmem:[%s10] sm:$0xff]
        %v4235 = vld [vmem:[%s10 + $0x8] sm:$0xff]
        %v4236 = vld [vmem:[%s10 + $0x10] sm:$0xff]
        %v4237 = vld [vmem:[%s10 + $0x18] sm:$0xff]
        %v4238 = vld [vmem:[%s11] sm:$0x1]
        %v4240 = vlaneseq
        %v4241 = vshrl.u32 %v4240, 7
        %v4242 = vsub.s32 0, %v4241
        %v4243 = vrot.slane %v4238, %v4242
        %v4246 = vsel %vm466, %v4233, 0
        %4248 = vmatprep.subr.mxu0 0.0
        %4249 = vmatpush1.msra.mxu0 0.0
        %4250 = vmatprep.subr.mxu0 0.0
        %4251 = vmatpush1.msra.mxu0 0.0
        %4252 = vmatprep.subr.mxu0 0.0
        %4253 = vmatpush1.msra.mxu0 0.0
        %4254 = vmatprep.subr.mxu0 0.0
        %4255 = vmatpush1.msra.mxu0 0.0
        %4256 = vmatprep.subr.mxu0 0.0
        %4257 = vmatpush1.msra.mxu0 0.0
        %4258 = vmatprep.subr.mxu0 0.0
        %4259 = vmatpush1.msra.mxu0 0.0
        %4260 = vmatprep.subr.mxu0 0.0
        %4261 = vmatpush1.msra.mxu0 0.0
        %4262 = vmatprep.subr.mxu0 0.0
        %4263 = vmatpush1.msra.mxu0 0.0
        %4264 = vmatprep.subr.mxu0 0.0
        %4265 = vmatpush1.msra.mxu0 0.0
        %4266 = vmatprep.subr.mxu0 0.0
        %4267 = vmatpush1.msra.mxu0 0.0
        %4268 = vmatprep.subr.mxu0 0.0
        %4269 = vmatpush1.msra.mxu0 0.0
        %4270 = vmatprep.subr.mxu0 0.0
        %4271 = vmatpush1.msra.mxu0 0.0
        %4272 = vmatprep.subr.mxu0 0.0
        %4273 = vmatpush1.msra.mxu0 %v4237
        %4274 = vmatprep.subr.mxu0 0.0
        %4275 = vmatpush1.msra.mxu0 %v4236
        %4276 = vmatprep.subr.mxu0 0.0
        %4277 = vmatpush1.msra.mxu0 %v4235
        %4278 = vmatprep.subr.mxu0 0.0
        %4279 = vmatpush1.msra.mxu0 %v4234
        %4280 = vmatprep.subr.mxu0 0.0
        %4281 = vmatpush2.msra.mxu0 0.0
        %4282 = vmatprep.subr.mxu0 0.0
        %4283 = vmatpush2.msra.mxu0 0.0
        %4284 = vmatprep.subr.mxu0 0.0
        %4285 = vmatpush2.msra.mxu0 0.0
        %4286 = vmatprep.subr.mxu0 0.0
        %4287 = vmatpush2.msra.mxu0 0.0
        %4288 = vmatprep.subr.mxu0 0.0
        %4289 = vmatpush2.msra.mxu0 0.0
        %4290 = vmatprep.subr.mxu0 0.0
        %4291 = vmatpush2.msra.mxu0 0.0
        %4292 = vmatprep.subr.mxu0 0.0
        %4293 = vmatpush2.msra.mxu0 0.0
        %4294 = vmatprep.subr.mxu0 0.0
        %4295 = vmatpush2.msra.mxu0 0.0
        %4296 = vmatprep.subr.mxu0 0.0
        %4297 = vmatpush2.msra.mxu0 0.0
        %4298 = vmatprep.subr.mxu0 0.0
        %4299 = vmatpush2.msra.mxu0 0.0
        %4300 = vmatprep.subr.mxu0 0.0
        %4301 = vmatpush2.msra.mxu0 0.0
        %4302 = vmatprep.subr.mxu0 0.0
        %4303 = vmatpush2.msra.mxu0 0.0
        %4304 = vmatprep.subr.mxu0 0.0
        %4305 = vmatpush2.msra.mxu0 0.0
        %4306 = vmatprep.subr.mxu0 0.0
        %4307 = vmatpush2.msra.mxu0 0.0
        %4308 = vmatprep.subr.mxu0 0.0
        %4309 = vmatpush2.msra.mxu0 0.0
        %4310 = vmatprep.subr.mxu0 0.0
        %4311 = vmatpush2.msra.mxu0 0.0
        %4312 = vmatprep.mubr.f32.mxu0 0.0
        %4313 = vmatmul.mubr.f32.gmra.mxu0 %v4246
        %v4314 = vpop.f32.mrf.mxu0
        %v4315 = vadd.f32 %v4243, %v4314
        %v4316 = vpop.f32.mrf.mxu0
        %4317 = vdwg.mxu0
        %v4318 = vmax.f32 %v4315, 0.0
        %v4319 = vld [vmem:[%s12] sm:$0xff]
        %v4320 = vld [vmem:[%s12 + $0x8] sm:$0xff]
        %v4321 = vld [vmem:[%s12 + $0x10] sm:$0xff]
        %v4322 = vld [vmem:[%s12 + $0x18] sm:$0xff]
        %v4323 = vld [vmem:[%s12 + $0x20] sm:$0xff]
        %v4324 = vld [vmem:[%s12 + $0x28] sm:$0xff]
        %v4325 = vld [vmem:[%s12 + $0x30] sm:$0xff]
        %v4326 = vld [vmem:[%s12 + $0x38] sm:$0xff]
        %v4327 = vld [vmem:[%s13] sm:$0x1]
        %v4329 = vlaneseq
        %v4330 = vshrl.u32 %v4329, 7
        %v4331 = vsub.s32 0, %v4330
        %v4332 = vrot.slane %v4327, %v4331
        %vm4334 = vcmask 523264
        %v4336 = vsel %vm4334, %v4318, 0
        %4338 = vmatprep.subr.mxu0 0.0
        %4339 = vmatpush1.msra.mxu0 0.0
        %4340 = vmatprep.subr.mxu0 0.0
        %4341 = vmatpush1.msra.mxu0 0.0
        %4342 = vmatprep.subr.mxu0 0.0
        %4343 = vmatpush1.msra.mxu0 0.0
        %4344 = vmatprep.subr.mxu0 0.0
        %4345 = vmatpush1.msra.mxu0 0.0
        %4346 = vmatprep.subr.mxu0 0.0
        %4347 = vmatpush1.msra.mxu0 0.0
        %4348 = vmatprep.subr.mxu0 0.0
        %4349 = vmatpush1.msra.mxu0 0.0
        %4350 = vmatprep.subr.mxu0 0.0
        %4351 = vmatpush1.msra.mxu0 0.0
        %4352 = vmatprep.subr.mxu0 0.0
        %4353 = vmatpush1.msra.mxu0 0.0
        %4354 = vmatprep.subr.mxu0 0.0
        %4355 = vmatpush1.msra.mxu0 %v4326
        %4356 = vmatprep.subr.mxu0 0.0
        %4357 = vmatpush1.msra.mxu0 %v4325
        %4358 = vmatprep.subr.mxu0 0.0
        %4359 = vmatpush1.msra.mxu0 %v4324
        %4360 = vmatprep.subr.mxu0 0.0
        %4361 = vmatpush1.msra.mxu0 %v4323
        %4362 = vmatprep.subr.mxu0 0.0
        %4363 = vmatpush1.msra.mxu0 %v4322
        %4364 = vmatprep.subr.mxu0 0.0
        %4365 = vmatpush1.msra.mxu0 %v4321
        %4366 = vmatprep.subr.mxu0 0.0
        %4367 = vmatpush1.msra.mxu0 %v4320
        %4368 = vmatprep.subr.mxu0 0.0
        %4369 = vmatpush1.msra.mxu0 %v4319
        %4370 = vmatprep.subr.mxu0 0.0
        %4371 = vmatpush2.msra.mxu0 0.0
        %4372 = vmatprep.subr.mxu0 0.0
        %4373 = vmatpush2.msra.mxu0 0.0
        %4374 = vmatprep.subr.mxu0 0.0
        %4375 = vmatpush2.msra.mxu0 0.0
        %4376 = vmatprep.subr.mxu0 0.0
        %4377 = vmatpush2.msra.mxu0 0.0
        %4378 = vmatprep.subr.mxu0 0.0
        %4379 = vmatpush2.msra.mxu0 0.0
        %4380 = vmatprep.subr.mxu0 0.0
        %4381 = vmatpush2.msra.mxu0 0.0
        %4382 = vmatprep.subr.mxu0 0.0
        %4383 = vmatpush2.msra.mxu0 0.0
        %4384 = vmatprep.subr.mxu0 0.0
        %4385 = vmatpush2.msra.mxu0 0.0
        %4386 = vmatprep.subr.mxu0 0.0
        %4387 = vmatpush2.msra.mxu0 0.0
        %4388 = vmatprep.subr.mxu0 0.0
        %4389 = vmatpush2.msra.mxu0 0.0
        %4390 = vmatprep.subr.mxu0 0.0
        %4391 = vmatpush2.msra.mxu0 0.0
        %4392 = vmatprep.subr.mxu0 0.0
        %4393 = vmatpush2.msra.mxu0 0.0
        %4394 = vmatprep.subr.mxu0 0.0
        %4395 = vmatpush2.msra.mxu0 0.0
        %4396 = vmatprep.subr.mxu0 0.0
        %4397 = vmatpush2.msra.mxu0 0.0
        %4398 = vmatprep.subr.mxu0 0.0
        %4399 = vmatpush2.msra.mxu0 0.0
        %4400 = vmatprep.subr.mxu0 0.0
        %4401 = vmatpush2.msra.mxu0 0.0
        %4402 = vmatprep.mubr.f32.mxu0 0.0
        %4403 = vmatmul.mubr.f32.gmra.mxu0 %v4336
        %v4404 = vpop.f32.mrf.mxu0
        %v4405 = vadd.f32 %v4332, %v4404
        %v4406 = vpop.f32.mrf.mxu0
        %4407 = vdwg.mxu0
        %v4408 = vadd.f32 %v4405, %v4204
        %s4409 = scalar_lea.vmem %s1, 1
        %v4410 = vld [vmem:[%s4409] sm:$0x1]
        %s4411 = scalar_lea.vmem %s2, 1
        %v4412 = vld [vmem:[%s4411] sm:$0x1]
        %v4413 = vsel %vm466, %v4408, 0.0
        %4414 = vadd.xlane.f32.xlu0 %v4413
        %v4415 = vpop.xlane.xlu0 %4414
        %v4416 = vmul.f32 %v4415, %v470
        %v4417 = vsub.f32 %v4408, %v4416
        %v4418 = vmul.f32 %v4417, %v4417
        %v4419 = vsel %vm466, %v4418, 0.0
        %4420 = vadd.xlane.f32.xlu0 %v4419
        %v4421 = vpop.xlane.xlu0 %4420
        %v4422 = vmul.f32 %v4421, %v470
        %v4423 = vadd.f32 %v4422, 1e-05
        %v4424 = vrsqrt.pop %v4423
        %v4425 = vmul.f32 %v4417, %v4424
        %v4427 = vlaneseq
        %v4428 = vshrl.u32 %v4427, 7
        %v4429 = vsub.s32 0, %v4428
        %v4430 = vrot.slane %v4410, %v4429
        %v4432 = vmul.f32 %v4425, %v4430
        %v4434 = vlaneseq
        %v4435 = vshrl.u32 %v4434, 7
        %v4436 = vsub.s32 0, %v4435
        %v4437 = vrot.slane %v4412, %v4436
        %v4439 = vadd.f32 %v4432, %v4437
        %s4440 = scalar_lea.vmem %s3, 256
        %v4441 = vld [vmem:[%s4440] sm:$0xff]
        %v4442 = vld [vmem:[%s4440 + $0x8] sm:$0xff]
        %v4443 = vld [vmem:[%s4440 + $0x10] sm:$0xff]
        %v4444 = vld [vmem:[%s4440 + $0x18] sm:$0xff]
        %v4445 = vld [vmem:[%s4440 + $0x20] sm:$0xff]
        %v4446 = vld [vmem:[%s4440 + $0x28] sm:$0xff]
        %v4447 = vld [vmem:[%s4440 + $0x30] sm:$0xff]
        %v4448 = vld [vmem:[%s4440 + $0x38] sm:$0xff]
        %v4449 = vld [vmem:[%s4440 + $0x40] sm:$0xff]
        %v4450 = vld [vmem:[%s4440 + $0x48] sm:$0xff]
        %v4451 = vld [vmem:[%s4440 + $0x50] sm:$0xff]
        %v4452 = vld [vmem:[%s4440 + $0x58] sm:$0xff]
        %v4453 = vld [vmem:[%s4440 + $0x60] sm:$0xff]
        %v4454 = vld [vmem:[%s4440 + $0x68] sm:$0xff]
        %v4455 = vld [vmem:[%s4440 + $0x70] sm:$0xff]
        %v4456 = vld [vmem:[%s4440 + $0x78] sm:$0xff]
        %v4457 = vld [vmem:[%s4440 + $0x80] sm:$0xff]
        %v4458 = vld [vmem:[%s4440 + $0x88] sm:$0xff]
        %v4459 = vld [vmem:[%s4440 + $0x90] sm:$0xff]
        %v4460 = vld [vmem:[%s4440 + $0x98] sm:$0xff]
        %v4461 = vld [vmem:[%s4440 + $0xa0] sm:$0xff]
        %v4462 = vld [vmem:[%s4440 + $0xa8] sm:$0xff]
        %v4463 = vld [vmem:[%s4440 + $0xb0] sm:$0xff]
        %v4464 = vld [vmem:[%s4440 + $0xb8] sm:$0xff]
        %v4465 = vld [vmem:[%s4440 + $0xc0] sm:$0xff]
        %v4466 = vld [vmem:[%s4440 + $0xc8] sm:$0xff]
        %v4467 = vld [vmem:[%s4440 + $0xd0] sm:$0xff]
        %v4468 = vld [vmem:[%s4440 + $0xd8] sm:$0xff]
        %v4469 = vld [vmem:[%s4440 + $0xe0] sm:$0xff]
        %v4470 = vld [vmem:[%s4440 + $0xe8] sm:$0xff]
        %v4471 = vld [vmem:[%s4440 + $0xf0] sm:$0xff]
        %v4472 = vld [vmem:[%s4440 + $0xf8] sm:$0xff]
        %v4474 = vsel %vm466, %v4439, 0
        %4476 = vmatprep.subr.mxu0 0.0
        %4477 = vmatpush1.msra.mxu0 0.0
        %4478 = vmatprep.subr.mxu0 0.0
        %4479 = vmatpush1.msra.mxu0 0.0
        %4480 = vmatprep.subr.mxu0 0.0
        %4481 = vmatpush1.msra.mxu0 0.0
        %4482 = vmatprep.subr.mxu0 0.0
        %4483 = vmatpush1.msra.mxu0 0.0
        %4484 = vmatprep.subr.mxu0 0.0
        %4485 = vmatpush1.msra.mxu0 0.0
        %4486 = vmatprep.subr.mxu0 0.0
        %4487 = vmatpush1.msra.mxu0 0.0
        %4488 = vmatprep.subr.mxu0 0.0
        %4489 = vmatpush1.msra.mxu0 0.0
        %4490 = vmatprep.subr.mxu0 0.0
        %4491 = vmatpush1.msra.mxu0 0.0
        %4492 = vmatprep.subr.mxu0 0.0
        %4493 = vmatpush1.msra.mxu0 0.0
        %4494 = vmatprep.subr.mxu0 0.0
        %4495 = vmatpush1.msra.mxu0 0.0
        %4496 = vmatprep.subr.mxu0 0.0
        %4497 = vmatpush1.msra.mxu0 0.0
        %4498 = vmatprep.subr.mxu0 0.0
        %4499 = vmatpush1.msra.mxu0 0.0
        %4500 = vmatprep.subr.mxu0 0.0
        %4501 = vmatpush1.msra.mxu0 %v4444
        %4502 = vmatprep.subr.mxu0 0.0
        %4503 = vmatpush1.msra.mxu0 %v4443
        %4504 = vmatprep.subr.mxu0 0.0
        %4505 = vmatpush1.msra.mxu0 %v4442
        %4506 = vmatprep.subr.mxu0 0.0
        %4507 = vmatpush1.msra.mxu0 %v4441
        %4508 = vmatprep.subr.mxu0 0.0
        %4509 = vmatpush2.msra.mxu0 0.0
        %4510 = vmatprep.subr.mxu0 0.0
        %4511 = vmatpush2.msra.mxu0 0.0
        %4512 = vmatprep.subr.mxu0 0.0
        %4513 = vmatpush2.msra.mxu0 0.0
        %4514 = vmatprep.subr.mxu0 0.0
        %4515 = vmatpush2.msra.mxu0 0.0
        %4516 = vmatprep.subr.mxu0 0.0
        %4517 = vmatpush2.msra.mxu0 0.0
        %4518 = vmatprep.subr.mxu0 0.0
        %4519 = vmatpush2.msra.mxu0 0.0
        %4520 = vmatprep.subr.mxu0 0.0
        %4521 = vmatpush2.msra.mxu0 0.0
        %4522 = vmatprep.subr.mxu0 0.0
        %4523 = vmatpush2.msra.mxu0 0.0
        %4524 = vmatprep.subr.mxu0 0.0
        %4525 = vmatpush2.msra.mxu0 0.0
        %4526 = vmatprep.subr.mxu0 0.0
        %4527 = vmatpush2.msra.mxu0 0.0
        %4528 = vmatprep.subr.mxu0 0.0
        %4529 = vmatpush2.msra.mxu0 0.0
        %4530 = vmatprep.subr.mxu0 0.0
        %4531 = vmatpush2.msra.mxu0 0.0
        %4532 = vmatprep.subr.mxu0 0.0
        %4533 = vmatpush2.msra.mxu0 0.0
        %4534 = vmatprep.subr.mxu0 0.0
        %4535 = vmatpush2.msra.mxu0 0.0
        %4536 = vmatprep.subr.mxu0 0.0
        %4537 = vmatpush2.msra.mxu0 0.0
        %4538 = vmatprep.subr.mxu0 0.0
        %4539 = vmatpush2.msra.mxu0 0.0
        %4540 = vmatprep.mubr.f32.mxu0 0.0
        %4541 = vmatmul.mubr.f32.gmra.mxu0 %v4474
        %v4542 = vpop.f32.mrf.mxu0
        %v4543 = vadd.f32 0.0, %v4542
        %v4544 = vpop.f32.mrf.mxu0
        %4545 = vdwg.mxu0
        %4546 = vmatprep.subr.mxu0 0.0
        %4547 = vmatpush1.msra.mxu0 0.0
        %4548 = vmatprep.subr.mxu0 0.0
        %4549 = vmatpush1.msra.mxu0 0.0
        %4550 = vmatprep.subr.mxu0 0.0
        %4551 = vmatpush1.msra.mxu0 0.0
        %4552 = vmatprep.subr.mxu0 0.0
        %4553 = vmatpush1.msra.mxu0 0.0
        %4554 = vmatprep.subr.mxu0 0.0
        %4555 = vmatpush1.msra.mxu0 0.0
        %4556 = vmatprep.subr.mxu0 0.0
        %4557 = vmatpush1.msra.mxu0 0.0
        %4558 = vmatprep.subr.mxu0 0.0
        %4559 = vmatpush1.msra.mxu0 0.0
        %4560 = vmatprep.subr.mxu0 0.0
        %4561 = vmatpush1.msra.mxu0 0.0
        %4562 = vmatprep.subr.mxu0 0.0
        %4563 = vmatpush1.msra.mxu0 0.0
        %4564 = vmatprep.subr.mxu0 0.0
        %4565 = vmatpush1.msra.mxu0 0.0
        %4566 = vmatprep.subr.mxu0 0.0
        %4567 = vmatpush1.msra.mxu0 0.0
        %4568 = vmatprep.subr.mxu0 0.0
        %4569 = vmatpush1.msra.mxu0 0.0
        %4570 = vmatprep.subr.mxu0 0.0
        %4571 = vmatpush1.msra.mxu0 %v4448
        %4572 = vmatprep.subr.mxu0 0.0
        %4573 = vmatpush1.msra.mxu0 %v4447
        %4574 = vmatprep.subr.mxu0 0.0
        %4575 = vmatpush1.msra.mxu0 %v4446
        %4576 = vmatprep.subr.mxu0 0.0
        %4577 = vmatpush1.msra.mxu0 %v4445
        %4578 = vmatprep.subr.mxu0 0.0
        %4579 = vmatpush2.msra.mxu0 0.0
        %4580 = vmatprep.subr.mxu0 0.0
        %4581 = vmatpush2.msra.mxu0 0.0
        %4582 = vmatprep.subr.mxu0 0.0
        %4583 = vmatpush2.msra.mxu0 0.0
        %4584 = vmatprep.subr.mxu0 0.0
        %4585 = vmatpush2.msra.mxu0 0.0
        %4586 = vmatprep.subr.mxu0 0.0
        %4587 = vmatpush2.msra.mxu0 0.0
        %4588 = vmatprep.subr.mxu0 0.0
        %4589 = vmatpush2.msra.mxu0 0.0
        %4590 = vmatprep.subr.mxu0 0.0
        %4591 = vmatpush2.msra.mxu0 0.0
        %4592 = vmatprep.subr.mxu0 0.0
        %4593 = vmatpush2.msra.mxu0 0.0
        %4594 = vmatprep.subr.mxu0 0.0
        %4595 = vmatpush2.msra.mxu0 0.0
        %4596 = vmatprep.subr.mxu0 0.0
        %4597 = vmatpush2.msra.mxu0 0.0
        %4598 = vmatprep.subr.mxu0 0.0
        %4599 = vmatpush2.msra.mxu0 0.0
        %4600 = vmatprep.subr.mxu0 0.0
        %4601 = vmatpush2.msra.mxu0 0.0
        %4602 = vmatprep.subr.mxu0 0.0
        %4603 = vmatpush2.msra.mxu0 0.0
        %4604 = vmatprep.subr.mxu0 0.0
        %4605 = vmatpush2.msra.mxu0 0.0
        %4606 = vmatprep.subr.mxu0 0.0
        %4607 = vmatpush2.msra.mxu0 0.0
        %4608 = vmatprep.subr.mxu0 0.0
        %4609 = vmatpush2.msra.mxu0 0.0
        %4610 = vmatprep.mubr.f32.mxu0 0.0
        %4611 = vmatmul.mubr.f32.gmra.mxu0 %v4474
        %v4612 = vpop.f32.mrf.mxu0
        %v4613 = vadd.f32 0.0, %v4612
        %v4614 = vpop.f32.mrf.mxu0
        %4615 = vdwg.mxu0
        %4616 = vmatprep.subr.mxu0 0.0
        %4617 = vmatpush1.msra.mxu0 0.0
        %4618 = vmatprep.subr.mxu0 0.0
        %4619 = vmatpush1.msra.mxu0 0.0
        %4620 = vmatprep.subr.mxu0 0.0
        %4621 = vmatpush1.msra.mxu0 0.0
        %4622 = vmatprep.subr.mxu0 0.0
        %4623 = vmatpush1.msra.mxu0 0.0
        %4624 = vmatprep.subr.mxu0 0.0
        %4625 = vmatpush1.msra.mxu0 0.0
        %4626 = vmatprep.subr.mxu0 0.0
        %4627 = vmatpush1.msra.mxu0 0.0
        %4628 = vmatprep.subr.mxu0 0.0
        %4629 = vmatpush1.msra.mxu0 0.0
        %4630 = vmatprep.subr.mxu0 0.0
        %4631 = vmatpush1.msra.mxu0 0.0
        %4632 = vmatprep.subr.mxu0 0.0
        %4633 = vmatpush1.msra.mxu0 0.0
        %4634 = vmatprep.subr.mxu0 0.0
        %4635 = vmatpush1.msra.mxu0 0.0
        %4636 = vmatprep.subr.mxu0 0.0
        %4637 = vmatpush1.msra.mxu0 0.0
        %4638 = vmatprep.subr.mxu0 0.0
        %4639 = vmatpush1.msra.mxu0 0.0
        %4640 = vmatprep.subr.mxu0 0.0
        %4641 = vmatpush1.msra.mxu0 %v4452
        %4642 = vmatprep.subr.mxu0 0.0
        %4643 = vmatpush1.msra.mxu0 %v4451
        %4644 = vmatprep.subr.mxu0 0.0
        %4645 = vmatpush1.msra.mxu0 %v4450
        %4646 = vmatprep.subr.mxu0 0.0
        %4647 = vmatpush1.msra.mxu0 %v4449
        %4648 = vmatprep.subr.mxu0 0.0
        %4649 = vmatpush2.msra.mxu0 0.0
        %4650 = vmatprep.subr.mxu0 0.0
        %4651 = vmatpush2.msra.mxu0 0.0
        %4652 = vmatprep.subr.mxu0 0.0
        %4653 = vmatpush2.msra.mxu0 0.0
        %4654 = vmatprep.subr.mxu0 0.0
        %4655 = vmatpush2.msra.mxu0 0.0
        %4656 = vmatprep.subr.mxu0 0.0
        %4657 = vmatpush2.msra.mxu0 0.0
        %4658 = vmatprep.subr.mxu0 0.0
        %4659 = vmatpush2.msra.mxu0 0.0
        %4660 = vmatprep.subr.mxu0 0.0
        %4661 = vmatpush2.msra.mxu0 0.0
        %4662 = vmatprep.subr.mxu0 0.0
        %4663 = vmatpush2.msra.mxu0 0.0
        %4664 = vmatprep.subr.mxu0 0.0
        %4665 = vmatpush2.msra.mxu0 0.0
        %4666 = vmatprep.subr.mxu0 0.0
        %4667 = vmatpush2.msra.mxu0 0.0
        %4668 = vmatprep.subr.mxu0 0.0
        %4669 = vmatpush2.msra.mxu0 0.0
        %4670 = vmatprep.subr.mxu0 0.0
        %4671 = vmatpush2.msra.mxu0 0.0
        %4672 = vmatprep.subr.mxu0 0.0
        %4673 = vmatpush2.msra.mxu0 0.0
        %4674 = vmatprep.subr.mxu0 0.0
        %4675 = vmatpush2.msra.mxu0 0.0
        %4676 = vmatprep.subr.mxu0 0.0
        %4677 = vmatpush2.msra.mxu0 0.0
        %4678 = vmatprep.subr.mxu0 0.0
        %4679 = vmatpush2.msra.mxu0 0.0
        %4680 = vmatprep.mubr.f32.mxu0 0.0
        %4681 = vmatmul.mubr.f32.gmra.mxu0 %v4474
        %v4682 = vpop.f32.mrf.mxu0
        %v4683 = vadd.f32 0.0, %v4682
        %v4684 = vpop.f32.mrf.mxu0
        %4685 = vdwg.mxu0
        %4686 = vmatprep.subr.mxu0 0.0
        %4687 = vmatpush1.msra.mxu0 0.0
        %4688 = vmatprep.subr.mxu0 0.0
        %4689 = vmatpush1.msra.mxu0 0.0
        %4690 = vmatprep.subr.mxu0 0.0
        %4691 = vmatpush1.msra.mxu0 0.0
        %4692 = vmatprep.subr.mxu0 0.0
        %4693 = vmatpush1.msra.mxu0 0.0
        %4694 = vmatprep.subr.mxu0 0.0
        %4695 = vmatpush1.msra.mxu0 0.0
        %4696 = vmatprep.subr.mxu0 0.0
        %4697 = vmatpush1.msra.mxu0 0.0
        %4698 = vmatprep.subr.mxu0 0.0
        %4699 = vmatpush1.msra.mxu0 0.0
        %4700 = vmatprep.subr.mxu0 0.0
        %4701 = vmatpush1.msra.mxu0 0.0
        %4702 = vmatprep.subr.mxu0 0.0
        %4703 = vmatpush1.msra.mxu0 0.0
        %4704 = vmatprep.subr.mxu0 0.0
        %4705 = vmatpush1.msra.mxu0 0.0
        %4706 = vmatprep.subr.mxu0 0.0
        %4707 = vmatpush1.msra.mxu0 0.0
        %4708 = vmatprep.subr.mxu0 0.0
        %4709 = vmatpush1.msra.mxu0 0.0
        %4710 = vmatprep.subr.mxu0 0.0
        %4711 = vmatpush1.msra.mxu0 %v4456
        %4712 = vmatprep.subr.mxu0 0.0
        %4713 = vmatpush1.msra.mxu0 %v4455
        %4714 = vmatprep.subr.mxu0 0.0
        %4715 = vmatpush1.msra.mxu0 %v4454
        %4716 = vmatprep.subr.mxu0 0.0
        %4717 = vmatpush1.msra.mxu0 %v4453
        %4718 = vmatprep.subr.mxu0 0.0
        %4719 = vmatpush2.msra.mxu0 0.0
        %4720 = vmatprep.subr.mxu0 0.0
        %4721 = vmatpush2.msra.mxu0 0.0
        %4722 = vmatprep.subr.mxu0 0.0
        %4723 = vmatpush2.msra.mxu0 0.0
        %4724 = vmatprep.subr.mxu0 0.0
        %4725 = vmatpush2.msra.mxu0 0.0
        %4726 = vmatprep.subr.mxu0 0.0
        %4727 = vmatpush2.msra.mxu0 0.0
        %4728 = vmatprep.subr.mxu0 0.0
        %4729 = vmatpush2.msra.mxu0 0.0
        %4730 = vmatprep.subr.mxu0 0.0
        %4731 = vmatpush2.msra.mxu0 0.0
        %4732 = vmatprep.subr.mxu0 0.0
        %4733 = vmatpush2.msra.mxu0 0.0
        %4734 = vmatprep.subr.mxu0 0.0
        %4735 = vmatpush2.msra.mxu0 0.0
        %4736 = vmatprep.subr.mxu0 0.0
        %4737 = vmatpush2.msra.mxu0 0.0
        %4738 = vmatprep.subr.mxu0 0.0
        %4739 = vmatpush2.msra.mxu0 0.0
        %4740 = vmatprep.subr.mxu0 0.0
        %4741 = vmatpush2.msra.mxu0 0.0
        %4742 = vmatprep.subr.mxu0 0.0
        %4743 = vmatpush2.msra.mxu0 0.0
        %4744 = vmatprep.subr.mxu0 0.0
        %4745 = vmatpush2.msra.mxu0 0.0
        %4746 = vmatprep.subr.mxu0 0.0
        %4747 = vmatpush2.msra.mxu0 0.0
        %4748 = vmatprep.subr.mxu0 0.0
        %4749 = vmatpush2.msra.mxu0 0.0
        %4750 = vmatprep.mubr.f32.mxu0 0.0
        %4751 = vmatmul.mubr.f32.gmra.mxu0 %v4474
        %v4752 = vpop.f32.mrf.mxu0
        %v4753 = vadd.f32 0.0, %v4752
        %v4754 = vpop.f32.mrf.mxu0
        %4755 = vdwg.mxu0
        %4756 = vmatprep.subr.mxu0 0.0
        %4757 = vmatpush1.msra.mxu0 0.0
        %4758 = vmatprep.subr.mxu0 0.0
        %4759 = vmatpush1.msra.mxu0 0.0
        %4760 = vmatprep.subr.mxu0 0.0
        %4761 = vmatpush1.msra.mxu0 0.0
        %4762 = vmatprep.subr.mxu0 0.0
        %4763 = vmatpush1.msra.mxu0 0.0
        %4764 = vmatprep.subr.mxu0 0.0
        %4765 = vmatpush1.msra.mxu0 0.0
        %4766 = vmatprep.subr.mxu0 0.0
        %4767 = vmatpush1.msra.mxu0 0.0
        %4768 = vmatprep.subr.mxu0 0.0
        %4769 = vmatpush1.msra.mxu0 0.0
        %4770 = vmatprep.subr.mxu0 0.0
        %4771 = vmatpush1.msra.mxu0 0.0
        %4772 = vmatprep.subr.mxu0 0.0
        %4773 = vmatpush1.msra.mxu0 0.0
        %4774 = vmatprep.subr.mxu0 0.0
        %4775 = vmatpush1.msra.mxu0 0.0
        %4776 = vmatprep.subr.mxu0 0.0
        %4777 = vmatpush1.msra.mxu0 0.0
        %4778 = vmatprep.subr.mxu0 0.0
        %4779 = vmatpush1.msra.mxu0 0.0
        %4780 = vmatprep.subr.mxu0 0.0
        %4781 = vmatpush1.msra.mxu0 %v4460
        %4782 = vmatprep.subr.mxu0 0.0
        %4783 = vmatpush1.msra.mxu0 %v4459
        %4784 = vmatprep.subr.mxu0 0.0
        %4785 = vmatpush1.msra.mxu0 %v4458
        %4786 = vmatprep.subr.mxu0 0.0
        %4787 = vmatpush1.msra.mxu0 %v4457
        %4788 = vmatprep.subr.mxu0 0.0
        %4789 = vmatpush2.msra.mxu0 0.0
        %4790 = vmatprep.subr.mxu0 0.0
        %4791 = vmatpush2.msra.mxu0 0.0
        %4792 = vmatprep.subr.mxu0 0.0
        %4793 = vmatpush2.msra.mxu0 0.0
        %4794 = vmatprep.subr.mxu0 0.0
        %4795 = vmatpush2.msra.mxu0 0.0
        %4796 = vmatprep.subr.mxu0 0.0
        %4797 = vmatpush2.msra.mxu0 0.0
        %4798 = vmatprep.subr.mxu0 0.0
        %4799 = vmatpush2.msra.mxu0 0.0
        %4800 = vmatprep.subr.mxu0 0.0
        %4801 = vmatpush2.msra.mxu0 0.0
        %4802 = vmatprep.subr.mxu0 0.0
        %4803 = vmatpush2.msra.mxu0 0.0
        %4804 = vmatprep.subr.mxu0 0.0
        %4805 = vmatpush2.msra.mxu0 0.0
        %4806 = vmatprep.subr.mxu0 0.0
        %4807 = vmatpush2.msra.mxu0 0.0
        %4808 = vmatprep.subr.mxu0 0.0
        %4809 = vmatpush2.msra.mxu0 0.0
        %4810 = vmatprep.subr.mxu0 0.0
        %4811 = vmatpush2.msra.mxu0 0.0
        %4812 = vmatprep.subr.mxu0 0.0
        %4813 = vmatpush2.msra.mxu0 0.0
        %4814 = vmatprep.subr.mxu0 0.0
        %4815 = vmatpush2.msra.mxu0 0.0
        %4816 = vmatprep.subr.mxu0 0.0
        %4817 = vmatpush2.msra.mxu0 0.0
        %4818 = vmatprep.subr.mxu0 0.0
        %4819 = vmatpush2.msra.mxu0 0.0
        %4820 = vmatprep.mubr.f32.mxu0 0.0
        %4821 = vmatmul.mubr.f32.gmra.mxu0 %v4474
        %v4822 = vpop.f32.mrf.mxu0
        %v4823 = vadd.f32 0.0, %v4822
        %v4824 = vpop.f32.mrf.mxu0
        %4825 = vdwg.mxu0
        %4826 = vmatprep.subr.mxu0 0.0
        %4827 = vmatpush1.msra.mxu0 0.0
        %4828 = vmatprep.subr.mxu0 0.0
        %4829 = vmatpush1.msra.mxu0 0.0
        %4830 = vmatprep.subr.mxu0 0.0
        %4831 = vmatpush1.msra.mxu0 0.0
        %4832 = vmatprep.subr.mxu0 0.0
        %4833 = vmatpush1.msra.mxu0 0.0
        %4834 = vmatprep.subr.mxu0 0.0
        %4835 = vmatpush1.msra.mxu0 0.0
        %4836 = vmatprep.subr.mxu0 0.0
        %4837 = vmatpush1.msra.mxu0 0.0
        %4838 = vmatprep.subr.mxu0 0.0
        %4839 = vmatpush1.msra.mxu0 0.0
        %4840 = vmatprep.subr.mxu0 0.0
        %4841 = vmatpush1.msra.mxu0 0.0
        %4842 = vmatprep.subr.mxu0 0.0
        %4843 = vmatpush1.msra.mxu0 0.0
        %4844 = vmatprep.subr.mxu0 0.0
        %4845 = vmatpush1.msra.mxu0 0.0
        %4846 = vmatprep.subr.mxu0 0.0
        %4847 = vmatpush1.msra.mxu0 0.0
        %4848 = vmatprep.subr.mxu0 0.0
        %4849 = vmatpush1.msra.mxu0 0.0
        %4850 = vmatprep.subr.mxu0 0.0
        %4851 = vmatpush1.msra.mxu0 %v4464
        %4852 = vmatprep.subr.mxu0 0.0
        %4853 = vmatpush1.msra.mxu0 %v4463
        %4854 = vmatprep.subr.mxu0 0.0
        %4855 = vmatpush1.msra.mxu0 %v4462
        %4856 = vmatprep.subr.mxu0 0.0
        %4857 = vmatpush1.msra.mxu0 %v4461
        %4858 = vmatprep.subr.mxu0 0.0
        %4859 = vmatpush2.msra.mxu0 0.0
        %4860 = vmatprep.subr.mxu0 0.0
        %4861 = vmatpush2.msra.mxu0 0.0
        %4862 = vmatprep.subr.mxu0 0.0
        %4863 = vmatpush2.msra.mxu0 0.0
        %4864 = vmatprep.subr.mxu0 0.0
        %4865 = vmatpush2.msra.mxu0 0.0
        %4866 = vmatprep.subr.mxu0 0.0
        %4867 = vmatpush2.msra.mxu0 0.0
        %4868 = vmatprep.subr.mxu0 0.0
        %4869 = vmatpush2.msra.mxu0 0.0
        %4870 = vmatprep.subr.mxu0 0.0
        %4871 = vmatpush2.msra.mxu0 0.0
        %4872 = vmatprep.subr.mxu0 0.0
        %4873 = vmatpush2.msra.mxu0 0.0
        %4874 = vmatprep.subr.mxu0 0.0
        %4875 = vmatpush2.msra.mxu0 0.0
        %4876 = vmatprep.subr.mxu0 0.0
        %4877 = vmatpush2.msra.mxu0 0.0
        %4878 = vmatprep.subr.mxu0 0.0
        %4879 = vmatpush2.msra.mxu0 0.0
        %4880 = vmatprep.subr.mxu0 0.0
        %4881 = vmatpush2.msra.mxu0 0.0
        %4882 = vmatprep.subr.mxu0 0.0
        %4883 = vmatpush2.msra.mxu0 0.0
        %4884 = vmatprep.subr.mxu0 0.0
        %4885 = vmatpush2.msra.mxu0 0.0
        %4886 = vmatprep.subr.mxu0 0.0
        %4887 = vmatpush2.msra.mxu0 0.0
        %4888 = vmatprep.subr.mxu0 0.0
        %4889 = vmatpush2.msra.mxu0 0.0
        %4890 = vmatprep.mubr.f32.mxu0 0.0
        %4891 = vmatmul.mubr.f32.gmra.mxu0 %v4474
        %v4892 = vpop.f32.mrf.mxu0
        %v4893 = vadd.f32 0.0, %v4892
        %v4894 = vpop.f32.mrf.mxu0
        %4895 = vdwg.mxu0
        %4896 = vmatprep.subr.mxu0 0.0
        %4897 = vmatpush1.msra.mxu0 0.0
        %4898 = vmatprep.subr.mxu0 0.0
        %4899 = vmatpush1.msra.mxu0 0.0
        %4900 = vmatprep.subr.mxu0 0.0
        %4901 = vmatpush1.msra.mxu0 0.0
        %4902 = vmatprep.subr.mxu0 0.0
        %4903 = vmatpush1.msra.mxu0 0.0
        %4904 = vmatprep.subr.mxu0 0.0
        %4905 = vmatpush1.msra.mxu0 0.0
        %4906 = vmatprep.subr.mxu0 0.0
        %4907 = vmatpush1.msra.mxu0 0.0
        %4908 = vmatprep.subr.mxu0 0.0
        %4909 = vmatpush1.msra.mxu0 0.0
        %4910 = vmatprep.subr.mxu0 0.0
        %4911 = vmatpush1.msra.mxu0 0.0
        %4912 = vmatprep.subr.mxu0 0.0
        %4913 = vmatpush1.msra.mxu0 0.0
        %4914 = vmatprep.subr.mxu0 0.0
        %4915 = vmatpush1.msra.mxu0 0.0
        %4916 = vmatprep.subr.mxu0 0.0
        %4917 = vmatpush1.msra.mxu0 0.0
        %4918 = vmatprep.subr.mxu0 0.0
        %4919 = vmatpush1.msra.mxu0 0.0
        %4920 = vmatprep.subr.mxu0 0.0
        %4921 = vmatpush1.msra.mxu0 %v4468
        %4922 = vmatprep.subr.mxu0 0.0
        %4923 = vmatpush1.msra.mxu0 %v4467
        %4924 = vmatprep.subr.mxu0 0.0
        %4925 = vmatpush1.msra.mxu0 %v4466
        %4926 = vmatprep.subr.mxu0 0.0
        %4927 = vmatpush1.msra.mxu0 %v4465
        %4928 = vmatprep.subr.mxu0 0.0
        %4929 = vmatpush2.msra.mxu0 0.0
        %4930 = vmatprep.subr.mxu0 0.0
        %4931 = vmatpush2.msra.mxu0 0.0
        %4932 = vmatprep.subr.mxu0 0.0
        %4933 = vmatpush2.msra.mxu0 0.0
        %4934 = vmatprep.subr.mxu0 0.0
        %4935 = vmatpush2.msra.mxu0 0.0
        %4936 = vmatprep.subr.mxu0 0.0
        %4937 = vmatpush2.msra.mxu0 0.0
        %4938 = vmatprep.subr.mxu0 0.0
        %4939 = vmatpush2.msra.mxu0 0.0
        %4940 = vmatprep.subr.mxu0 0.0
        %4941 = vmatpush2.msra.mxu0 0.0
        %4942 = vmatprep.subr.mxu0 0.0
        %4943 = vmatpush2.msra.mxu0 0.0
        %4944 = vmatprep.subr.mxu0 0.0
        %4945 = vmatpush2.msra.mxu0 0.0
        %4946 = vmatprep.subr.mxu0 0.0
        %4947 = vmatpush2.msra.mxu0 0.0
        %4948 = vmatprep.subr.mxu0 0.0
        %4949 = vmatpush2.msra.mxu0 0.0
        %4950 = vmatprep.subr.mxu0 0.0
        %4951 = vmatpush2.msra.mxu0 0.0
        %4952 = vmatprep.subr.mxu0 0.0
        %4953 = vmatpush2.msra.mxu0 0.0
        %4954 = vmatprep.subr.mxu0 0.0
        %4955 = vmatpush2.msra.mxu0 0.0
        %4956 = vmatprep.subr.mxu0 0.0
        %4957 = vmatpush2.msra.mxu0 0.0
        %4958 = vmatprep.subr.mxu0 0.0
        %4959 = vmatpush2.msra.mxu0 0.0
        %4960 = vmatprep.mubr.f32.mxu0 0.0
        %4961 = vmatmul.mubr.f32.gmra.mxu0 %v4474
        %v4962 = vpop.f32.mrf.mxu0
        %v4963 = vadd.f32 0.0, %v4962
        %v4964 = vpop.f32.mrf.mxu0
        %4965 = vdwg.mxu0
        %4966 = vmatprep.subr.mxu0 0.0
        %4967 = vmatpush1.msra.mxu0 0.0
        %4968 = vmatprep.subr.mxu0 0.0
        %4969 = vmatpush1.msra.mxu0 0.0
        %4970 = vmatprep.subr.mxu0 0.0
        %4971 = vmatpush1.msra.mxu0 0.0
        %4972 = vmatprep.subr.mxu0 0.0
        %4973 = vmatpush1.msra.mxu0 0.0
        %4974 = vmatprep.subr.mxu0 0.0
        %4975 = vmatpush1.msra.mxu0 0.0
        %4976 = vmatprep.subr.mxu0 0.0
        %4977 = vmatpush1.msra.mxu0 0.0
        %4978 = vmatprep.subr.mxu0 0.0
        %4979 = vmatpush1.msra.mxu0 0.0
        %4980 = vmatprep.subr.mxu0 0.0
        %4981 = vmatpush1.msra.mxu0 0.0
        %4982 = vmatprep.subr.mxu0 0.0
        %4983 = vmatpush1.msra.mxu0 0.0
        %4984 = vmatprep.subr.mxu0 0.0
        %4985 = vmatpush1.msra.mxu0 0.0
        %4986 = vmatprep.subr.mxu0 0.0
        %4987 = vmatpush1.msra.mxu0 0.0
        %4988 = vmatprep.subr.mxu0 0.0
        %4989 = vmatpush1.msra.mxu0 0.0
        %4990 = vmatprep.subr.mxu0 0.0
        %4991 = vmatpush1.msra.mxu0 %v4472
        %4992 = vmatprep.subr.mxu0 0.0
        %4993 = vmatpush1.msra.mxu0 %v4471
        %4994 = vmatprep.subr.mxu0 0.0
        %4995 = vmatpush1.msra.mxu0 %v4470
        %4996 = vmatprep.subr.mxu0 0.0
        %4997 = vmatpush1.msra.mxu0 %v4469
        %4998 = vmatprep.subr.mxu0 0.0
        %4999 = vmatpush2.msra.mxu0 0.0
        %5000 = vmatprep.subr.mxu0 0.0
        %5001 = vmatpush2.msra.mxu0 0.0
        %5002 = vmatprep.subr.mxu0 0.0
        %5003 = vmatpush2.msra.mxu0 0.0
        %5004 = vmatprep.subr.mxu0 0.0
        %5005 = vmatpush2.msra.mxu0 0.0
        %5006 = vmatprep.subr.mxu0 0.0
        %5007 = vmatpush2.msra.mxu0 0.0
        %5008 = vmatprep.subr.mxu0 0.0
        %5009 = vmatpush2.msra.mxu0 0.0
        %5010 = vmatprep.subr.mxu0 0.0
        %5011 = vmatpush2.msra.mxu0 0.0
        %5012 = vmatprep.subr.mxu0 0.0
        %5013 = vmatpush2.msra.mxu0 0.0
        %5014 = vmatprep.subr.mxu0 0.0
        %5015 = vmatpush2.msra.mxu0 0.0
        %5016 = vmatprep.subr.mxu0 0.0
        %5017 = vmatpush2.msra.mxu0 0.0
        %5018 = vmatprep.subr.mxu0 0.0
        %5019 = vmatpush2.msra.mxu0 0.0
        %5020 = vmatprep.subr.mxu0 0.0
        %5021 = vmatpush2.msra.mxu0 0.0
        %5022 = vmatprep.subr.mxu0 0.0
        %5023 = vmatpush2.msra.mxu0 0.0
        %5024 = vmatprep.subr.mxu0 0.0
        %5025 = vmatpush2.msra.mxu0 0.0
        %5026 = vmatprep.subr.mxu0 0.0
        %5027 = vmatpush2.msra.mxu0 0.0
        %5028 = vmatprep.subr.mxu0 0.0
        %5029 = vmatpush2.msra.mxu0 0.0
        %5030 = vmatprep.mubr.f32.mxu0 0.0
        %5031 = vmatmul.mubr.f32.gmra.mxu0 %v4474
        %v5032 = vpop.f32.mrf.mxu0
        %v5033 = vadd.f32 0.0, %v5032
        %v5034 = vpop.f32.mrf.mxu0
        %5035 = vdwg.mxu0
        %s5036 = scalar_lea.vmem %s4, 256
        %v5037 = vld [vmem:[%s5036] sm:$0xff]
        %v5038 = vld [vmem:[%s5036 + $0x8] sm:$0xff]
        %v5039 = vld [vmem:[%s5036 + $0x10] sm:$0xff]
        %v5040 = vld [vmem:[%s5036 + $0x18] sm:$0xff]
        %v5041 = vld [vmem:[%s5036 + $0x20] sm:$0xff]
        %v5042 = vld [vmem:[%s5036 + $0x28] sm:$0xff]
        %v5043 = vld [vmem:[%s5036 + $0x30] sm:$0xff]
        %v5044 = vld [vmem:[%s5036 + $0x38] sm:$0xff]
        %v5045 = vld [vmem:[%s5036 + $0x40] sm:$0xff]
        %v5046 = vld [vmem:[%s5036 + $0x48] sm:$0xff]
        %v5047 = vld [vmem:[%s5036 + $0x50] sm:$0xff]
        %v5048 = vld [vmem:[%s5036 + $0x58] sm:$0xff]
        %v5049 = vld [vmem:[%s5036 + $0x60] sm:$0xff]
        %v5050 = vld [vmem:[%s5036 + $0x68] sm:$0xff]
        %v5051 = vld [vmem:[%s5036 + $0x70] sm:$0xff]
        %v5052 = vld [vmem:[%s5036 + $0x78] sm:$0xff]
        %v5053 = vld [vmem:[%s5036 + $0x80] sm:$0xff]
        %v5054 = vld [vmem:[%s5036 + $0x88] sm:$0xff]
        %v5055 = vld [vmem:[%s5036 + $0x90] sm:$0xff]
        %v5056 = vld [vmem:[%s5036 + $0x98] sm:$0xff]
        %v5057 = vld [vmem:[%s5036 + $0xa0] sm:$0xff]
        %v5058 = vld [vmem:[%s5036 + $0xa8] sm:$0xff]
        %v5059 = vld [vmem:[%s5036 + $0xb0] sm:$0xff]
        %v5060 = vld [vmem:[%s5036 + $0xb8] sm:$0xff]
        %v5061 = vld [vmem:[%s5036 + $0xc0] sm:$0xff]
        %v5062 = vld [vmem:[%s5036 + $0xc8] sm:$0xff]
        %v5063 = vld [vmem:[%s5036 + $0xd0] sm:$0xff]
        %v5064 = vld [vmem:[%s5036 + $0xd8] sm:$0xff]
        %v5065 = vld [vmem:[%s5036 + $0xe0] sm:$0xff]
        %v5066 = vld [vmem:[%s5036 + $0xe8] sm:$0xff]
        %v5067 = vld [vmem:[%s5036 + $0xf0] sm:$0xff]
        %v5068 = vld [vmem:[%s5036 + $0xf8] sm:$0xff]
        %5069 = vmatprep.subr.mxu0 0.0
        %5070 = vmatpush1.msra.mxu0 0.0
        %5071 = vmatprep.subr.mxu0 0.0
        %5072 = vmatpush1.msra.mxu0 0.0
        %5073 = vmatprep.subr.mxu0 0.0
        %5074 = vmatpush1.msra.mxu0 0.0
        %5075 = vmatprep.subr.mxu0 0.0
        %5076 = vmatpush1.msra.mxu0 0.0
        %5077 = vmatprep.subr.mxu0 0.0
        %5078 = vmatpush1.msra.mxu0 0.0
        %5079 = vmatprep.subr.mxu0 0.0
        %5080 = vmatpush1.msra.mxu0 0.0
        %5081 = vmatprep.subr.mxu0 0.0
        %5082 = vmatpush1.msra.mxu0 0.0
        %5083 = vmatprep.subr.mxu0 0.0
        %5084 = vmatpush1.msra.mxu0 0.0
        %5085 = vmatprep.subr.mxu0 0.0
        %5086 = vmatpush1.msra.mxu0 0.0
        %5087 = vmatprep.subr.mxu0 0.0
        %5088 = vmatpush1.msra.mxu0 0.0
        %5089 = vmatprep.subr.mxu0 0.0
        %5090 = vmatpush1.msra.mxu0 0.0
        %5091 = vmatprep.subr.mxu0 0.0
        %5092 = vmatpush1.msra.mxu0 0.0
        %5093 = vmatprep.subr.mxu0 0.0
        %5094 = vmatpush1.msra.mxu0 %v5040
        %5095 = vmatprep.subr.mxu0 0.0
        %5096 = vmatpush1.msra.mxu0 %v5039
        %5097 = vmatprep.subr.mxu0 0.0
        %5098 = vmatpush1.msra.mxu0 %v5038
        %5099 = vmatprep.subr.mxu0 0.0
        %5100 = vmatpush1.msra.mxu0 %v5037
        %5101 = vmatprep.subr.mxu0 0.0
        %5102 = vmatpush2.msra.mxu0 0.0
        %5103 = vmatprep.subr.mxu0 0.0
        %5104 = vmatpush2.msra.mxu0 0.0
        %5105 = vmatprep.subr.mxu0 0.0
        %5106 = vmatpush2.msra.mxu0 0.0
        %5107 = vmatprep.subr.mxu0 0.0
        %5108 = vmatpush2.msra.mxu0 0.0
        %5109 = vmatprep.subr.mxu0 0.0
        %5110 = vmatpush2.msra.mxu0 0.0
        %5111 = vmatprep.subr.mxu0 0.0
        %5112 = vmatpush2.msra.mxu0 0.0
        %5113 = vmatprep.subr.mxu0 0.0
        %5114 = vmatpush2.msra.mxu0 0.0
        %5115 = vmatprep.subr.mxu0 0.0
        %5116 = vmatpush2.msra.mxu0 0.0
        %5117 = vmatprep.subr.mxu0 0.0
        %5118 = vmatpush2.msra.mxu0 0.0
        %5119 = vmatprep.subr.mxu0 0.0
        %5120 = vmatpush2.msra.mxu0 0.0
        %5121 = vmatprep.subr.mxu0 0.0
        %5122 = vmatpush2.msra.mxu0 0.0
        %5123 = vmatprep.subr.mxu0 0.0
        %5124 = vmatpush2.msra.mxu0 0.0
        %5125 = vmatprep.subr.mxu0 0.0
        %5126 = vmatpush2.msra.mxu0 0.0
        %5127 = vmatprep.subr.mxu0 0.0
        %5128 = vmatpush2.msra.mxu0 0.0
        %5129 = vmatprep.subr.mxu0 0.0
        %5130 = vmatpush2.msra.mxu0 0.0
        %5131 = vmatprep.subr.mxu0 0.0
        %5132 = vmatpush2.msra.mxu0 0.0
        %5133 = vmatprep.mubr.f32.mxu0 0.0
        %5134 = vmatmul.mubr.f32.gmra.mxu0 %v4474
        %v5135 = vpop.f32.mrf.mxu0
        %v5136 = vadd.f32 0.0, %v5135
        %v5137 = vpop.f32.mrf.mxu0
        %5138 = vdwg.mxu0
        %5139 = vmatprep.subr.mxu0 0.0
        %5140 = vmatpush1.msra.mxu0 0.0
        %5141 = vmatprep.subr.mxu0 0.0
        %5142 = vmatpush1.msra.mxu0 0.0
        %5143 = vmatprep.subr.mxu0 0.0
        %5144 = vmatpush1.msra.mxu0 0.0
        %5145 = vmatprep.subr.mxu0 0.0
        %5146 = vmatpush1.msra.mxu0 0.0
        %5147 = vmatprep.subr.mxu0 0.0
        %5148 = vmatpush1.msra.mxu0 0.0
        %5149 = vmatprep.subr.mxu0 0.0
        %5150 = vmatpush1.msra.mxu0 0.0
        %5151 = vmatprep.subr.mxu0 0.0
        %5152 = vmatpush1.msra.mxu0 0.0
        %5153 = vmatprep.subr.mxu0 0.0
        %5154 = vmatpush1.msra.mxu0 0.0
        %5155 = vmatprep.subr.mxu0 0.0
        %5156 = vmatpush1.msra.mxu0 0.0
        %5157 = vmatprep.subr.mxu0 0.0
        %5158 = vmatpush1.msra.mxu0 0.0
        %5159 = vmatprep.subr.mxu0 0.0
        %5160 = vmatpush1.msra.mxu0 0.0
        %5161 = vmatprep.subr.mxu0 0.0
        %5162 = vmatpush1.msra.mxu0 0.0
        %5163 = vmatprep.subr.mxu0 0.0
        %5164 = vmatpush1.msra.mxu0 %v5044
        %5165 = vmatprep.subr.mxu0 0.0
        %5166 = vmatpush1.msra.mxu0 %v5043
        %5167 = vmatprep.subr.mxu0 0.0
        %5168 = vmatpush1.msra.mxu0 %v5042
        %5169 = vmatprep.subr.mxu0 0.0
        %5170 = vmatpush1.msra.mxu0 %v5041
        %5171 = vmatprep.subr.mxu0 0.0
        %5172 = vmatpush2.msra.mxu0 0.0
        %5173 = vmatprep.subr.mxu0 0.0
        %5174 = vmatpush2.msra.mxu0 0.0
        %5175 = vmatprep.subr.mxu0 0.0
        %5176 = vmatpush2.msra.mxu0 0.0
        %5177 = vmatprep.subr.mxu0 0.0
        %5178 = vmatpush2.msra.mxu0 0.0
        %5179 = vmatprep.subr.mxu0 0.0
        %5180 = vmatpush2.msra.mxu0 0.0
        %5181 = vmatprep.subr.mxu0 0.0
        %5182 = vmatpush2.msra.mxu0 0.0
        %5183 = vmatprep.subr.mxu0 0.0
        %5184 = vmatpush2.msra.mxu0 0.0
        %5185 = vmatprep.subr.mxu0 0.0
        %5186 = vmatpush2.msra.mxu0 0.0
        %5187 = vmatprep.subr.mxu0 0.0
        %5188 = vmatpush2.msra.mxu0 0.0
        %5189 = vmatprep.subr.mxu0 0.0
        %5190 = vmatpush2.msra.mxu0 0.0
        %5191 = vmatprep.subr.mxu0 0.0
        %5192 = vmatpush2.msra.mxu0 0.0
        %5193 = vmatprep.subr.mxu0 0.0
        %5194 = vmatpush2.msra.mxu0 0.0
        %5195 = vmatprep.subr.mxu0 0.0
        %5196 = vmatpush2.msra.mxu0 0.0
        %5197 = vmatprep.subr.mxu0 0.0
        %5198 = vmatpush2.msra.mxu0 0.0
        %5199 = vmatprep.subr.mxu0 0.0
        %5200 = vmatpush2.msra.mxu0 0.0
        %5201 = vmatprep.subr.mxu0 0.0
        %5202 = vmatpush2.msra.mxu0 0.0
        %5203 = vmatprep.mubr.f32.mxu0 0.0
        %5204 = vmatmul.mubr.f32.gmra.mxu0 %v4474
        %v5205 = vpop.f32.mrf.mxu0
        %v5206 = vadd.f32 0.0, %v5205
        %v5207 = vpop.f32.mrf.mxu0
        %5208 = vdwg.mxu0
        %5209 = vmatprep.subr.mxu0 0.0
        %5210 = vmatpush1.msra.mxu0 0.0
        %5211 = vmatprep.subr.mxu0 0.0
        %5212 = vmatpush1.msra.mxu0 0.0
        %5213 = vmatprep.subr.mxu0 0.0
        %5214 = vmatpush1.msra.mxu0 0.0
        %5215 = vmatprep.subr.mxu0 0.0
        %5216 = vmatpush1.msra.mxu0 0.0
        %5217 = vmatprep.subr.mxu0 0.0
        %5218 = vmatpush1.msra.mxu0 0.0
        %5219 = vmatprep.subr.mxu0 0.0
        %5220 = vmatpush1.msra.mxu0 0.0
        %5221 = vmatprep.subr.mxu0 0.0
        %5222 = vmatpush1.msra.mxu0 0.0
        %5223 = vmatprep.subr.mxu0 0.0
        %5224 = vmatpush1.msra.mxu0 0.0
        %5225 = vmatprep.subr.mxu0 0.0
        %5226 = vmatpush1.msra.mxu0 0.0
        %5227 = vmatprep.subr.mxu0 0.0
        %5228 = vmatpush1.msra.mxu0 0.0
        %5229 = vmatprep.subr.mxu0 0.0
        %5230 = vmatpush1.msra.mxu0 0.0
        %5231 = vmatprep.subr.mxu0 0.0
        %5232 = vmatpush1.msra.mxu0 0.0
        %5233 = vmatprep.subr.mxu0 0.0
        %5234 = vmatpush1.msra.mxu0 %v5048
        %5235 = vmatprep.subr.mxu0 0.0
        %5236 = vmatpush1.msra.mxu0 %v5047
        %5237 = vmatprep.subr.mxu0 0.0
        %5238 = vmatpush1.msra.mxu0 %v5046
        %5239 = vmatprep.subr.mxu0 0.0
        %5240 = vmatpush1.msra.mxu0 %v5045
        %5241 = vmatprep.subr.mxu0 0.0
        %5242 = vmatpush2.msra.mxu0 0.0
        %5243 = vmatprep.subr.mxu0 0.0
        %5244 = vmatpush2.msra.mxu0 0.0
        %5245 = vmatprep.subr.mxu0 0.0
        %5246 = vmatpush2.msra.mxu0 0.0
        %5247 = vmatprep.subr.mxu0 0.0
        %5248 = vmatpush2.msra.mxu0 0.0
        %5249 = vmatprep.subr.mxu0 0.0
        %5250 = vmatpush2.msra.mxu0 0.0
        %5251 = vmatprep.subr.mxu0 0.0
        %5252 = vmatpush2.msra.mxu0 0.0
        %5253 = vmatprep.subr.mxu0 0.0
        %5254 = vmatpush2.msra.mxu0 0.0
        %5255 = vmatprep.subr.mxu0 0.0
        %5256 = vmatpush2.msra.mxu0 0.0
        %5257 = vmatprep.subr.mxu0 0.0
        %5258 = vmatpush2.msra.mxu0 0.0
        %5259 = vmatprep.subr.mxu0 0.0
        %5260 = vmatpush2.msra.mxu0 0.0
        %5261 = vmatprep.subr.mxu0 0.0
        %5262 = vmatpush2.msra.mxu0 0.0
        %5263 = vmatprep.subr.mxu0 0.0
        %5264 = vmatpush2.msra.mxu0 0.0
        %5265 = vmatprep.subr.mxu0 0.0
        %5266 = vmatpush2.msra.mxu0 0.0
        %5267 = vmatprep.subr.mxu0 0.0
        %5268 = vmatpush2.msra.mxu0 0.0
        %5269 = vmatprep.subr.mxu0 0.0
        %5270 = vmatpush2.msra.mxu0 0.0
        %5271 = vmatprep.subr.mxu0 0.0
        %5272 = vmatpush2.msra.mxu0 0.0
        %5273 = vmatprep.mubr.f32.mxu0 0.0
        %5274 = vmatmul.mubr.f32.gmra.mxu0 %v4474
        %v5275 = vpop.f32.mrf.mxu0
        %v5276 = vadd.f32 0.0, %v5275
        %v5277 = vpop.f32.mrf.mxu0
        %5278 = vdwg.mxu0
        %5279 = vmatprep.subr.mxu0 0.0
        %5280 = vmatpush1.msra.mxu0 0.0
        %5281 = vmatprep.subr.mxu0 0.0
        %5282 = vmatpush1.msra.mxu0 0.0
        %5283 = vmatprep.subr.mxu0 0.0
        %5284 = vmatpush1.msra.mxu0 0.0
        %5285 = vmatprep.subr.mxu0 0.0
        %5286 = vmatpush1.msra.mxu0 0.0
        %5287 = vmatprep.subr.mxu0 0.0
        %5288 = vmatpush1.msra.mxu0 0.0
        %5289 = vmatprep.subr.mxu0 0.0
        %5290 = vmatpush1.msra.mxu0 0.0
        %5291 = vmatprep.subr.mxu0 0.0
        %5292 = vmatpush1.msra.mxu0 0.0
        %5293 = vmatprep.subr.mxu0 0.0
        %5294 = vmatpush1.msra.mxu0 0.0
        %5295 = vmatprep.subr.mxu0 0.0
        %5296 = vmatpush1.msra.mxu0 0.0
        %5297 = vmatprep.subr.mxu0 0.0
        %5298 = vmatpush1.msra.mxu0 0.0
        %5299 = vmatprep.subr.mxu0 0.0
        %5300 = vmatpush1.msra.mxu0 0.0
        %5301 = vmatprep.subr.mxu0 0.0
        %5302 = vmatpush1.msra.mxu0 0.0
        %5303 = vmatprep.subr.mxu0 0.0
        %5304 = vmatpush1.msra.mxu0 %v5052
        %5305 = vmatprep.subr.mxu0 0.0
        %5306 = vmatpush1.msra.mxu0 %v5051
        %5307 = vmatprep.subr.mxu0 0.0
        %5308 = vmatpush1.msra.mxu0 %v5050
        %5309 = vmatprep.subr.mxu0 0.0
        %5310 = vmatpush1.msra.mxu0 %v5049
        %5311 = vmatprep.subr.mxu0 0.0
        %5312 = vmatpush2.msra.mxu0 0.0
        %5313 = vmatprep.subr.mxu0 0.0
        %5314 = vmatpush2.msra.mxu0 0.0
        %5315 = vmatprep.subr.mxu0 0.0
        %5316 = vmatpush2.msra.mxu0 0.0
        %5317 = vmatprep.subr.mxu0 0.0
        %5318 = vmatpush2.msra.mxu0 0.0
        %5319 = vmatprep.subr.mxu0 0.0
        %5320 = vmatpush2.msra.mxu0 0.0
        %5321 = vmatprep.subr.mxu0 0.0
        %5322 = vmatpush2.msra.mxu0 0.0
        %5323 = vmatprep.subr.mxu0 0.0
        %5324 = vmatpush2.msra.mxu0 0.0
        %5325 = vmatprep.subr.mxu0 0.0
        %5326 = vmatpush2.msra.mxu0 0.0
        %5327 = vmatprep.subr.mxu0 0.0
        %5328 = vmatpush2.msra.mxu0 0.0
        %5329 = vmatprep.subr.mxu0 0.0
        %5330 = vmatpush2.msra.mxu0 0.0
        %5331 = vmatprep.subr.mxu0 0.0
        %5332 = vmatpush2.msra.mxu0 0.0
        %5333 = vmatprep.subr.mxu0 0.0
        %5334 = vmatpush2.msra.mxu0 0.0
        %5335 = vmatprep.subr.mxu0 0.0
        %5336 = vmatpush2.msra.mxu0 0.0
        %5337 = vmatprep.subr.mxu0 0.0
        %5338 = vmatpush2.msra.mxu0 0.0
        %5339 = vmatprep.subr.mxu0 0.0
        %5340 = vmatpush2.msra.mxu0 0.0
        %5341 = vmatprep.subr.mxu0 0.0
        %5342 = vmatpush2.msra.mxu0 0.0
        %5343 = vmatprep.mubr.f32.mxu0 0.0
        %5344 = vmatmul.mubr.f32.gmra.mxu0 %v4474
        %v5345 = vpop.f32.mrf.mxu0
        %v5346 = vadd.f32 0.0, %v5345
        %v5347 = vpop.f32.mrf.mxu0
        %5348 = vdwg.mxu0
        %5349 = vmatprep.subr.mxu0 0.0
        %5350 = vmatpush1.msra.mxu0 0.0
        %5351 = vmatprep.subr.mxu0 0.0
        %5352 = vmatpush1.msra.mxu0 0.0
        %5353 = vmatprep.subr.mxu0 0.0
        %5354 = vmatpush1.msra.mxu0 0.0
        %5355 = vmatprep.subr.mxu0 0.0
        %5356 = vmatpush1.msra.mxu0 0.0
        %5357 = vmatprep.subr.mxu0 0.0
        %5358 = vmatpush1.msra.mxu0 0.0
        %5359 = vmatprep.subr.mxu0 0.0
        %5360 = vmatpush1.msra.mxu0 0.0
        %5361 = vmatprep.subr.mxu0 0.0
        %5362 = vmatpush1.msra.mxu0 0.0
        %5363 = vmatprep.subr.mxu0 0.0
        %5364 = vmatpush1.msra.mxu0 0.0
        %5365 = vmatprep.subr.mxu0 0.0
        %5366 = vmatpush1.msra.mxu0 0.0
        %5367 = vmatprep.subr.mxu0 0.0
        %5368 = vmatpush1.msra.mxu0 0.0
        %5369 = vmatprep.subr.mxu0 0.0
        %5370 = vmatpush1.msra.mxu0 0.0
        %5371 = vmatprep.subr.mxu0 0.0
        %5372 = vmatpush1.msra.mxu0 0.0
        %5373 = vmatprep.subr.mxu0 0.0
        %5374 = vmatpush1.msra.mxu0 %v5056
        %5375 = vmatprep.subr.mxu0 0.0
        %5376 = vmatpush1.msra.mxu0 %v5055
        %5377 = vmatprep.subr.mxu0 0.0
        %5378 = vmatpush1.msra.mxu0 %v5054
        %5379 = vmatprep.subr.mxu0 0.0
        %5380 = vmatpush1.msra.mxu0 %v5053
        %5381 = vmatprep.subr.mxu0 0.0
        %5382 = vmatpush2.msra.mxu0 0.0
        %5383 = vmatprep.subr.mxu0 0.0
        %5384 = vmatpush2.msra.mxu0 0.0
        %5385 = vmatprep.subr.mxu0 0.0
        %5386 = vmatpush2.msra.mxu0 0.0
        %5387 = vmatprep.subr.mxu0 0.0
        %5388 = vmatpush2.msra.mxu0 0.0
        %5389 = vmatprep.subr.mxu0 0.0
        %5390 = vmatpush2.msra.mxu0 0.0
        %5391 = vmatprep.subr.mxu0 0.0
        %5392 = vmatpush2.msra.mxu0 0.0
        %5393 = vmatprep.subr.mxu0 0.0
        %5394 = vmatpush2.msra.mxu0 0.0
        %5395 = vmatprep.subr.mxu0 0.0
        %5396 = vmatpush2.msra.mxu0 0.0
        %5397 = vmatprep.subr.mxu0 0.0
        %5398 = vmatpush2.msra.mxu0 0.0
        %5399 = vmatprep.subr.mxu0 0.0
        %5400 = vmatpush2.msra.mxu0 0.0
        %5401 = vmatprep.subr.mxu0 0.0
        %5402 = vmatpush2.msra.mxu0 0.0
        %5403 = vmatprep.subr.mxu0 0.0
        %5404 = vmatpush2.msra.mxu0 0.0
        %5405 = vmatprep.subr.mxu0 0.0
        %5406 = vmatpush2.msra.mxu0 0.0
        %5407 = vmatprep.subr.mxu0 0.0
        %5408 = vmatpush2.msra.mxu0 0.0
        %5409 = vmatprep.subr.mxu0 0.0
        %5410 = vmatpush2.msra.mxu0 0.0
        %5411 = vmatprep.subr.mxu0 0.0
        %5412 = vmatpush2.msra.mxu0 0.0
        %5413 = vmatprep.mubr.f32.mxu0 0.0
        %5414 = vmatmul.mubr.f32.gmra.mxu0 %v4474
        %v5415 = vpop.f32.mrf.mxu0
        %v5416 = vadd.f32 0.0, %v5415
        %v5417 = vpop.f32.mrf.mxu0
        %5418 = vdwg.mxu0
        %5419 = vmatprep.subr.mxu0 0.0
        %5420 = vmatpush1.msra.mxu0 0.0
        %5421 = vmatprep.subr.mxu0 0.0
        %5422 = vmatpush1.msra.mxu0 0.0
        %5423 = vmatprep.subr.mxu0 0.0
        %5424 = vmatpush1.msra.mxu0 0.0
        %5425 = vmatprep.subr.mxu0 0.0
        %5426 = vmatpush1.msra.mxu0 0.0
        %5427 = vmatprep.subr.mxu0 0.0
        %5428 = vmatpush1.msra.mxu0 0.0
        %5429 = vmatprep.subr.mxu0 0.0
        %5430 = vmatpush1.msra.mxu0 0.0
        %5431 = vmatprep.subr.mxu0 0.0
        %5432 = vmatpush1.msra.mxu0 0.0
        %5433 = vmatprep.subr.mxu0 0.0
        %5434 = vmatpush1.msra.mxu0 0.0
        %5435 = vmatprep.subr.mxu0 0.0
        %5436 = vmatpush1.msra.mxu0 0.0
        %5437 = vmatprep.subr.mxu0 0.0
        %5438 = vmatpush1.msra.mxu0 0.0
        %5439 = vmatprep.subr.mxu0 0.0
        %5440 = vmatpush1.msra.mxu0 0.0
        %5441 = vmatprep.subr.mxu0 0.0
        %5442 = vmatpush1.msra.mxu0 0.0
        %5443 = vmatprep.subr.mxu0 0.0
        %5444 = vmatpush1.msra.mxu0 %v5060
        %5445 = vmatprep.subr.mxu0 0.0
        %5446 = vmatpush1.msra.mxu0 %v5059
        %5447 = vmatprep.subr.mxu0 0.0
        %5448 = vmatpush1.msra.mxu0 %v5058
        %5449 = vmatprep.subr.mxu0 0.0
        %5450 = vmatpush1.msra.mxu0 %v5057
        %5451 = vmatprep.subr.mxu0 0.0
        %5452 = vmatpush2.msra.mxu0 0.0
        %5453 = vmatprep.subr.mxu0 0.0
        %5454 = vmatpush2.msra.mxu0 0.0
        %5455 = vmatprep.subr.mxu0 0.0
        %5456 = vmatpush2.msra.mxu0 0.0
        %5457 = vmatprep.subr.mxu0 0.0
        %5458 = vmatpush2.msra.mxu0 0.0
        %5459 = vmatprep.subr.mxu0 0.0
        %5460 = vmatpush2.msra.mxu0 0.0
        %5461 = vmatprep.subr.mxu0 0.0
        %5462 = vmatpush2.msra.mxu0 0.0
        %5463 = vmatprep.subr.mxu0 0.0
        %5464 = vmatpush2.msra.mxu0 0.0
        %5465 = vmatprep.subr.mxu0 0.0
        %5466 = vmatpush2.msra.mxu0 0.0
        %5467 = vmatprep.subr.mxu0 0.0
        %5468 = vmatpush2.msra.mxu0 0.0
        %5469 = vmatprep.subr.mxu0 0.0
        %5470 = vmatpush2.msra.mxu0 0.0
        %5471 = vmatprep.subr.mxu0 0.0
        %5472 = vmatpush2.msra.mxu0 0.0
        %5473 = vmatprep.subr.mxu0 0.0
        %5474 = vmatpush2.msra.mxu0 0.0
        %5475 = vmatprep.subr.mxu0 0.0
        %5476 = vmatpush2.msra.mxu0 0.0
        %5477 = vmatprep.subr.mxu0 0.0
        %5478 = vmatpush2.msra.mxu0 0.0
        %5479 = vmatprep.subr.mxu0 0.0
        %5480 = vmatpush2.msra.mxu0 0.0
        %5481 = vmatprep.subr.mxu0 0.0
        %5482 = vmatpush2.msra.mxu0 0.0
        %5483 = vmatprep.mubr.f32.mxu0 0.0
        %5484 = vmatmul.mubr.f32.gmra.mxu0 %v4474
        %v5485 = vpop.f32.mrf.mxu0
        %v5486 = vadd.f32 0.0, %v5485
        %v5487 = vpop.f32.mrf.mxu0
        %5488 = vdwg.mxu0
        %5489 = vmatprep.subr.mxu0 0.0
        %5490 = vmatpush1.msra.mxu0 0.0
        %5491 = vmatprep.subr.mxu0 0.0
        %5492 = vmatpush1.msra.mxu0 0.0
        %5493 = vmatprep.subr.mxu0 0.0
        %5494 = vmatpush1.msra.mxu0 0.0
        %5495 = vmatprep.subr.mxu0 0.0
        %5496 = vmatpush1.msra.mxu0 0.0
        %5497 = vmatprep.subr.mxu0 0.0
        %5498 = vmatpush1.msra.mxu0 0.0
        %5499 = vmatprep.subr.mxu0 0.0
        %5500 = vmatpush1.msra.mxu0 0.0
        %5501 = vmatprep.subr.mxu0 0.0
        %5502 = vmatpush1.msra.mxu0 0.0
        %5503 = vmatprep.subr.mxu0 0.0
        %5504 = vmatpush1.msra.mxu0 0.0
        %5505 = vmatprep.subr.mxu0 0.0
        %5506 = vmatpush1.msra.mxu0 0.0
        %5507 = vmatprep.subr.mxu0 0.0
        %5508 = vmatpush1.msra.mxu0 0.0
        %5509 = vmatprep.subr.mxu0 0.0
        %5510 = vmatpush1.msra.mxu0 0.0
        %5511 = vmatprep.subr.mxu0 0.0
        %5512 = vmatpush1.msra.mxu0 0.0
        %5513 = vmatprep.subr.mxu0 0.0
        %5514 = vmatpush1.msra.mxu0 %v5064
        %5515 = vmatprep.subr.mxu0 0.0
        %5516 = vmatpush1.msra.mxu0 %v5063
        %5517 = vmatprep.subr.mxu0 0.0
        %5518 = vmatpush1.msra.mxu0 %v5062
        %5519 = vmatprep.subr.mxu0 0.0
        %5520 = vmatpush1.msra.mxu0 %v5061
        %5521 = vmatprep.subr.mxu0 0.0
        %5522 = vmatpush2.msra.mxu0 0.0
        %5523 = vmatprep.subr.mxu0 0.0
        %5524 = vmatpush2.msra.mxu0 0.0
        %5525 = vmatprep.subr.mxu0 0.0
        %5526 = vmatpush2.msra.mxu0 0.0
        %5527 = vmatprep.subr.mxu0 0.0
        %5528 = vmatpush2.msra.mxu0 0.0
        %5529 = vmatprep.subr.mxu0 0.0
        %5530 = vmatpush2.msra.mxu0 0.0
        %5531 = vmatprep.subr.mxu0 0.0
        %5532 = vmatpush2.msra.mxu0 0.0
        %5533 = vmatprep.subr.mxu0 0.0
        %5534 = vmatpush2.msra.mxu0 0.0
        %5535 = vmatprep.subr.mxu0 0.0
        %5536 = vmatpush2.msra.mxu0 0.0
        %5537 = vmatprep.subr.mxu0 0.0
        %5538 = vmatpush2.msra.mxu0 0.0
        %5539 = vmatprep.subr.mxu0 0.0
        %5540 = vmatpush2.msra.mxu0 0.0
        %5541 = vmatprep.subr.mxu0 0.0
        %5542 = vmatpush2.msra.mxu0 0.0
        %5543 = vmatprep.subr.mxu0 0.0
        %5544 = vmatpush2.msra.mxu0 0.0
        %5545 = vmatprep.subr.mxu0 0.0
        %5546 = vmatpush2.msra.mxu0 0.0
        %5547 = vmatprep.subr.mxu0 0.0
        %5548 = vmatpush2.msra.mxu0 0.0
        %5549 = vmatprep.subr.mxu0 0.0
        %5550 = vmatpush2.msra.mxu0 0.0
        %5551 = vmatprep.subr.mxu0 0.0
        %5552 = vmatpush2.msra.mxu0 0.0
        %5553 = vmatprep.mubr.f32.mxu0 0.0
        %5554 = vmatmul.mubr.f32.gmra.mxu0 %v4474
        %v5555 = vpop.f32.mrf.mxu0
        %v5556 = vadd.f32 0.0, %v5555
        %v5557 = vpop.f32.mrf.mxu0
        %5558 = vdwg.mxu0
        %5559 = vmatprep.subr.mxu0 0.0
        %5560 = vmatpush1.msra.mxu0 0.0
        %5561 = vmatprep.subr.mxu0 0.0
        %5562 = vmatpush1.msra.mxu0 0.0
        %5563 = vmatprep.subr.mxu0 0.0
        %5564 = vmatpush1.msra.mxu0 0.0
        %5565 = vmatprep.subr.mxu0 0.0
        %5566 = vmatpush1.msra.mxu0 0.0
        %5567 = vmatprep.subr.mxu0 0.0
        %5568 = vmatpush1.msra.mxu0 0.0
        %5569 = vmatprep.subr.mxu0 0.0
        %5570 = vmatpush1.msra.mxu0 0.0
        %5571 = vmatprep.subr.mxu0 0.0
        %5572 = vmatpush1.msra.mxu0 0.0
        %5573 = vmatprep.subr.mxu0 0.0
        %5574 = vmatpush1.msra.mxu0 0.0
        %5575 = vmatprep.subr.mxu0 0.0
        %5576 = vmatpush1.msra.mxu0 0.0
        %5577 = vmatprep.subr.mxu0 0.0
        %5578 = vmatpush1.msra.mxu0 0.0
        %5579 = vmatprep.subr.mxu0 0.0
        %5580 = vmatpush1.msra.mxu0 0.0
        %5581 = vmatprep.subr.mxu0 0.0
        %5582 = vmatpush1.msra.mxu0 0.0
        %5583 = vmatprep.subr.mxu0 0.0
        %5584 = vmatpush1.msra.mxu0 %v5068
        %5585 = vmatprep.subr.mxu0 0.0
        %5586 = vmatpush1.msra.mxu0 %v5067
        %5587 = vmatprep.subr.mxu0 0.0
        %5588 = vmatpush1.msra.mxu0 %v5066
        %5589 = vmatprep.subr.mxu0 0.0
        %5590 = vmatpush1.msra.mxu0 %v5065
        %5591 = vmatprep.subr.mxu0 0.0
        %5592 = vmatpush2.msra.mxu0 0.0
        %5593 = vmatprep.subr.mxu0 0.0
        %5594 = vmatpush2.msra.mxu0 0.0
        %5595 = vmatprep.subr.mxu0 0.0
        %5596 = vmatpush2.msra.mxu0 0.0
        %5597 = vmatprep.subr.mxu0 0.0
        %5598 = vmatpush2.msra.mxu0 0.0
        %5599 = vmatprep.subr.mxu0 0.0
        %5600 = vmatpush2.msra.mxu0 0.0
        %5601 = vmatprep.subr.mxu0 0.0
        %5602 = vmatpush2.msra.mxu0 0.0
        %5603 = vmatprep.subr.mxu0 0.0
        %5604 = vmatpush2.msra.mxu0 0.0
        %5605 = vmatprep.subr.mxu0 0.0
        %5606 = vmatpush2.msra.mxu0 0.0
        %5607 = vmatprep.subr.mxu0 0.0
        %5608 = vmatpush2.msra.mxu0 0.0
        %5609 = vmatprep.subr.mxu0 0.0
        %5610 = vmatpush2.msra.mxu0 0.0
        %5611 = vmatprep.subr.mxu0 0.0
        %5612 = vmatpush2.msra.mxu0 0.0
        %5613 = vmatprep.subr.mxu0 0.0
        %5614 = vmatpush2.msra.mxu0 0.0
        %5615 = vmatprep.subr.mxu0 0.0
        %5616 = vmatpush2.msra.mxu0 0.0
        %5617 = vmatprep.subr.mxu0 0.0
        %5618 = vmatpush2.msra.mxu0 0.0
        %5619 = vmatprep.subr.mxu0 0.0
        %5620 = vmatpush2.msra.mxu0 0.0
        %5621 = vmatprep.subr.mxu0 0.0
        %5622 = vmatpush2.msra.mxu0 0.0
        %5623 = vmatprep.mubr.f32.mxu0 0.0
        %5624 = vmatmul.mubr.f32.gmra.mxu0 %v4474
        %v5625 = vpop.f32.mrf.mxu0
        %v5626 = vadd.f32 0.0, %v5625
        %v5627 = vpop.f32.mrf.mxu0
        %5628 = vdwg.mxu0
        %s5629 = scalar_lea.vmem %s5, 256
        %v5630 = vld [vmem:[%s5629] sm:$0xff]
        %v5631 = vld [vmem:[%s5629 + $0x8] sm:$0xff]
        %v5632 = vld [vmem:[%s5629 + $0x10] sm:$0xff]
        %v5633 = vld [vmem:[%s5629 + $0x18] sm:$0xff]
        %v5634 = vld [vmem:[%s5629 + $0x20] sm:$0xff]
        %v5635 = vld [vmem:[%s5629 + $0x28] sm:$0xff]
        %v5636 = vld [vmem:[%s5629 + $0x30] sm:$0xff]
        %v5637 = vld [vmem:[%s5629 + $0x38] sm:$0xff]
        %v5638 = vld [vmem:[%s5629 + $0x40] sm:$0xff]
        %v5639 = vld [vmem:[%s5629 + $0x48] sm:$0xff]
        %v5640 = vld [vmem:[%s5629 + $0x50] sm:$0xff]
        %v5641 = vld [vmem:[%s5629 + $0x58] sm:$0xff]
        %v5642 = vld [vmem:[%s5629 + $0x60] sm:$0xff]
        %v5643 = vld [vmem:[%s5629 + $0x68] sm:$0xff]
        %v5644 = vld [vmem:[%s5629 + $0x70] sm:$0xff]
        %v5645 = vld [vmem:[%s5629 + $0x78] sm:$0xff]
        %v5646 = vld [vmem:[%s5629 + $0x80] sm:$0xff]
        %v5647 = vld [vmem:[%s5629 + $0x88] sm:$0xff]
        %v5648 = vld [vmem:[%s5629 + $0x90] sm:$0xff]
        %v5649 = vld [vmem:[%s5629 + $0x98] sm:$0xff]
        %v5650 = vld [vmem:[%s5629 + $0xa0] sm:$0xff]
        %v5651 = vld [vmem:[%s5629 + $0xa8] sm:$0xff]
        %v5652 = vld [vmem:[%s5629 + $0xb0] sm:$0xff]
        %v5653 = vld [vmem:[%s5629 + $0xb8] sm:$0xff]
        %v5654 = vld [vmem:[%s5629 + $0xc0] sm:$0xff]
        %v5655 = vld [vmem:[%s5629 + $0xc8] sm:$0xff]
        %v5656 = vld [vmem:[%s5629 + $0xd0] sm:$0xff]
        %v5657 = vld [vmem:[%s5629 + $0xd8] sm:$0xff]
        %v5658 = vld [vmem:[%s5629 + $0xe0] sm:$0xff]
        %v5659 = vld [vmem:[%s5629 + $0xe8] sm:$0xff]
        %v5660 = vld [vmem:[%s5629 + $0xf0] sm:$0xff]
        %v5661 = vld [vmem:[%s5629 + $0xf8] sm:$0xff]
        %5662 = vmatprep.subr.mxu0 0.0
        %5663 = vmatpush1.msra.mxu0 0.0
        %5664 = vmatprep.subr.mxu0 0.0
        %5665 = vmatpush1.msra.mxu0 0.0
        %5666 = vmatprep.subr.mxu0 0.0
        %5667 = vmatpush1.msra.mxu0 0.0
        %5668 = vmatprep.subr.mxu0 0.0
        %5669 = vmatpush1.msra.mxu0 0.0
        %5670 = vmatprep.subr.mxu0 0.0
        %5671 = vmatpush1.msra.mxu0 0.0
        %5672 = vmatprep.subr.mxu0 0.0
        %5673 = vmatpush1.msra.mxu0 0.0
        %5674 = vmatprep.subr.mxu0 0.0
        %5675 = vmatpush1.msra.mxu0 0.0
        %5676 = vmatprep.subr.mxu0 0.0
        %5677 = vmatpush1.msra.mxu0 0.0
        %5678 = vmatprep.subr.mxu0 0.0
        %5679 = vmatpush1.msra.mxu0 0.0
        %5680 = vmatprep.subr.mxu0 0.0
        %5681 = vmatpush1.msra.mxu0 0.0
        %5682 = vmatprep.subr.mxu0 0.0
        %5683 = vmatpush1.msra.mxu0 0.0
        %5684 = vmatprep.subr.mxu0 0.0
        %5685 = vmatpush1.msra.mxu0 0.0
        %5686 = vmatprep.subr.mxu0 0.0
        %5687 = vmatpush1.msra.mxu0 %v5633
        %5688 = vmatprep.subr.mxu0 0.0
        %5689 = vmatpush1.msra.mxu0 %v5632
        %5690 = vmatprep.subr.mxu0 0.0
        %5691 = vmatpush1.msra.mxu0 %v5631
        %5692 = vmatprep.subr.mxu0 0.0
        %5693 = vmatpush1.msra.mxu0 %v5630
        %5694 = vmatprep.subr.mxu0 0.0
        %5695 = vmatpush2.msra.mxu0 0.0
        %5696 = vmatprep.subr.mxu0 0.0
        %5697 = vmatpush2.msra.mxu0 0.0
        %5698 = vmatprep.subr.mxu0 0.0
        %5699 = vmatpush2.msra.mxu0 0.0
        %5700 = vmatprep.subr.mxu0 0.0
        %5701 = vmatpush2.msra.mxu0 0.0
        %5702 = vmatprep.subr.mxu0 0.0
        %5703 = vmatpush2.msra.mxu0 0.0
        %5704 = vmatprep.subr.mxu0 0.0
        %5705 = vmatpush2.msra.mxu0 0.0
        %5706 = vmatprep.subr.mxu0 0.0
        %5707 = vmatpush2.msra.mxu0 0.0
        %5708 = vmatprep.subr.mxu0 0.0
        %5709 = vmatpush2.msra.mxu0 0.0
        %5710 = vmatprep.subr.mxu0 0.0
        %5711 = vmatpush2.msra.mxu0 0.0
        %5712 = vmatprep.subr.mxu0 0.0
        %5713 = vmatpush2.msra.mxu0 0.0
        %5714 = vmatprep.subr.mxu0 0.0
        %5715 = vmatpush2.msra.mxu0 0.0
        %5716 = vmatprep.subr.mxu0 0.0
        %5717 = vmatpush2.msra.mxu0 0.0
        %5718 = vmatprep.subr.mxu0 0.0
        %5719 = vmatpush2.msra.mxu0 0.0
        %5720 = vmatprep.subr.mxu0 0.0
        %5721 = vmatpush2.msra.mxu0 0.0
        %5722 = vmatprep.subr.mxu0 0.0
        %5723 = vmatpush2.msra.mxu0 0.0
        %5724 = vmatprep.subr.mxu0 0.0
        %5725 = vmatpush2.msra.mxu0 0.0
        %5726 = vmatprep.mubr.f32.mxu0 0.0
        %5727 = vmatmul.mubr.f32.gmra.mxu0 %v4474
        %v5728 = vpop.f32.mrf.mxu0
        %v5729 = vadd.f32 0.0, %v5728
        %v5730 = vpop.f32.mrf.mxu0
        %5731 = vdwg.mxu0
        %5732 = vmatprep.subr.mxu0 0.0
        %5733 = vmatpush1.msra.mxu0 0.0
        %5734 = vmatprep.subr.mxu0 0.0
        %5735 = vmatpush1.msra.mxu0 0.0
        %5736 = vmatprep.subr.mxu0 0.0
        %5737 = vmatpush1.msra.mxu0 0.0
        %5738 = vmatprep.subr.mxu0 0.0
        %5739 = vmatpush1.msra.mxu0 0.0
        %5740 = vmatprep.subr.mxu0 0.0
        %5741 = vmatpush1.msra.mxu0 0.0
        %5742 = vmatprep.subr.mxu0 0.0
        %5743 = vmatpush1.msra.mxu0 0.0
        %5744 = vmatprep.subr.mxu0 0.0
        %5745 = vmatpush1.msra.mxu0 0.0
        %5746 = vmatprep.subr.mxu0 0.0
        %5747 = vmatpush1.msra.mxu0 0.0
        %5748 = vmatprep.subr.mxu0 0.0
        %5749 = vmatpush1.msra.mxu0 0.0
        %5750 = vmatprep.subr.mxu0 0.0
        %5751 = vmatpush1.msra.mxu0 0.0
        %5752 = vmatprep.subr.mxu0 0.0
        %5753 = vmatpush1.msra.mxu0 0.0
        %5754 = vmatprep.subr.mxu0 0.0
        %5755 = vmatpush1.msra.mxu0 0.0
        %5756 = vmatprep.subr.mxu0 0.0
        %5757 = vmatpush1.msra.mxu0 %v5637
        %5758 = vmatprep.subr.mxu0 0.0
        %5759 = vmatpush1.msra.mxu0 %v5636
        %5760 = vmatprep.subr.mxu0 0.0
        %5761 = vmatpush1.msra.mxu0 %v5635
        %5762 = vmatprep.subr.mxu0 0.0
        %5763 = vmatpush1.msra.mxu0 %v5634
        %5764 = vmatprep.subr.mxu0 0.0
        %5765 = vmatpush2.msra.mxu0 0.0
        %5766 = vmatprep.subr.mxu0 0.0
        %5767 = vmatpush2.msra.mxu0 0.0
        %5768 = vmatprep.subr.mxu0 0.0
        %5769 = vmatpush2.msra.mxu0 0.0
        %5770 = vmatprep.subr.mxu0 0.0
        %5771 = vmatpush2.msra.mxu0 0.0
        %5772 = vmatprep.subr.mxu0 0.0
        %5773 = vmatpush2.msra.mxu0 0.0
        %5774 = vmatprep.subr.mxu0 0.0
        %5775 = vmatpush2.msra.mxu0 0.0
        %5776 = vmatprep.subr.mxu0 0.0
        %5777 = vmatpush2.msra.mxu0 0.0
        %5778 = vmatprep.subr.mxu0 0.0
        %5779 = vmatpush2.msra.mxu0 0.0
        %5780 = vmatprep.subr.mxu0 0.0
        %5781 = vmatpush2.msra.mxu0 0.0
        %5782 = vmatprep.subr.mxu0 0.0
        %5783 = vmatpush2.msra.mxu0 0.0
        %5784 = vmatprep.subr.mxu0 0.0
        %5785 = vmatpush2.msra.mxu0 0.0
        %5786 = vmatprep.subr.mxu0 0.0
        %5787 = vmatpush2.msra.mxu0 0.0
        %5788 = vmatprep.subr.mxu0 0.0
        %5789 = vmatpush2.msra.mxu0 0.0
        %5790 = vmatprep.subr.mxu0 0.0
        %5791 = vmatpush2.msra.mxu0 0.0
        %5792 = vmatprep.subr.mxu0 0.0
        %5793 = vmatpush2.msra.mxu0 0.0
        %5794 = vmatprep.subr.mxu0 0.0
        %5795 = vmatpush2.msra.mxu0 0.0
        %5796 = vmatprep.mubr.f32.mxu0 0.0
        %5797 = vmatmul.mubr.f32.gmra.mxu0 %v4474
        %v5798 = vpop.f32.mrf.mxu0
        %v5799 = vadd.f32 0.0, %v5798
        %v5800 = vpop.f32.mrf.mxu0
        %5801 = vdwg.mxu0
        %5802 = vmatprep.subr.mxu0 0.0
        %5803 = vmatpush1.msra.mxu0 0.0
        %5804 = vmatprep.subr.mxu0 0.0
        %5805 = vmatpush1.msra.mxu0 0.0
        %5806 = vmatprep.subr.mxu0 0.0
        %5807 = vmatpush1.msra.mxu0 0.0
        %5808 = vmatprep.subr.mxu0 0.0
        %5809 = vmatpush1.msra.mxu0 0.0
        %5810 = vmatprep.subr.mxu0 0.0
        %5811 = vmatpush1.msra.mxu0 0.0
        %5812 = vmatprep.subr.mxu0 0.0
        %5813 = vmatpush1.msra.mxu0 0.0
        %5814 = vmatprep.subr.mxu0 0.0
        %5815 = vmatpush1.msra.mxu0 0.0
        %5816 = vmatprep.subr.mxu0 0.0
        %5817 = vmatpush1.msra.mxu0 0.0
        %5818 = vmatprep.subr.mxu0 0.0
        %5819 = vmatpush1.msra.mxu0 0.0
        %5820 = vmatprep.subr.mxu0 0.0
        %5821 = vmatpush1.msra.mxu0 0.0
        %5822 = vmatprep.subr.mxu0 0.0
        %5823 = vmatpush1.msra.mxu0 0.0
        %5824 = vmatprep.subr.mxu0 0.0
        %5825 = vmatpush1.msra.mxu0 0.0
        %5826 = vmatprep.subr.mxu0 0.0
        %5827 = vmatpush1.msra.mxu0 %v5641
        %5828 = vmatprep.subr.mxu0 0.0
        %5829 = vmatpush1.msra.mxu0 %v5640
        %5830 = vmatprep.subr.mxu0 0.0
        %5831 = vmatpush1.msra.mxu0 %v5639
        %5832 = vmatprep.subr.mxu0 0.0
        %5833 = vmatpush1.msra.mxu0 %v5638
        %5834 = vmatprep.subr.mxu0 0.0
        %5835 = vmatpush2.msra.mxu0 0.0
        %5836 = vmatprep.subr.mxu0 0.0
        %5837 = vmatpush2.msra.mxu0 0.0
        %5838 = vmatprep.subr.mxu0 0.0
        %5839 = vmatpush2.msra.mxu0 0.0
        %5840 = vmatprep.subr.mxu0 0.0
        %5841 = vmatpush2.msra.mxu0 0.0
        %5842 = vmatprep.subr.mxu0 0.0
        %5843 = vmatpush2.msra.mxu0 0.0
        %5844 = vmatprep.subr.mxu0 0.0
        %5845 = vmatpush2.msra.mxu0 0.0
        %5846 = vmatprep.subr.mxu0 0.0
        %5847 = vmatpush2.msra.mxu0 0.0
        %5848 = vmatprep.subr.mxu0 0.0
        %5849 = vmatpush2.msra.mxu0 0.0
        %5850 = vmatprep.subr.mxu0 0.0
        %5851 = vmatpush2.msra.mxu0 0.0
        %5852 = vmatprep.subr.mxu0 0.0
        %5853 = vmatpush2.msra.mxu0 0.0
        %5854 = vmatprep.subr.mxu0 0.0
        %5855 = vmatpush2.msra.mxu0 0.0
        %5856 = vmatprep.subr.mxu0 0.0
        %5857 = vmatpush2.msra.mxu0 0.0
        %5858 = vmatprep.subr.mxu0 0.0
        %5859 = vmatpush2.msra.mxu0 0.0
        %5860 = vmatprep.subr.mxu0 0.0
        %5861 = vmatpush2.msra.mxu0 0.0
        %5862 = vmatprep.subr.mxu0 0.0
        %5863 = vmatpush2.msra.mxu0 0.0
        %5864 = vmatprep.subr.mxu0 0.0
        %5865 = vmatpush2.msra.mxu0 0.0
        %5866 = vmatprep.mubr.f32.mxu0 0.0
        %5867 = vmatmul.mubr.f32.gmra.mxu0 %v4474
        %v5868 = vpop.f32.mrf.mxu0
        %v5869 = vadd.f32 0.0, %v5868
        %v5870 = vpop.f32.mrf.mxu0
        %5871 = vdwg.mxu0
        %5872 = vmatprep.subr.mxu0 0.0
        %5873 = vmatpush1.msra.mxu0 0.0
        %5874 = vmatprep.subr.mxu0 0.0
        %5875 = vmatpush1.msra.mxu0 0.0
        %5876 = vmatprep.subr.mxu0 0.0
        %5877 = vmatpush1.msra.mxu0 0.0
        %5878 = vmatprep.subr.mxu0 0.0
        %5879 = vmatpush1.msra.mxu0 0.0
        %5880 = vmatprep.subr.mxu0 0.0
        %5881 = vmatpush1.msra.mxu0 0.0
        %5882 = vmatprep.subr.mxu0 0.0
        %5883 = vmatpush1.msra.mxu0 0.0
        %5884 = vmatprep.subr.mxu0 0.0
        %5885 = vmatpush1.msra.mxu0 0.0
        %5886 = vmatprep.subr.mxu0 0.0
        %5887 = vmatpush1.msra.mxu0 0.0
        %5888 = vmatprep.subr.mxu0 0.0
        %5889 = vmatpush1.msra.mxu0 0.0
        %5890 = vmatprep.subr.mxu0 0.0
        %5891 = vmatpush1.msra.mxu0 0.0
        %5892 = vmatprep.subr.mxu0 0.0
        %5893 = vmatpush1.msra.mxu0 0.0
        %5894 = vmatprep.subr.mxu0 0.0
        %5895 = vmatpush1.msra.mxu0 0.0
        %5896 = vmatprep.subr.mxu0 0.0
        %5897 = vmatpush1.msra.mxu0 %v5645
        %5898 = vmatprep.subr.mxu0 0.0
        %5899 = vmatpush1.msra.mxu0 %v5644
        %5900 = vmatprep.subr.mxu0 0.0
        %5901 = vmatpush1.msra.mxu0 %v5643
        %5902 = vmatprep.subr.mxu0 0.0
        %5903 = vmatpush1.msra.mxu0 %v5642
        %5904 = vmatprep.subr.mxu0 0.0
        %5905 = vmatpush2.msra.mxu0 0.0
        %5906 = vmatprep.subr.mxu0 0.0
        %5907 = vmatpush2.msra.mxu0 0.0
        %5908 = vmatprep.subr.mxu0 0.0
        %5909 = vmatpush2.msra.mxu0 0.0
        %5910 = vmatprep.subr.mxu0 0.0
        %5911 = vmatpush2.msra.mxu0 0.0
        %5912 = vmatprep.subr.mxu0 0.0
        %5913 = vmatpush2.msra.mxu0 0.0
        %5914 = vmatprep.subr.mxu0 0.0
        %5915 = vmatpush2.msra.mxu0 0.0
        %5916 = vmatprep.subr.mxu0 0.0
        %5917 = vmatpush2.msra.mxu0 0.0
        %5918 = vmatprep.subr.mxu0 0.0
        %5919 = vmatpush2.msra.mxu0 0.0
        %5920 = vmatprep.subr.mxu0 0.0
        %5921 = vmatpush2.msra.mxu0 0.0
        %5922 = vmatprep.subr.mxu0 0.0
        %5923 = vmatpush2.msra.mxu0 0.0
        %5924 = vmatprep.subr.mxu0 0.0
        %5925 = vmatpush2.msra.mxu0 0.0
        %5926 = vmatprep.subr.mxu0 0.0
        %5927 = vmatpush2.msra.mxu0 0.0
        %5928 = vmatprep.subr.mxu0 0.0
        %5929 = vmatpush2.msra.mxu0 0.0
        %5930 = vmatprep.subr.mxu0 0.0
        %5931 = vmatpush2.msra.mxu0 0.0
        %5932 = vmatprep.subr.mxu0 0.0
        %5933 = vmatpush2.msra.mxu0 0.0
        %5934 = vmatprep.subr.mxu0 0.0
        %5935 = vmatpush2.msra.mxu0 0.0
        %5936 = vmatprep.mubr.f32.mxu0 0.0
        %5937 = vmatmul.mubr.f32.gmra.mxu0 %v4474
        %v5938 = vpop.f32.mrf.mxu0
        %v5939 = vadd.f32 0.0, %v5938
        %v5940 = vpop.f32.mrf.mxu0
        %5941 = vdwg.mxu0
        %5942 = vmatprep.subr.mxu0 0.0
        %5943 = vmatpush1.msra.mxu0 0.0
        %5944 = vmatprep.subr.mxu0 0.0
        %5945 = vmatpush1.msra.mxu0 0.0
        %5946 = vmatprep.subr.mxu0 0.0
        %5947 = vmatpush1.msra.mxu0 0.0
        %5948 = vmatprep.subr.mxu0 0.0
        %5949 = vmatpush1.msra.mxu0 0.0
        %5950 = vmatprep.subr.mxu0 0.0
        %5951 = vmatpush1.msra.mxu0 0.0
        %5952 = vmatprep.subr.mxu0 0.0
        %5953 = vmatpush1.msra.mxu0 0.0
        %5954 = vmatprep.subr.mxu0 0.0
        %5955 = vmatpush1.msra.mxu0 0.0
        %5956 = vmatprep.subr.mxu0 0.0
        %5957 = vmatpush1.msra.mxu0 0.0
        %5958 = vmatprep.subr.mxu0 0.0
        %5959 = vmatpush1.msra.mxu0 0.0
        %5960 = vmatprep.subr.mxu0 0.0
        %5961 = vmatpush1.msra.mxu0 0.0
        %5962 = vmatprep.subr.mxu0 0.0
        %5963 = vmatpush1.msra.mxu0 0.0
        %5964 = vmatprep.subr.mxu0 0.0
        %5965 = vmatpush1.msra.mxu0 0.0
        %5966 = vmatprep.subr.mxu0 0.0
        %5967 = vmatpush1.msra.mxu0 %v5649
        %5968 = vmatprep.subr.mxu0 0.0
        %5969 = vmatpush1.msra.mxu0 %v5648
        %5970 = vmatprep.subr.mxu0 0.0
        %5971 = vmatpush1.msra.mxu0 %v5647
        %5972 = vmatprep.subr.mxu0 0.0
        %5973 = vmatpush1.msra.mxu0 %v5646
        %5974 = vmatprep.subr.mxu0 0.0
        %5975 = vmatpush2.msra.mxu0 0.0
        %5976 = vmatprep.subr.mxu0 0.0
        %5977 = vmatpush2.msra.mxu0 0.0
        %5978 = vmatprep.subr.mxu0 0.0
        %5979 = vmatpush2.msra.mxu0 0.0
        %5980 = vmatprep.subr.mxu0 0.0
        %5981 = vmatpush2.msra.mxu0 0.0
        %5982 = vmatprep.subr.mxu0 0.0
        %5983 = vmatpush2.msra.mxu0 0.0
        %5984 = vmatprep.subr.mxu0 0.0
        %5985 = vmatpush2.msra.mxu0 0.0
        %5986 = vmatprep.subr.mxu0 0.0
        %5987 = vmatpush2.msra.mxu0 0.0
        %5988 = vmatprep.subr.mxu0 0.0
        %5989 = vmatpush2.msra.mxu0 0.0
        %5990 = vmatprep.subr.mxu0 0.0
        %5991 = vmatpush2.msra.mxu0 0.0
        %5992 = vmatprep.subr.mxu0 0.0
        %5993 = vmatpush2.msra.mxu0 0.0
        %5994 = vmatprep.subr.mxu0 0.0
        %5995 = vmatpush2.msra.mxu0 0.0
        %5996 = vmatprep.subr.mxu0 0.0
        %5997 = vmatpush2.msra.mxu0 0.0
        %5998 = vmatprep.subr.mxu0 0.0
        %5999 = vmatpush2.msra.mxu0 0.0
        %6000 = vmatprep.subr.mxu0 0.0
        %6001 = vmatpush2.msra.mxu0 0.0
        %6002 = vmatprep.subr.mxu0 0.0
        %6003 = vmatpush2.msra.mxu0 0.0
        %6004 = vmatprep.subr.mxu0 0.0
        %6005 = vmatpush2.msra.mxu0 0.0
        %6006 = vmatprep.mubr.f32.mxu0 0.0
        %6007 = vmatmul.mubr.f32.gmra.mxu0 %v4474
        %v6008 = vpop.f32.mrf.mxu0
        %v6009 = vadd.f32 0.0, %v6008
        %v6010 = vpop.f32.mrf.mxu0
        %6011 = vdwg.mxu0
        %6012 = vmatprep.subr.mxu0 0.0
        %6013 = vmatpush1.msra.mxu0 0.0
        %6014 = vmatprep.subr.mxu0 0.0
        %6015 = vmatpush1.msra.mxu0 0.0
        %6016 = vmatprep.subr.mxu0 0.0
        %6017 = vmatpush1.msra.mxu0 0.0
        %6018 = vmatprep.subr.mxu0 0.0
        %6019 = vmatpush1.msra.mxu0 0.0
        %6020 = vmatprep.subr.mxu0 0.0
        %6021 = vmatpush1.msra.mxu0 0.0
        %6022 = vmatprep.subr.mxu0 0.0
        %6023 = vmatpush1.msra.mxu0 0.0
        %6024 = vmatprep.subr.mxu0 0.0
        %6025 = vmatpush1.msra.mxu0 0.0
        %6026 = vmatprep.subr.mxu0 0.0
        %6027 = vmatpush1.msra.mxu0 0.0
        %6028 = vmatprep.subr.mxu0 0.0
        %6029 = vmatpush1.msra.mxu0 0.0
        %6030 = vmatprep.subr.mxu0 0.0
        %6031 = vmatpush1.msra.mxu0 0.0
        %6032 = vmatprep.subr.mxu0 0.0
        %6033 = vmatpush1.msra.mxu0 0.0
        %6034 = vmatprep.subr.mxu0 0.0
        %6035 = vmatpush1.msra.mxu0 0.0
        %6036 = vmatprep.subr.mxu0 0.0
        %6037 = vmatpush1.msra.mxu0 %v5653
        %6038 = vmatprep.subr.mxu0 0.0
        %6039 = vmatpush1.msra.mxu0 %v5652
        %6040 = vmatprep.subr.mxu0 0.0
        %6041 = vmatpush1.msra.mxu0 %v5651
        %6042 = vmatprep.subr.mxu0 0.0
        %6043 = vmatpush1.msra.mxu0 %v5650
        %6044 = vmatprep.subr.mxu0 0.0
        %6045 = vmatpush2.msra.mxu0 0.0
        %6046 = vmatprep.subr.mxu0 0.0
        %6047 = vmatpush2.msra.mxu0 0.0
        %6048 = vmatprep.subr.mxu0 0.0
        %6049 = vmatpush2.msra.mxu0 0.0
        %6050 = vmatprep.subr.mxu0 0.0
        %6051 = vmatpush2.msra.mxu0 0.0
        %6052 = vmatprep.subr.mxu0 0.0
        %6053 = vmatpush2.msra.mxu0 0.0
        %6054 = vmatprep.subr.mxu0 0.0
        %6055 = vmatpush2.msra.mxu0 0.0
        %6056 = vmatprep.subr.mxu0 0.0
        %6057 = vmatpush2.msra.mxu0 0.0
        %6058 = vmatprep.subr.mxu0 0.0
        %6059 = vmatpush2.msra.mxu0 0.0
        %6060 = vmatprep.subr.mxu0 0.0
        %6061 = vmatpush2.msra.mxu0 0.0
        %6062 = vmatprep.subr.mxu0 0.0
        %6063 = vmatpush2.msra.mxu0 0.0
        %6064 = vmatprep.subr.mxu0 0.0
        %6065 = vmatpush2.msra.mxu0 0.0
        %6066 = vmatprep.subr.mxu0 0.0
        %6067 = vmatpush2.msra.mxu0 0.0
        %6068 = vmatprep.subr.mxu0 0.0
        %6069 = vmatpush2.msra.mxu0 0.0
        %6070 = vmatprep.subr.mxu0 0.0
        %6071 = vmatpush2.msra.mxu0 0.0
        %6072 = vmatprep.subr.mxu0 0.0
        %6073 = vmatpush2.msra.mxu0 0.0
        %6074 = vmatprep.subr.mxu0 0.0
        %6075 = vmatpush2.msra.mxu0 0.0
        %6076 = vmatprep.mubr.f32.mxu0 0.0
        %6077 = vmatmul.mubr.f32.gmra.mxu0 %v4474
        %v6078 = vpop.f32.mrf.mxu0
        %v6079 = vadd.f32 0.0, %v6078
        %v6080 = vpop.f32.mrf.mxu0
        %6081 = vdwg.mxu0
        %6082 = vmatprep.subr.mxu0 0.0
        %6083 = vmatpush1.msra.mxu0 0.0
        %6084 = vmatprep.subr.mxu0 0.0
        %6085 = vmatpush1.msra.mxu0 0.0
        %6086 = vmatprep.subr.mxu0 0.0
        %6087 = vmatpush1.msra.mxu0 0.0
        %6088 = vmatprep.subr.mxu0 0.0
        %6089 = vmatpush1.msra.mxu0 0.0
        %6090 = vmatprep.subr.mxu0 0.0
        %6091 = vmatpush1.msra.mxu0 0.0
        %6092 = vmatprep.subr.mxu0 0.0
        %6093 = vmatpush1.msra.mxu0 0.0
        %6094 = vmatprep.subr.mxu0 0.0
        %6095 = vmatpush1.msra.mxu0 0.0
        %6096 = vmatprep.subr.mxu0 0.0
        %6097 = vmatpush1.msra.mxu0 0.0
        %6098 = vmatprep.subr.mxu0 0.0
        %6099 = vmatpush1.msra.mxu0 0.0
        %6100 = vmatprep.subr.mxu0 0.0
        %6101 = vmatpush1.msra.mxu0 0.0
        %6102 = vmatprep.subr.mxu0 0.0
        %6103 = vmatpush1.msra.mxu0 0.0
        %6104 = vmatprep.subr.mxu0 0.0
        %6105 = vmatpush1.msra.mxu0 0.0
        %6106 = vmatprep.subr.mxu0 0.0
        %6107 = vmatpush1.msra.mxu0 %v5657
        %6108 = vmatprep.subr.mxu0 0.0
        %6109 = vmatpush1.msra.mxu0 %v5656
        %6110 = vmatprep.subr.mxu0 0.0
        %6111 = vmatpush1.msra.mxu0 %v5655
        %6112 = vmatprep.subr.mxu0 0.0
        %6113 = vmatpush1.msra.mxu0 %v5654
        %6114 = vmatprep.subr.mxu0 0.0
        %6115 = vmatpush2.msra.mxu0 0.0
        %6116 = vmatprep.subr.mxu0 0.0
        %6117 = vmatpush2.msra.mxu0 0.0
        %6118 = vmatprep.subr.mxu0 0.0
        %6119 = vmatpush2.msra.mxu0 0.0
        %6120 = vmatprep.subr.mxu0 0.0
        %6121 = vmatpush2.msra.mxu0 0.0
        %6122 = vmatprep.subr.mxu0 0.0
        %6123 = vmatpush2.msra.mxu0 0.0
        %6124 = vmatprep.subr.mxu0 0.0
        %6125 = vmatpush2.msra.mxu0 0.0
        %6126 = vmatprep.subr.mxu0 0.0
        %6127 = vmatpush2.msra.mxu0 0.0
        %6128 = vmatprep.subr.mxu0 0.0
        %6129 = vmatpush2.msra.mxu0 0.0
        %6130 = vmatprep.subr.mxu0 0.0
        %6131 = vmatpush2.msra.mxu0 0.0
        %6132 = vmatprep.subr.mxu0 0.0
        %6133 = vmatpush2.msra.mxu0 0.0
        %6134 = vmatprep.subr.mxu0 0.0
        %6135 = vmatpush2.msra.mxu0 0.0
        %6136 = vmatprep.subr.mxu0 0.0
        %6137 = vmatpush2.msra.mxu0 0.0
        %6138 = vmatprep.subr.mxu0 0.0
        %6139 = vmatpush2.msra.mxu0 0.0
        %6140 = vmatprep.subr.mxu0 0.0
        %6141 = vmatpush2.msra.mxu0 0.0
        %6142 = vmatprep.subr.mxu0 0.0
        %6143 = vmatpush2.msra.mxu0 0.0
        %6144 = vmatprep.subr.mxu0 0.0
        %6145 = vmatpush2.msra.mxu0 0.0
        %6146 = vmatprep.mubr.f32.mxu0 0.0
        %6147 = vmatmul.mubr.f32.gmra.mxu0 %v4474
        %v6148 = vpop.f32.mrf.mxu0
        %v6149 = vadd.f32 0.0, %v6148
        %v6150 = vpop.f32.mrf.mxu0
        %6151 = vdwg.mxu0
        %6152 = vmatprep.subr.mxu0 0.0
        %6153 = vmatpush1.msra.mxu0 0.0
        %6154 = vmatprep.subr.mxu0 0.0
        %6155 = vmatpush1.msra.mxu0 0.0
        %6156 = vmatprep.subr.mxu0 0.0
        %6157 = vmatpush1.msra.mxu0 0.0
        %6158 = vmatprep.subr.mxu0 0.0
        %6159 = vmatpush1.msra.mxu0 0.0
        %6160 = vmatprep.subr.mxu0 0.0
        %6161 = vmatpush1.msra.mxu0 0.0
        %6162 = vmatprep.subr.mxu0 0.0
        %6163 = vmatpush1.msra.mxu0 0.0
        %6164 = vmatprep.subr.mxu0 0.0
        %6165 = vmatpush1.msra.mxu0 0.0
        %6166 = vmatprep.subr.mxu0 0.0
        %6167 = vmatpush1.msra.mxu0 0.0
        %6168 = vmatprep.subr.mxu0 0.0
        %6169 = vmatpush1.msra.mxu0 0.0
        %6170 = vmatprep.subr.mxu0 0.0
        %6171 = vmatpush1.msra.mxu0 0.0
        %6172 = vmatprep.subr.mxu0 0.0
        %6173 = vmatpush1.msra.mxu0 0.0
        %6174 = vmatprep.subr.mxu0 0.0
        %6175 = vmatpush1.msra.mxu0 0.0
        %6176 = vmatprep.subr.mxu0 0.0
        %6177 = vmatpush1.msra.mxu0 %v5661
        %6178 = vmatprep.subr.mxu0 0.0
        %6179 = vmatpush1.msra.mxu0 %v5660
        %6180 = vmatprep.subr.mxu0 0.0
        %6181 = vmatpush1.msra.mxu0 %v5659
        %6182 = vmatprep.subr.mxu0 0.0
        %6183 = vmatpush1.msra.mxu0 %v5658
        %6184 = vmatprep.subr.mxu0 0.0
        %6185 = vmatpush2.msra.mxu0 0.0
        %6186 = vmatprep.subr.mxu0 0.0
        %6187 = vmatpush2.msra.mxu0 0.0
        %6188 = vmatprep.subr.mxu0 0.0
        %6189 = vmatpush2.msra.mxu0 0.0
        %6190 = vmatprep.subr.mxu0 0.0
        %6191 = vmatpush2.msra.mxu0 0.0
        %6192 = vmatprep.subr.mxu0 0.0
        %6193 = vmatpush2.msra.mxu0 0.0
        %6194 = vmatprep.subr.mxu0 0.0
        %6195 = vmatpush2.msra.mxu0 0.0
        %6196 = vmatprep.subr.mxu0 0.0
        %6197 = vmatpush2.msra.mxu0 0.0
        %6198 = vmatprep.subr.mxu0 0.0
        %6199 = vmatpush2.msra.mxu0 0.0
        %6200 = vmatprep.subr.mxu0 0.0
        %6201 = vmatpush2.msra.mxu0 0.0
        %6202 = vmatprep.subr.mxu0 0.0
        %6203 = vmatpush2.msra.mxu0 0.0
        %6204 = vmatprep.subr.mxu0 0.0
        %6205 = vmatpush2.msra.mxu0 0.0
        %6206 = vmatprep.subr.mxu0 0.0
        %6207 = vmatpush2.msra.mxu0 0.0
        %6208 = vmatprep.subr.mxu0 0.0
        %6209 = vmatpush2.msra.mxu0 0.0
        %6210 = vmatprep.subr.mxu0 0.0
        %6211 = vmatpush2.msra.mxu0 0.0
        %6212 = vmatprep.subr.mxu0 0.0
        %6213 = vmatpush2.msra.mxu0 0.0
        %6214 = vmatprep.subr.mxu0 0.0
        %6215 = vmatpush2.msra.mxu0 0.0
        %6216 = vmatprep.mubr.f32.mxu0 0.0
        %6217 = vmatmul.mubr.f32.gmra.mxu0 %v4474
        %v6218 = vpop.f32.mrf.mxu0
        %v6219 = vadd.f32 0.0, %v6218
        %v6220 = vpop.f32.mrf.mxu0
        %6221 = vdwg.mxu0
        %v6223 = vsel %vm2274, %v4543, 0
        %v6226 = vsel %vm2274, %v5136, 0
        %6228 = vmatprep.subr.mxu0 0.0
        %6229 = vmatpush1.xpose.msra.mxu0 0.0
        %6230 = vmatprep.subr.mxu0 0.0
        %6231 = vmatpush1.xpose.msra.mxu0 0.0
        %6232 = vmatprep.subr.mxu0 0.0
        %6233 = vmatpush1.xpose.msra.mxu0 0.0
        %6234 = vmatprep.subr.mxu0 0.0
        %6235 = vmatpush1.xpose.msra.mxu0 0.0
        %6236 = vmatprep.subr.mxu0 0.0
        %6237 = vmatpush1.xpose.msra.mxu0 0.0
        %6238 = vmatprep.subr.mxu0 0.0
        %6239 = vmatpush1.xpose.msra.mxu0 0.0
        %6240 = vmatprep.subr.mxu0 0.0
        %6241 = vmatpush1.xpose.msra.mxu0 0.0
        %6242 = vmatprep.subr.mxu0 0.0
        %6243 = vmatpush1.xpose.msra.mxu0 0.0
        %6244 = vmatprep.subr.mxu0 0.0
        %6245 = vmatpush1.xpose.msra.mxu0 0.0
        %6246 = vmatprep.subr.mxu0 0.0
        %6247 = vmatpush1.xpose.msra.mxu0 0.0
        %6248 = vmatprep.subr.mxu0 0.0
        %6249 = vmatpush1.xpose.msra.mxu0 0.0
        %6250 = vmatprep.subr.mxu0 0.0
        %6251 = vmatpush1.xpose.msra.mxu0 0.0
        %6252 = vmatprep.subr.mxu0 0.0
        %6253 = vmatpush1.xpose.msra.mxu0 0.0
        %6254 = vmatprep.subr.mxu0 0.0
        %6255 = vmatpush1.xpose.msra.mxu0 0.0
        %6256 = vmatprep.subr.mxu0 0.0
        %6257 = vmatpush1.xpose.msra.mxu0 0.0
        %6258 = vmatprep.subr.mxu0 0.0
        %6259 = vmatpush1.xpose.msra.mxu0 %v6226
        %6260 = vmatprep.subr.mxu0 0.0
        %6261 = vmatpush2.xpose.msra.mxu0 0.0
        %6262 = vmatprep.subr.mxu0 0.0
        %6263 = vmatpush2.xpose.msra.mxu0 0.0
        %6264 = vmatprep.subr.mxu0 0.0
        %6265 = vmatpush2.xpose.msra.mxu0 0.0
        %6266 = vmatprep.subr.mxu0 0.0
        %6267 = vmatpush2.xpose.msra.mxu0 0.0
        %6268 = vmatprep.subr.mxu0 0.0
        %6269 = vmatpush2.xpose.msra.mxu0 0.0
        %6270 = vmatprep.subr.mxu0 0.0
        %6271 = vmatpush2.xpose.msra.mxu0 0.0
        %6272 = vmatprep.subr.mxu0 0.0
        %6273 = vmatpush2.xpose.msra.mxu0 0.0
        %6274 = vmatprep.subr.mxu0 0.0
        %6275 = vmatpush2.xpose.msra.mxu0 0.0
        %6276 = vmatprep.subr.mxu0 0.0
        %6277 = vmatpush2.xpose.msra.mxu0 0.0
        %6278 = vmatprep.subr.mxu0 0.0
        %6279 = vmatpush2.xpose.msra.mxu0 0.0
        %6280 = vmatprep.subr.mxu0 0.0
        %6281 = vmatpush2.xpose.msra.mxu0 0.0
        %6282 = vmatprep.subr.mxu0 0.0
        %6283 = vmatpush2.xpose.msra.mxu0 0.0
        %6284 = vmatprep.subr.mxu0 0.0
        %6285 = vmatpush2.xpose.msra.mxu0 0.0
        %6286 = vmatprep.subr.mxu0 0.0
        %6287 = vmatpush2.xpose.msra.mxu0 0.0
        %6288 = vmatprep.subr.mxu0 0.0
        %6289 = vmatpush2.xpose.msra.mxu0 0.0
        %6290 = vmatprep.subr.mxu0 0.0
        %6291 = vmatpush2.xpose.msra.mxu0 0.0
        %6292 = vmatprep.mubr.f32.mxu0 0.0
        %6293 = vmatmul.mubr.f32.gmra.mxu0 %v6223
        %v6294 = vpop.f32.mrf.mxu0
        %v6295 = vadd.f32 0.0, %v6294
        %v6296 = vpop.f32.mrf.mxu0
        %6297 = vdwg.mxu0
        %v6299 = vsel %vm2274, %v4613, 0
        %v6302 = vsel %vm2274, %v5206, 0
        %6304 = vmatprep.subr.mxu0 0.0
        %6305 = vmatpush1.xpose.msra.mxu0 0.0
        %6306 = vmatprep.subr.mxu0 0.0
        %6307 = vmatpush1.xpose.msra.mxu0 0.0
        %6308 = vmatprep.subr.mxu0 0.0
        %6309 = vmatpush1.xpose.msra.mxu0 0.0
        %6310 = vmatprep.subr.mxu0 0.0
        %6311 = vmatpush1.xpose.msra.mxu0 0.0
        %6312 = vmatprep.subr.mxu0 0.0
        %6313 = vmatpush1.xpose.msra.mxu0 0.0
        %6314 = vmatprep.subr.mxu0 0.0
        %6315 = vmatpush1.xpose.msra.mxu0 0.0
        %6316 = vmatprep.subr.mxu0 0.0
        %6317 = vmatpush1.xpose.msra.mxu0 0.0
        %6318 = vmatprep.subr.mxu0 0.0
        %6319 = vmatpush1.xpose.msra.mxu0 0.0
        %6320 = vmatprep.subr.mxu0 0.0
        %6321 = vmatpush1.xpose.msra.mxu0 0.0
        %6322 = vmatprep.subr.mxu0 0.0
        %6323 = vmatpush1.xpose.msra.mxu0 0.0
        %6324 = vmatprep.subr.mxu0 0.0
        %6325 = vmatpush1.xpose.msra.mxu0 0.0
        %6326 = vmatprep.subr.mxu0 0.0
        %6327 = vmatpush1.xpose.msra.mxu0 0.0
        %6328 = vmatprep.subr.mxu0 0.0
        %6329 = vmatpush1.xpose.msra.mxu0 0.0
        %6330 = vmatprep.subr.mxu0 0.0
        %6331 = vmatpush1.xpose.msra.mxu0 0.0
        %6332 = vmatprep.subr.mxu0 0.0
        %6333 = vmatpush1.xpose.msra.mxu0 0.0
        %6334 = vmatprep.subr.mxu0 0.0
        %6335 = vmatpush1.xpose.msra.mxu0 %v6302
        %6336 = vmatprep.subr.mxu0 0.0
        %6337 = vmatpush2.xpose.msra.mxu0 0.0
        %6338 = vmatprep.subr.mxu0 0.0
        %6339 = vmatpush2.xpose.msra.mxu0 0.0
        %6340 = vmatprep.subr.mxu0 0.0
        %6341 = vmatpush2.xpose.msra.mxu0 0.0
        %6342 = vmatprep.subr.mxu0 0.0
        %6343 = vmatpush2.xpose.msra.mxu0 0.0
        %6344 = vmatprep.subr.mxu0 0.0
        %6345 = vmatpush2.xpose.msra.mxu0 0.0
        %6346 = vmatprep.subr.mxu0 0.0
        %6347 = vmatpush2.xpose.msra.mxu0 0.0
        %6348 = vmatprep.subr.mxu0 0.0
        %6349 = vmatpush2.xpose.msra.mxu0 0.0
        %6350 = vmatprep.subr.mxu0 0.0
        %6351 = vmatpush2.xpose.msra.mxu0 0.0
        %6352 = vmatprep.subr.mxu0 0.0
        %6353 = vmatpush2.xpose.msra.mxu0 0.0
        %6354 = vmatprep.subr.mxu0 0.0
        %6355 = vmatpush2.xpose.msra.mxu0 0.0
        %6356 = vmatprep.subr.mxu0 0.0
        %6357 = vmatpush2.xpose.msra.mxu0 0.0
        %6358 = vmatprep.subr.mxu0 0.0
        %6359 = vmatpush2.xpose.msra.mxu0 0.0
        %6360 = vmatprep.subr.mxu0 0.0
        %6361 = vmatpush2.xpose.msra.mxu0 0.0
        %6362 = vmatprep.subr.mxu0 0.0
        %6363 = vmatpush2.xpose.msra.mxu0 0.0
        %6364 = vmatprep.subr.mxu0 0.0
        %6365 = vmatpush2.xpose.msra.mxu0 0.0
        %6366 = vmatprep.subr.mxu0 0.0
        %6367 = vmatpush2.xpose.msra.mxu0 0.0
        %6368 = vmatprep.mubr.f32.mxu0 0.0
        %6369 = vmatmul.mubr.f32.gmra.mxu0 %v6299
        %v6370 = vpop.f32.mrf.mxu0
        %v6371 = vadd.f32 0.0, %v6370
        %v6372 = vpop.f32.mrf.mxu0
        %6373 = vdwg.mxu0
        %v6375 = vsel %vm2274, %v4683, 0
        %v6378 = vsel %vm2274, %v5276, 0
        %6380 = vmatprep.subr.mxu0 0.0
        %6381 = vmatpush1.xpose.msra.mxu0 0.0
        %6382 = vmatprep.subr.mxu0 0.0
        %6383 = vmatpush1.xpose.msra.mxu0 0.0
        %6384 = vmatprep.subr.mxu0 0.0
        %6385 = vmatpush1.xpose.msra.mxu0 0.0
        %6386 = vmatprep.subr.mxu0 0.0
        %6387 = vmatpush1.xpose.msra.mxu0 0.0
        %6388 = vmatprep.subr.mxu0 0.0
        %6389 = vmatpush1.xpose.msra.mxu0 0.0
        %6390 = vmatprep.subr.mxu0 0.0
        %6391 = vmatpush1.xpose.msra.mxu0 0.0
        %6392 = vmatprep.subr.mxu0 0.0
        %6393 = vmatpush1.xpose.msra.mxu0 0.0
        %6394 = vmatprep.subr.mxu0 0.0
        %6395 = vmatpush1.xpose.msra.mxu0 0.0
        %6396 = vmatprep.subr.mxu0 0.0
        %6397 = vmatpush1.xpose.msra.mxu0 0.0
        %6398 = vmatprep.subr.mxu0 0.0
        %6399 = vmatpush1.xpose.msra.mxu0 0.0
        %6400 = vmatprep.subr.mxu0 0.0
        %6401 = vmatpush1.xpose.msra.mxu0 0.0
        %6402 = vmatprep.subr.mxu0 0.0
        %6403 = vmatpush1.xpose.msra.mxu0 0.0
        %6404 = vmatprep.subr.mxu0 0.0
        %6405 = vmatpush1.xpose.msra.mxu0 0.0
        %6406 = vmatprep.subr.mxu0 0.0
        %6407 = vmatpush1.xpose.msra.mxu0 0.0
        %6408 = vmatprep.subr.mxu0 0.0
        %6409 = vmatpush1.xpose.msra.mxu0 0.0
        %6410 = vmatprep.subr.mxu0 0.0
        %6411 = vmatpush1.xpose.msra.mxu0 %v6378
        %6412 = vmatprep.subr.mxu0 0.0
        %6413 = vmatpush2.xpose.msra.mxu0 0.0
        %6414 = vmatprep.subr.mxu0 0.0
        %6415 = vmatpush2.xpose.msra.mxu0 0.0
        %6416 = vmatprep.subr.mxu0 0.0
        %6417 = vmatpush2.xpose.msra.mxu0 0.0
        %6418 = vmatprep.subr.mxu0 0.0
        %6419 = vmatpush2.xpose.msra.mxu0 0.0
        %6420 = vmatprep.subr.mxu0 0.0
        %6421 = vmatpush2.xpose.msra.mxu0 0.0
        %6422 = vmatprep.subr.mxu0 0.0
        %6423 = vmatpush2.xpose.msra.mxu0 0.0
        %6424 = vmatprep.subr.mxu0 0.0
        %6425 = vmatpush2.xpose.msra.mxu0 0.0
        %6426 = vmatprep.subr.mxu0 0.0
        %6427 = vmatpush2.xpose.msra.mxu0 0.0
        %6428 = vmatprep.subr.mxu0 0.0
        %6429 = vmatpush2.xpose.msra.mxu0 0.0
        %6430 = vmatprep.subr.mxu0 0.0
        %6431 = vmatpush2.xpose.msra.mxu0 0.0
        %6432 = vmatprep.subr.mxu0 0.0
        %6433 = vmatpush2.xpose.msra.mxu0 0.0
        %6434 = vmatprep.subr.mxu0 0.0
        %6435 = vmatpush2.xpose.msra.mxu0 0.0
        %6436 = vmatprep.subr.mxu0 0.0
        %6437 = vmatpush2.xpose.msra.mxu0 0.0
        %6438 = vmatprep.subr.mxu0 0.0
        %6439 = vmatpush2.xpose.msra.mxu0 0.0
        %6440 = vmatprep.subr.mxu0 0.0
        %6441 = vmatpush2.xpose.msra.mxu0 0.0
        %6442 = vmatprep.subr.mxu0 0.0
        %6443 = vmatpush2.xpose.msra.mxu0 0.0
        %6444 = vmatprep.mubr.f32.mxu0 0.0
        %6445 = vmatmul.mubr.f32.gmra.mxu0 %v6375
        %v6446 = vpop.f32.mrf.mxu0
        %v6447 = vadd.f32 0.0, %v6446
        %v6448 = vpop.f32.mrf.mxu0
        %6449 = vdwg.mxu0
        %v6451 = vsel %vm2274, %v4753, 0
        %v6454 = vsel %vm2274, %v5346, 0
        %6456 = vmatprep.subr.mxu0 0.0
        %6457 = vmatpush1.xpose.msra.mxu0 0.0
        %6458 = vmatprep.subr.mxu0 0.0
        %6459 = vmatpush1.xpose.msra.mxu0 0.0
        %6460 = vmatprep.subr.mxu0 0.0
        %6461 = vmatpush1.xpose.msra.mxu0 0.0
        %6462 = vmatprep.subr.mxu0 0.0
        %6463 = vmatpush1.xpose.msra.mxu0 0.0
        %6464 = vmatprep.subr.mxu0 0.0
        %6465 = vmatpush1.xpose.msra.mxu0 0.0
        %6466 = vmatprep.subr.mxu0 0.0
        %6467 = vmatpush1.xpose.msra.mxu0 0.0
        %6468 = vmatprep.subr.mxu0 0.0
        %6469 = vmatpush1.xpose.msra.mxu0 0.0
        %6470 = vmatprep.subr.mxu0 0.0
        %6471 = vmatpush1.xpose.msra.mxu0 0.0
        %6472 = vmatprep.subr.mxu0 0.0
        %6473 = vmatpush1.xpose.msra.mxu0 0.0
        %6474 = vmatprep.subr.mxu0 0.0
        %6475 = vmatpush1.xpose.msra.mxu0 0.0
        %6476 = vmatprep.subr.mxu0 0.0
        %6477 = vmatpush1.xpose.msra.mxu0 0.0
        %6478 = vmatprep.subr.mxu0 0.0
        %6479 = vmatpush1.xpose.msra.mxu0 0.0
        %6480 = vmatprep.subr.mxu0 0.0
        %6481 = vmatpush1.xpose.msra.mxu0 0.0
        %6482 = vmatprep.subr.mxu0 0.0
        %6483 = vmatpush1.xpose.msra.mxu0 0.0
        %6484 = vmatprep.subr.mxu0 0.0
        %6485 = vmatpush1.xpose.msra.mxu0 0.0
        %6486 = vmatprep.subr.mxu0 0.0
        %6487 = vmatpush1.xpose.msra.mxu0 %v6454
        %6488 = vmatprep.subr.mxu0 0.0
        %6489 = vmatpush2.xpose.msra.mxu0 0.0
        %6490 = vmatprep.subr.mxu0 0.0
        %6491 = vmatpush2.xpose.msra.mxu0 0.0
        %6492 = vmatprep.subr.mxu0 0.0
        %6493 = vmatpush2.xpose.msra.mxu0 0.0
        %6494 = vmatprep.subr.mxu0 0.0
        %6495 = vmatpush2.xpose.msra.mxu0 0.0
        %6496 = vmatprep.subr.mxu0 0.0
        %6497 = vmatpush2.xpose.msra.mxu0 0.0
        %6498 = vmatprep.subr.mxu0 0.0
        %6499 = vmatpush2.xpose.msra.mxu0 0.0
        %6500 = vmatprep.subr.mxu0 0.0
        %6501 = vmatpush2.xpose.msra.mxu0 0.0
        %6502 = vmatprep.subr.mxu0 0.0
        %6503 = vmatpush2.xpose.msra.mxu0 0.0
        %6504 = vmatprep.subr.mxu0 0.0
        %6505 = vmatpush2.xpose.msra.mxu0 0.0
        %6506 = vmatprep.subr.mxu0 0.0
        %6507 = vmatpush2.xpose.msra.mxu0 0.0
        %6508 = vmatprep.subr.mxu0 0.0
        %6509 = vmatpush2.xpose.msra.mxu0 0.0
        %6510 = vmatprep.subr.mxu0 0.0
        %6511 = vmatpush2.xpose.msra.mxu0 0.0
        %6512 = vmatprep.subr.mxu0 0.0
        %6513 = vmatpush2.xpose.msra.mxu0 0.0
        %6514 = vmatprep.subr.mxu0 0.0
        %6515 = vmatpush2.xpose.msra.mxu0 0.0
        %6516 = vmatprep.subr.mxu0 0.0
        %6517 = vmatpush2.xpose.msra.mxu0 0.0
        %6518 = vmatprep.subr.mxu0 0.0
        %6519 = vmatpush2.xpose.msra.mxu0 0.0
        %6520 = vmatprep.mubr.f32.mxu0 0.0
        %6521 = vmatmul.mubr.f32.gmra.mxu0 %v6451
        %v6522 = vpop.f32.mrf.mxu0
        %v6523 = vadd.f32 0.0, %v6522
        %v6524 = vpop.f32.mrf.mxu0
        %6525 = vdwg.mxu0
        %v6527 = vsel %vm2274, %v4823, 0
        %v6530 = vsel %vm2274, %v5416, 0
        %6532 = vmatprep.subr.mxu0 0.0
        %6533 = vmatpush1.xpose.msra.mxu0 0.0
        %6534 = vmatprep.subr.mxu0 0.0
        %6535 = vmatpush1.xpose.msra.mxu0 0.0
        %6536 = vmatprep.subr.mxu0 0.0
        %6537 = vmatpush1.xpose.msra.mxu0 0.0
        %6538 = vmatprep.subr.mxu0 0.0
        %6539 = vmatpush1.xpose.msra.mxu0 0.0
        %6540 = vmatprep.subr.mxu0 0.0
        %6541 = vmatpush1.xpose.msra.mxu0 0.0
        %6542 = vmatprep.subr.mxu0 0.0
        %6543 = vmatpush1.xpose.msra.mxu0 0.0
        %6544 = vmatprep.subr.mxu0 0.0
        %6545 = vmatpush1.xpose.msra.mxu0 0.0
        %6546 = vmatprep.subr.mxu0 0.0
        %6547 = vmatpush1.xpose.msra.mxu0 0.0
        %6548 = vmatprep.subr.mxu0 0.0
        %6549 = vmatpush1.xpose.msra.mxu0 0.0
        %6550 = vmatprep.subr.mxu0 0.0
        %6551 = vmatpush1.xpose.msra.mxu0 0.0
        %6552 = vmatprep.subr.mxu0 0.0
        %6553 = vmatpush1.xpose.msra.mxu0 0.0
        %6554 = vmatprep.subr.mxu0 0.0
        %6555 = vmatpush1.xpose.msra.mxu0 0.0
        %6556 = vmatprep.subr.mxu0 0.0
        %6557 = vmatpush1.xpose.msra.mxu0 0.0
        %6558 = vmatprep.subr.mxu0 0.0
        %6559 = vmatpush1.xpose.msra.mxu0 0.0
        %6560 = vmatprep.subr.mxu0 0.0
        %6561 = vmatpush1.xpose.msra.mxu0 0.0
        %6562 = vmatprep.subr.mxu0 0.0
        %6563 = vmatpush1.xpose.msra.mxu0 %v6530
        %6564 = vmatprep.subr.mxu0 0.0
        %6565 = vmatpush2.xpose.msra.mxu0 0.0
        %6566 = vmatprep.subr.mxu0 0.0
        %6567 = vmatpush2.xpose.msra.mxu0 0.0
        %6568 = vmatprep.subr.mxu0 0.0
        %6569 = vmatpush2.xpose.msra.mxu0 0.0
        %6570 = vmatprep.subr.mxu0 0.0
        %6571 = vmatpush2.xpose.msra.mxu0 0.0
        %6572 = vmatprep.subr.mxu0 0.0
        %6573 = vmatpush2.xpose.msra.mxu0 0.0
        %6574 = vmatprep.subr.mxu0 0.0
        %6575 = vmatpush2.xpose.msra.mxu0 0.0
        %6576 = vmatprep.subr.mxu0 0.0
        %6577 = vmatpush2.xpose.msra.mxu0 0.0
        %6578 = vmatprep.subr.mxu0 0.0
        %6579 = vmatpush2.xpose.msra.mxu0 0.0
        %6580 = vmatprep.subr.mxu0 0.0
        %6581 = vmatpush2.xpose.msra.mxu0 0.0
        %6582 = vmatprep.subr.mxu0 0.0
        %6583 = vmatpush2.xpose.msra.mxu0 0.0
        %6584 = vmatprep.subr.mxu0 0.0
        %6585 = vmatpush2.xpose.msra.mxu0 0.0
        %6586 = vmatprep.subr.mxu0 0.0
        %6587 = vmatpush2.xpose.msra.mxu0 0.0
        %6588 = vmatprep.subr.mxu0 0.0
        %6589 = vmatpush2.xpose.msra.mxu0 0.0
        %6590 = vmatprep.subr.mxu0 0.0
        %6591 = vmatpush2.xpose.msra.mxu0 0.0
        %6592 = vmatprep.subr.mxu0 0.0
        %6593 = vmatpush2.xpose.msra.mxu0 0.0
        %6594 = vmatprep.subr.mxu0 0.0
        %6595 = vmatpush2.xpose.msra.mxu0 0.0
        %6596 = vmatprep.mubr.f32.mxu0 0.0
        %6597 = vmatmul.mubr.f32.gmra.mxu0 %v6527
        %v6598 = vpop.f32.mrf.mxu0
        %v6599 = vadd.f32 0.0, %v6598
        %v6600 = vpop.f32.mrf.mxu0
        %6601 = vdwg.mxu0
        %v6603 = vsel %vm2274, %v4893, 0
        %v6606 = vsel %vm2274, %v5486, 0
        %6608 = vmatprep.subr.mxu0 0.0
        %6609 = vmatpush1.xpose.msra.mxu0 0.0
        %6610 = vmatprep.subr.mxu0 0.0
        %6611 = vmatpush1.xpose.msra.mxu0 0.0
        %6612 = vmatprep.subr.mxu0 0.0
        %6613 = vmatpush1.xpose.msra.mxu0 0.0
        %6614 = vmatprep.subr.mxu0 0.0
        %6615 = vmatpush1.xpose.msra.mxu0 0.0
        %6616 = vmatprep.subr.mxu0 0.0
        %6617 = vmatpush1.xpose.msra.mxu0 0.0
        %6618 = vmatprep.subr.mxu0 0.0
        %6619 = vmatpush1.xpose.msra.mxu0 0.0
        %6620 = vmatprep.subr.mxu0 0.0
        %6621 = vmatpush1.xpose.msra.mxu0 0.0
        %6622 = vmatprep.subr.mxu0 0.0
        %6623 = vmatpush1.xpose.msra.mxu0 0.0
        %6624 = vmatprep.subr.mxu0 0.0
        %6625 = vmatpush1.xpose.msra.mxu0 0.0
        %6626 = vmatprep.subr.mxu0 0.0
        %6627 = vmatpush1.xpose.msra.mxu0 0.0
        %6628 = vmatprep.subr.mxu0 0.0
        %6629 = vmatpush1.xpose.msra.mxu0 0.0
        %6630 = vmatprep.subr.mxu0 0.0
        %6631 = vmatpush1.xpose.msra.mxu0 0.0
        %6632 = vmatprep.subr.mxu0 0.0
        %6633 = vmatpush1.xpose.msra.mxu0 0.0
        %6634 = vmatprep.subr.mxu0 0.0
        %6635 = vmatpush1.xpose.msra.mxu0 0.0
        %6636 = vmatprep.subr.mxu0 0.0
        %6637 = vmatpush1.xpose.msra.mxu0 0.0
        %6638 = vmatprep.subr.mxu0 0.0
        %6639 = vmatpush1.xpose.msra.mxu0 %v6606
        %6640 = vmatprep.subr.mxu0 0.0
        %6641 = vmatpush2.xpose.msra.mxu0 0.0
        %6642 = vmatprep.subr.mxu0 0.0
        %6643 = vmatpush2.xpose.msra.mxu0 0.0
        %6644 = vmatprep.subr.mxu0 0.0
        %6645 = vmatpush2.xpose.msra.mxu0 0.0
        %6646 = vmatprep.subr.mxu0 0.0
        %6647 = vmatpush2.xpose.msra.mxu0 0.0
        %6648 = vmatprep.subr.mxu0 0.0
        %6649 = vmatpush2.xpose.msra.mxu0 0.0
        %6650 = vmatprep.subr.mxu0 0.0
        %6651 = vmatpush2.xpose.msra.mxu0 0.0
        %6652 = vmatprep.subr.mxu0 0.0
        %6653 = vmatpush2.xpose.msra.mxu0 0.0
        %6654 = vmatprep.subr.mxu0 0.0
        %6655 = vmatpush2.xpose.msra.mxu0 0.0
        %6656 = vmatprep.subr.mxu0 0.0
        %6657 = vmatpush2.xpose.msra.mxu0 0.0
        %6658 = vmatprep.subr.mxu0 0.0
        %6659 = vmatpush2.xpose.msra.mxu0 0.0
        %6660 = vmatprep.subr.mxu0 0.0
        %6661 = vmatpush2.xpose.msra.mxu0 0.0
        %6662 = vmatprep.subr.mxu0 0.0
        %6663 = vmatpush2.xpose.msra.mxu0 0.0
        %6664 = vmatprep.subr.mxu0 0.0
        %6665 = vmatpush2.xpose.msra.mxu0 0.0
        %6666 = vmatprep.subr.mxu0 0.0
        %6667 = vmatpush2.xpose.msra.mxu0 0.0
        %6668 = vmatprep.subr.mxu0 0.0
        %6669 = vmatpush2.xpose.msra.mxu0 0.0
        %6670 = vmatprep.subr.mxu0 0.0
        %6671 = vmatpush2.xpose.msra.mxu0 0.0
        %6672 = vmatprep.mubr.f32.mxu0 0.0
        %6673 = vmatmul.mubr.f32.gmra.mxu0 %v6603
        %v6674 = vpop.f32.mrf.mxu0
        %v6675 = vadd.f32 0.0, %v6674
        %v6676 = vpop.f32.mrf.mxu0
        %6677 = vdwg.mxu0
        %v6679 = vsel %vm2274, %v4963, 0
        %v6682 = vsel %vm2274, %v5556, 0
        %6684 = vmatprep.subr.mxu0 0.0
        %6685 = vmatpush1.xpose.msra.mxu0 0.0
        %6686 = vmatprep.subr.mxu0 0.0
        %6687 = vmatpush1.xpose.msra.mxu0 0.0
        %6688 = vmatprep.subr.mxu0 0.0
        %6689 = vmatpush1.xpose.msra.mxu0 0.0
        %6690 = vmatprep.subr.mxu0 0.0
        %6691 = vmatpush1.xpose.msra.mxu0 0.0
        %6692 = vmatprep.subr.mxu0 0.0
        %6693 = vmatpush1.xpose.msra.mxu0 0.0
        %6694 = vmatprep.subr.mxu0 0.0
        %6695 = vmatpush1.xpose.msra.mxu0 0.0
        %6696 = vmatprep.subr.mxu0 0.0
        %6697 = vmatpush1.xpose.msra.mxu0 0.0
        %6698 = vmatprep.subr.mxu0 0.0
        %6699 = vmatpush1.xpose.msra.mxu0 0.0
        %6700 = vmatprep.subr.mxu0 0.0
        %6701 = vmatpush1.xpose.msra.mxu0 0.0
        %6702 = vmatprep.subr.mxu0 0.0
        %6703 = vmatpush1.xpose.msra.mxu0 0.0
        %6704 = vmatprep.subr.mxu0 0.0
        %6705 = vmatpush1.xpose.msra.mxu0 0.0
        %6706 = vmatprep.subr.mxu0 0.0
        %6707 = vmatpush1.xpose.msra.mxu0 0.0
        %6708 = vmatprep.subr.mxu0 0.0
        %6709 = vmatpush1.xpose.msra.mxu0 0.0
        %6710 = vmatprep.subr.mxu0 0.0
        %6711 = vmatpush1.xpose.msra.mxu0 0.0
        %6712 = vmatprep.subr.mxu0 0.0
        %6713 = vmatpush1.xpose.msra.mxu0 0.0
        %6714 = vmatprep.subr.mxu0 0.0
        %6715 = vmatpush1.xpose.msra.mxu0 %v6682
        %6716 = vmatprep.subr.mxu0 0.0
        %6717 = vmatpush2.xpose.msra.mxu0 0.0
        %6718 = vmatprep.subr.mxu0 0.0
        %6719 = vmatpush2.xpose.msra.mxu0 0.0
        %6720 = vmatprep.subr.mxu0 0.0
        %6721 = vmatpush2.xpose.msra.mxu0 0.0
        %6722 = vmatprep.subr.mxu0 0.0
        %6723 = vmatpush2.xpose.msra.mxu0 0.0
        %6724 = vmatprep.subr.mxu0 0.0
        %6725 = vmatpush2.xpose.msra.mxu0 0.0
        %6726 = vmatprep.subr.mxu0 0.0
        %6727 = vmatpush2.xpose.msra.mxu0 0.0
        %6728 = vmatprep.subr.mxu0 0.0
        %6729 = vmatpush2.xpose.msra.mxu0 0.0
        %6730 = vmatprep.subr.mxu0 0.0
        %6731 = vmatpush2.xpose.msra.mxu0 0.0
        %6732 = vmatprep.subr.mxu0 0.0
        %6733 = vmatpush2.xpose.msra.mxu0 0.0
        %6734 = vmatprep.subr.mxu0 0.0
        %6735 = vmatpush2.xpose.msra.mxu0 0.0
        %6736 = vmatprep.subr.mxu0 0.0
        %6737 = vmatpush2.xpose.msra.mxu0 0.0
        %6738 = vmatprep.subr.mxu0 0.0
        %6739 = vmatpush2.xpose.msra.mxu0 0.0
        %6740 = vmatprep.subr.mxu0 0.0
        %6741 = vmatpush2.xpose.msra.mxu0 0.0
        %6742 = vmatprep.subr.mxu0 0.0
        %6743 = vmatpush2.xpose.msra.mxu0 0.0
        %6744 = vmatprep.subr.mxu0 0.0
        %6745 = vmatpush2.xpose.msra.mxu0 0.0
        %6746 = vmatprep.subr.mxu0 0.0
        %6747 = vmatpush2.xpose.msra.mxu0 0.0
        %6748 = vmatprep.mubr.f32.mxu0 0.0
        %6749 = vmatmul.mubr.f32.gmra.mxu0 %v6679
        %v6750 = vpop.f32.mrf.mxu0
        %v6751 = vadd.f32 0.0, %v6750
        %v6752 = vpop.f32.mrf.mxu0
        %6753 = vdwg.mxu0
        %v6755 = vsel %vm2274, %v5033, 0
        %v6758 = vsel %vm2274, %v5626, 0
        %6760 = vmatprep.subr.mxu0 0.0
        %6761 = vmatpush1.xpose.msra.mxu0 0.0
        %6762 = vmatprep.subr.mxu0 0.0
        %6763 = vmatpush1.xpose.msra.mxu0 0.0
        %6764 = vmatprep.subr.mxu0 0.0
        %6765 = vmatpush1.xpose.msra.mxu0 0.0
        %6766 = vmatprep.subr.mxu0 0.0
        %6767 = vmatpush1.xpose.msra.mxu0 0.0
        %6768 = vmatprep.subr.mxu0 0.0
        %6769 = vmatpush1.xpose.msra.mxu0 0.0
        %6770 = vmatprep.subr.mxu0 0.0
        %6771 = vmatpush1.xpose.msra.mxu0 0.0
        %6772 = vmatprep.subr.mxu0 0.0
        %6773 = vmatpush1.xpose.msra.mxu0 0.0
        %6774 = vmatprep.subr.mxu0 0.0
        %6775 = vmatpush1.xpose.msra.mxu0 0.0
        %6776 = vmatprep.subr.mxu0 0.0
        %6777 = vmatpush1.xpose.msra.mxu0 0.0
        %6778 = vmatprep.subr.mxu0 0.0
        %6779 = vmatpush1.xpose.msra.mxu0 0.0
        %6780 = vmatprep.subr.mxu0 0.0
        %6781 = vmatpush1.xpose.msra.mxu0 0.0
        %6782 = vmatprep.subr.mxu0 0.0
        %6783 = vmatpush1.xpose.msra.mxu0 0.0
        %6784 = vmatprep.subr.mxu0 0.0
        %6785 = vmatpush1.xpose.msra.mxu0 0.0
        %6786 = vmatprep.subr.mxu0 0.0
        %6787 = vmatpush1.xpose.msra.mxu0 0.0
        %6788 = vmatprep.subr.mxu0 0.0
        %6789 = vmatpush1.xpose.msra.mxu0 0.0
        %6790 = vmatprep.subr.mxu0 0.0
        %6791 = vmatpush1.xpose.msra.mxu0 %v6758
        %6792 = vmatprep.subr.mxu0 0.0
        %6793 = vmatpush2.xpose.msra.mxu0 0.0
        %6794 = vmatprep.subr.mxu0 0.0
        %6795 = vmatpush2.xpose.msra.mxu0 0.0
        %6796 = vmatprep.subr.mxu0 0.0
        %6797 = vmatpush2.xpose.msra.mxu0 0.0
        %6798 = vmatprep.subr.mxu0 0.0
        %6799 = vmatpush2.xpose.msra.mxu0 0.0
        %6800 = vmatprep.subr.mxu0 0.0
        %6801 = vmatpush2.xpose.msra.mxu0 0.0
        %6802 = vmatprep.subr.mxu0 0.0
        %6803 = vmatpush2.xpose.msra.mxu0 0.0
        %6804 = vmatprep.subr.mxu0 0.0
        %6805 = vmatpush2.xpose.msra.mxu0 0.0
        %6806 = vmatprep.subr.mxu0 0.0
        %6807 = vmatpush2.xpose.msra.mxu0 0.0
        %6808 = vmatprep.subr.mxu0 0.0
        %6809 = vmatpush2.xpose.msra.mxu0 0.0
        %6810 = vmatprep.subr.mxu0 0.0
        %6811 = vmatpush2.xpose.msra.mxu0 0.0
        %6812 = vmatprep.subr.mxu0 0.0
        %6813 = vmatpush2.xpose.msra.mxu0 0.0
        %6814 = vmatprep.subr.mxu0 0.0
        %6815 = vmatpush2.xpose.msra.mxu0 0.0
        %6816 = vmatprep.subr.mxu0 0.0
        %6817 = vmatpush2.xpose.msra.mxu0 0.0
        %6818 = vmatprep.subr.mxu0 0.0
        %6819 = vmatpush2.xpose.msra.mxu0 0.0
        %6820 = vmatprep.subr.mxu0 0.0
        %6821 = vmatpush2.xpose.msra.mxu0 0.0
        %6822 = vmatprep.subr.mxu0 0.0
        %6823 = vmatpush2.xpose.msra.mxu0 0.0
        %6824 = vmatprep.mubr.f32.mxu0 0.0
        %6825 = vmatmul.mubr.f32.gmra.mxu0 %v6755
        %v6826 = vpop.f32.mrf.mxu0
        %v6827 = vadd.f32 0.0, %v6826
        %v6828 = vpop.f32.mrf.mxu0
        %6829 = vdwg.mxu0
        %v6830 = vmul.f32 %v6295, 0.17677669
        %v6831 = vmul.f32 %v6371, 0.17677669
        %v6832 = vmul.f32 %v6447, 0.17677669
        %v6833 = vmul.f32 %v6523, 0.17677669
        %v6834 = vmul.f32 %v6599, 0.17677669
        %v6835 = vmul.f32 %v6675, 0.17677669
        %v6836 = vmul.f32 %v6751, 0.17677669
        %v6837 = vmul.f32 %v6827, 0.17677669
        %v6838 = vsel %vm2891, %v6830, -inf
        %6839 = vmax.xlane.f32.xlu0 %v6838
        %v6840 = vpop.xlane.xlu0 %6839
        %v6841 = vsel %vm2891, %v6831, -inf
        %6842 = vmax.xlane.f32.xlu0 %v6841
        %v6843 = vpop.xlane.xlu0 %6842
        %v6844 = vsel %vm2891, %v6832, -inf
        %6845 = vmax.xlane.f32.xlu0 %v6844
        %v6846 = vpop.xlane.xlu0 %6845
        %v6847 = vsel %vm2891, %v6833, -inf
        %6848 = vmax.xlane.f32.xlu0 %v6847
        %v6849 = vpop.xlane.xlu0 %6848
        %v6850 = vsel %vm2891, %v6834, -inf
        %6851 = vmax.xlane.f32.xlu0 %v6850
        %v6852 = vpop.xlane.xlu0 %6851
        %v6853 = vsel %vm2891, %v6835, -inf
        %6854 = vmax.xlane.f32.xlu0 %v6853
        %v6855 = vpop.xlane.xlu0 %6854
        %v6856 = vsel %vm2891, %v6836, -inf
        %6857 = vmax.xlane.f32.xlu0 %v6856
        %v6858 = vpop.xlane.xlu0 %6857
        %v6859 = vsel %vm2891, %v6837, -inf
        %6860 = vmax.xlane.f32.xlu0 %v6859
        %v6861 = vpop.xlane.xlu0 %6860
        %v6862 = vsub.f32 %v6830, %v6840
        %v6863 = vsub.f32 %v6831, %v6843
        %v6864 = vsub.f32 %v6832, %v6846
        %v6865 = vsub.f32 %v6833, %v6849
        %v6866 = vsub.f32 %v6834, %v6852
        %v6867 = vsub.f32 %v6835, %v6855
        %v6868 = vsub.f32 %v6836, %v6858
        %v6869 = vsub.f32 %v6837, %v6861
        %v6870 = vmul.f32 %v6862, 1.442695
        %v6871 = vpow.pop %v6870
        %v6872 = vmul.f32 %v6863, 1.442695
        %v6873 = vpow.pop %v6872
        %v6874 = vmul.f32 %v6864, 1.442695
        %v6875 = vpow.pop %v6874
        %v6876 = vmul.f32 %v6865, 1.442695
        %v6877 = vpow.pop %v6876
        %v6878 = vmul.f32 %v6866, 1.442695
        %v6879 = vpow.pop %v6878
        %v6880 = vmul.f32 %v6867, 1.442695
        %v6881 = vpow.pop %v6880
        %v6882 = vmul.f32 %v6868, 1.442695
        %v6883 = vpow.pop %v6882
        %v6884 = vmul.f32 %v6869, 1.442695
        %v6885 = vpow.pop %v6884
        %v6886 = vsel %vm2891, %v6871, 0.0
        %6887 = vadd.xlane.f32.xlu0 %v6886
        %v6888 = vpop.xlane.xlu0 %6887
        %v6889 = vsel %vm2891, %v6873, 0.0
        %6890 = vadd.xlane.f32.xlu0 %v6889
        %v6891 = vpop.xlane.xlu0 %6890
        %v6892 = vsel %vm2891, %v6875, 0.0
        %6893 = vadd.xlane.f32.xlu0 %v6892
        %v6894 = vpop.xlane.xlu0 %6893
        %v6895 = vsel %vm2891, %v6877, 0.0
        %6896 = vadd.xlane.f32.xlu0 %v6895
        %v6897 = vpop.xlane.xlu0 %6896
        %v6898 = vsel %vm2891, %v6879, 0.0
        %6899 = vadd.xlane.f32.xlu0 %v6898
        %v6900 = vpop.xlane.xlu0 %6899
        %v6901 = vsel %vm2891, %v6881, 0.0
        %6902 = vadd.xlane.f32.xlu0 %v6901
        %v6903 = vpop.xlane.xlu0 %6902
        %v6904 = vsel %vm2891, %v6883, 0.0
        %6905 = vadd.xlane.f32.xlu0 %v6904
        %v6906 = vpop.xlane.xlu0 %6905
        %v6907 = vsel %vm2891, %v6885, 0.0
        %6908 = vadd.xlane.f32.xlu0 %v6907
        %v6909 = vpop.xlane.xlu0 %6908
        %v6910 = vrcp.pop %v6888
        %v6911 = vrcp.pop %v6891
        %v6912 = vrcp.pop %v6894
        %v6913 = vrcp.pop %v6897
        %v6914 = vrcp.pop %v6900
        %v6915 = vrcp.pop %v6903
        %v6916 = vrcp.pop %v6906
        %v6917 = vrcp.pop %v6909
        %v6918 = vmul.f32 %v6871, %v6910
        %v6919 = vmul.f32 %v6873, %v6911
        %v6920 = vmul.f32 %v6875, %v6912
        %v6921 = vmul.f32 %v6877, %v6913
        %v6922 = vmul.f32 %v6879, %v6914
        %v6923 = vmul.f32 %v6881, %v6915
        %v6924 = vmul.f32 %v6883, %v6916
        %v6925 = vmul.f32 %v6885, %v6917
        %v6927 = vsel %vm2891, %v6918, 0
        %6929 = vmatprep.subr.mxu0 0.0
        %6930 = vmatpush1.msra.mxu0 0.0
        %6931 = vmatprep.subr.mxu0 0.0
        %6932 = vmatpush1.msra.mxu0 0.0
        %6933 = vmatprep.subr.mxu0 0.0
        %6934 = vmatpush1.msra.mxu0 0.0
        %6935 = vmatprep.subr.mxu0 0.0
        %6936 = vmatpush1.msra.mxu0 0.0
        %6937 = vmatprep.subr.mxu0 0.0
        %6938 = vmatpush1.msra.mxu0 0.0
        %6939 = vmatprep.subr.mxu0 0.0
        %6940 = vmatpush1.msra.mxu0 0.0
        %6941 = vmatprep.subr.mxu0 0.0
        %6942 = vmatpush1.msra.mxu0 0.0
        %6943 = vmatprep.subr.mxu0 0.0
        %6944 = vmatpush1.msra.mxu0 0.0
        %6945 = vmatprep.subr.mxu0 0.0
        %6946 = vmatpush1.msra.mxu0 0.0
        %6947 = vmatprep.subr.mxu0 0.0
        %6948 = vmatpush1.msra.mxu0 0.0
        %6949 = vmatprep.subr.mxu0 0.0
        %6950 = vmatpush1.msra.mxu0 0.0
        %6951 = vmatprep.subr.mxu0 0.0
        %6952 = vmatpush1.msra.mxu0 0.0
        %6953 = vmatprep.subr.mxu0 0.0
        %6954 = vmatpush1.msra.mxu0 0.0
        %6955 = vmatprep.subr.mxu0 0.0
        %6956 = vmatpush1.msra.mxu0 0.0
        %6957 = vmatprep.subr.mxu0 0.0
        %6958 = vmatpush1.msra.mxu0 0.0
        %6959 = vmatprep.subr.mxu0 0.0
        %6960 = vmatpush1.msra.mxu0 %v5729
        %6961 = vmatprep.subr.mxu0 0.0
        %6962 = vmatpush2.msra.mxu0 0.0
        %6963 = vmatprep.subr.mxu0 0.0
        %6964 = vmatpush2.msra.mxu0 0.0
        %6965 = vmatprep.subr.mxu0 0.0
        %6966 = vmatpush2.msra.mxu0 0.0
        %6967 = vmatprep.subr.mxu0 0.0
        %6968 = vmatpush2.msra.mxu0 0.0
        %6969 = vmatprep.subr.mxu0 0.0
        %6970 = vmatpush2.msra.mxu0 0.0
        %6971 = vmatprep.subr.mxu0 0.0
        %6972 = vmatpush2.msra.mxu0 0.0
        %6973 = vmatprep.subr.mxu0 0.0
        %6974 = vmatpush2.msra.mxu0 0.0
        %6975 = vmatprep.subr.mxu0 0.0
        %6976 = vmatpush2.msra.mxu0 0.0
        %6977 = vmatprep.subr.mxu0 0.0
        %6978 = vmatpush2.msra.mxu0 0.0
        %6979 = vmatprep.subr.mxu0 0.0
        %6980 = vmatpush2.msra.mxu0 0.0
        %6981 = vmatprep.subr.mxu0 0.0
        %6982 = vmatpush2.msra.mxu0 0.0
        %6983 = vmatprep.subr.mxu0 0.0
        %6984 = vmatpush2.msra.mxu0 0.0
        %6985 = vmatprep.subr.mxu0 0.0
        %6986 = vmatpush2.msra.mxu0 0.0
        %6987 = vmatprep.subr.mxu0 0.0
        %6988 = vmatpush2.msra.mxu0 0.0
        %6989 = vmatprep.subr.mxu0 0.0
        %6990 = vmatpush2.msra.mxu0 0.0
        %6991 = vmatprep.subr.mxu0 0.0
        %6992 = vmatpush2.msra.mxu0 0.0
        %6993 = vmatprep.mubr.f32.mxu0 0.0
        %6994 = vmatmul.mubr.f32.gmra.mxu0 %v6927
        %v6995 = vpop.f32.mrf.mxu0
        %v6996 = vadd.f32 0.0, %v6995
        %v6997 = vpop.f32.mrf.mxu0
        %6998 = vdwg.mxu0
        %v7000 = vsel %vm2891, %v6919, 0
        %7002 = vmatprep.subr.mxu0 0.0
        %7003 = vmatpush1.msra.mxu0 0.0
        %7004 = vmatprep.subr.mxu0 0.0
        %7005 = vmatpush1.msra.mxu0 0.0
        %7006 = vmatprep.subr.mxu0 0.0
        %7007 = vmatpush1.msra.mxu0 0.0
        %7008 = vmatprep.subr.mxu0 0.0
        %7009 = vmatpush1.msra.mxu0 0.0
        %7010 = vmatprep.subr.mxu0 0.0
        %7011 = vmatpush1.msra.mxu0 0.0
        %7012 = vmatprep.subr.mxu0 0.0
        %7013 = vmatpush1.msra.mxu0 0.0
        %7014 = vmatprep.subr.mxu0 0.0
        %7015 = vmatpush1.msra.mxu0 0.0
        %7016 = vmatprep.subr.mxu0 0.0
        %7017 = vmatpush1.msra.mxu0 0.0
        %7018 = vmatprep.subr.mxu0 0.0
        %7019 = vmatpush1.msra.mxu0 0.0
        %7020 = vmatprep.subr.mxu0 0.0
        %7021 = vmatpush1.msra.mxu0 0.0
        %7022 = vmatprep.subr.mxu0 0.0
        %7023 = vmatpush1.msra.mxu0 0.0
        %7024 = vmatprep.subr.mxu0 0.0
        %7025 = vmatpush1.msra.mxu0 0.0
        %7026 = vmatprep.subr.mxu0 0.0
        %7027 = vmatpush1.msra.mxu0 0.0
        %7028 = vmatprep.subr.mxu0 0.0
        %7029 = vmatpush1.msra.mxu0 0.0
        %7030 = vmatprep.subr.mxu0 0.0
        %7031 = vmatpush1.msra.mxu0 0.0
        %7032 = vmatprep.subr.mxu0 0.0
        %7033 = vmatpush1.msra.mxu0 %v5799
        %7034 = vmatprep.subr.mxu0 0.0
        %7035 = vmatpush2.msra.mxu0 0.0
        %7036 = vmatprep.subr.mxu0 0.0
        %7037 = vmatpush2.msra.mxu0 0.0
        %7038 = vmatprep.subr.mxu0 0.0
        %7039 = vmatpush2.msra.mxu0 0.0
        %7040 = vmatprep.subr.mxu0 0.0
        %7041 = vmatpush2.msra.mxu0 0.0
        %7042 = vmatprep.subr.mxu0 0.0
        %7043 = vmatpush2.msra.mxu0 0.0
        %7044 = vmatprep.subr.mxu0 0.0
        %7045 = vmatpush2.msra.mxu0 0.0
        %7046 = vmatprep.subr.mxu0 0.0
        %7047 = vmatpush2.msra.mxu0 0.0
        %7048 = vmatprep.subr.mxu0 0.0
        %7049 = vmatpush2.msra.mxu0 0.0
        %7050 = vmatprep.subr.mxu0 0.0
        %7051 = vmatpush2.msra.mxu0 0.0
        %7052 = vmatprep.subr.mxu0 0.0
        %7053 = vmatpush2.msra.mxu0 0.0
        %7054 = vmatprep.subr.mxu0 0.0
        %7055 = vmatpush2.msra.mxu0 0.0
        %7056 = vmatprep.subr.mxu0 0.0
        %7057 = vmatpush2.msra.mxu0 0.0
        %7058 = vmatprep.subr.mxu0 0.0
        %7059 = vmatpush2.msra.mxu0 0.0
        %7060 = vmatprep.subr.mxu0 0.0
        %7061 = vmatpush2.msra.mxu0 0.0
        %7062 = vmatprep.subr.mxu0 0.0
        %7063 = vmatpush2.msra.mxu0 0.0
        %7064 = vmatprep.subr.mxu0 0.0
        %7065 = vmatpush2.msra.mxu0 0.0
        %7066 = vmatprep.mubr.f32.mxu0 0.0
        %7067 = vmatmul.mubr.f32.gmra.mxu0 %v7000
        %v7068 = vpop.f32.mrf.mxu0
        %v7069 = vadd.f32 0.0, %v7068
        %v7070 = vpop.f32.mrf.mxu0
        %7071 = vdwg.mxu0
        %v7073 = vsel %vm2891, %v6920, 0
        %7075 = vmatprep.subr.mxu0 0.0
        %7076 = vmatpush1.msra.mxu0 0.0
        %7077 = vmatprep.subr.mxu0 0.0
        %7078 = vmatpush1.msra.mxu0 0.0
        %7079 = vmatprep.subr.mxu0 0.0
        %7080 = vmatpush1.msra.mxu0 0.0
        %7081 = vmatprep.subr.mxu0 0.0
        %7082 = vmatpush1.msra.mxu0 0.0
        %7083 = vmatprep.subr.mxu0 0.0
        %7084 = vmatpush1.msra.mxu0 0.0
        %7085 = vmatprep.subr.mxu0 0.0
        %7086 = vmatpush1.msra.mxu0 0.0
        %7087 = vmatprep.subr.mxu0 0.0
        %7088 = vmatpush1.msra.mxu0 0.0
        %7089 = vmatprep.subr.mxu0 0.0
        %7090 = vmatpush1.msra.mxu0 0.0
        %7091 = vmatprep.subr.mxu0 0.0
        %7092 = vmatpush1.msra.mxu0 0.0
        %7093 = vmatprep.subr.mxu0 0.0
        %7094 = vmatpush1.msra.mxu0 0.0
        %7095 = vmatprep.subr.mxu0 0.0
        %7096 = vmatpush1.msra.mxu0 0.0
        %7097 = vmatprep.subr.mxu0 0.0
        %7098 = vmatpush1.msra.mxu0 0.0
        %7099 = vmatprep.subr.mxu0 0.0
        %7100 = vmatpush1.msra.mxu0 0.0
        %7101 = vmatprep.subr.mxu0 0.0
        %7102 = vmatpush1.msra.mxu0 0.0
        %7103 = vmatprep.subr.mxu0 0.0
        %7104 = vmatpush1.msra.mxu0 0.0
        %7105 = vmatprep.subr.mxu0 0.0
        %7106 = vmatpush1.msra.mxu0 %v5869
        %7107 = vmatprep.subr.mxu0 0.0
        %7108 = vmatpush2.msra.mxu0 0.0
        %7109 = vmatprep.subr.mxu0 0.0
        %7110 = vmatpush2.msra.mxu0 0.0
        %7111 = vmatprep.subr.mxu0 0.0
        %7112 = vmatpush2.msra.mxu0 0.0
        %7113 = vmatprep.subr.mxu0 0.0
        %7114 = vmatpush2.msra.mxu0 0.0
        %7115 = vmatprep.subr.mxu0 0.0
        %7116 = vmatpush2.msra.mxu0 0.0
        %7117 = vmatprep.subr.mxu0 0.0
        %7118 = vmatpush2.msra.mxu0 0.0
        %7119 = vmatprep.subr.mxu0 0.0
        %7120 = vmatpush2.msra.mxu0 0.0
        %7121 = vmatprep.subr.mxu0 0.0
        %7122 = vmatpush2.msra.mxu0 0.0
        %7123 = vmatprep.subr.mxu0 0.0
        %7124 = vmatpush2.msra.mxu0 0.0
        %7125 = vmatprep.subr.mxu0 0.0
        %7126 = vmatpush2.msra.mxu0 0.0
        %7127 = vmatprep.subr.mxu0 0.0
        %7128 = vmatpush2.msra.mxu0 0.0
        %7129 = vmatprep.subr.mxu0 0.0
        %7130 = vmatpush2.msra.mxu0 0.0
        %7131 = vmatprep.subr.mxu0 0.0
        %7132 = vmatpush2.msra.mxu0 0.0
        %7133 = vmatprep.subr.mxu0 0.0
        %7134 = vmatpush2.msra.mxu0 0.0
        %7135 = vmatprep.subr.mxu0 0.0
        %7136 = vmatpush2.msra.mxu0 0.0
        %7137 = vmatprep.subr.mxu0 0.0
        %7138 = vmatpush2.msra.mxu0 0.0
        %7139 = vmatprep.mubr.f32.mxu0 0.0
        %7140 = vmatmul.mubr.f32.gmra.mxu0 %v7073
        %v7141 = vpop.f32.mrf.mxu0
        %v7142 = vadd.f32 0.0, %v7141
        %v7143 = vpop.f32.mrf.mxu0
        %7144 = vdwg.mxu0
        %v7146 = vsel %vm2891, %v6921, 0
        %7148 = vmatprep.subr.mxu0 0.0
        %7149 = vmatpush1.msra.mxu0 0.0
        %7150 = vmatprep.subr.mxu0 0.0
        %7151 = vmatpush1.msra.mxu0 0.0
        %7152 = vmatprep.subr.mxu0 0.0
        %7153 = vmatpush1.msra.mxu0 0.0
        %7154 = vmatprep.subr.mxu0 0.0
        %7155 = vmatpush1.msra.mxu0 0.0
        %7156 = vmatprep.subr.mxu0 0.0
        %7157 = vmatpush1.msra.mxu0 0.0
        %7158 = vmatprep.subr.mxu0 0.0
        %7159 = vmatpush1.msra.mxu0 0.0
        %7160 = vmatprep.subr.mxu0 0.0
        %7161 = vmatpush1.msra.mxu0 0.0
        %7162 = vmatprep.subr.mxu0 0.0
        %7163 = vmatpush1.msra.mxu0 0.0
        %7164 = vmatprep.subr.mxu0 0.0
        %7165 = vmatpush1.msra.mxu0 0.0
        %7166 = vmatprep.subr.mxu0 0.0
        %7167 = vmatpush1.msra.mxu0 0.0
        %7168 = vmatprep.subr.mxu0 0.0
        %7169 = vmatpush1.msra.mxu0 0.0
        %7170 = vmatprep.subr.mxu0 0.0
        %7171 = vmatpush1.msra.mxu0 0.0
        %7172 = vmatprep.subr.mxu0 0.0
        %7173 = vmatpush1.msra.mxu0 0.0
        %7174 = vmatprep.subr.mxu0 0.0
        %7175 = vmatpush1.msra.mxu0 0.0
        %7176 = vmatprep.subr.mxu0 0.0
        %7177 = vmatpush1.msra.mxu0 0.0
        %7178 = vmatprep.subr.mxu0 0.0
        %7179 = vmatpush1.msra.mxu0 %v5939
        %7180 = vmatprep.subr.mxu0 0.0
        %7181 = vmatpush2.msra.mxu0 0.0
        %7182 = vmatprep.subr.mxu0 0.0
        %7183 = vmatpush2.msra.mxu0 0.0
        %7184 = vmatprep.subr.mxu0 0.0
        %7185 = vmatpush2.msra.mxu0 0.0
        %7186 = vmatprep.subr.mxu0 0.0
        %7187 = vmatpush2.msra.mxu0 0.0
        %7188 = vmatprep.subr.mxu0 0.0
        %7189 = vmatpush2.msra.mxu0 0.0
        %7190 = vmatprep.subr.mxu0 0.0
        %7191 = vmatpush2.msra.mxu0 0.0
        %7192 = vmatprep.subr.mxu0 0.0
        %7193 = vmatpush2.msra.mxu0 0.0
        %7194 = vmatprep.subr.mxu0 0.0
        %7195 = vmatpush2.msra.mxu0 0.0
        %7196 = vmatprep.subr.mxu0 0.0
        %7197 = vmatpush2.msra.mxu0 0.0
        %7198 = vmatprep.subr.mxu0 0.0
        %7199 = vmatpush2.msra.mxu0 0.0
        %7200 = vmatprep.subr.mxu0 0.0
        %7201 = vmatpush2.msra.mxu0 0.0
        %7202 = vmatprep.subr.mxu0 0.0
        %7203 = vmatpush2.msra.mxu0 0.0
        %7204 = vmatprep.subr.mxu0 0.0
        %7205 = vmatpush2.msra.mxu0 0.0
        %7206 = vmatprep.subr.mxu0 0.0
        %7207 = vmatpush2.msra.mxu0 0.0
        %7208 = vmatprep.subr.mxu0 0.0
        %7209 = vmatpush2.msra.mxu0 0.0
        %7210 = vmatprep.subr.mxu0 0.0
        %7211 = vmatpush2.msra.mxu0 0.0
        %7212 = vmatprep.mubr.f32.mxu0 0.0
        %7213 = vmatmul.mubr.f32.gmra.mxu0 %v7146
        %v7214 = vpop.f32.mrf.mxu0
        %v7215 = vadd.f32 0.0, %v7214
        %v7216 = vpop.f32.mrf.mxu0
        %7217 = vdwg.mxu0
        %v7219 = vsel %vm2891, %v6922, 0
        %7221 = vmatprep.subr.mxu0 0.0
        %7222 = vmatpush1.msra.mxu0 0.0
        %7223 = vmatprep.subr.mxu0 0.0
        %7224 = vmatpush1.msra.mxu0 0.0
        %7225 = vmatprep.subr.mxu0 0.0
        %7226 = vmatpush1.msra.mxu0 0.0
        %7227 = vmatprep.subr.mxu0 0.0
        %7228 = vmatpush1.msra.mxu0 0.0
        %7229 = vmatprep.subr.mxu0 0.0
        %7230 = vmatpush1.msra.mxu0 0.0
        %7231 = vmatprep.subr.mxu0 0.0
        %7232 = vmatpush1.msra.mxu0 0.0
        %7233 = vmatprep.subr.mxu0 0.0
        %7234 = vmatpush1.msra.mxu0 0.0
        %7235 = vmatprep.subr.mxu0 0.0
        %7236 = vmatpush1.msra.mxu0 0.0
        %7237 = vmatprep.subr.mxu0 0.0
        %7238 = vmatpush1.msra.mxu0 0.0
        %7239 = vmatprep.subr.mxu0 0.0
        %7240 = vmatpush1.msra.mxu0 0.0
        %7241 = vmatprep.subr.mxu0 0.0
        %7242 = vmatpush1.msra.mxu0 0.0
        %7243 = vmatprep.subr.mxu0 0.0
        %7244 = vmatpush1.msra.mxu0 0.0
        %7245 = vmatprep.subr.mxu0 0.0
        %7246 = vmatpush1.msra.mxu0 0.0
        %7247 = vmatprep.subr.mxu0 0.0
        %7248 = vmatpush1.msra.mxu0 0.0
        %7249 = vmatprep.subr.mxu0 0.0
        %7250 = vmatpush1.msra.mxu0 0.0
        %7251 = vmatprep.subr.mxu0 0.0
        %7252 = vmatpush1.msra.mxu0 %v6009
        %7253 = vmatprep.subr.mxu0 0.0
        %7254 = vmatpush2.msra.mxu0 0.0
        %7255 = vmatprep.subr.mxu0 0.0
        %7256 = vmatpush2.msra.mxu0 0.0
        %7257 = vmatprep.subr.mxu0 0.0
        %7258 = vmatpush2.msra.mxu0 0.0
        %7259 = vmatprep.subr.mxu0 0.0
        %7260 = vmatpush2.msra.mxu0 0.0
        %7261 = vmatprep.subr.mxu0 0.0
        %7262 = vmatpush2.msra.mxu0 0.0
        %7263 = vmatprep.subr.mxu0 0.0
        %7264 = vmatpush2.msra.mxu0 0.0
        %7265 = vmatprep.subr.mxu0 0.0
        %7266 = vmatpush2.msra.mxu0 0.0
        %7267 = vmatprep.subr.mxu0 0.0
        %7268 = vmatpush2.msra.mxu0 0.0
        %7269 = vmatprep.subr.mxu0 0.0
        %7270 = vmatpush2.msra.mxu0 0.0
        %7271 = vmatprep.subr.mxu0 0.0
        %7272 = vmatpush2.msra.mxu0 0.0
        %7273 = vmatprep.subr.mxu0 0.0
        %7274 = vmatpush2.msra.mxu0 0.0
        %7275 = vmatprep.subr.mxu0 0.0
        %7276 = vmatpush2.msra.mxu0 0.0
        %7277 = vmatprep.subr.mxu0 0.0
        %7278 = vmatpush2.msra.mxu0 0.0
        %7279 = vmatprep.subr.mxu0 0.0
        %7280 = vmatpush2.msra.mxu0 0.0
        %7281 = vmatprep.subr.mxu0 0.0
        %7282 = vmatpush2.msra.mxu0 0.0
        %7283 = vmatprep.subr.mxu0 0.0
        %7284 = vmatpush2.msra.mxu0 0.0
        %7285 = vmatprep.mubr.f32.mxu0 0.0
        %7286 = vmatmul.mubr.f32.gmra.mxu0 %v7219
        %v7287 = vpop.f32.mrf.mxu0
        %v7288 = vadd.f32 0.0, %v7287
        %v7289 = vpop.f32.mrf.mxu0
        %7290 = vdwg.mxu0
        %v7292 = vsel %vm2891, %v6923, 0
        %7294 = vmatprep.subr.mxu0 0.0
        %7295 = vmatpush1.msra.mxu0 0.0
        %7296 = vmatprep.subr.mxu0 0.0
        %7297 = vmatpush1.msra.mxu0 0.0
        %7298 = vmatprep.subr.mxu0 0.0
        %7299 = vmatpush1.msra.mxu0 0.0
        %7300 = vmatprep.subr.mxu0 0.0
        %7301 = vmatpush1.msra.mxu0 0.0
        %7302 = vmatprep.subr.mxu0 0.0
        %7303 = vmatpush1.msra.mxu0 0.0
        %7304 = vmatprep.subr.mxu0 0.0
        %7305 = vmatpush1.msra.mxu0 0.0
        %7306 = vmatprep.subr.mxu0 0.0
        %7307 = vmatpush1.msra.mxu0 0.0
        %7308 = vmatprep.subr.mxu0 0.0
        %7309 = vmatpush1.msra.mxu0 0.0
        %7310 = vmatprep.subr.mxu0 0.0
        %7311 = vmatpush1.msra.mxu0 0.0
        %7312 = vmatprep.subr.mxu0 0.0
        %7313 = vmatpush1.msra.mxu0 0.0
        %7314 = vmatprep.subr.mxu0 0.0
        %7315 = vmatpush1.msra.mxu0 0.0
        %7316 = vmatprep.subr.mxu0 0.0
        %7317 = vmatpush1.msra.mxu0 0.0
        %7318 = vmatprep.subr.mxu0 0.0
        %7319 = vmatpush1.msra.mxu0 0.0
        %7320 = vmatprep.subr.mxu0 0.0
        %7321 = vmatpush1.msra.mxu0 0.0
        %7322 = vmatprep.subr.mxu0 0.0
        %7323 = vmatpush1.msra.mxu0 0.0
        %7324 = vmatprep.subr.mxu0 0.0
        %7325 = vmatpush1.msra.mxu0 %v6079
        %7326 = vmatprep.subr.mxu0 0.0
        %7327 = vmatpush2.msra.mxu0 0.0
        %7328 = vmatprep.subr.mxu0 0.0
        %7329 = vmatpush2.msra.mxu0 0.0
        %7330 = vmatprep.subr.mxu0 0.0
        %7331 = vmatpush2.msra.mxu0 0.0
        %7332 = vmatprep.subr.mxu0 0.0
        %7333 = vmatpush2.msra.mxu0 0.0
        %7334 = vmatprep.subr.mxu0 0.0
        %7335 = vmatpush2.msra.mxu0 0.0
        %7336 = vmatprep.subr.mxu0 0.0
        %7337 = vmatpush2.msra.mxu0 0.0
        %7338 = vmatprep.subr.mxu0 0.0
        %7339 = vmatpush2.msra.mxu0 0.0
        %7340 = vmatprep.subr.mxu0 0.0
        %7341 = vmatpush2.msra.mxu0 0.0
        %7342 = vmatprep.subr.mxu0 0.0
        %7343 = vmatpush2.msra.mxu0 0.0
        %7344 = vmatprep.subr.mxu0 0.0
        %7345 = vmatpush2.msra.mxu0 0.0
        %7346 = vmatprep.subr.mxu0 0.0
        %7347 = vmatpush2.msra.mxu0 0.0
        %7348 = vmatprep.subr.mxu0 0.0
        %7349 = vmatpush2.msra.mxu0 0.0
        %7350 = vmatprep.subr.mxu0 0.0
        %7351 = vmatpush2.msra.mxu0 0.0
        %7352 = vmatprep.subr.mxu0 0.0
        %7353 = vmatpush2.msra.mxu0 0.0
        %7354 = vmatprep.subr.mxu0 0.0
        %7355 = vmatpush2.msra.mxu0 0.0
        %7356 = vmatprep.subr.mxu0 0.0
        %7357 = vmatpush2.msra.mxu0 0.0
        %7358 = vmatprep.mubr.f32.mxu0 0.0
        %7359 = vmatmul.mubr.f32.gmra.mxu0 %v7292
        %v7360 = vpop.f32.mrf.mxu0
        %v7361 = vadd.f32 0.0, %v7360
        %v7362 = vpop.f32.mrf.mxu0
        %7363 = vdwg.mxu0
        %v7365 = vsel %vm2891, %v6924, 0
        %7367 = vmatprep.subr.mxu0 0.0
        %7368 = vmatpush1.msra.mxu0 0.0
        %7369 = vmatprep.subr.mxu0 0.0
        %7370 = vmatpush1.msra.mxu0 0.0
        %7371 = vmatprep.subr.mxu0 0.0
        %7372 = vmatpush1.msra.mxu0 0.0
        %7373 = vmatprep.subr.mxu0 0.0
        %7374 = vmatpush1.msra.mxu0 0.0
        %7375 = vmatprep.subr.mxu0 0.0
        %7376 = vmatpush1.msra.mxu0 0.0
        %7377 = vmatprep.subr.mxu0 0.0
        %7378 = vmatpush1.msra.mxu0 0.0
        %7379 = vmatprep.subr.mxu0 0.0
        %7380 = vmatpush1.msra.mxu0 0.0
        %7381 = vmatprep.subr.mxu0 0.0
        %7382 = vmatpush1.msra.mxu0 0.0
        %7383 = vmatprep.subr.mxu0 0.0
        %7384 = vmatpush1.msra.mxu0 0.0
        %7385 = vmatprep.subr.mxu0 0.0
        %7386 = vmatpush1.msra.mxu0 0.0
        %7387 = vmatprep.subr.mxu0 0.0
        %7388 = vmatpush1.msra.mxu0 0.0
        %7389 = vmatprep.subr.mxu0 0.0
        %7390 = vmatpush1.msra.mxu0 0.0
        %7391 = vmatprep.subr.mxu0 0.0
        %7392 = vmatpush1.msra.mxu0 0.0
        %7393 = vmatprep.subr.mxu0 0.0
        %7394 = vmatpush1.msra.mxu0 0.0
        %7395 = vmatprep.subr.mxu0 0.0
        %7396 = vmatpush1.msra.mxu0 0.0
        %7397 = vmatprep.subr.mxu0 0.0
        %7398 = vmatpush1.msra.mxu0 %v6149
        %7399 = vmatprep.subr.mxu0 0.0
        %7400 = vmatpush2.msra.mxu0 0.0
        %7401 = vmatprep.subr.mxu0 0.0
        %7402 = vmatpush2.msra.mxu0 0.0
        %7403 = vmatprep.subr.mxu0 0.0
        %7404 = vmatpush2.msra.mxu0 0.0
        %7405 = vmatprep.subr.mxu0 0.0
        %7406 = vmatpush2.msra.mxu0 0.0
        %7407 = vmatprep.subr.mxu0 0.0
        %7408 = vmatpush2.msra.mxu0 0.0
        %7409 = vmatprep.subr.mxu0 0.0
        %7410 = vmatpush2.msra.mxu0 0.0
        %7411 = vmatprep.subr.mxu0 0.0
        %7412 = vmatpush2.msra.mxu0 0.0
        %7413 = vmatprep.subr.mxu0 0.0
        %7414 = vmatpush2.msra.mxu0 0.0
        %7415 = vmatprep.subr.mxu0 0.0
        %7416 = vmatpush2.msra.mxu0 0.0
        %7417 = vmatprep.subr.mxu0 0.0
        %7418 = vmatpush2.msra.mxu0 0.0
        %7419 = vmatprep.subr.mxu0 0.0
        %7420 = vmatpush2.msra.mxu0 0.0
        %7421 = vmatprep.subr.mxu0 0.0
        %7422 = vmatpush2.msra.mxu0 0.0
        %7423 = vmatprep.subr.mxu0 0.0
        %7424 = vmatpush2.msra.mxu0 0.0
        %7425 = vmatprep.subr.mxu0 0.0
        %7426 = vmatpush2.msra.mxu0 0.0
        %7427 = vmatprep.subr.mxu0 0.0
        %7428 = vmatpush2.msra.mxu0 0.0
        %7429 = vmatprep.subr.mxu0 0.0
        %7430 = vmatpush2.msra.mxu0 0.0
        %7431 = vmatprep.mubr.f32.mxu0 0.0
        %7432 = vmatmul.mubr.f32.gmra.mxu0 %v7365
        %v7433 = vpop.f32.mrf.mxu0
        %v7434 = vadd.f32 0.0, %v7433
        %v7435 = vpop.f32.mrf.mxu0
        %7436 = vdwg.mxu0
        %v7438 = vsel %vm2891, %v6925, 0
        %7440 = vmatprep.subr.mxu0 0.0
        %7441 = vmatpush1.msra.mxu0 0.0
        %7442 = vmatprep.subr.mxu0 0.0
        %7443 = vmatpush1.msra.mxu0 0.0
        %7444 = vmatprep.subr.mxu0 0.0
        %7445 = vmatpush1.msra.mxu0 0.0
        %7446 = vmatprep.subr.mxu0 0.0
        %7447 = vmatpush1.msra.mxu0 0.0
        %7448 = vmatprep.subr.mxu0 0.0
        %7449 = vmatpush1.msra.mxu0 0.0
        %7450 = vmatprep.subr.mxu0 0.0
        %7451 = vmatpush1.msra.mxu0 0.0
        %7452 = vmatprep.subr.mxu0 0.0
        %7453 = vmatpush1.msra.mxu0 0.0
        %7454 = vmatprep.subr.mxu0 0.0
        %7455 = vmatpush1.msra.mxu0 0.0
        %7456 = vmatprep.subr.mxu0 0.0
        %7457 = vmatpush1.msra.mxu0 0.0
        %7458 = vmatprep.subr.mxu0 0.0
        %7459 = vmatpush1.msra.mxu0 0.0
        %7460 = vmatprep.subr.mxu0 0.0
        %7461 = vmatpush1.msra.mxu0 0.0
        %7462 = vmatprep.subr.mxu0 0.0
        %7463 = vmatpush1.msra.mxu0 0.0
        %7464 = vmatprep.subr.mxu0 0.0
        %7465 = vmatpush1.msra.mxu0 0.0
        %7466 = vmatprep.subr.mxu0 0.0
        %7467 = vmatpush1.msra.mxu0 0.0
        %7468 = vmatprep.subr.mxu0 0.0
        %7469 = vmatpush1.msra.mxu0 0.0
        %7470 = vmatprep.subr.mxu0 0.0
        %7471 = vmatpush1.msra.mxu0 %v6219
        %7472 = vmatprep.subr.mxu0 0.0
        %7473 = vmatpush2.msra.mxu0 0.0
        %7474 = vmatprep.subr.mxu0 0.0
        %7475 = vmatpush2.msra.mxu0 0.0
        %7476 = vmatprep.subr.mxu0 0.0
        %7477 = vmatpush2.msra.mxu0 0.0
        %7478 = vmatprep.subr.mxu0 0.0
        %7479 = vmatpush2.msra.mxu0 0.0
        %7480 = vmatprep.subr.mxu0 0.0
        %7481 = vmatpush2.msra.mxu0 0.0
        %7482 = vmatprep.subr.mxu0 0.0
        %7483 = vmatpush2.msra.mxu0 0.0
        %7484 = vmatprep.subr.mxu0 0.0
        %7485 = vmatpush2.msra.mxu0 0.0
        %7486 = vmatprep.subr.mxu0 0.0
        %7487 = vmatpush2.msra.mxu0 0.0
        %7488 = vmatprep.subr.mxu0 0.0
        %7489 = vmatpush2.msra.mxu0 0.0
        %7490 = vmatprep.subr.mxu0 0.0
        %7491 = vmatpush2.msra.mxu0 0.0
        %7492 = vmatprep.subr.mxu0 0.0
        %7493 = vmatpush2.msra.mxu0 0.0
        %7494 = vmatprep.subr.mxu0 0.0
        %7495 = vmatpush2.msra.mxu0 0.0
        %7496 = vmatprep.subr.mxu0 0.0
        %7497 = vmatpush2.msra.mxu0 0.0
        %7498 = vmatprep.subr.mxu0 0.0
        %7499 = vmatpush2.msra.mxu0 0.0
        %7500 = vmatprep.subr.mxu0 0.0
        %7501 = vmatpush2.msra.mxu0 0.0
        %7502 = vmatprep.subr.mxu0 0.0
        %7503 = vmatpush2.msra.mxu0 0.0
        %7504 = vmatprep.mubr.f32.mxu0 0.0
        %7505 = vmatmul.mubr.f32.gmra.mxu0 %v7438
        %v7506 = vpop.f32.mrf.mxu0
        %v7507 = vadd.f32 0.0, %v7506
        %v7508 = vpop.f32.mrf.mxu0
        %7509 = vdwg.mxu0
        %s7510 = scalar_lea.vmem %s6, 32
        %v7511 = vld [vmem:[%s7510] sm:$0xf]
        %v7512 = vld [vmem:[%s7510 + $0x4] sm:$0xf]
        %v7513 = vld [vmem:[%s7510 + $0x8] sm:$0xf]
        %v7514 = vld [vmem:[%s7510 + $0xc] sm:$0xf]
        %v7515 = vld [vmem:[%s7510 + $0x10] sm:$0xf]
        %v7516 = vld [vmem:[%s7510 + $0x14] sm:$0xf]
        %v7517 = vld [vmem:[%s7510 + $0x18] sm:$0xf]
        %v7518 = vld [vmem:[%s7510 + $0x1c] sm:$0xf]
        %v7520 = vsel %vm2274, %v6996, 0
        %v7523 = vsel %vm3575, %v7511, 0
        %7525 = vmatprep.subr.mxu0 0.0
        %7526 = vmatpush1.msra.mxu0 0.0
        %7527 = vmatprep.subr.mxu0 0.0
        %7528 = vmatpush1.msra.mxu0 0.0
        %7529 = vmatprep.subr.mxu0 0.0
        %7530 = vmatpush1.msra.mxu0 0.0
        %7531 = vmatprep.subr.mxu0 0.0
        %7532 = vmatpush1.msra.mxu0 0.0
        %7533 = vmatprep.subr.mxu0 0.0
        %7534 = vmatpush1.msra.mxu0 0.0
        %7535 = vmatprep.subr.mxu0 0.0
        %7536 = vmatpush1.msra.mxu0 0.0
        %7537 = vmatprep.subr.mxu0 0.0
        %7538 = vmatpush1.msra.mxu0 0.0
        %7539 = vmatprep.subr.mxu0 0.0
        %7540 = vmatpush1.msra.mxu0 0.0
        %7541 = vmatprep.subr.mxu0 0.0
        %7542 = vmatpush1.msra.mxu0 0.0
        %7543 = vmatprep.subr.mxu0 0.0
        %7544 = vmatpush1.msra.mxu0 0.0
        %7545 = vmatprep.subr.mxu0 0.0
        %7546 = vmatpush1.msra.mxu0 0.0
        %7547 = vmatprep.subr.mxu0 0.0
        %7548 = vmatpush1.msra.mxu0 0.0
        %7549 = vmatprep.subr.mxu0 0.0
        %7550 = vmatpush1.msra.mxu0 0.0
        %7551 = vmatprep.subr.mxu0 0.0
        %7552 = vmatpush1.msra.mxu0 0.0
        %7553 = vmatprep.subr.mxu0 0.0
        %7554 = vmatpush1.msra.mxu0 0.0
        %7555 = vmatprep.subr.mxu0 0.0
        %7556 = vmatpush1.msra.mxu0 %v7523
        %7557 = vmatprep.subr.mxu0 0.0
        %7558 = vmatpush2.msra.mxu0 0.0
        %7559 = vmatprep.subr.mxu0 0.0
        %7560 = vmatpush2.msra.mxu0 0.0
        %7561 = vmatprep.subr.mxu0 0.0
        %7562 = vmatpush2.msra.mxu0 0.0
        %7563 = vmatprep.subr.mxu0 0.0
        %7564 = vmatpush2.msra.mxu0 0.0
        %7565 = vmatprep.subr.mxu0 0.0
        %7566 = vmatpush2.msra.mxu0 0.0
        %7567 = vmatprep.subr.mxu0 0.0
        %7568 = vmatpush2.msra.mxu0 0.0
        %7569 = vmatprep.subr.mxu0 0.0
        %7570 = vmatpush2.msra.mxu0 0.0
        %7571 = vmatprep.subr.mxu0 0.0
        %7572 = vmatpush2.msra.mxu0 0.0
        %7573 = vmatprep.subr.mxu0 0.0
        %7574 = vmatpush2.msra.mxu0 0.0
        %7575 = vmatprep.subr.mxu0 0.0
        %7576 = vmatpush2.msra.mxu0 0.0
        %7577 = vmatprep.subr.mxu0 0.0
        %7578 = vmatpush2.msra.mxu0 0.0
        %7579 = vmatprep.subr.mxu0 0.0
        %7580 = vmatpush2.msra.mxu0 0.0
        %7581 = vmatprep.subr.mxu0 0.0
        %7582 = vmatpush2.msra.mxu0 0.0
        %7583 = vmatprep.subr.mxu0 0.0
        %7584 = vmatpush2.msra.mxu0 0.0
        %7585 = vmatprep.subr.mxu0 0.0
        %7586 = vmatpush2.msra.mxu0 0.0
        %7587 = vmatprep.subr.mxu0 0.0
        %7588 = vmatpush2.msra.mxu0 0.0
        %7589 = vmatprep.mubr.f32.mxu0 0.0
        %7590 = vmatmul.mubr.f32.gmra.mxu0 %v7520
        %v7591 = vpop.f32.mrf.mxu0
        %v7592 = vadd.f32 0.0, %v7591
        %v7593 = vpop.f32.mrf.mxu0
        %7594 = vdwg.mxu0
        %v7596 = vsel %vm2274, %v7069, 0
        %v7599 = vsel %vm3575, %v7512, 0
        %7601 = vmatprep.subr.mxu0 0.0
        %7602 = vmatpush1.msra.mxu0 0.0
        %7603 = vmatprep.subr.mxu0 0.0
        %7604 = vmatpush1.msra.mxu0 0.0
        %7605 = vmatprep.subr.mxu0 0.0
        %7606 = vmatpush1.msra.mxu0 0.0
        %7607 = vmatprep.subr.mxu0 0.0
        %7608 = vmatpush1.msra.mxu0 0.0
        %7609 = vmatprep.subr.mxu0 0.0
        %7610 = vmatpush1.msra.mxu0 0.0
        %7611 = vmatprep.subr.mxu0 0.0
        %7612 = vmatpush1.msra.mxu0 0.0
        %7613 = vmatprep.subr.mxu0 0.0
        %7614 = vmatpush1.msra.mxu0 0.0
        %7615 = vmatprep.subr.mxu0 0.0
        %7616 = vmatpush1.msra.mxu0 0.0
        %7617 = vmatprep.subr.mxu0 0.0
        %7618 = vmatpush1.msra.mxu0 0.0
        %7619 = vmatprep.subr.mxu0 0.0
        %7620 = vmatpush1.msra.mxu0 0.0
        %7621 = vmatprep.subr.mxu0 0.0
        %7622 = vmatpush1.msra.mxu0 0.0
        %7623 = vmatprep.subr.mxu0 0.0
        %7624 = vmatpush1.msra.mxu0 0.0
        %7625 = vmatprep.subr.mxu0 0.0
        %7626 = vmatpush1.msra.mxu0 0.0
        %7627 = vmatprep.subr.mxu0 0.0
        %7628 = vmatpush1.msra.mxu0 0.0
        %7629 = vmatprep.subr.mxu0 0.0
        %7630 = vmatpush1.msra.mxu0 0.0
        %7631 = vmatprep.subr.mxu0 0.0
        %7632 = vmatpush1.msra.mxu0 %v7599
        %7633 = vmatprep.subr.mxu0 0.0
        %7634 = vmatpush2.msra.mxu0 0.0
        %7635 = vmatprep.subr.mxu0 0.0
        %7636 = vmatpush2.msra.mxu0 0.0
        %7637 = vmatprep.subr.mxu0 0.0
        %7638 = vmatpush2.msra.mxu0 0.0
        %7639 = vmatprep.subr.mxu0 0.0
        %7640 = vmatpush2.msra.mxu0 0.0
        %7641 = vmatprep.subr.mxu0 0.0
        %7642 = vmatpush2.msra.mxu0 0.0
        %7643 = vmatprep.subr.mxu0 0.0
        %7644 = vmatpush2.msra.mxu0 0.0
        %7645 = vmatprep.subr.mxu0 0.0
        %7646 = vmatpush2.msra.mxu0 0.0
        %7647 = vmatprep.subr.mxu0 0.0
        %7648 = vmatpush2.msra.mxu0 0.0
        %7649 = vmatprep.subr.mxu0 0.0
        %7650 = vmatpush2.msra.mxu0 0.0
        %7651 = vmatprep.subr.mxu0 0.0
        %7652 = vmatpush2.msra.mxu0 0.0
        %7653 = vmatprep.subr.mxu0 0.0
        %7654 = vmatpush2.msra.mxu0 0.0
        %7655 = vmatprep.subr.mxu0 0.0
        %7656 = vmatpush2.msra.mxu0 0.0
        %7657 = vmatprep.subr.mxu0 0.0
        %7658 = vmatpush2.msra.mxu0 0.0
        %7659 = vmatprep.subr.mxu0 0.0
        %7660 = vmatpush2.msra.mxu0 0.0
        %7661 = vmatprep.subr.mxu0 0.0
        %7662 = vmatpush2.msra.mxu0 0.0
        %7663 = vmatprep.subr.mxu0 0.0
        %7664 = vmatpush2.msra.mxu0 0.0
        %7665 = vmatprep.mubr.f32.mxu0 0.0
        %7666 = vmatmul.mubr.f32.gmra.mxu0 %v7596
        %v7667 = vpop.f32.mrf.mxu0
        %v7668 = vadd.f32 0.0, %v7667
        %v7669 = vpop.f32.mrf.mxu0
        %7670 = vdwg.mxu0
        %v7672 = vsel %vm2274, %v7142, 0
        %v7675 = vsel %vm3575, %v7513, 0
        %7677 = vmatprep.subr.mxu0 0.0
        %7678 = vmatpush1.msra.mxu0 0.0
        %7679 = vmatprep.subr.mxu0 0.0
        %7680 = vmatpush1.msra.mxu0 0.0
        %7681 = vmatprep.subr.mxu0 0.0
        %7682 = vmatpush1.msra.mxu0 0.0
        %7683 = vmatprep.subr.mxu0 0.0
        %7684 = vmatpush1.msra.mxu0 0.0
        %7685 = vmatprep.subr.mxu0 0.0
        %7686 = vmatpush1.msra.mxu0 0.0
        %7687 = vmatprep.subr.mxu0 0.0
        %7688 = vmatpush1.msra.mxu0 0.0
        %7689 = vmatprep.subr.mxu0 0.0
        %7690 = vmatpush1.msra.mxu0 0.0
        %7691 = vmatprep.subr.mxu0 0.0
        %7692 = vmatpush1.msra.mxu0 0.0
        %7693 = vmatprep.subr.mxu0 0.0
        %7694 = vmatpush1.msra.mxu0 0.0
        %7695 = vmatprep.subr.mxu0 0.0
        %7696 = vmatpush1.msra.mxu0 0.0
        %7697 = vmatprep.subr.mxu0 0.0
        %7698 = vmatpush1.msra.mxu0 0.0
        %7699 = vmatprep.subr.mxu0 0.0
        %7700 = vmatpush1.msra.mxu0 0.0
        %7701 = vmatprep.subr.mxu0 0.0
        %7702 = vmatpush1.msra.mxu0 0.0
        %7703 = vmatprep.subr.mxu0 0.0
        %7704 = vmatpush1.msra.mxu0 0.0
        %7705 = vmatprep.subr.mxu0 0.0
        %7706 = vmatpush1.msra.mxu0 0.0
        %7707 = vmatprep.subr.mxu0 0.0
        %7708 = vmatpush1.msra.mxu0 %v7675
        %7709 = vmatprep.subr.mxu0 0.0
        %7710 = vmatpush2.msra.mxu0 0.0
        %7711 = vmatprep.subr.mxu0 0.0
        %7712 = vmatpush2.msra.mxu0 0.0
        %7713 = vmatprep.subr.mxu0 0.0
        %7714 = vmatpush2.msra.mxu0 0.0
        %7715 = vmatprep.subr.mxu0 0.0
        %7716 = vmatpush2.msra.mxu0 0.0
        %7717 = vmatprep.subr.mxu0 0.0
        %7718 = vmatpush2.msra.mxu0 0.0
        %7719 = vmatprep.subr.mxu0 0.0
        %7720 = vmatpush2.msra.mxu0 0.0
        %7721 = vmatprep.subr.mxu0 0.0
        %7722 = vmatpush2.msra.mxu0 0.0
        %7723 = vmatprep.subr.mxu0 0.0
        %7724 = vmatpush2.msra.mxu0 0.0
        %7725 = vmatprep.subr.mxu0 0.0
        %7726 = vmatpush2.msra.mxu0 0.0
        %7727 = vmatprep.subr.mxu0 0.0
        %7728 = vmatpush2.msra.mxu0 0.0
        %7729 = vmatprep.subr.mxu0 0.0
        %7730 = vmatpush2.msra.mxu0 0.0
        %7731 = vmatprep.subr.mxu0 0.0
        %7732 = vmatpush2.msra.mxu0 0.0
        %7733 = vmatprep.subr.mxu0 0.0
        %7734 = vmatpush2.msra.mxu0 0.0
        %7735 = vmatprep.subr.mxu0 0.0
        %7736 = vmatpush2.msra.mxu0 0.0
        %7737 = vmatprep.subr.mxu0 0.0
        %7738 = vmatpush2.msra.mxu0 0.0
        %7739 = vmatprep.subr.mxu0 0.0
        %7740 = vmatpush2.msra.mxu0 0.0
        %7741 = vmatprep.mubr.f32.mxu0 0.0
        %7742 = vmatmul.mubr.f32.gmra.mxu0 %v7672
        %v7743 = vpop.f32.mrf.mxu0
        %v7744 = vadd.f32 0.0, %v7743
        %v7745 = vpop.f32.mrf.mxu0
        %7746 = vdwg.mxu0
        %v7748 = vsel %vm2274, %v7215, 0
        %v7751 = vsel %vm3575, %v7514, 0
        %7753 = vmatprep.subr.mxu0 0.0
        %7754 = vmatpush1.msra.mxu0 0.0
        %7755 = vmatprep.subr.mxu0 0.0
        %7756 = vmatpush1.msra.mxu0 0.0
        %7757 = vmatprep.subr.mxu0 0.0
        %7758 = vmatpush1.msra.mxu0 0.0
        %7759 = vmatprep.subr.mxu0 0.0
        %7760 = vmatpush1.msra.mxu0 0.0
        %7761 = vmatprep.subr.mxu0 0.0
        %7762 = vmatpush1.msra.mxu0 0.0
        %7763 = vmatprep.subr.mxu0 0.0
        %7764 = vmatpush1.msra.mxu0 0.0
        %7765 = vmatprep.subr.mxu0 0.0
        %7766 = vmatpush1.msra.mxu0 0.0
        %7767 = vmatprep.subr.mxu0 0.0
        %7768 = vmatpush1.msra.mxu0 0.0
        %7769 = vmatprep.subr.mxu0 0.0
        %7770 = vmatpush1.msra.mxu0 0.0
        %7771 = vmatprep.subr.mxu0 0.0
        %7772 = vmatpush1.msra.mxu0 0.0
        %7773 = vmatprep.subr.mxu0 0.0
        %7774 = vmatpush1.msra.mxu0 0.0
        %7775 = vmatprep.subr.mxu0 0.0
        %7776 = vmatpush1.msra.mxu0 0.0
        %7777 = vmatprep.subr.mxu0 0.0
        %7778 = vmatpush1.msra.mxu0 0.0
        %7779 = vmatprep.subr.mxu0 0.0
        %7780 = vmatpush1.msra.mxu0 0.0
        %7781 = vmatprep.subr.mxu0 0.0
        %7782 = vmatpush1.msra.mxu0 0.0
        %7783 = vmatprep.subr.mxu0 0.0
        %7784 = vmatpush1.msra.mxu0 %v7751
        %7785 = vmatprep.subr.mxu0 0.0
        %7786 = vmatpush2.msra.mxu0 0.0
        %7787 = vmatprep.subr.mxu0 0.0
        %7788 = vmatpush2.msra.mxu0 0.0
        %7789 = vmatprep.subr.mxu0 0.0
        %7790 = vmatpush2.msra.mxu0 0.0
        %7791 = vmatprep.subr.mxu0 0.0
        %7792 = vmatpush2.msra.mxu0 0.0
        %7793 = vmatprep.subr.mxu0 0.0
        %7794 = vmatpush2.msra.mxu0 0.0
        %7795 = vmatprep.subr.mxu0 0.0
        %7796 = vmatpush2.msra.mxu0 0.0
        %7797 = vmatprep.subr.mxu0 0.0
        %7798 = vmatpush2.msra.mxu0 0.0
        %7799 = vmatprep.subr.mxu0 0.0
        %7800 = vmatpush2.msra.mxu0 0.0
        %7801 = vmatprep.subr.mxu0 0.0
        %7802 = vmatpush2.msra.mxu0 0.0
        %7803 = vmatprep.subr.mxu0 0.0
        %7804 = vmatpush2.msra.mxu0 0.0
        %7805 = vmatprep.subr.mxu0 0.0
        %7806 = vmatpush2.msra.mxu0 0.0
        %7807 = vmatprep.subr.mxu0 0.0
        %7808 = vmatpush2.msra.mxu0 0.0
        %7809 = vmatprep.subr.mxu0 0.0
        %7810 = vmatpush2.msra.mxu0 0.0
        %7811 = vmatprep.subr.mxu0 0.0
        %7812 = vmatpush2.msra.mxu0 0.0
        %7813 = vmatprep.subr.mxu0 0.0
        %7814 = vmatpush2.msra.mxu0 0.0
        %7815 = vmatprep.subr.mxu0 0.0
        %7816 = vmatpush2.msra.mxu0 0.0
        %7817 = vmatprep.mubr.f32.mxu0 0.0
        %7818 = vmatmul.mubr.f32.gmra.mxu0 %v7748
        %v7819 = vpop.f32.mrf.mxu0
        %v7820 = vadd.f32 0.0, %v7819
        %v7821 = vpop.f32.mrf.mxu0
        %7822 = vdwg.mxu0
        %v7824 = vsel %vm2274, %v7288, 0
        %v7827 = vsel %vm3575, %v7515, 0
        %7829 = vmatprep.subr.mxu0 0.0
        %7830 = vmatpush1.msra.mxu0 0.0
        %7831 = vmatprep.subr.mxu0 0.0
        %7832 = vmatpush1.msra.mxu0 0.0
        %7833 = vmatprep.subr.mxu0 0.0
        %7834 = vmatpush1.msra.mxu0 0.0
        %7835 = vmatprep.subr.mxu0 0.0
        %7836 = vmatpush1.msra.mxu0 0.0
        %7837 = vmatprep.subr.mxu0 0.0
        %7838 = vmatpush1.msra.mxu0 0.0
        %7839 = vmatprep.subr.mxu0 0.0
        %7840 = vmatpush1.msra.mxu0 0.0
        %7841 = vmatprep.subr.mxu0 0.0
        %7842 = vmatpush1.msra.mxu0 0.0
        %7843 = vmatprep.subr.mxu0 0.0
        %7844 = vmatpush1.msra.mxu0 0.0
        %7845 = vmatprep.subr.mxu0 0.0
        %7846 = vmatpush1.msra.mxu0 0.0
        %7847 = vmatprep.subr.mxu0 0.0
        %7848 = vmatpush1.msra.mxu0 0.0
        %7849 = vmatprep.subr.mxu0 0.0
        %7850 = vmatpush1.msra.mxu0 0.0
        %7851 = vmatprep.subr.mxu0 0.0
        %7852 = vmatpush1.msra.mxu0 0.0
        %7853 = vmatprep.subr.mxu0 0.0
        %7854 = vmatpush1.msra.mxu0 0.0
        %7855 = vmatprep.subr.mxu0 0.0
        %7856 = vmatpush1.msra.mxu0 0.0
        %7857 = vmatprep.subr.mxu0 0.0
        %7858 = vmatpush1.msra.mxu0 0.0
        %7859 = vmatprep.subr.mxu0 0.0
        %7860 = vmatpush1.msra.mxu0 %v7827
        %7861 = vmatprep.subr.mxu0 0.0
        %7862 = vmatpush2.msra.mxu0 0.0
        %7863 = vmatprep.subr.mxu0 0.0
        %7864 = vmatpush2.msra.mxu0 0.0
        %7865 = vmatprep.subr.mxu0 0.0
        %7866 = vmatpush2.msra.mxu0 0.0
        %7867 = vmatprep.subr.mxu0 0.0
        %7868 = vmatpush2.msra.mxu0 0.0
        %7869 = vmatprep.subr.mxu0 0.0
        %7870 = vmatpush2.msra.mxu0 0.0
        %7871 = vmatprep.subr.mxu0 0.0
        %7872 = vmatpush2.msra.mxu0 0.0
        %7873 = vmatprep.subr.mxu0 0.0
        %7874 = vmatpush2.msra.mxu0 0.0
        %7875 = vmatprep.subr.mxu0 0.0
        %7876 = vmatpush2.msra.mxu0 0.0
        %7877 = vmatprep.subr.mxu0 0.0
        %7878 = vmatpush2.msra.mxu0 0.0
        %7879 = vmatprep.subr.mxu0 0.0
        %7880 = vmatpush2.msra.mxu0 0.0
        %7881 = vmatprep.subr.mxu0 0.0
        %7882 = vmatpush2.msra.mxu0 0.0
        %7883 = vmatprep.subr.mxu0 0.0
        %7884 = vmatpush2.msra.mxu0 0.0
        %7885 = vmatprep.subr.mxu0 0.0
        %7886 = vmatpush2.msra.mxu0 0.0
        %7887 = vmatprep.subr.mxu0 0.0
        %7888 = vmatpush2.msra.mxu0 0.0
        %7889 = vmatprep.subr.mxu0 0.0
        %7890 = vmatpush2.msra.mxu0 0.0
        %7891 = vmatprep.subr.mxu0 0.0
        %7892 = vmatpush2.msra.mxu0 0.0
        %7893 = vmatprep.mubr.f32.mxu0 0.0
        %7894 = vmatmul.mubr.f32.gmra.mxu0 %v7824
        %v7895 = vpop.f32.mrf.mxu0
        %v7896 = vadd.f32 0.0, %v7895
        %v7897 = vpop.f32.mrf.mxu0
        %7898 = vdwg.mxu0
        %v7900 = vsel %vm2274, %v7361, 0
        %v7903 = vsel %vm3575, %v7516, 0
        %7905 = vmatprep.subr.mxu0 0.0
        %7906 = vmatpush1.msra.mxu0 0.0
        %7907 = vmatprep.subr.mxu0 0.0
        %7908 = vmatpush1.msra.mxu0 0.0
        %7909 = vmatprep.subr.mxu0 0.0
        %7910 = vmatpush1.msra.mxu0 0.0
        %7911 = vmatprep.subr.mxu0 0.0
        %7912 = vmatpush1.msra.mxu0 0.0
        %7913 = vmatprep.subr.mxu0 0.0
        %7914 = vmatpush1.msra.mxu0 0.0
        %7915 = vmatprep.subr.mxu0 0.0
        %7916 = vmatpush1.msra.mxu0 0.0
        %7917 = vmatprep.subr.mxu0 0.0
        %7918 = vmatpush1.msra.mxu0 0.0
        %7919 = vmatprep.subr.mxu0 0.0
        %7920 = vmatpush1.msra.mxu0 0.0
        %7921 = vmatprep.subr.mxu0 0.0
        %7922 = vmatpush1.msra.mxu0 0.0
        %7923 = vmatprep.subr.mxu0 0.0
        %7924 = vmatpush1.msra.mxu0 0.0
        %7925 = vmatprep.subr.mxu0 0.0
        %7926 = vmatpush1.msra.mxu0 0.0
        %7927 = vmatprep.subr.mxu0 0.0
        %7928 = vmatpush1.msra.mxu0 0.0
        %7929 = vmatprep.subr.mxu0 0.0
        %7930 = vmatpush1.msra.mxu0 0.0
        %7931 = vmatprep.subr.mxu0 0.0
        %7932 = vmatpush1.msra.mxu0 0.0
        %7933 = vmatprep.subr.mxu0 0.0
        %7934 = vmatpush1.msra.mxu0 0.0
        %7935 = vmatprep.subr.mxu0 0.0
        %7936 = vmatpush1.msra.mxu0 %v7903
        %7937 = vmatprep.subr.mxu0 0.0
        %7938 = vmatpush2.msra.mxu0 0.0
        %7939 = vmatprep.subr.mxu0 0.0
        %7940 = vmatpush2.msra.mxu0 0.0
        %7941 = vmatprep.subr.mxu0 0.0
        %7942 = vmatpush2.msra.mxu0 0.0
        %7943 = vmatprep.subr.mxu0 0.0
        %7944 = vmatpush2.msra.mxu0 0.0
        %7945 = vmatprep.subr.mxu0 0.0
        %7946 = vmatpush2.msra.mxu0 0.0
        %7947 = vmatprep.subr.mxu0 0.0
        %7948 = vmatpush2.msra.mxu0 0.0
        %7949 = vmatprep.subr.mxu0 0.0
        %7950 = vmatpush2.msra.mxu0 0.0
        %7951 = vmatprep.subr.mxu0 0.0
        %7952 = vmatpush2.msra.mxu0 0.0
        %7953 = vmatprep.subr.mxu0 0.0
        %7954 = vmatpush2.msra.mxu0 0.0
        %7955 = vmatprep.subr.mxu0 0.0
        %7956 = vmatpush2.msra.mxu0 0.0
        %7957 = vmatprep.subr.mxu0 0.0
        %7958 = vmatpush2.msra.mxu0 0.0
        %7959 = vmatprep.subr.mxu0 0.0
        %7960 = vmatpush2.msra.mxu0 0.0
        %7961 = vmatprep.subr.mxu0 0.0
        %7962 = vmatpush2.msra.mxu0 0.0
        %7963 = vmatprep.subr.mxu0 0.0
        %7964 = vmatpush2.msra.mxu0 0.0
        %7965 = vmatprep.subr.mxu0 0.0
        %7966 = vmatpush2.msra.mxu0 0.0
        %7967 = vmatprep.subr.mxu0 0.0
        %7968 = vmatpush2.msra.mxu0 0.0
        %7969 = vmatprep.mubr.f32.mxu0 0.0
        %7970 = vmatmul.mubr.f32.gmra.mxu0 %v7900
        %v7971 = vpop.f32.mrf.mxu0
        %v7972 = vadd.f32 0.0, %v7971
        %v7973 = vpop.f32.mrf.mxu0
        %7974 = vdwg.mxu0
        %v7976 = vsel %vm2274, %v7434, 0
        %v7979 = vsel %vm3575, %v7517, 0
        %7981 = vmatprep.subr.mxu0 0.0
        %7982 = vmatpush1.msra.mxu0 0.0
        %7983 = vmatprep.subr.mxu0 0.0
        %7984 = vmatpush1.msra.mxu0 0.0
        %7985 = vmatprep.subr.mxu0 0.0
        %7986 = vmatpush1.msra.mxu0 0.0
        %7987 = vmatprep.subr.mxu0 0.0
        %7988 = vmatpush1.msra.mxu0 0.0
        %7989 = vmatprep.subr.mxu0 0.0
        %7990 = vmatpush1.msra.mxu0 0.0
        %7991 = vmatprep.subr.mxu0 0.0
        %7992 = vmatpush1.msra.mxu0 0.0
        %7993 = vmatprep.subr.mxu0 0.0
        %7994 = vmatpush1.msra.mxu0 0.0
        %7995 = vmatprep.subr.mxu0 0.0
        %7996 = vmatpush1.msra.mxu0 0.0
        %7997 = vmatprep.subr.mxu0 0.0
        %7998 = vmatpush1.msra.mxu0 0.0
        %7999 = vmatprep.subr.mxu0 0.0
        %8000 = vmatpush1.msra.mxu0 0.0
        %8001 = vmatprep.subr.mxu0 0.0
        %8002 = vmatpush1.msra.mxu0 0.0
        %8003 = vmatprep.subr.mxu0 0.0
        %8004 = vmatpush1.msra.mxu0 0.0
        %8005 = vmatprep.subr.mxu0 0.0
        %8006 = vmatpush1.msra.mxu0 0.0
        %8007 = vmatprep.subr.mxu0 0.0
        %8008 = vmatpush1.msra.mxu0 0.0
        %8009 = vmatprep.subr.mxu0 0.0
        %8010 = vmatpush1.msra.mxu0 0.0
        %8011 = vmatprep.subr.mxu0 0.0
        %8012 = vmatpush1.msra.mxu0 %v7979
        %8013 = vmatprep.subr.mxu0 0.0
        %8014 = vmatpush2.msra.mxu0 0.0
        %8015 = vmatprep.subr.mxu0 0.0
        %8016 = vmatpush2.msra.mxu0 0.0
        %8017 = vmatprep.subr.mxu0 0.0
        %8018 = vmatpush2.msra.mxu0 0.0
        %8019 = vmatprep.subr.mxu0 0.0
        %8020 = vmatpush2.msra.mxu0 0.0
        %8021 = vmatprep.subr.mxu0 0.0
        %8022 = vmatpush2.msra.mxu0 0.0
        %8023 = vmatprep.subr.mxu0 0.0
        %8024 = vmatpush2.msra.mxu0 0.0
        %8025 = vmatprep.subr.mxu0 0.0
        %8026 = vmatpush2.msra.mxu0 0.0
        %8027 = vmatprep.subr.mxu0 0.0
        %8028 = vmatpush2.msra.mxu0 0.0
        %8029 = vmatprep.subr.mxu0 0.0
        %8030 = vmatpush2.msra.mxu0 0.0
        %8031 = vmatprep.subr.mxu0 0.0
        %8032 = vmatpush2.msra.mxu0 0.0
        %8033 = vmatprep.subr.mxu0 0.0
        %8034 = vmatpush2.msra.mxu0 0.0
        %8035 = vmatprep.subr.mxu0 0.0
        %8036 = vmatpush2.msra.mxu0 0.0
        %8037 = vmatprep.subr.mxu0 0.0
        %8038 = vmatpush2.msra.mxu0 0.0
        %8039 = vmatprep.subr.mxu0 0.0
        %8040 = vmatpush2.msra.mxu0 0.0
        %8041 = vmatprep.subr.mxu0 0.0
        %8042 = vmatpush2.msra.mxu0 0.0
        %8043 = vmatprep.subr.mxu0 0.0
        %8044 = vmatpush2.msra.mxu0 0.0
        %8045 = vmatprep.mubr.f32.mxu0 0.0
        %8046 = vmatmul.mubr.f32.gmra.mxu0 %v7976
        %v8047 = vpop.f32.mrf.mxu0
        %v8048 = vadd.f32 0.0, %v8047
        %v8049 = vpop.f32.mrf.mxu0
        %8050 = vdwg.mxu0
        %v8052 = vsel %vm2274, %v7507, 0
        %v8055 = vsel %vm3575, %v7518, 0
        %8057 = vmatprep.subr.mxu0 0.0
        %8058 = vmatpush1.msra.mxu0 0.0
        %8059 = vmatprep.subr.mxu0 0.0
        %8060 = vmatpush1.msra.mxu0 0.0
        %8061 = vmatprep.subr.mxu0 0.0
        %8062 = vmatpush1.msra.mxu0 0.0
        %8063 = vmatprep.subr.mxu0 0.0
        %8064 = vmatpush1.msra.mxu0 0.0
        %8065 = vmatprep.subr.mxu0 0.0
        %8066 = vmatpush1.msra.mxu0 0.0
        %8067 = vmatprep.subr.mxu0 0.0
        %8068 = vmatpush1.msra.mxu0 0.0
        %8069 = vmatprep.subr.mxu0 0.0
        %8070 = vmatpush1.msra.mxu0 0.0
        %8071 = vmatprep.subr.mxu0 0.0
        %8072 = vmatpush1.msra.mxu0 0.0
        %8073 = vmatprep.subr.mxu0 0.0
        %8074 = vmatpush1.msra.mxu0 0.0
        %8075 = vmatprep.subr.mxu0 0.0
        %8076 = vmatpush1.msra.mxu0 0.0
        %8077 = vmatprep.subr.mxu0 0.0
        %8078 = vmatpush1.msra.mxu0 0.0
        %8079 = vmatprep.subr.mxu0 0.0
        %8080 = vmatpush1.msra.mxu0 0.0
        %8081 = vmatprep.subr.mxu0 0.0
        %8082 = vmatpush1.msra.mxu0 0.0
        %8083 = vmatprep.subr.mxu0 0.0
        %8084 = vmatpush1.msra.mxu0 0.0
        %8085 = vmatprep.subr.mxu0 0.0
        %8086 = vmatpush1.msra.mxu0 0.0
        %8087 = vmatprep.subr.mxu0 0.0
        %8088 = vmatpush1.msra.mxu0 %v8055
        %8089 = vmatprep.subr.mxu0 0.0
        %8090 = vmatpush2.msra.mxu0 0.0
        %8091 = vmatprep.subr.mxu0 0.0
        %8092 = vmatpush2.msra.mxu0 0.0
        %8093 = vmatprep.subr.mxu0 0.0
        %8094 = vmatpush2.msra.mxu0 0.0
        %8095 = vmatprep.subr.mxu0 0.0
        %8096 = vmatpush2.msra.mxu0 0.0
        %8097 = vmatprep.subr.mxu0 0.0
        %8098 = vmatpush2.msra.mxu0 0.0
        %8099 = vmatprep.subr.mxu0 0.0
        %8100 = vmatpush2.msra.mxu0 0.0
        %8101 = vmatprep.subr.mxu0 0.0
        %8102 = vmatpush2.msra.mxu0 0.0
        %8103 = vmatprep.subr.mxu0 0.0
        %8104 = vmatpush2.msra.mxu0 0.0
        %8105 = vmatprep.subr.mxu0 0.0
        %8106 = vmatpush2.msra.mxu0 0.0
        %8107 = vmatprep.subr.mxu0 0.0
        %8108 = vmatpush2.msra.mxu0 0.0
        %8109 = vmatprep.subr.mxu0 0.0
        %8110 = vmatpush2.msra.mxu0 0.0
        %8111 = vmatprep.subr.mxu0 0.0
        %8112 = vmatpush2.msra.mxu0 0.0
        %8113 = vmatprep.subr.mxu0 0.0
        %8114 = vmatpush2.msra.mxu0 0.0
        %8115 = vmatprep.subr.mxu0 0.0
        %8116 = vmatpush2.msra.mxu0 0.0
        %8117 = vmatprep.subr.mxu0 0.0
        %8118 = vmatpush2.msra.mxu0 0.0
        %8119 = vmatprep.subr.mxu0 0.0
        %8120 = vmatpush2.msra.mxu0 0.0
        %8121 = vmatprep.mubr.f32.mxu0 0.0
        %8122 = vmatmul.mubr.f32.gmra.mxu0 %v8052
        %v8123 = vpop.f32.mrf.mxu0
        %v8124 = vadd.f32 0.0, %v8123
        %v8125 = vpop.f32.mrf.mxu0
        %8126 = vdwg.mxu0
        %v8127 = vsel %vm466, %v7592, 0.0
        %v8128 = vsel %vm466, %v7668, 0.0
        %v8129 = vadd.f32 %v8127, %v8128
        %v8130 = vsel %vm466, %v7744, 0.0
        %v8131 = vadd.f32 %v8129, %v8130
        %v8132 = vsel %vm466, %v7820, 0.0
        %v8133 = vadd.f32 %v8131, %v8132
        %v8134 = vsel %vm466, %v7896, 0.0
        %v8135 = vadd.f32 %v8133, %v8134
        %v8136 = vsel %vm466, %v7972, 0.0
        %v8137 = vadd.f32 %v8135, %v8136
        %v8138 = vsel %vm466, %v8048, 0.0
        %v8139 = vadd.f32 %v8137, %v8138
        %v8140 = vsel %vm466, %v8124, 0.0
        %v8141 = vadd.f32 %v8139, %v8140
        %s8142 = scalar_lea.vmem %s7, 1
        %v8143 = vld [vmem:[%s8142] sm:$0x1]
        %v8145 = vlaneseq
        %v8146 = vshrl.u32 %v8145, 7
        %v8147 = vsub.s32 0, %v8146
        %v8148 = vrot.slane %v8143, %v8147
        %v8150 = vadd.f32 %v8141, %v8148
        %v8151 = vadd.f32 %v8150, %v4408
        %s8152 = scalar_lea.vmem %s8, 1
        %v8153 = vld [vmem:[%s8152] sm:$0x1]
        %s8154 = scalar_lea.vmem %s9, 1
        %v8155 = vld [vmem:[%s8154] sm:$0x1]
        %v8156 = vsel %vm466, %v8151, 0.0
        %8157 = vadd.xlane.f32.xlu0 %v8156
        %v8158 = vpop.xlane.xlu0 %8157
        %v8159 = vmul.f32 %v8158, %v470
        %v8160 = vsub.f32 %v8151, %v8159
        %v8161 = vmul.f32 %v8160, %v8160
        %v8162 = vsel %vm466, %v8161, 0.0
        %8163 = vadd.xlane.f32.xlu0 %v8162
        %v8164 = vpop.xlane.xlu0 %8163
        %v8165 = vmul.f32 %v8164, %v470
        %v8166 = vadd.f32 %v8165, 1e-05
        %v8167 = vrsqrt.pop %v8166
        %v8168 = vmul.f32 %v8160, %v8167
        %v8170 = vlaneseq
        %v8171 = vshrl.u32 %v8170, 7
        %v8172 = vsub.s32 0, %v8171
        %v8173 = vrot.slane %v8153, %v8172
        %v8175 = vmul.f32 %v8168, %v8173
        %v8177 = vlaneseq
        %v8178 = vshrl.u32 %v8177, 7
        %v8179 = vsub.s32 0, %v8178
        %v8180 = vrot.slane %v8155, %v8179
        %v8182 = vadd.f32 %v8175, %v8180
        %s8183 = scalar_lea.vmem %s10, 32
        %v8184 = vld [vmem:[%s8183] sm:$0xff]
        %v8185 = vld [vmem:[%s8183 + $0x8] sm:$0xff]
        %v8186 = vld [vmem:[%s8183 + $0x10] sm:$0xff]
        %v8187 = vld [vmem:[%s8183 + $0x18] sm:$0xff]
        %s8188 = scalar_lea.vmem %s11, 1
        %v8189 = vld [vmem:[%s8188] sm:$0x1]
        %v8191 = vlaneseq
        %v8192 = vshrl.u32 %v8191, 7
        %v8193 = vsub.s32 0, %v8192
        %v8194 = vrot.slane %v8189, %v8193
        %v8197 = vsel %vm466, %v8182, 0
        %8199 = vmatprep.subr.mxu0 0.0
        %8200 = vmatpush1.msra.mxu0 0.0
        %8201 = vmatprep.subr.mxu0 0.0
        %8202 = vmatpush1.msra.mxu0 0.0
        %8203 = vmatprep.subr.mxu0 0.0
        %8204 = vmatpush1.msra.mxu0 0.0
        %8205 = vmatprep.subr.mxu0 0.0
        %8206 = vmatpush1.msra.mxu0 0.0
        %8207 = vmatprep.subr.mxu0 0.0
        %8208 = vmatpush1.msra.mxu0 0.0
        %8209 = vmatprep.subr.mxu0 0.0
        %8210 = vmatpush1.msra.mxu0 0.0
        %8211 = vmatprep.subr.mxu0 0.0
        %8212 = vmatpush1.msra.mxu0 0.0
        %8213 = vmatprep.subr.mxu0 0.0
        %8214 = vmatpush1.msra.mxu0 0.0
        %8215 = vmatprep.subr.mxu0 0.0
        %8216 = vmatpush1.msra.mxu0 0.0
        %8217 = vmatprep.subr.mxu0 0.0
        %8218 = vmatpush1.msra.mxu0 0.0
        %8219 = vmatprep.subr.mxu0 0.0
        %8220 = vmatpush1.msra.mxu0 0.0
        %8221 = vmatprep.subr.mxu0 0.0
        %8222 = vmatpush1.msra.mxu0 0.0
        %8223 = vmatprep.subr.mxu0 0.0
        %8224 = vmatpush1.msra.mxu0 %v8187
        %8225 = vmatprep.subr.mxu0 0.0
        %8226 = vmatpush1.msra.mxu0 %v8186
        %8227 = vmatprep.subr.mxu0 0.0
        %8228 = vmatpush1.msra.mxu0 %v8185
        %8229 = vmatprep.subr.mxu0 0.0
        %8230 = vmatpush1.msra.mxu0 %v8184
        %8231 = vmatprep.subr.mxu0 0.0
        %8232 = vmatpush2.msra.mxu0 0.0
        %8233 = vmatprep.subr.mxu0 0.0
        %8234 = vmatpush2.msra.mxu0 0.0
        %8235 = vmatprep.subr.mxu0 0.0
        %8236 = vmatpush2.msra.mxu0 0.0
        %8237 = vmatprep.subr.mxu0 0.0
        %8238 = vmatpush2.msra.mxu0 0.0
        %8239 = vmatprep.subr.mxu0 0.0
        %8240 = vmatpush2.msra.mxu0 0.0
        %8241 = vmatprep.subr.mxu0 0.0
        %8242 = vmatpush2.msra.mxu0 0.0
        %8243 = vmatprep.subr.mxu0 0.0
        %8244 = vmatpush2.msra.mxu0 0.0
        %8245 = vmatprep.subr.mxu0 0.0
        %8246 = vmatpush2.msra.mxu0 0.0
        %8247 = vmatprep.subr.mxu0 0.0
        %8248 = vmatpush2.msra.mxu0 0.0
        %8249 = vmatprep.subr.mxu0 0.0
        %8250 = vmatpush2.msra.mxu0 0.0
        %8251 = vmatprep.subr.mxu0 0.0
        %8252 = vmatpush2.msra.mxu0 0.0
        %8253 = vmatprep.subr.mxu0 0.0
        %8254 = vmatpush2.msra.mxu0 0.0
        %8255 = vmatprep.subr.mxu0 0.0
        %8256 = vmatpush2.msra.mxu0 0.0
        %8257 = vmatprep.subr.mxu0 0.0
        %8258 = vmatpush2.msra.mxu0 0.0
        %8259 = vmatprep.subr.mxu0 0.0
        %8260 = vmatpush2.msra.mxu0 0.0
        %8261 = vmatprep.subr.mxu0 0.0
        %8262 = vmatpush2.msra.mxu0 0.0
        %8263 = vmatprep.mubr.f32.mxu0 0.0
        %8264 = vmatmul.mubr.f32.gmra.mxu0 %v8197
        %v8265 = vpop.f32.mrf.mxu0
        %v8266 = vadd.f32 %v8194, %v8265
        %v8267 = vpop.f32.mrf.mxu0
        %8268 = vdwg.mxu0
        %v8269 = vmax.f32 %v8266, 0.0
        %s8270 = scalar_lea.vmem %s12, 64
        %v8271 = vld [vmem:[%s8270] sm:$0xff]
        %v8272 = vld [vmem:[%s8270 + $0x8] sm:$0xff]
        %v8273 = vld [vmem:[%s8270 + $0x10] sm:$0xff]
        %v8274 = vld [vmem:[%s8270 + $0x18] sm:$0xff]
        %v8275 = vld [vmem:[%s8270 + $0x20] sm:$0xff]
        %v8276 = vld [vmem:[%s8270 + $0x28] sm:$0xff]
        %v8277 = vld [vmem:[%s8270 + $0x30] sm:$0xff]
        %v8278 = vld [vmem:[%s8270 + $0x38] sm:$0xff]
        %s8279 = scalar_lea.vmem %s13, 1
        %v8280 = vld [vmem:[%s8279] sm:$0x1]
        %v8282 = vlaneseq
        %v8283 = vshrl.u32 %v8282, 7
        %v8284 = vsub.s32 0, %v8283
        %v8285 = vrot.slane %v8280, %v8284
        %v8288 = vsel %vm4334, %v8269, 0
        %8290 = vmatprep.subr.mxu0 0.0
        %8291 = vmatpush1.msra.mxu0 0.0
        %8292 = vmatprep.subr.mxu0 0.0
        %8293 = vmatpush1.msra.mxu0 0.0
        %8294 = vmatprep.subr.mxu0 0.0
        %8295 = vmatpush1.msra.mxu0 0.0
        %8296 = vmatprep.subr.mxu0 0.0
        %8297 = vmatpush1.msra.mxu0 0.0
        %8298 = vmatprep.subr.mxu0 0.0
        %8299 = vmatpush1.msra.mxu0 0.0
        %8300 = vmatprep.subr.mxu0 0.0
        %8301 = vmatpush1.msra.mxu0 0.0
        %8302 = vmatprep.subr.mxu0 0.0
        %8303 = vmatpush1.msra.mxu0 0.0
        %8304 = vmatprep.subr.mxu0 0.0
        %8305 = vmatpush1.msra.mxu0 0.0
        %8306 = vmatprep.subr.mxu0 0.0
        %8307 = vmatpush1.msra.mxu0 %v8278
        %8308 = vmatprep.subr.mxu0 0.0
        %8309 = vmatpush1.msra.mxu0 %v8277
        %8310 = vmatprep.subr.mxu0 0.0
        %8311 = vmatpush1.msra.mxu0 %v8276
        %8312 = vmatprep.subr.mxu0 0.0
        %8313 = vmatpush1.msra.mxu0 %v8275
        %8314 = vmatprep.subr.mxu0 0.0
        %8315 = vmatpush1.msra.mxu0 %v8274
        %8316 = vmatprep.subr.mxu0 0.0
        %8317 = vmatpush1.msra.mxu0 %v8273
        %8318 = vmatprep.subr.mxu0 0.0
        %8319 = vmatpush1.msra.mxu0 %v8272
        %8320 = vmatprep.subr.mxu0 0.0
        %8321 = vmatpush1.msra.mxu0 %v8271
        %8322 = vmatprep.subr.mxu0 0.0
        %8323 = vmatpush2.msra.mxu0 0.0
        %8324 = vmatprep.subr.mxu0 0.0
        %8325 = vmatpush2.msra.mxu0 0.0
        %8326 = vmatprep.subr.mxu0 0.0
        %8327 = vmatpush2.msra.mxu0 0.0
        %8328 = vmatprep.subr.mxu0 0.0
        %8329 = vmatpush2.msra.mxu0 0.0
        %8330 = vmatprep.subr.mxu0 0.0
        %8331 = vmatpush2.msra.mxu0 0.0
        %8332 = vmatprep.subr.mxu0 0.0
        %8333 = vmatpush2.msra.mxu0 0.0
        %8334 = vmatprep.subr.mxu0 0.0
        %8335 = vmatpush2.msra.mxu0 0.0
        %8336 = vmatprep.subr.mxu0 0.0
        %8337 = vmatpush2.msra.mxu0 0.0
        %8338 = vmatprep.subr.mxu0 0.0
        %8339 = vmatpush2.msra.mxu0 0.0
        %8340 = vmatprep.subr.mxu0 0.0
        %8341 = vmatpush2.msra.mxu0 0.0
        %8342 = vmatprep.subr.mxu0 0.0
        %8343 = vmatpush2.msra.mxu0 0.0
        %8344 = vmatprep.subr.mxu0 0.0
        %8345 = vmatpush2.msra.mxu0 0.0
        %8346 = vmatprep.subr.mxu0 0.0
        %8347 = vmatpush2.msra.mxu0 0.0
        %8348 = vmatprep.subr.mxu0 0.0
        %8349 = vmatpush2.msra.mxu0 0.0
        %8350 = vmatprep.subr.mxu0 0.0
        %8351 = vmatpush2.msra.mxu0 0.0
        %8352 = vmatprep.subr.mxu0 0.0
        %8353 = vmatpush2.msra.mxu0 0.0
        %8354 = vmatprep.mubr.f32.mxu0 0.0
        %8355 = vmatmul.mubr.f32.gmra.mxu0 %v8288
        %v8356 = vpop.f32.mrf.mxu0
        %v8357 = vadd.f32 %v8285, %v8356
        %v8358 = vpop.f32.mrf.mxu0
        %8359 = vdwg.mxu0
        %v8360 = vadd.f32 %v8357, %v8151
        %8361 = vst.msk [vmem:[%s458] sm:$0xff] %vm466, %v8360
        %s8362 = sand.u32 %s335, 1
        %s8363 = scalar_lea.sflag [#allocation3], %s8362
        %s8364 = sand.u32 %s335, 1
        %s8365 = smul.addr %s8364, 8
        %s8366 = scalar_lea.vmem [#allocation2], %s8365
        // Predicated region
        $region77: #{tpu_custom_call.1} parent=75 // pred_check
          %p8367 = pneg %p345
        $region78: #{tpu_custom_call.1} parent=75 // pred_check_branch
          %8369 = sbr.rel (%p8367) target = $region80
        $region79: #{tpu_custom_call.1} parent=75 // pred_region
          %s8371 = ssub.s32 128, 128
          %8372 = vsyncadd %s8363, %s8371
          %s8373 = smul.addr %s28, 128
          %s8374 = scalar_lea.hbm %s14, %s8373
          %s8376 = sshll.u32 %s8366, 4
          %s8377 = int_to_ptr.vmem [resolvable:$true] %s8376
          %8379 = dma.vmem_to_hbm [thread:$0]  %s8377, 128, %s8374, %s8363
        $region80: #{tpu_custom_call.1} parent=75 // pred_fallthru
          _
      $region76: #{tpu_custom_call.1} parent=5 // pred_fallthru
        _
      %p8380 = scmp.le.s32.totalorder 2, %s23
      // Predicated region
      $region81: #{tpu_custom_call.1} parent=5 // pred_check
        %p8381 = pneg %p8380
      $region82: #{tpu_custom_call.1} parent=5 // pred_check_branch
        %8383 = sbr.rel (%p8381) target = $region84
      $region83: #{tpu_custom_call.1} parent=5 // pred_region
        %s8384 = ssub.s32 %s23, 2
        // Predicated region
        $region85: #{tpu_custom_call.1} parent=83 // pred_check
          %p8385 = pneg %p351
        $region86: #{tpu_custom_call.1} parent=83 // pred_check_branch
          %8387 = sbr.rel (%p8385) target = $region88
        $region87: #{tpu_custom_call.1} parent=83 // pred_region
          %s8388 = sand.u32 %s336, 1
          %s8389 = scalar_lea.sflag [#allocation3], %s8388
          %s8390 = sand.u32 %s336, 1
          %s8391 = smul.addr %s8390, 8
          %s8392 = scalar_lea.vmem [#allocation2], %s8391
          %8393 = dma.done %s8389, 128
        $region88: #{tpu_custom_call.1} parent=83 // pred_fallthru
          _
      $region84: #{tpu_custom_call.1} parent=5 // pred_fallthru
        _
    $region6: #{tpu_custom_call.1} parent=1 // loop_footer
      %s27 = sadd.s32 1, %s23
    $region7: #{tpu_custom_call.1} parent=1 // loop_footer_branch
      %22 = sbr.rel target = $region3
    $region8: #{tpu_custom_call.1} parent=1 // loop_exit
      _
    %8394 = vsyncpa [#allocation3], 1
    %s8395 = scalar_lea.sflag [#allocation3], 1
    %8396 = vsyncpa %s8395, 1

</llo_original>
